<compile_context>
chip_gen: v7x
topology: tpu7x:2x2x1
jax: 0.10.0
libtpu: 0.0.40
codegen_flags: <defaults>
</compile_context>

<pallas_src>
import jax
import jax.numpy as jnp
from jax import lax
from jax.experimental import pallas as pl
from jax.experimental.pallas import tpu as pltpu


# ----------------------------- Pallas kernel ------------------------------- #
def lstm_mlcq_kernel(x_ref,      # (1, Tc*Bt, E) bf16  time-major chunk, this batch tile
                     wih0_ref,   # (E, 4H) bf16
                     whh0_ref,   # (H, 4H) bf16
                     b0_ref,     # (1, 4H) f32   (b_ih0 + b_hh0, permuted)
                     wih1_ref,   # (H, 4H) bf16
                     whh1_ref,   # (H, 4H) bf16
                     b1_ref,     # (1, 4H) f32   (b_ih1 + b_hh1, permuted)
                     wfc_ref,    # (H, Cp) bf16  (lane-padded classifier)
                     bfc_ref,    # (1, Cp) f32
                     out_ref,    # (Bt, Cp) f32
                     h0, c0, h1, c1,   # (Bt, H) scratch: h* bf16, c* f32
                     gin_ref):         # (Tc*Bt, 4H) bf16 scratch
    H = whh0_ref.shape[0]
    Bt = h0.shape[0]
    Tc = x_ref.shape[1] // Bt
    tc = pl.program_id(1)

    # Recurrent state is zero at the start of each batch tile's time sweep.
    @pl.when(tc == 0)
    def _():
        h0[...] = jnp.zeros_like(h0)
        c0[...] = jnp.zeros_like(c0)
        h1[...] = jnp.zeros_like(h1)
        c1[...] = jnp.zeros_like(c1)

    # Hoisted layer-0 input projection for this time chunk (bias folded in);
    # f32 accumulation on the MXU, bf16 store halves scratch + per-step vld.
    gin_ref[...] = (
        jnp.dot(x_ref[0], wih0_ref[...], preferred_element_type=jnp.float32)
        + b0_ref[...]).astype(gin_ref.dtype)

    # Hoist the (1,4H)->(Bt,4H) bias broadcast out of the time loop.
    b1_full = jnp.broadcast_to(b1_ref[...], (Bt, 4 * H))

    def gates_to_state(g, c_prev):
        # Gate order permuted to (i, f, o, g): one sigmoid over a contiguous
        # 3H slab + one tanh over H.
        s = jax.nn.sigmoid(g[:, :3 * H])
        gg = jnp.tanh(g[:, 3 * H:])
        c_new = s[:, H:2 * H] * c_prev + s[:, :H] * gg
        h_new = s[:, 2 * H:3 * H] * jnp.tanh(c_new)
        return h_new, c_new

    def step(t, carry):
        row = pl.multiple_of(t * Bt, Bt)                 # Bt multiple of 16
        g0 = (gin_ref[pl.ds(row, Bt), :]
              + jnp.dot(h0[...], whh0_ref[...],
                        preferred_element_type=jnp.float32))
        h0_new, c0_new = gates_to_state(g0, c0[...])
        h0_bf = h0_new.astype(jnp.bfloat16)
        h0[...] = h0_bf
        c0[...] = c0_new

        # TODO(synk): training-mode inter-layer dropout not implemented
        # (identity, matching model.eval()).
        # Two separate K=H matmuls (not fused to K=2H): Bt is large now, so
        # fixed per-matmul latency is amortized and a (Bt,2H) lane-concat per
        # step would add more copy traffic than it saves.
        g1 = (jnp.dot(h1[...], whh1_ref[...],
                      preferred_element_type=jnp.float32)
              + jnp.dot(h0_bf, wih1_ref[...],
                        preferred_element_type=jnp.float32)
              + b1_full)
        h1_new, c1_new = gates_to_state(g1, c1[...])
        h1[...] = h1_new.astype(jnp.bfloat16)
        c1[...] = c1_new
        return carry

    # Full unroll for tiny chunks; conservative partial unroll otherwise
    # (large Bt already gives the scheduler plenty of work per iteration).
    unroll = True if Tc <= 8 else 2
    lax.fori_loop(0, Tc, step, 0, unroll=unroll)

    # lstm_out[:, -1, :] is exactly h1 after the last step of the last chunk;
    # pre-fc dropout is identity in eval mode.
    @pl.when(tc == pl.num_programs(1) - 1)
    def _():
        logits = (jnp.dot(h1[...], wfc_ref[...],
                          preferred_element_type=jnp.float32) + bfc_ref[...])
        out_ref[...] = logits.astype(out_ref.dtype)


# ------------------------------ wrapper helpers ----------------------------- #
def _permute_gates(w, H):
    # PyTorch LSTM gate order (i, f, g, o) -> (i, f, o, g): the three sigmoid
    # gates become one contiguous lane slab.
    return jnp.concatenate(
        [w[..., 0 * H:1 * H], w[..., 1 * H:2 * H],
         w[..., 3 * H:4 * H], w[..., 2 * H:3 * H]], axis=-1)


def _round_up(x, m):
    return ((x + m - 1) // m) * m


def _batch_tiling(B, max_tile=256):
    """Padded-batch tiling: sublanes multiple of 16 (bf16 packing); one
    maximal tile up to `max_tile`, balanced tiles beyond that."""
    b16 = _round_up(B, 16)
    if b16 <= max_tile:
        return b16, 1
    nbt = -(-b16 // max_tile)                 # cdiv
    bt = _round_up(-(-b16 // nbt), 16)
    return bt, nbt


def _time_chunk(T, Bt, E, H, budget_bytes=16 * 1024 * 1024):
    """Largest divisor of T whose chunk (double-buffered bf16 x + bf16 gin)
    fits the VMEM budget."""
    bytes_per_row = 4 * E + 8 * H             # 2 x-buffers * 2B*E + 2B*4H gin
    max_rows = max(Bt, budget_bytes // bytes_per_row)
    max_tc = max(1, max_rows // Bt)
    if T <= max_tc:
        return T
    for c in range(min(max_tc, T), 0, -1):
        if T % c == 0:
            return c
    return 1


# ------------------------------ forward ------------------------------------ #
@jax.jit
def lstm_mlcq_forward(tokens, params):
    emb_table = params["embedding"]                       # (V, E)
    B, T = tokens.shape
    E = emb_table.shape[1]
    H = params["whh0"].shape[0]
    C = params["wfc"].shape[1]
    Cp = max(128, _round_up(C, 128))                      # lane-dense classifier

    Bt, nbt = _batch_tiling(B)
    B_pad = Bt * nbt
    Tc = _time_chunk(T, Bt, E, H)
    ntc = T // Tc

    # Embedding lookup (gather) is plain-JAX glue; pad batch to the tile.
    x = jnp.take(emb_table, tokens, axis=0).astype(jnp.float32)   # (B, T, E)
    x = jnp.pad(x, ((0, B_pad - B), (0, 0), (0, 0)))
    # Time-major, grouped per batch tile: (nbt, T*Bt, E) so each per-step gate
    # slice inside the kernel is a contiguous, sublane-aligned (Bt, 4H) block.
    x = jnp.transpose(x, (1, 0, 2))                               # (T, B_pad, E)
    x = x.reshape(T, nbt, Bt, E).transpose(1, 0, 2, 3).reshape(nbt, T * Bt, E)
    x = x.astype(jnp.bfloat16)

    to_bf16 = lambda w: _permute_gates(w, H).astype(jnp.bfloat16)
    wih0 = to_bf16(params["wih0"])
    whh0 = to_bf16(params["whh0"])
    wih1 = to_bf16(params["wih1"])
    whh1 = to_bf16(params["whh1"])
    b0 = _permute_gates(params["b0"], H).astype(jnp.float32)
    b1 = _permute_gates(params["b1"], H).astype(jnp.float32)
    wfc = jnp.pad(params["wfc"], ((0, 0), (0, Cp - C))).astype(jnp.bfloat16)
    bfc = jnp.pad(params["bfc"], ((0, 0), (0, Cp - C))).astype(jnp.float32)

    args = (x, wih0, whh0, b0, wih1, whh1, b1, wfc, bfc)

    # Weights / biases: one VMEM-resident copy, no pipeline double-buffering.
    weight_spec = pl.BlockSpec(memory_space=pltpu.MemorySpace.VMEM)

    grid_spec = pltpu.PrefetchScalarGridSpec(
        num_scalar_prefetch=0,
        grid=(nbt, ntc),
        in_specs=[pl.BlockSpec((1, Tc * Bt, E), lambda b, t: (b, t, 0))]
                 + [weight_spec] * (len(args) - 1),
        out_specs=pl.BlockSpec((Bt, Cp), lambda b, t: (b, 0)),
        scratch_shapes=[
            pltpu.VMEM((Bt, H), jnp.bfloat16),            # h0
            pltpu.VMEM((Bt, H), jnp.float32),             # c0
            pltpu.VMEM((Bt, H), jnp.bfloat16),            # h1
            pltpu.VMEM((Bt, H), jnp.float32),             # c1
            pltpu.VMEM((Tc * Bt, 4 * H), jnp.bfloat16),   # hoisted x@Wih0+b0
        ],
    )

    out = pl.pallas_call(
        lstm_mlcq_kernel,
        out_shape=jax.ShapeDtypeStruct((B_pad, Cp), jnp.float32),
        grid_spec=grid_spec,
        compiler_params=pltpu.CompilerParams(
            # Batch tiles may shard across TensorCores; time chunks are the
            # serial recurrence carried in scratch.
            dimension_semantics=("parallel", "arbitrary"),
            # 48 MiB: headroom inside v7x's 64 MiB/TC; comfortably under the
            # 128 MiB of v5e/v6e.
            vmem_limit_bytes=48 * 1024 * 1024),
    )(*args)
    return out[:B, :C]


# --------------------------- parameter init -------------------------------- #
def init_params(key, vocab_size, embedding_dim, hidden_dim, num_classes):
    E, H, C = embedding_dim, hidden_dim, num_classes
    k = 1.0 / jnp.sqrt(jnp.float32(H))
    keys = jax.random.split(key, 12)

    def unif(k_, shape):
        return jax.random.uniform(k_, shape, jnp.float32, minval=-k, maxval=k)

    params = {
        "embedding": jax.random.normal(keys[0], (vocab_size, E), jnp.float32),
        # PyTorch layout, stored transposed: W_ih (4H, E) -> (E, 4H), gate
        # order (i, f, g, o); biases pre-summed (b_ih + b_hh).
        "wih0": unif(keys[1], (E, 4 * H)),
        "whh0": unif(keys[2], (H, 4 * H)),
        "b0":   (unif(keys[3], (1, 4 * H)) + unif(keys[4], (1, 4 * H))),
        "wih1": unif(keys[5], (H, 4 * H)),
        "whh1": unif(keys[6], (H, 4 * H)),
        "b1":   (unif(keys[7], (1, 4 * H)) + unif(keys[8], (1, 4 * H))),
        "wfc":  unif(keys[9], (H, C)),
        "bfc":  unif(keys[10], (1, C)),
    }
    return params


# ------------------------------- main --------------------------------------- #
if __name__ == "__main__":
    # Small, shape-consistent config (original: vocab=50257, E=768, H=512).
    VOCAB, E, H, C = 1000, 128, 128, 5
    B, T = 2, 8

    key = jax.random.PRNGKey(0)
    pkey, tkey = jax.random.split(key)
    params = init_params(pkey, VOCAB, E, H, C)
    tokens = jax.random.randint(tkey, (B, T), 0, VOCAB, dtype=jnp.int32)

    out = lstm_mlcq_forward(tokens, params)
    jax.block_until_ready(out)
    assert out.shape == (B, C) and out.dtype == jnp.float32
    print("KERNEL_OK")
</pallas_src>

<mosaic_0001>
module attributes {stable_mosaic.version = 11 : i64} {
  func.func @lstm_mlcq_kernel(%arg0: i32, %arg1: i32, %arg2: memref<1x128x128xbf16, #tpu.memory_space<vmem>>, %arg3: memref<128x512xbf16, #tpu.memory_space<vmem>>, %arg4: memref<128x512xbf16, #tpu.memory_space<vmem>>, %arg5: memref<1x512xf32, #tpu.memory_space<vmem>>, %arg6: memref<128x512xbf16, #tpu.memory_space<vmem>>, %arg7: memref<128x512xbf16, #tpu.memory_space<vmem>>, %arg8: memref<1x512xf32, #tpu.memory_space<vmem>>, %arg9: memref<128x128xbf16, #tpu.memory_space<vmem>>, %arg10: memref<1x128xf32, #tpu.memory_space<vmem>>, %arg11: memref<16x128xf32, #tpu.memory_space<vmem>>, %arg12: memref<16x128xbf16, #tpu.memory_space<vmem>>, %arg13: memref<16x128xf32, #tpu.memory_space<vmem>>, %arg14: memref<16x128xbf16, #tpu.memory_space<vmem>>, %arg15: memref<16x128xf32, #tpu.memory_space<vmem>>, %arg16: memref<128x512xbf16, #tpu.memory_space<vmem>>) attributes {dimension_semantics = [#tpu.dimension_semantics<parallel>, #tpu.dimension_semantics<arbitrary>], iteration_bounds = array<i64: 1, 1>, scalar_prefetch = 0 : i64, scratch_operands = 5 : i64, tpu.core_type = #tpu.core_type<tc>, window_params = [{transform_indices = @transform_0, window_bounds = array<i64: 1, 128, 128>}, {pipeline_mode = #tpu.pipeline_mode<synchronous>, transform_indices = @transform_1, window_bounds = array<i64: 128, 512>}, {pipeline_mode = #tpu.pipeline_mode<synchronous>, transform_indices = @transform_2, window_bounds = array<i64: 128, 512>}, {pipeline_mode = #tpu.pipeline_mode<synchronous>, transform_indices = @transform_3, window_bounds = array<i64: 1, 512>}, {pipeline_mode = #tpu.pipeline_mode<synchronous>, transform_indices = @transform_4, window_bounds = array<i64: 128, 512>}, {pipeline_mode = #tpu.pipeline_mode<synchronous>, transform_indices = @transform_5, window_bounds = array<i64: 128, 512>}, {pipeline_mode = #tpu.pipeline_mode<synchronous>, transform_indices = @transform_6, window_bounds = array<i64: 1, 512>}, {pipeline_mode = #tpu.pipeline_mode<synchronous>, transform_indices = @transform_7, window_bounds = array<i64: 128, 128>}, {pipeline_mode = #tpu.pipeline_mode<synchronous>, transform_indices = @transform_8, window_bounds = array<i64: 1, 128>}, {transform_indices = @transform_9, window_bounds = array<i64: 16, 128>}]} {
    %c0_i32 = arith.constant 0 : i32
    %0 = arith.cmpi eq, %arg1, %c0_i32 : i32
    %1 = arith.extui %0 : i1 to i32
    %c0_i32_0 = arith.constant 0 : i32
    %2 = arith.cmpi ne, %1, %c0_i32_0 : i32
    scf.if %2 {
      %cst_245 = arith.constant 0.000000e+00 : bf16
      %466 = vector.broadcast %cst_245 : bf16 to vector<16x128xbf16>
      %c0_246 = arith.constant 0 : index
      %c0_247 = arith.constant 0 : index
      %467 = vector.load %arg12[%c0_246, %c0_247] : memref<16x128xbf16, #tpu.memory_space<vmem>>, vector<16x128xbf16>
      tpu.vector_store %arg12[%c0_246, %c0_247], %466 {strides = array<i32>} : memref<16x128xbf16, #tpu.memory_space<vmem>>, vector<16x128xbf16>,
      %cst_248 = arith.constant 0.000000e+00 : f32
      %468 = vector.broadcast %cst_248 : f32 to vector<16x128xf32>
      %c0_249 = arith.constant 0 : index
      %c0_250 = arith.constant 0 : index
      %469 = vector.load %arg13[%c0_249, %c0_250] : memref<16x128xf32, #tpu.memory_space<vmem>>, vector<16x128xf32>
      tpu.vector_store %arg13[%c0_249, %c0_250], %468 {strides = array<i32>} : memref<16x128xf32, #tpu.memory_space<vmem>>, vector<16x128xf32>,
      %cst_251 = arith.constant 0.000000e+00 : bf16
      %470 = vector.broadcast %cst_251 : bf16 to vector<16x128xbf16>
      %c0_252 = arith.constant 0 : index
      %c0_253 = arith.constant 0 : index
      %471 = vector.load %arg14[%c0_252, %c0_253] : memref<16x128xbf16, #tpu.memory_space<vmem>>, vector<16x128xbf16>
      tpu.vector_store %arg14[%c0_252, %c0_253], %470 {strides = array<i32>} : memref<16x128xbf16, #tpu.memory_space<vmem>>, vector<16x128xbf16>,
      %cst_254 = arith.constant 0.000000e+00 : f32
      %472 = vector.broadcast %cst_254 : f32 to vector<16x128xf32>
      %c0_255 = arith.constant 0 : index
      %c0_256 = arith.constant 0 : index
      %473 = vector.load %arg15[%c0_255, %c0_256] : memref<16x128xf32, #tpu.memory_space<vmem>>, vector<16x128xf32>
      tpu.vector_store %arg15[%c0_255, %c0_256], %472 {strides = array<i32>} : memref<16x128xf32, #tpu.memory_space<vmem>>, vector<16x128xf32>,
    } else {
    }
    %c0 = arith.constant 0 : index
    %c0_1 = arith.constant 0 : index
    %c0_2 = arith.constant 0 : index
    %3 = vector.load %arg2[%c0, %c0_1, %c0_2] : memref<1x128x128xbf16, #tpu.memory_space<vmem>>, vector<1x128x128xbf16>
    %4 = vector.shape_cast %3 : vector<1x128x128xbf16> to vector<128x128xbf16>
    %c0_3 = arith.constant 0 : index
    %c0_4 = arith.constant 0 : index
    %5 = vector.load %arg3[%c0_3, %c0_4] : memref<128x512xbf16, #tpu.memory_space<vmem>>, vector<128x512xbf16>
    %cst = arith.constant dense<0.000000e+00> : vector<128x512xf32>
    %6 = tpu.matmul %4, %5, %cst {dimension_numbers = #tpu.dot_dimension_numbers<[1], [0], [0], [1], [0, 0, 1, 1], [], []>} : vector<128x128xbf16>, vector<128x512xbf16>, vector<128x512xf32> -> vector<128x512xf32>
    %c0_5 = arith.constant 0 : index
    %c0_6 = arith.constant 0 : index
    %7 = vector.load %arg5[%c0_5, %c0_6] : memref<1x512xf32, #tpu.memory_space<vmem>>, vector<1x512xf32>
    %8 = vector.broadcast %7 : vector<1x512xf32> to vector<128x512xf32>
    %9 = arith.addf %6, %8 : vector<128x512xf32>
    %10 = arith.truncf %9 : vector<128x512xf32> to vector<128x512xbf16>
    %c0_7 = arith.constant 0 : index
    %c0_8 = arith.constant 0 : index
    %11 = vector.load %arg16[%c0_7, %c0_8] : memref<128x512xbf16, #tpu.memory_space<vmem>>, vector<128x512xbf16>
    tpu.vector_store %arg16[%c0_7, %c0_8], %10 {strides = array<i32>} : memref<128x512xbf16, #tpu.memory_space<vmem>>, vector<128x512xbf16>,
    %c0_9 = arith.constant 0 : index
    %c0_10 = arith.constant 0 : index
    %12 = vector.load %arg8[%c0_9, %c0_10] : memref<1x512xf32, #tpu.memory_space<vmem>>, vector<1x512xf32>
    %13 = vector.shape_cast %12 : vector<1x512xf32> to vector<1x512xf32>
    %14 = vector.broadcast %13 : vector<1x512xf32> to vector<16x512xf32>
    %c0_i32_11 = arith.constant 0 : i32
    %c16_i32 = arith.constant 16 : i32
    %15 = arith.muli %c0_i32_11, %c16_i32 : i32
    %16 = tpu.assume_multiple %15, 16 : i32
    %17 = arith.index_cast %16 : i32 to index
    %c0_12 = arith.constant 0 : index
    %18 = vector.load %arg16[%17, %c0_12] : memref<128x512xbf16, #tpu.memory_space<vmem>>, vector<16x512xbf16>
    %c0_13 = arith.constant 0 : index
    %c0_14 = arith.constant 0 : index
    %19 = vector.load %arg12[%c0_13, %c0_14] : memref<16x128xbf16, #tpu.memory_space<vmem>>, vector<16x128xbf16>
    %c0_15 = arith.constant 0 : index
    %c0_16 = arith.constant 0 : index
    %20 = vector.load %arg4[%c0_15, %c0_16] : memref<128x512xbf16, #tpu.memory_space<vmem>>, vector<128x512xbf16>
    %cst_17 = arith.constant dense<0.000000e+00> : vector<16x512xf32>
    %21 = tpu.matmul %19, %20, %cst_17 {dimension_numbers = #tpu.dot_dimension_numbers<[1], [0], [0], [1], [0, 0, 1, 1], [], []>} : vector<16x128xbf16>, vector<128x512xbf16>, vector<16x512xf32> -> vector<16x512xf32>
    %22 = arith.extf %18 : vector<16x512xbf16> to vector<16x512xf32>
    %23 = arith.addf %22, %21 : vector<16x512xf32>
    %c0_18 = arith.constant 0 : index
    %c0_19 = arith.constant 0 : index
    %24 = vector.load %arg13[%c0_18, %c0_19] : memref<16x128xf32, #tpu.memory_space<vmem>>, vector<16x128xf32>
    %25 = vector.extract_strided_slice %23 {offsets = [0, 0], sizes = [16, 384], strides = [1, 1]} : vector<16x512xf32> to vector<16x384xf32>
    %26 = arith.negf %25 : vector<16x384xf32>
    %27 = math.exp %26 : vector<16x384xf32>
    %cst_20 = arith.constant 1.000000e+00 : f32
    %28 = vector.broadcast %cst_20 : f32 to vector<16x384xf32>
    %29 = arith.addf %28, %27 : vector<16x384xf32>
    %30 = arith.divf %28, %29 : vector<16x384xf32>
    %31 = vector.extract_strided_slice %23 {offsets = [0, 384], sizes = [16, 128], strides = [1, 1]} : vector<16x512xf32> to vector<16x128xf32>
    %32 = math.tanh %31 : vector<16x128xf32>
    %33 = vector.extract_strided_slice %30 {offsets = [0, 128], sizes = [16, 128], strides = [1, 1]} : vector<16x384xf32> to vector<16x128xf32>
    %34 = arith.mulf %33, %24 : vector<16x128xf32>
    %35 = vector.extract_strided_slice %30 {offsets = [0, 0], sizes = [16, 128], strides = [1, 1]} : vector<16x384xf32> to vector<16x128xf32>
    %36 = arith.mulf %35, %32 : vector<16x128xf32>
    %37 = arith.addf %34, %36 : vector<16x128xf32>
    %38 = vector.extract_strided_slice %30 {offsets = [0, 256], sizes = [16, 128], strides = [1, 1]} : vector<16x384xf32> to vector<16x128xf32>
    %39 = math.tanh %37 : vector<16x128xf32>
    %40 = arith.mulf %38, %39 : vector<16x128xf32>
    %41 = arith.truncf %40 : vector<16x128xf32> to vector<16x128xbf16>
    %c0_21 = arith.constant 0 : index
    %c0_22 = arith.constant 0 : index
    %42 = vector.load %arg12[%c0_21, %c0_22] : memref<16x128xbf16, #tpu.memory_space<vmem>>, vector<16x128xbf16>
    tpu.vector_store %arg12[%c0_21, %c0_22], %41 {strides = array<i32>} : memref<16x128xbf16, #tpu.memory_space<vmem>>, vector<16x128xbf16>,
    %c0_23 = arith.constant 0 : index
    %c0_24 = arith.constant 0 : index
    %43 = vector.load %arg13[%c0_23, %c0_24] : memref<16x128xf32, #tpu.memory_space<vmem>>, vector<16x128xf32>
    tpu.vector_store %arg13[%c0_23, %c0_24], %37 {strides = array<i32>} : memref<16x128xf32, #tpu.memory_space<vmem>>, vector<16x128xf32>,
    %c0_25 = arith.constant 0 : index
    %c0_26 = arith.constant 0 : index
    %44 = vector.load %arg14[%c0_25, %c0_26] : memref<16x128xbf16, #tpu.memory_space<vmem>>, vector<16x128xbf16>
    %c0_27 = arith.constant 0 : index
    %c0_28 = arith.constant 0 : index
    %45 = vector.load %arg7[%c0_27, %c0_28] : memref<128x512xbf16, #tpu.memory_space<vmem>>, vector<128x512xbf16>
    %cst_29 = arith.constant dense<0.000000e+00> : vector<16x512xf32>
    %46 = tpu.matmul %44, %45, %cst_29 {dimension_numbers = #tpu.dot_dimension_numbers<[1], [0], [0], [1], [0, 0, 1, 1], [], []>} : vector<16x128xbf16>, vector<128x512xbf16>, vector<16x512xf32> -> vector<16x512xf32>
    %c0_30 = arith.constant 0 : index
    %c0_31 = arith.constant 0 : index
    %47 = vector.load %arg6[%c0_30, %c0_31] : memref<128x512xbf16, #tpu.memory_space<vmem>>, vector<128x512xbf16>
    %cst_32 = arith.constant dense<0.000000e+00> : vector<16x512xf32>
    %48 = tpu.matmul %41, %47, %cst_32 {dimension_numbers = #tpu.dot_dimension_numbers<[1], [0], [0], [1], [0, 0, 1, 1], [], []>} : vector<16x128xbf16>, vector<128x512xbf16>, vector<16x512xf32> -> vector<16x512xf32>
    %49 = arith.addf %46, %48 : vector<16x512xf32>
    %50 = arith.addf %49, %14 : vector<16x512xf32>
    %c0_33 = arith.constant 0 : index
    %c0_34 = arith.constant 0 : index
    %51 = vector.load %arg15[%c0_33, %c0_34] : memref<16x128xf32, #tpu.memory_space<vmem>>, vector<16x128xf32>
    %52 = vector.extract_strided_slice %50 {offsets = [0, 0], sizes = [16, 384], strides = [1, 1]} : vector<16x512xf32> to vector<16x384xf32>
    %53 = arith.negf %52 : vector<16x384xf32>
    %54 = math.exp %53 : vector<16x384xf32>
    %cst_35 = arith.constant 1.000000e+00 : f32
    %55 = vector.broadcast %cst_35 : f32 to vector<16x384xf32>
    %56 = arith.addf %55, %54 : vector<16x384xf32>
    %57 = arith.divf %55, %56 : vector<16x384xf32>
    %58 = vector.extract_strided_slice %50 {offsets = [0, 384], sizes = [16, 128], strides = [1, 1]} : vector<16x512xf32> to vector<16x128xf32>
    %59 = math.tanh %58 : vector<16x128xf32>
    %60 = vector.extract_strided_slice %57 {offsets = [0, 128], sizes = [16, 128], strides = [1, 1]} : vector<16x384xf32> to vector<16x128xf32>
    %61 = arith.mulf %60, %51 : vector<16x128xf32>
    %62 = vector.extract_strided_slice %57 {offsets = [0, 0], sizes = [16, 128], strides = [1, 1]} : vector<16x384xf32> to vector<16x128xf32>
    %63 = arith.mulf %62, %59 : vector<16x128xf32>
    %64 = arith.addf %61, %63 : vector<16x128xf32>
    %65 = vector.extract_strided_slice %57 {offsets = [0, 256], sizes = [16, 128], strides = [1, 1]} : vector<16x384xf32> to vector<16x128xf32>
    %66 = math.tanh %64 : vector<16x128xf32>
    %67 = arith.mulf %65, %66 : vector<16x128xf32>
    %68 = arith.truncf %67 : vector<16x128xf32> to vector<16x128xbf16>
    %c0_36 = arith.constant 0 : index
    %c0_37 = arith.constant 0 : index
    %69 = vector.load %arg14[%c0_36, %c0_37] : memref<16x128xbf16, #tpu.memory_space<vmem>>, vector<16x128xbf16>
    tpu.vector_store %arg14[%c0_36, %c0_37], %68 {strides = array<i32>} : memref<16x128xbf16, #tpu.memory_space<vmem>>, vector<16x128xbf16>,
    %c0_38 = arith.constant 0 : index
    %c0_39 = arith.constant 0 : index
    %70 = vector.load %arg15[%c0_38, %c0_39] : memref<16x128xf32, #tpu.memory_space<vmem>>, vector<16x128xf32>
    tpu.vector_store %arg15[%c0_38, %c0_39], %64 {strides = array<i32>} : memref<16x128xf32, #tpu.memory_space<vmem>>, vector<16x128xf32>,
    %c1_i32 = arith.constant 1 : i32
    %c16_i32_40 = arith.constant 16 : i32
    %71 = arith.muli %c1_i32, %c16_i32_40 : i32
    %72 = tpu.assume_multiple %71, 16 : i32
    %73 = arith.index_cast %72 : i32 to index
    %c0_41 = arith.constant 0 : index
    %74 = vector.load %arg16[%73, %c0_41] : memref<128x512xbf16, #tpu.memory_space<vmem>>, vector<16x512xbf16>
    %c0_42 = arith.constant 0 : index
    %c0_43 = arith.constant 0 : index
    %75 = vector.load %arg12[%c0_42, %c0_43] : memref<16x128xbf16, #tpu.memory_space<vmem>>, vector<16x128xbf16>
    %c0_44 = arith.constant 0 : index
    %c0_45 = arith.constant 0 : index
    %76 = vector.load %arg4[%c0_44, %c0_45] : memref<128x512xbf16, #tpu.memory_space<vmem>>, vector<128x512xbf16>
    %cst_46 = arith.constant dense<0.000000e+00> : vector<16x512xf32>
    %77 = tpu.matmul %75, %76, %cst_46 {dimension_numbers = #tpu.dot_dimension_numbers<[1], [0], [0], [1], [0, 0, 1, 1], [], []>} : vector<16x128xbf16>, vector<128x512xbf16>, vector<16x512xf32> -> vector<16x512xf32>
    %78 = arith.extf %74 : vector<16x512xbf16> to vector<16x512xf32>
    %79 = arith.addf %78, %77 : vector<16x512xf32>
    %c0_47 = arith.constant 0 : index
    %c0_48 = arith.constant 0 : index
    %80 = vector.load %arg13[%c0_47, %c0_48] : memref<16x128xf32, #tpu.memory_space<vmem>>, vector<16x128xf32>
    %81 = vector.extract_strided_slice %79 {offsets = [0, 0], sizes = [16, 384], strides = [1, 1]} : vector<16x512xf32> to vector<16x384xf32>
    %82 = arith.negf %81 : vector<16x384xf32>
    %83 = math.exp %82 : vector<16x384xf32>
    %cst_49 = arith.constant 1.000000e+00 : f32
    %84 = vector.broadcast %cst_49 : f32 to vector<16x384xf32>
    %85 = arith.addf %84, %83 : vector<16x384xf32>
    %86 = arith.divf %84, %85 : vector<16x384xf32>
    %87 = vector.extract_strided_slice %79 {offsets = [0, 384], sizes = [16, 128], strides = [1, 1]} : vector<16x512xf32> to vector<16x128xf32>
    %88 = math.tanh %87 : vector<16x128xf32>
    %89 = vector.extract_strided_slice %86 {offsets = [0, 128], sizes = [16, 128], strides = [1, 1]} : vector<16x384xf32> to vector<16x128xf32>
    %90 = arith.mulf %89, %80 : vector<16x128xf32>
    %91 = vector.extract_strided_slice %86 {offsets = [0, 0], sizes = [16, 128], strides = [1, 1]} : vector<16x384xf32> to vector<16x128xf32>
    %92 = arith.mulf %91, %88 : vector<16x128xf32>
    %93 = arith.addf %90, %92 : vector<16x128xf32>
    %94 = vector.extract_strided_slice %86 {offsets = [0, 256], sizes = [16, 128], strides = [1, 1]} : vector<16x384xf32> to vector<16x128xf32>
    %95 = math.tanh %93 : vector<16x128xf32>
    %96 = arith.mulf %94, %95 : vector<16x128xf32>
    %97 = arith.truncf %96 : vector<16x128xf32> to vector<16x128xbf16>
    %c0_50 = arith.constant 0 : index
    %c0_51 = arith.constant 0 : index
    %98 = vector.load %arg12[%c0_50, %c0_51] : memref<16x128xbf16, #tpu.memory_space<vmem>>, vector<16x128xbf16>
    tpu.vector_store %arg12[%c0_50, %c0_51], %97 {strides = array<i32>} : memref<16x128xbf16, #tpu.memory_space<vmem>>, vector<16x128xbf16>,
    %c0_52 = arith.constant 0 : index
    %c0_53 = arith.constant 0 : index
    %99 = vector.load %arg13[%c0_52, %c0_53] : memref<16x128xf32, #tpu.memory_space<vmem>>, vector<16x128xf32>
    tpu.vector_store %arg13[%c0_52, %c0_53], %93 {strides = array<i32>} : memref<16x128xf32, #tpu.memory_space<vmem>>, vector<16x128xf32>,
    %c0_54 = arith.constant 0 : index
    %c0_55 = arith.constant 0 : index
    %100 = vector.load %arg14[%c0_54, %c0_55] : memref<16x128xbf16, #tpu.memory_space<vmem>>, vector<16x128xbf16>
    %c0_56 = arith.constant 0 : index
    %c0_57 = arith.constant 0 : index
    %101 = vector.load %arg7[%c0_56, %c0_57] : memref<128x512xbf16, #tpu.memory_space<vmem>>, vector<128x512xbf16>
    %cst_58 = arith.constant dense<0.000000e+00> : vector<16x512xf32>
    %102 = tpu.matmul %100, %101, %cst_58 {dimension_numbers = #tpu.dot_dimension_numbers<[1], [0], [0], [1], [0, 0, 1, 1], [], []>} : vector<16x128xbf16>, vector<128x512xbf16>, vector<16x512xf32> -> vector<16x512xf32>
    %c0_59 = arith.constant 0 : index
    %c0_60 = arith.constant 0 : index
    %103 = vector.load %arg6[%c0_59, %c0_60] : memref<128x512xbf16, #tpu.memory_space<vmem>>, vector<128x512xbf16>
    %cst_61 = arith.constant dense<0.000000e+00> : vector<16x512xf32>
    %104 = tpu.matmul %97, %103, %cst_61 {dimension_numbers = #tpu.dot_dimension_numbers<[1], [0], [0], [1], [0, 0, 1, 1], [], []>} : vector<16x128xbf16>, vector<128x512xbf16>, vector<16x512xf32> -> vector<16x512xf32>
    %105 = arith.addf %102, %104 : vector<16x512xf32>
    %106 = arith.addf %105, %14 : vector<16x512xf32>
    %c0_62 = arith.constant 0 : index
    %c0_63 = arith.constant 0 : index
    %107 = vector.load %arg15[%c0_62, %c0_63] : memref<16x128xf32, #tpu.memory_space<vmem>>, vector<16x128xf32>
    %108 = vector.extract_strided_slice %106 {offsets = [0, 0], sizes = [16, 384], strides = [1, 1]} : vector<16x512xf32> to vector<16x384xf32>
    %109 = arith.negf %108 : vector<16x384xf32>
    %110 = math.exp %109 : vector<16x384xf32>
    %cst_64 = arith.constant 1.000000e+00 : f32
    %111 = vector.broadcast %cst_64 : f32 to vector<16x384xf32>
    %112 = arith.addf %111, %110 : vector<16x384xf32>
    %113 = arith.divf %111, %112 : vector<16x384xf32>
    %114 = vector.extract_strided_slice %106 {offsets = [0, 384], sizes = [16, 128], strides = [1, 1]} : vector<16x512xf32> to vector<16x128xf32>
    %115 = math.tanh %114 : vector<16x128xf32>
    %116 = vector.extract_strided_slice %113 {offsets = [0, 128], sizes = [16, 128], strides = [1, 1]} : vector<16x384xf32> to vector<16x128xf32>
    %117 = arith.mulf %116, %107 : vector<16x128xf32>
    %118 = vector.extract_strided_slice %113 {offsets = [0, 0], sizes = [16, 128], strides = [1, 1]} : vector<16x384xf32> to vector<16x128xf32>
    %119 = arith.mulf %118, %115 : vector<16x128xf32>
    %120 = arith.addf %117, %119 : vector<16x128xf32>
    %121 = vector.extract_strided_slice %113 {offsets = [0, 256], sizes = [16, 128], strides = [1, 1]} : vector<16x384xf32> to vector<16x128xf32>
    %122 = math.tanh %120 : vector<16x128xf32>
    %123 = arith.mulf %121, %122 : vector<16x128xf32>
    %124 = arith.truncf %123 : vector<16x128xf32> to vector<16x128xbf16>
    %c0_65 = arith.constant 0 : index
    %c0_66 = arith.constant 0 : index
    %125 = vector.load %arg14[%c0_65, %c0_66] : memref<16x128xbf16, #tpu.memory_space<vmem>>, vector<16x128xbf16>
    tpu.vector_store %arg14[%c0_65, %c0_66], %124 {strides = array<i32>} : memref<16x128xbf16, #tpu.memory_space<vmem>>, vector<16x128xbf16>,
    %c0_67 = arith.constant 0 : index
    %c0_68 = arith.constant 0 : index
    %126 = vector.load %arg15[%c0_67, %c0_68] : memref<16x128xf32, #tpu.memory_space<vmem>>, vector<16x128xf32>
    tpu.vector_store %arg15[%c0_67, %c0_68], %120 {strides = array<i32>} : memref<16x128xf32, #tpu.memory_space<vmem>>, vector<16x128xf32>,
    %c2_i32 = arith.constant 2 : i32
    %c16_i32_69 = arith.constant 16 : i32
    %127 = arith.muli %c2_i32, %c16_i32_69 : i32
    %128 = tpu.assume_multiple %127, 16 : i32
    %129 = arith.index_cast %128 : i32 to index
    %c0_70 = arith.constant 0 : index
    %130 = vector.load %arg16[%129, %c0_70] : memref<128x512xbf16, #tpu.memory_space<vmem>>, vector<16x512xbf16>
    %c0_71 = arith.constant 0 : index
    %c0_72 = arith.constant 0 : index
    %131 = vector.load %arg12[%c0_71, %c0_72] : memref<16x128xbf16, #tpu.memory_space<vmem>>, vector<16x128xbf16>
    %c0_73 = arith.constant 0 : index
    %c0_74 = arith.constant 0 : index
    %132 = vector.load %arg4[%c0_73, %c0_74] : memref<128x512xbf16, #tpu.memory_space<vmem>>, vector<128x512xbf16>
    %cst_75 = arith.constant dense<0.000000e+00> : vector<16x512xf32>
    %133 = tpu.matmul %131, %132, %cst_75 {dimension_numbers = #tpu.dot_dimension_numbers<[1], [0], [0], [1], [0, 0, 1, 1], [], []>} : vector<16x128xbf16>, vector<128x512xbf16>, vector<16x512xf32> -> vector<16x512xf32>
    %134 = arith.extf %130 : vector<16x512xbf16> to vector<16x512xf32>
    %135 = arith.addf %134, %133 : vector<16x512xf32>
    %c0_76 = arith.constant 0 : index
    %c0_77 = arith.constant 0 : index
    %136 = vector.load %arg13[%c0_76, %c0_77] : memref<16x128xf32, #tpu.memory_space<vmem>>, vector<16x128xf32>
    %137 = vector.extract_strided_slice %135 {offsets = [0, 0], sizes = [16, 384], strides = [1, 1]} : vector<16x512xf32> to vector<16x384xf32>
    %138 = arith.negf %137 : vector<16x384xf32>
    %139 = math.exp %138 : vector<16x384xf32>
    %cst_78 = arith.constant 1.000000e+00 : f32
    %140 = vector.broadcast %cst_78 : f32 to vector<16x384xf32>
    %141 = arith.addf %140, %139 : vector<16x384xf32>
    %142 = arith.divf %140, %141 : vector<16x384xf32>
    %143 = vector.extract_strided_slice %135 {offsets = [0, 384], sizes = [16, 128], strides = [1, 1]} : vector<16x512xf32> to vector<16x128xf32>
    %144 = math.tanh %143 : vector<16x128xf32>
    %145 = vector.extract_strided_slice %142 {offsets = [0, 128], sizes = [16, 128], strides = [1, 1]} : vector<16x384xf32> to vector<16x128xf32>
    %146 = arith.mulf %145, %136 : vector<16x128xf32>
    %147 = vector.extract_strided_slice %142 {offsets = [0, 0], sizes = [16, 128], strides = [1, 1]} : vector<16x384xf32> to vector<16x128xf32>
    %148 = arith.mulf %147, %144 : vector<16x128xf32>
    %149 = arith.addf %146, %148 : vector<16x128xf32>
    %150 = vector.extract_strided_slice %142 {offsets = [0, 256], sizes = [16, 128], strides = [1, 1]} : vector<16x384xf32> to vector<16x128xf32>
    %151 = math.tanh %149 : vector<16x128xf32>
    %152 = arith.mulf %150, %151 : vector<16x128xf32>
    %153 = arith.truncf %152 : vector<16x128xf32> to vector<16x128xbf16>
    %c0_79 = arith.constant 0 : index
    %c0_80 = arith.constant 0 : index
    %154 = vector.load %arg12[%c0_79, %c0_80] : memref<16x128xbf16, #tpu.memory_space<vmem>>, vector<16x128xbf16>
    tpu.vector_store %arg12[%c0_79, %c0_80], %153 {strides = array<i32>} : memref<16x128xbf16, #tpu.memory_space<vmem>>, vector<16x128xbf16>,
    %c0_81 = arith.constant 0 : index
    %c0_82 = arith.constant 0 : index
    %155 = vector.load %arg13[%c0_81, %c0_82] : memref<16x128xf32, #tpu.memory_space<vmem>>, vector<16x128xf32>
    tpu.vector_store %arg13[%c0_81, %c0_82], %149 {strides = array<i32>} : memref<16x128xf32, #tpu.memory_space<vmem>>, vector<16x128xf32>,
    %c0_83 = arith.constant 0 : index
    %c0_84 = arith.constant 0 : index
    %156 = vector.load %arg14[%c0_83, %c0_84] : memref<16x128xbf16, #tpu.memory_space<vmem>>, vector<16x128xbf16>
    %c0_85 = arith.constant 0 : index
    %c0_86 = arith.constant 0 : index
    %157 = vector.load %arg7[%c0_85, %c0_86] : memref<128x512xbf16, #tpu.memory_space<vmem>>, vector<128x512xbf16>
    %cst_87 = arith.constant dense<0.000000e+00> : vector<16x512xf32>
    %158 = tpu.matmul %156, %157, %cst_87 {dimension_numbers = #tpu.dot_dimension_numbers<[1], [0], [0], [1], [0, 0, 1, 1], [], []>} : vector<16x128xbf16>, vector<128x512xbf16>, vector<16x512xf32> -> vector<16x512xf32>
    %c0_88 = arith.constant 0 : index
    %c0_89 = arith.constant 0 : index
    %159 = vector.load %arg6[%c0_88, %c0_89] : memref<128x512xbf16, #tpu.memory_space<vmem>>, vector<128x512xbf16>
    %cst_90 = arith.constant dense<0.000000e+00> : vector<16x512xf32>
    %160 = tpu.matmul %153, %159, %cst_90 {dimension_numbers = #tpu.dot_dimension_numbers<[1], [0], [0], [1], [0, 0, 1, 1], [], []>} : vector<16x128xbf16>, vector<128x512xbf16>, vector<16x512xf32> -> vector<16x512xf32>
    %161 = arith.addf %158, %160 : vector<16x512xf32>
    %162 = arith.addf %161, %14 : vector<16x512xf32>
    %c0_91 = arith.constant 0 : index
    %c0_92 = arith.constant 0 : index
    %163 = vector.load %arg15[%c0_91, %c0_92] : memref<16x128xf32, #tpu.memory_space<vmem>>, vector<16x128xf32>
    %164 = vector.extract_strided_slice %162 {offsets = [0, 0], sizes = [16, 384], strides = [1, 1]} : vector<16x512xf32> to vector<16x384xf32>
    %165 = arith.negf %164 : vector<16x384xf32>
    %166 = math.exp %165 : vector<16x384xf32>
    %cst_93 = arith.constant 1.000000e+00 : f32
    %167 = vector.broadcast %cst_93 : f32 to vector<16x384xf32>
    %168 = arith.addf %167, %166 : vector<16x384xf32>
    %169 = arith.divf %167, %168 : vector<16x384xf32>
    %170 = vector.extract_strided_slice %162 {offsets = [0, 384], sizes = [16, 128], strides = [1, 1]} : vector<16x512xf32> to vector<16x128xf32>
    %171 = math.tanh %170 : vector<16x128xf32>
    %172 = vector.extract_strided_slice %169 {offsets = [0, 128], sizes = [16, 128], strides = [1, 1]} : vector<16x384xf32> to vector<16x128xf32>
    %173 = arith.mulf %172, %163 : vector<16x128xf32>
    %174 = vector.extract_strided_slice %169 {offsets = [0, 0], sizes = [16, 128], strides = [1, 1]} : vector<16x384xf32> to vector<16x128xf32>
    %175 = arith.mulf %174, %171 : vector<16x128xf32>
    %176 = arith.addf %173, %175 : vector<16x128xf32>
    %177 = vector.extract_strided_slice %169 {offsets = [0, 256], sizes = [16, 128], strides = [1, 1]} : vector<16x384xf32> to vector<16x128xf32>
    %178 = math.tanh %176 : vector<16x128xf32>
    %179 = arith.mulf %177, %178 : vector<16x128xf32>
    %180 = arith.truncf %179 : vector<16x128xf32> to vector<16x128xbf16>
    %c0_94 = arith.constant 0 : index
    %c0_95 = arith.constant 0 : index
    %181 = vector.load %arg14[%c0_94, %c0_95] : memref<16x128xbf16, #tpu.memory_space<vmem>>, vector<16x128xbf16>
    tpu.vector_store %arg14[%c0_94, %c0_95], %180 {strides = array<i32>} : memref<16x128xbf16, #tpu.memory_space<vmem>>, vector<16x128xbf16>,
    %c0_96 = arith.constant 0 : index
    %c0_97 = arith.constant 0 : index
    %182 = vector.load %arg15[%c0_96, %c0_97] : memref<16x128xf32, #tpu.memory_space<vmem>>, vector<16x128xf32>
    tpu.vector_store %arg15[%c0_96, %c0_97], %176 {strides = array<i32>} : memref<16x128xf32, #tpu.memory_space<vmem>>, vector<16x128xf32>,
    %c3_i32 = arith.constant 3 : i32
    %c16_i32_98 = arith.constant 16 : i32
    %183 = arith.muli %c3_i32, %c16_i32_98 : i32
    %184 = tpu.assume_multiple %183, 16 : i32
    %185 = arith.index_cast %184 : i32 to index
    %c0_99 = arith.constant 0 : index
    %186 = vector.load %arg16[%185, %c0_99] : memref<128x512xbf16, #tpu.memory_space<vmem>>, vector<16x512xbf16>
    %c0_100 = arith.constant 0 : index
    %c0_101 = arith.constant 0 : index
    %187 = vector.load %arg12[%c0_100, %c0_101] : memref<16x128xbf16, #tpu.memory_space<vmem>>, vector<16x128xbf16>
    %c0_102 = arith.constant 0 : index
    %c0_103 = arith.constant 0 : index
    %188 = vector.load %arg4[%c0_102, %c0_103] : memref<128x512xbf16, #tpu.memory_space<vmem>>, vector<128x512xbf16>
    %cst_104 = arith.constant dense<0.000000e+00> : vector<16x512xf32>
    %189 = tpu.matmul %187, %188, %cst_104 {dimension_numbers = #tpu.dot_dimension_numbers<[1], [0], [0], [1], [0, 0, 1, 1], [], []>} : vector<16x128xbf16>, vector<128x512xbf16>, vector<16x512xf32> -> vector<16x512xf32>
    %190 = arith.extf %186 : vector<16x512xbf16> to vector<16x512xf32>
    %191 = arith.addf %190, %189 : vector<16x512xf32>
    %c0_105 = arith.constant 0 : index
    %c0_106 = arith.constant 0 : index
    %192 = vector.load %arg13[%c0_105, %c0_106] : memref<16x128xf32, #tpu.memory_space<vmem>>, vector<16x128xf32>
    %193 = vector.extract_strided_slice %191 {offsets = [0, 0], sizes = [16, 384], strides = [1, 1]} : vector<16x512xf32> to vector<16x384xf32>
    %194 = arith.negf %193 : vector<16x384xf32>
    %195 = math.exp %194 : vector<16x384xf32>
    %cst_107 = arith.constant 1.000000e+00 : f32
    %196 = vector.broadcast %cst_107 : f32 to vector<16x384xf32>
    %197 = arith.addf %196, %195 : vector<16x384xf32>
    %198 = arith.divf %196, %197 : vector<16x384xf32>
    %199 = vector.extract_strided_slice %191 {offsets = [0, 384], sizes = [16, 128], strides = [1, 1]} : vector<16x512xf32> to vector<16x128xf32>
    %200 = math.tanh %199 : vector<16x128xf32>
    %201 = vector.extract_strided_slice %198 {offsets = [0, 128], sizes = [16, 128], strides = [1, 1]} : vector<16x384xf32> to vector<16x128xf32>
    %202 = arith.mulf %201, %192 : vector<16x128xf32>
    %203 = vector.extract_strided_slice %198 {offsets = [0, 0], sizes = [16, 128], strides = [1, 1]} : vector<16x384xf32> to vector<16x128xf32>
    %204 = arith.mulf %203, %200 : vector<16x128xf32>
    %205 = arith.addf %202, %204 : vector<16x128xf32>
    %206 = vector.extract_strided_slice %198 {offsets = [0, 256], sizes = [16, 128], strides = [1, 1]} : vector<16x384xf32> to vector<16x128xf32>
    %207 = math.tanh %205 : vector<16x128xf32>
    %208 = arith.mulf %206, %207 : vector<16x128xf32>
    %209 = arith.truncf %208 : vector<16x128xf32> to vector<16x128xbf16>
    %c0_108 = arith.constant 0 : index
    %c0_109 = arith.constant 0 : index
    %210 = vector.load %arg12[%c0_108, %c0_109] : memref<16x128xbf16, #tpu.memory_space<vmem>>, vector<16x128xbf16>
    tpu.vector_store %arg12[%c0_108, %c0_109], %209 {strides = array<i32>} : memref<16x128xbf16, #tpu.memory_space<vmem>>, vector<16x128xbf16>,
    %c0_110 = arith.constant 0 : index
    %c0_111 = arith.constant 0 : index
    %211 = vector.load %arg13[%c0_110, %c0_111] : memref<16x128xf32, #tpu.memory_space<vmem>>, vector<16x128xf32>
    tpu.vector_store %arg13[%c0_110, %c0_111], %205 {strides = array<i32>} : memref<16x128xf32, #tpu.memory_space<vmem>>, vector<16x128xf32>,
    %c0_112 = arith.constant 0 : index
    %c0_113 = arith.constant 0 : index
    %212 = vector.load %arg14[%c0_112, %c0_113] : memref<16x128xbf16, #tpu.memory_space<vmem>>, vector<16x128xbf16>
    %c0_114 = arith.constant 0 : index
    %c0_115 = arith.constant 0 : index
    %213 = vector.load %arg7[%c0_114, %c0_115] : memref<128x512xbf16, #tpu.memory_space<vmem>>, vector<128x512xbf16>
    %cst_116 = arith.constant dense<0.000000e+00> : vector<16x512xf32>
    %214 = tpu.matmul %212, %213, %cst_116 {dimension_numbers = #tpu.dot_dimension_numbers<[1], [0], [0], [1], [0, 0, 1, 1], [], []>} : vector<16x128xbf16>, vector<128x512xbf16>, vector<16x512xf32> -> vector<16x512xf32>
    %c0_117 = arith.constant 0 : index
    %c0_118 = arith.constant 0 : index
    %215 = vector.load %arg6[%c0_117, %c0_118] : memref<128x512xbf16, #tpu.memory_space<vmem>>, vector<128x512xbf16>
    %cst_119 = arith.constant dense<0.000000e+00> : vector<16x512xf32>
    %216 = tpu.matmul %209, %215, %cst_119 {dimension_numbers = #tpu.dot_dimension_numbers<[1], [0], [0], [1], [0, 0, 1, 1], [], []>} : vector<16x128xbf16>, vector<128x512xbf16>, vector<16x512xf32> -> vector<16x512xf32>
    %217 = arith.addf %214, %216 : vector<16x512xf32>
    %218 = arith.addf %217, %14 : vector<16x512xf32>
    %c0_120 = arith.constant 0 : index
    %c0_121 = arith.constant 0 : index
    %219 = vector.load %arg15[%c0_120, %c0_121] : memref<16x128xf32, #tpu.memory_space<vmem>>, vector<16x128xf32>
    %220 = vector.extract_strided_slice %218 {offsets = [0, 0], sizes = [16, 384], strides = [1, 1]} : vector<16x512xf32> to vector<16x384xf32>
    %221 = arith.negf %220 : vector<16x384xf32>
    %222 = math.exp %221 : vector<16x384xf32>
    %cst_122 = arith.constant 1.000000e+00 : f32
    %223 = vector.broadcast %cst_122 : f32 to vector<16x384xf32>
    %224 = arith.addf %223, %222 : vector<16x384xf32>
    %225 = arith.divf %223, %224 : vector<16x384xf32>
    %226 = vector.extract_strided_slice %218 {offsets = [0, 384], sizes = [16, 128], strides = [1, 1]} : vector<16x512xf32> to vector<16x128xf32>
    %227 = math.tanh %226 : vector<16x128xf32>
    %228 = vector.extract_strided_slice %225 {offsets = [0, 128], sizes = [16, 128], strides = [1, 1]} : vector<16x384xf32> to vector<16x128xf32>
    %229 = arith.mulf %228, %219 : vector<16x128xf32>
    %230 = vector.extract_strided_slice %225 {offsets = [0, 0], sizes = [16, 128], strides = [1, 1]} : vector<16x384xf32> to vector<16x128xf32>
    %231 = arith.mulf %230, %227 : vector<16x128xf32>
    %232 = arith.addf %229, %231 : vector<16x128xf32>
    %233 = vector.extract_strided_slice %225 {offsets = [0, 256], sizes = [16, 128], strides = [1, 1]} : vector<16x384xf32> to vector<16x128xf32>
    %234 = math.tanh %232 : vector<16x128xf32>
    %235 = arith.mulf %233, %234 : vector<16x128xf32>
    %236 = arith.truncf %235 : vector<16x128xf32> to vector<16x128xbf16>
    %c0_123 = arith.constant 0 : index
    %c0_124 = arith.constant 0 : index
    %237 = vector.load %arg14[%c0_123, %c0_124] : memref<16x128xbf16, #tpu.memory_space<vmem>>, vector<16x128xbf16>
    tpu.vector_store %arg14[%c0_123, %c0_124], %236 {strides = array<i32>} : memref<16x128xbf16, #tpu.memory_space<vmem>>, vector<16x128xbf16>,
    %c0_125 = arith.constant 0 : index
    %c0_126 = arith.constant 0 : index
    %238 = vector.load %arg15[%c0_125, %c0_126] : memref<16x128xf32, #tpu.memory_space<vmem>>, vector<16x128xf32>
    tpu.vector_store %arg15[%c0_125, %c0_126], %232 {strides = array<i32>} : memref<16x128xf32, #tpu.memory_space<vmem>>, vector<16x128xf32>,
    %c4_i32 = arith.constant 4 : i32
    %c16_i32_127 = arith.constant 16 : i32
    %239 = arith.muli %c4_i32, %c16_i32_127 : i32
    %240 = tpu.assume_multiple %239, 16 : i32
    %241 = arith.index_cast %240 : i32 to index
    %c0_128 = arith.constant 0 : index
    %242 = vector.load %arg16[%241, %c0_128] : memref<128x512xbf16, #tpu.memory_space<vmem>>, vector<16x512xbf16>
    %c0_129 = arith.constant 0 : index
    %c0_130 = arith.constant 0 : index
    %243 = vector.load %arg12[%c0_129, %c0_130] : memref<16x128xbf16, #tpu.memory_space<vmem>>, vector<16x128xbf16>
    %c0_131 = arith.constant 0 : index
    %c0_132 = arith.constant 0 : index
    %244 = vector.load %arg4[%c0_131, %c0_132] : memref<128x512xbf16, #tpu.memory_space<vmem>>, vector<128x512xbf16>
    %cst_133 = arith.constant dense<0.000000e+00> : vector<16x512xf32>
    %245 = tpu.matmul %243, %244, %cst_133 {dimension_numbers = #tpu.dot_dimension_numbers<[1], [0], [0], [1], [0, 0, 1, 1], [], []>} : vector<16x128xbf16>, vector<128x512xbf16>, vector<16x512xf32> -> vector<16x512xf32>
    %246 = arith.extf %242 : vector<16x512xbf16> to vector<16x512xf32>
    %247 = arith.addf %246, %245 : vector<16x512xf32>
    %c0_134 = arith.constant 0 : index
    %c0_135 = arith.constant 0 : index
    %248 = vector.load %arg13[%c0_134, %c0_135] : memref<16x128xf32, #tpu.memory_space<vmem>>, vector<16x128xf32>
    %249 = vector.extract_strided_slice %247 {offsets = [0, 0], sizes = [16, 384], strides = [1, 1]} : vector<16x512xf32> to vector<16x384xf32>
    %250 = arith.negf %249 : vector<16x384xf32>
    %251 = math.exp %250 : vector<16x384xf32>
    %cst_136 = arith.constant 1.000000e+00 : f32
    %252 = vector.broadcast %cst_136 : f32 to vector<16x384xf32>
    %253 = arith.addf %252, %251 : vector<16x384xf32>
    %254 = arith.divf %252, %253 : vector<16x384xf32>
    %255 = vector.extract_strided_slice %247 {offsets = [0, 384], sizes = [16, 128], strides = [1, 1]} : vector<16x512xf32> to vector<16x128xf32>
    %256 = math.tanh %255 : vector<16x128xf32>
    %257 = vector.extract_strided_slice %254 {offsets = [0, 128], sizes = [16, 128], strides = [1, 1]} : vector<16x384xf32> to vector<16x128xf32>
    %258 = arith.mulf %257, %248 : vector<16x128xf32>
    %259 = vector.extract_strided_slice %254 {offsets = [0, 0], sizes = [16, 128], strides = [1, 1]} : vector<16x384xf32> to vector<16x128xf32>
    %260 = arith.mulf %259, %256 : vector<16x128xf32>
    %261 = arith.addf %258, %260 : vector<16x128xf32>
    %262 = vector.extract_strided_slice %254 {offsets = [0, 256], sizes = [16, 128], strides = [1, 1]} : vector<16x384xf32> to vector<16x128xf32>
    %263 = math.tanh %261 : vector<16x128xf32>
    %264 = arith.mulf %262, %263 : vector<16x128xf32>
    %265 = arith.truncf %264 : vector<16x128xf32> to vector<16x128xbf16>
    %c0_137 = arith.constant 0 : index
    %c0_138 = arith.constant 0 : index
    %266 = vector.load %arg12[%c0_137, %c0_138] : memref<16x128xbf16, #tpu.memory_space<vmem>>, vector<16x128xbf16>
    tpu.vector_store %arg12[%c0_137, %c0_138], %265 {strides = array<i32>} : memref<16x128xbf16, #tpu.memory_space<vmem>>, vector<16x128xbf16>,
    %c0_139 = arith.constant 0 : index
    %c0_140 = arith.constant 0 : index
    %267 = vector.load %arg13[%c0_139, %c0_140] : memref<16x128xf32, #tpu.memory_space<vmem>>, vector<16x128xf32>
    tpu.vector_store %arg13[%c0_139, %c0_140], %261 {strides = array<i32>} : memref<16x128xf32, #tpu.memory_space<vmem>>, vector<16x128xf32>,
    %c0_141 = arith.constant 0 : index
    %c0_142 = arith.constant 0 : index
    %268 = vector.load %arg14[%c0_141, %c0_142] : memref<16x128xbf16, #tpu.memory_space<vmem>>, vector<16x128xbf16>
    %c0_143 = arith.constant 0 : index
    %c0_144 = arith.constant 0 : index
    %269 = vector.load %arg7[%c0_143, %c0_144] : memref<128x512xbf16, #tpu.memory_space<vmem>>, vector<128x512xbf16>
    %cst_145 = arith.constant dense<0.000000e+00> : vector<16x512xf32>
    %270 = tpu.matmul %268, %269, %cst_145 {dimension_numbers = #tpu.dot_dimension_numbers<[1], [0], [0], [1], [0, 0, 1, 1], [], []>} : vector<16x128xbf16>, vector<128x512xbf16>, vector<16x512xf32> -> vector<16x512xf32>
    %c0_146 = arith.constant 0 : index
    %c0_147 = arith.constant 0 : index
    %271 = vector.load %arg6[%c0_146, %c0_147] : memref<128x512xbf16, #tpu.memory_space<vmem>>, vector<128x512xbf16>
    %cst_148 = arith.constant dense<0.000000e+00> : vector<16x512xf32>
    %272 = tpu.matmul %265, %271, %cst_148 {dimension_numbers = #tpu.dot_dimension_numbers<[1], [0], [0], [1], [0, 0, 1, 1], [], []>} : vector<16x128xbf16>, vector<128x512xbf16>, vector<16x512xf32> -> vector<16x512xf32>
    %273 = arith.addf %270, %272 : vector<16x512xf32>
    %274 = arith.addf %273, %14 : vector<16x512xf32>
    %c0_149 = arith.constant 0 : index
    %c0_150 = arith.constant 0 : index
    %275 = vector.load %arg15[%c0_149, %c0_150] : memref<16x128xf32, #tpu.memory_space<vmem>>, vector<16x128xf32>
    %276 = vector.extract_strided_slice %274 {offsets = [0, 0], sizes = [16, 384], strides = [1, 1]} : vector<16x512xf32> to vector<16x384xf32>
    %277 = arith.negf %276 : vector<16x384xf32>
    %278 = math.exp %277 : vector<16x384xf32>
    %cst_151 = arith.constant 1.000000e+00 : f32
    %279 = vector.broadcast %cst_151 : f32 to vector<16x384xf32>
    %280 = arith.addf %279, %278 : vector<16x384xf32>
    %281 = arith.divf %279, %280 : vector<16x384xf32>
    %282 = vector.extract_strided_slice %274 {offsets = [0, 384], sizes = [16, 128], strides = [1, 1]} : vector<16x512xf32> to vector<16x128xf32>
    %283 = math.tanh %282 : vector<16x128xf32>
    %284 = vector.extract_strided_slice %281 {offsets = [0, 128], sizes = [16, 128], strides = [1, 1]} : vector<16x384xf32> to vector<16x128xf32>
    %285 = arith.mulf %284, %275 : vector<16x128xf32>
    %286 = vector.extract_strided_slice %281 {offsets = [0, 0], sizes = [16, 128], strides = [1, 1]} : vector<16x384xf32> to vector<16x128xf32>
    %287 = arith.mulf %286, %283 : vector<16x128xf32>
    %288 = arith.addf %285, %287 : vector<16x128xf32>
    %289 = vector.extract_strided_slice %281 {offsets = [0, 256], sizes = [16, 128], strides = [1, 1]} : vector<16x384xf32> to vector<16x128xf32>
    %290 = math.tanh %288 : vector<16x128xf32>
    %291 = arith.mulf %289, %290 : vector<16x128xf32>
    %292 = arith.truncf %291 : vector<16x128xf32> to vector<16x128xbf16>
    %c0_152 = arith.constant 0 : index
    %c0_153 = arith.constant 0 : index
    %293 = vector.load %arg14[%c0_152, %c0_153] : memref<16x128xbf16, #tpu.memory_space<vmem>>, vector<16x128xbf16>
    tpu.vector_store %arg14[%c0_152, %c0_153], %292 {strides = array<i32>} : memref<16x128xbf16, #tpu.memory_space<vmem>>, vector<16x128xbf16>,
    %c0_154 = arith.constant 0 : index
    %c0_155 = arith.constant 0 : index
    %294 = vector.load %arg15[%c0_154, %c0_155] : memref<16x128xf32, #tpu.memory_space<vmem>>, vector<16x128xf32>
    tpu.vector_store %arg15[%c0_154, %c0_155], %288 {strides = array<i32>} : memref<16x128xf32, #tpu.memory_space<vmem>>, vector<16x128xf32>,
    %c5_i32 = arith.constant 5 : i32
    %c16_i32_156 = arith.constant 16 : i32
    %295 = arith.muli %c5_i32, %c16_i32_156 : i32
    %296 = tpu.assume_multiple %295, 16 : i32
    %297 = arith.index_cast %296 : i32 to index
    %c0_157 = arith.constant 0 : index
    %298 = vector.load %arg16[%297, %c0_157] : memref<128x512xbf16, #tpu.memory_space<vmem>>, vector<16x512xbf16>
    %c0_158 = arith.constant 0 : index
    %c0_159 = arith.constant 0 : index
    %299 = vector.load %arg12[%c0_158, %c0_159] : memref<16x128xbf16, #tpu.memory_space<vmem>>, vector<16x128xbf16>
    %c0_160 = arith.constant 0 : index
    %c0_161 = arith.constant 0 : index
    %300 = vector.load %arg4[%c0_160, %c0_161] : memref<128x512xbf16, #tpu.memory_space<vmem>>, vector<128x512xbf16>
    %cst_162 = arith.constant dense<0.000000e+00> : vector<16x512xf32>
    %301 = tpu.matmul %299, %300, %cst_162 {dimension_numbers = #tpu.dot_dimension_numbers<[1], [0], [0], [1], [0, 0, 1, 1], [], []>} : vector<16x128xbf16>, vector<128x512xbf16>, vector<16x512xf32> -> vector<16x512xf32>
    %302 = arith.extf %298 : vector<16x512xbf16> to vector<16x512xf32>
    %303 = arith.addf %302, %301 : vector<16x512xf32>
    %c0_163 = arith.constant 0 : index
    %c0_164 = arith.constant 0 : index
    %304 = vector.load %arg13[%c0_163, %c0_164] : memref<16x128xf32, #tpu.memory_space<vmem>>, vector<16x128xf32>
    %305 = vector.extract_strided_slice %303 {offsets = [0, 0], sizes = [16, 384], strides = [1, 1]} : vector<16x512xf32> to vector<16x384xf32>
    %306 = arith.negf %305 : vector<16x384xf32>
    %307 = math.exp %306 : vector<16x384xf32>
    %cst_165 = arith.constant 1.000000e+00 : f32
    %308 = vector.broadcast %cst_165 : f32 to vector<16x384xf32>
    %309 = arith.addf %308, %307 : vector<16x384xf32>
    %310 = arith.divf %308, %309 : vector<16x384xf32>
    %311 = vector.extract_strided_slice %303 {offsets = [0, 384], sizes = [16, 128], strides = [1, 1]} : vector<16x512xf32> to vector<16x128xf32>
    %312 = math.tanh %311 : vector<16x128xf32>
    %313 = vector.extract_strided_slice %310 {offsets = [0, 128], sizes = [16, 128], strides = [1, 1]} : vector<16x384xf32> to vector<16x128xf32>
    %314 = arith.mulf %313, %304 : vector<16x128xf32>
    %315 = vector.extract_strided_slice %310 {offsets = [0, 0], sizes = [16, 128], strides = [1, 1]} : vector<16x384xf32> to vector<16x128xf32>
    %316 = arith.mulf %315, %312 : vector<16x128xf32>
    %317 = arith.addf %314, %316 : vector<16x128xf32>
    %318 = vector.extract_strided_slice %310 {offsets = [0, 256], sizes = [16, 128], strides = [1, 1]} : vector<16x384xf32> to vector<16x128xf32>
    %319 = math.tanh %317 : vector<16x128xf32>
    %320 = arith.mulf %318, %319 : vector<16x128xf32>
    %321 = arith.truncf %320 : vector<16x128xf32> to vector<16x128xbf16>
    %c0_166 = arith.constant 0 : index
    %c0_167 = arith.constant 0 : index
    %322 = vector.load %arg12[%c0_166, %c0_167] : memref<16x128xbf16, #tpu.memory_space<vmem>>, vector<16x128xbf16>
    tpu.vector_store %arg12[%c0_166, %c0_167], %321 {strides = array<i32>} : memref<16x128xbf16, #tpu.memory_space<vmem>>, vector<16x128xbf16>,
    %c0_168 = arith.constant 0 : index
    %c0_169 = arith.constant 0 : index
    %323 = vector.load %arg13[%c0_168, %c0_169] : memref<16x128xf32, #tpu.memory_space<vmem>>, vector<16x128xf32>
    tpu.vector_store %arg13[%c0_168, %c0_169], %317 {strides = array<i32>} : memref<16x128xf32, #tpu.memory_space<vmem>>, vector<16x128xf32>,
    %c0_170 = arith.constant 0 : index
    %c0_171 = arith.constant 0 : index
    %324 = vector.load %arg14[%c0_170, %c0_171] : memref<16x128xbf16, #tpu.memory_space<vmem>>, vector<16x128xbf16>
    %c0_172 = arith.constant 0 : index
    %c0_173 = arith.constant 0 : index
    %325 = vector.load %arg7[%c0_172, %c0_173] : memref<128x512xbf16, #tpu.memory_space<vmem>>, vector<128x512xbf16>
    %cst_174 = arith.constant dense<0.000000e+00> : vector<16x512xf32>
    %326 = tpu.matmul %324, %325, %cst_174 {dimension_numbers = #tpu.dot_dimension_numbers<[1], [0], [0], [1], [0, 0, 1, 1], [], []>} : vector<16x128xbf16>, vector<128x512xbf16>, vector<16x512xf32> -> vector<16x512xf32>
    %c0_175 = arith.constant 0 : index
    %c0_176 = arith.constant 0 : index
    %327 = vector.load %arg6[%c0_175, %c0_176] : memref<128x512xbf16, #tpu.memory_space<vmem>>, vector<128x512xbf16>
    %cst_177 = arith.constant dense<0.000000e+00> : vector<16x512xf32>
    %328 = tpu.matmul %321, %327, %cst_177 {dimension_numbers = #tpu.dot_dimension_numbers<[1], [0], [0], [1], [0, 0, 1, 1], [], []>} : vector<16x128xbf16>, vector<128x512xbf16>, vector<16x512xf32> -> vector<16x512xf32>
    %329 = arith.addf %326, %328 : vector<16x512xf32>
    %330 = arith.addf %329, %14 : vector<16x512xf32>
    %c0_178 = arith.constant 0 : index
    %c0_179 = arith.constant 0 : index
    %331 = vector.load %arg15[%c0_178, %c0_179] : memref<16x128xf32, #tpu.memory_space<vmem>>, vector<16x128xf32>
    %332 = vector.extract_strided_slice %330 {offsets = [0, 0], sizes = [16, 384], strides = [1, 1]} : vector<16x512xf32> to vector<16x384xf32>
    %333 = arith.negf %332 : vector<16x384xf32>
    %334 = math.exp %333 : vector<16x384xf32>
    %cst_180 = arith.constant 1.000000e+00 : f32
    %335 = vector.broadcast %cst_180 : f32 to vector<16x384xf32>
    %336 = arith.addf %335, %334 : vector<16x384xf32>
    %337 = arith.divf %335, %336 : vector<16x384xf32>
    %338 = vector.extract_strided_slice %330 {offsets = [0, 384], sizes = [16, 128], strides = [1, 1]} : vector<16x512xf32> to vector<16x128xf32>
    %339 = math.tanh %338 : vector<16x128xf32>
    %340 = vector.extract_strided_slice %337 {offsets = [0, 128], sizes = [16, 128], strides = [1, 1]} : vector<16x384xf32> to vector<16x128xf32>
    %341 = arith.mulf %340, %331 : vector<16x128xf32>
    %342 = vector.extract_strided_slice %337 {offsets = [0, 0], sizes = [16, 128], strides = [1, 1]} : vector<16x384xf32> to vector<16x128xf32>
    %343 = arith.mulf %342, %339 : vector<16x128xf32>
    %344 = arith.addf %341, %343 : vector<16x128xf32>
    %345 = vector.extract_strided_slice %337 {offsets = [0, 256], sizes = [16, 128], strides = [1, 1]} : vector<16x384xf32> to vector<16x128xf32>
    %346 = math.tanh %344 : vector<16x128xf32>
    %347 = arith.mulf %345, %346 : vector<16x128xf32>
    %348 = arith.truncf %347 : vector<16x128xf32> to vector<16x128xbf16>
    %c0_181 = arith.constant 0 : index
    %c0_182 = arith.constant 0 : index
    %349 = vector.load %arg14[%c0_181, %c0_182] : memref<16x128xbf16, #tpu.memory_space<vmem>>, vector<16x128xbf16>
    tpu.vector_store %arg14[%c0_181, %c0_182], %348 {strides = array<i32>} : memref<16x128xbf16, #tpu.memory_space<vmem>>, vector<16x128xbf16>,
    %c0_183 = arith.constant 0 : index
    %c0_184 = arith.constant 0 : index
    %350 = vector.load %arg15[%c0_183, %c0_184] : memref<16x128xf32, #tpu.memory_space<vmem>>, vector<16x128xf32>
    tpu.vector_store %arg15[%c0_183, %c0_184], %344 {strides = array<i32>} : memref<16x128xf32, #tpu.memory_space<vmem>>, vector<16x128xf32>,
    %c6_i32 = arith.constant 6 : i32
    %c16_i32_185 = arith.constant 16 : i32
    %351 = arith.muli %c6_i32, %c16_i32_185 : i32
    %352 = tpu.assume_multiple %351, 16 : i32
    %353 = arith.index_cast %352 : i32 to index
    %c0_186 = arith.constant 0 : index
    %354 = vector.load %arg16[%353, %c0_186] : memref<128x512xbf16, #tpu.memory_space<vmem>>, vector<16x512xbf16>
    %c0_187 = arith.constant 0 : index
    %c0_188 = arith.constant 0 : index
    %355 = vector.load %arg12[%c0_187, %c0_188] : memref<16x128xbf16, #tpu.memory_space<vmem>>, vector<16x128xbf16>
    %c0_189 = arith.constant 0 : index
    %c0_190 = arith.constant 0 : index
    %356 = vector.load %arg4[%c0_189, %c0_190] : memref<128x512xbf16, #tpu.memory_space<vmem>>, vector<128x512xbf16>
    %cst_191 = arith.constant dense<0.000000e+00> : vector<16x512xf32>
    %357 = tpu.matmul %355, %356, %cst_191 {dimension_numbers = #tpu.dot_dimension_numbers<[1], [0], [0], [1], [0, 0, 1, 1], [], []>} : vector<16x128xbf16>, vector<128x512xbf16>, vector<16x512xf32> -> vector<16x512xf32>
    %358 = arith.extf %354 : vector<16x512xbf16> to vector<16x512xf32>
    %359 = arith.addf %358, %357 : vector<16x512xf32>
    %c0_192 = arith.constant 0 : index
    %c0_193 = arith.constant 0 : index
    %360 = vector.load %arg13[%c0_192, %c0_193] : memref<16x128xf32, #tpu.memory_space<vmem>>, vector<16x128xf32>
    %361 = vector.extract_strided_slice %359 {offsets = [0, 0], sizes = [16, 384], strides = [1, 1]} : vector<16x512xf32> to vector<16x384xf32>
    %362 = arith.negf %361 : vector<16x384xf32>
    %363 = math.exp %362 : vector<16x384xf32>
    %cst_194 = arith.constant 1.000000e+00 : f32
    %364 = vector.broadcast %cst_194 : f32 to vector<16x384xf32>
    %365 = arith.addf %364, %363 : vector<16x384xf32>
    %366 = arith.divf %364, %365 : vector<16x384xf32>
    %367 = vector.extract_strided_slice %359 {offsets = [0, 384], sizes = [16, 128], strides = [1, 1]} : vector<16x512xf32> to vector<16x128xf32>
    %368 = math.tanh %367 : vector<16x128xf32>
    %369 = vector.extract_strided_slice %366 {offsets = [0, 128], sizes = [16, 128], strides = [1, 1]} : vector<16x384xf32> to vector<16x128xf32>
    %370 = arith.mulf %369, %360 : vector<16x128xf32>
    %371 = vector.extract_strided_slice %366 {offsets = [0, 0], sizes = [16, 128], strides = [1, 1]} : vector<16x384xf32> to vector<16x128xf32>
    %372 = arith.mulf %371, %368 : vector<16x128xf32>
    %373 = arith.addf %370, %372 : vector<16x128xf32>
    %374 = vector.extract_strided_slice %366 {offsets = [0, 256], sizes = [16, 128], strides = [1, 1]} : vector<16x384xf32> to vector<16x128xf32>
    %375 = math.tanh %373 : vector<16x128xf32>
    %376 = arith.mulf %374, %375 : vector<16x128xf32>
    %377 = arith.truncf %376 : vector<16x128xf32> to vector<16x128xbf16>
    %c0_195 = arith.constant 0 : index
    %c0_196 = arith.constant 0 : index
    %378 = vector.load %arg12[%c0_195, %c0_196] : memref<16x128xbf16, #tpu.memory_space<vmem>>, vector<16x128xbf16>
    tpu.vector_store %arg12[%c0_195, %c0_196], %377 {strides = array<i32>} : memref<16x128xbf16, #tpu.memory_space<vmem>>, vector<16x128xbf16>,
    %c0_197 = arith.constant 0 : index
    %c0_198 = arith.constant 0 : index
    %379 = vector.load %arg13[%c0_197, %c0_198] : memref<16x128xf32, #tpu.memory_space<vmem>>, vector<16x128xf32>
    tpu.vector_store %arg13[%c0_197, %c0_198], %373 {strides = array<i32>} : memref<16x128xf32, #tpu.memory_space<vmem>>, vector<16x128xf32>,
    %c0_199 = arith.constant 0 : index
    %c0_200 = arith.constant 0 : index
    %380 = vector.load %arg14[%c0_199, %c0_200] : memref<16x128xbf16, #tpu.memory_space<vmem>>, vector<16x128xbf16>
    %c0_201 = arith.constant 0 : index
    %c0_202 = arith.constant 0 : index
    %381 = vector.load %arg7[%c0_201, %c0_202] : memref<128x512xbf16, #tpu.memory_space<vmem>>, vector<128x512xbf16>
    %cst_203 = arith.constant dense<0.000000e+00> : vector<16x512xf32>
    %382 = tpu.matmul %380, %381, %cst_203 {dimension_numbers = #tpu.dot_dimension_numbers<[1], [0], [0], [1], [0, 0, 1, 1], [], []>} : vector<16x128xbf16>, vector<128x512xbf16>, vector<16x512xf32> -> vector<16x512xf32>
    %c0_204 = arith.constant 0 : index
    %c0_205 = arith.constant 0 : index
    %383 = vector.load %arg6[%c0_204, %c0_205] : memref<128x512xbf16, #tpu.memory_space<vmem>>, vector<128x512xbf16>
    %cst_206 = arith.constant dense<0.000000e+00> : vector<16x512xf32>
    %384 = tpu.matmul %377, %383, %cst_206 {dimension_numbers = #tpu.dot_dimension_numbers<[1], [0], [0], [1], [0, 0, 1, 1], [], []>} : vector<16x128xbf16>, vector<128x512xbf16>, vector<16x512xf32> -> vector<16x512xf32>
    %385 = arith.addf %382, %384 : vector<16x512xf32>
    %386 = arith.addf %385, %14 : vector<16x512xf32>
    %c0_207 = arith.constant 0 : index
    %c0_208 = arith.constant 0 : index
    %387 = vector.load %arg15[%c0_207, %c0_208] : memref<16x128xf32, #tpu.memory_space<vmem>>, vector<16x128xf32>
    %388 = vector.extract_strided_slice %386 {offsets = [0, 0], sizes = [16, 384], strides = [1, 1]} : vector<16x512xf32> to vector<16x384xf32>
    %389 = arith.negf %388 : vector<16x384xf32>
    %390 = math.exp %389 : vector<16x384xf32>
    %cst_209 = arith.constant 1.000000e+00 : f32
    %391 = vector.broadcast %cst_209 : f32 to vector<16x384xf32>
    %392 = arith.addf %391, %390 : vector<16x384xf32>
    %393 = arith.divf %391, %392 : vector<16x384xf32>
    %394 = vector.extract_strided_slice %386 {offsets = [0, 384], sizes = [16, 128], strides = [1, 1]} : vector<16x512xf32> to vector<16x128xf32>
    %395 = math.tanh %394 : vector<16x128xf32>
    %396 = vector.extract_strided_slice %393 {offsets = [0, 128], sizes = [16, 128], strides = [1, 1]} : vector<16x384xf32> to vector<16x128xf32>
    %397 = arith.mulf %396, %387 : vector<16x128xf32>
    %398 = vector.extract_strided_slice %393 {offsets = [0, 0], sizes = [16, 128], strides = [1, 1]} : vector<16x384xf32> to vector<16x128xf32>
    %399 = arith.mulf %398, %395 : vector<16x128xf32>
    %400 = arith.addf %397, %399 : vector<16x128xf32>
    %401 = vector.extract_strided_slice %393 {offsets = [0, 256], sizes = [16, 128], strides = [1, 1]} : vector<16x384xf32> to vector<16x128xf32>
    %402 = math.tanh %400 : vector<16x128xf32>
    %403 = arith.mulf %401, %402 : vector<16x128xf32>
    %404 = arith.truncf %403 : vector<16x128xf32> to vector<16x128xbf16>
    %c0_210 = arith.constant 0 : index
    %c0_211 = arith.constant 0 : index
    %405 = vector.load %arg14[%c0_210, %c0_211] : memref<16x128xbf16, #tpu.memory_space<vmem>>, vector<16x128xbf16>
    tpu.vector_store %arg14[%c0_210, %c0_211], %404 {strides = array<i32>} : memref<16x128xbf16, #tpu.memory_space<vmem>>, vector<16x128xbf16>,
    %c0_212 = arith.constant 0 : index
    %c0_213 = arith.constant 0 : index
    %406 = vector.load %arg15[%c0_212, %c0_213] : memref<16x128xf32, #tpu.memory_space<vmem>>, vector<16x128xf32>
    tpu.vector_store %arg15[%c0_212, %c0_213], %400 {strides = array<i32>} : memref<16x128xf32, #tpu.memory_space<vmem>>, vector<16x128xf32>,
    %c7_i32 = arith.constant 7 : i32
    %c16_i32_214 = arith.constant 16 : i32
    %407 = arith.muli %c7_i32, %c16_i32_214 : i32
    %408 = tpu.assume_multiple %407, 16 : i32
    %409 = arith.index_cast %408 : i32 to index
    %c0_215 = arith.constant 0 : index
    %410 = vector.load %arg16[%409, %c0_215] : memref<128x512xbf16, #tpu.memory_space<vmem>>, vector<16x512xbf16>
    %c0_216 = arith.constant 0 : index
    %c0_217 = arith.constant 0 : index
    %411 = vector.load %arg12[%c0_216, %c0_217] : memref<16x128xbf16, #tpu.memory_space<vmem>>, vector<16x128xbf16>
    %c0_218 = arith.constant 0 : index
    %c0_219 = arith.constant 0 : index
    %412 = vector.load %arg4[%c0_218, %c0_219] : memref<128x512xbf16, #tpu.memory_space<vmem>>, vector<128x512xbf16>
    %cst_220 = arith.constant dense<0.000000e+00> : vector<16x512xf32>
    %413 = tpu.matmul %411, %412, %cst_220 {dimension_numbers = #tpu.dot_dimension_numbers<[1], [0], [0], [1], [0, 0, 1, 1], [], []>} : vector<16x128xbf16>, vector<128x512xbf16>, vector<16x512xf32> -> vector<16x512xf32>
    %414 = arith.extf %410 : vector<16x512xbf16> to vector<16x512xf32>
    %415 = arith.addf %414, %413 : vector<16x512xf32>
    %c0_221 = arith.constant 0 : index
    %c0_222 = arith.constant 0 : index
    %416 = vector.load %arg13[%c0_221, %c0_222] : memref<16x128xf32, #tpu.memory_space<vmem>>, vector<16x128xf32>
    %417 = vector.extract_strided_slice %415 {offsets = [0, 0], sizes = [16, 384], strides = [1, 1]} : vector<16x512xf32> to vector<16x384xf32>
    %418 = arith.negf %417 : vector<16x384xf32>
    %419 = math.exp %418 : vector<16x384xf32>
    %cst_223 = arith.constant 1.000000e+00 : f32
    %420 = vector.broadcast %cst_223 : f32 to vector<16x384xf32>
    %421 = arith.addf %420, %419 : vector<16x384xf32>
    %422 = arith.divf %420, %421 : vector<16x384xf32>
    %423 = vector.extract_strided_slice %415 {offsets = [0, 384], sizes = [16, 128], strides = [1, 1]} : vector<16x512xf32> to vector<16x128xf32>
    %424 = math.tanh %423 : vector<16x128xf32>
    %425 = vector.extract_strided_slice %422 {offsets = [0, 128], sizes = [16, 128], strides = [1, 1]} : vector<16x384xf32> to vector<16x128xf32>
    %426 = arith.mulf %425, %416 : vector<16x128xf32>
    %427 = vector.extract_strided_slice %422 {offsets = [0, 0], sizes = [16, 128], strides = [1, 1]} : vector<16x384xf32> to vector<16x128xf32>
    %428 = arith.mulf %427, %424 : vector<16x128xf32>
    %429 = arith.addf %426, %428 : vector<16x128xf32>
    %430 = vector.extract_strided_slice %422 {offsets = [0, 256], sizes = [16, 128], strides = [1, 1]} : vector<16x384xf32> to vector<16x128xf32>
    %431 = math.tanh %429 : vector<16x128xf32>
    %432 = arith.mulf %430, %431 : vector<16x128xf32>
    %433 = arith.truncf %432 : vector<16x128xf32> to vector<16x128xbf16>
    %c0_224 = arith.constant 0 : index
    %c0_225 = arith.constant 0 : index
    %434 = vector.load %arg12[%c0_224, %c0_225] : memref<16x128xbf16, #tpu.memory_space<vmem>>, vector<16x128xbf16>
    tpu.vector_store %arg12[%c0_224, %c0_225], %433 {strides = array<i32>} : memref<16x128xbf16, #tpu.memory_space<vmem>>, vector<16x128xbf16>,
    %c0_226 = arith.constant 0 : index
    %c0_227 = arith.constant 0 : index
    %435 = vector.load %arg13[%c0_226, %c0_227] : memref<16x128xf32, #tpu.memory_space<vmem>>, vector<16x128xf32>
    tpu.vector_store %arg13[%c0_226, %c0_227], %429 {strides = array<i32>} : memref<16x128xf32, #tpu.memory_space<vmem>>, vector<16x128xf32>,
    %c0_228 = arith.constant 0 : index
    %c0_229 = arith.constant 0 : index
    %436 = vector.load %arg14[%c0_228, %c0_229] : memref<16x128xbf16, #tpu.memory_space<vmem>>, vector<16x128xbf16>
    %c0_230 = arith.constant 0 : index
    %c0_231 = arith.constant 0 : index
    %437 = vector.load %arg7[%c0_230, %c0_231] : memref<128x512xbf16, #tpu.memory_space<vmem>>, vector<128x512xbf16>
    %cst_232 = arith.constant dense<0.000000e+00> : vector<16x512xf32>
    %438 = tpu.matmul %436, %437, %cst_232 {dimension_numbers = #tpu.dot_dimension_numbers<[1], [0], [0], [1], [0, 0, 1, 1], [], []>} : vector<16x128xbf16>, vector<128x512xbf16>, vector<16x512xf32> -> vector<16x512xf32>
    %c0_233 = arith.constant 0 : index
    %c0_234 = arith.constant 0 : index
    %439 = vector.load %arg6[%c0_233, %c0_234] : memref<128x512xbf16, #tpu.memory_space<vmem>>, vector<128x512xbf16>
    %cst_235 = arith.constant dense<0.000000e+00> : vector<16x512xf32>
    %440 = tpu.matmul %433, %439, %cst_235 {dimension_numbers = #tpu.dot_dimension_numbers<[1], [0], [0], [1], [0, 0, 1, 1], [], []>} : vector<16x128xbf16>, vector<128x512xbf16>, vector<16x512xf32> -> vector<16x512xf32>
    %441 = arith.addf %438, %440 : vector<16x512xf32>
    %442 = arith.addf %441, %14 : vector<16x512xf32>
    %c0_236 = arith.constant 0 : index
    %c0_237 = arith.constant 0 : index
    %443 = vector.load %arg15[%c0_236, %c0_237] : memref<16x128xf32, #tpu.memory_space<vmem>>, vector<16x128xf32>
    %444 = vector.extract_strided_slice %442 {offsets = [0, 0], sizes = [16, 384], strides = [1, 1]} : vector<16x512xf32> to vector<16x384xf32>
    %445 = arith.negf %444 : vector<16x384xf32>
    %446 = math.exp %445 : vector<16x384xf32>
    %cst_238 = arith.constant 1.000000e+00 : f32
    %447 = vector.broadcast %cst_238 : f32 to vector<16x384xf32>
    %448 = arith.addf %447, %446 : vector<16x384xf32>
    %449 = arith.divf %447, %448 : vector<16x384xf32>
    %450 = vector.extract_strided_slice %442 {offsets = [0, 384], sizes = [16, 128], strides = [1, 1]} : vector<16x512xf32> to vector<16x128xf32>
    %451 = math.tanh %450 : vector<16x128xf32>
    %452 = vector.extract_strided_slice %449 {offsets = [0, 128], sizes = [16, 128], strides = [1, 1]} : vector<16x384xf32> to vector<16x128xf32>
    %453 = arith.mulf %452, %443 : vector<16x128xf32>
    %454 = vector.extract_strided_slice %449 {offsets = [0, 0], sizes = [16, 128], strides = [1, 1]} : vector<16x384xf32> to vector<16x128xf32>
    %455 = arith.mulf %454, %451 : vector<16x128xf32>
    %456 = arith.addf %453, %455 : vector<16x128xf32>
    %457 = vector.extract_strided_slice %449 {offsets = [0, 256], sizes = [16, 128], strides = [1, 1]} : vector<16x384xf32> to vector<16x128xf32>
    %458 = math.tanh %456 : vector<16x128xf32>
    %459 = arith.mulf %457, %458 : vector<16x128xf32>
    %460 = arith.truncf %459 : vector<16x128xf32> to vector<16x128xbf16>
    %c0_239 = arith.constant 0 : index
    %c0_240 = arith.constant 0 : index
    %461 = vector.load %arg14[%c0_239, %c0_240] : memref<16x128xbf16, #tpu.memory_space<vmem>>, vector<16x128xbf16>
    tpu.vector_store %arg14[%c0_239, %c0_240], %460 {strides = array<i32>} : memref<16x128xbf16, #tpu.memory_space<vmem>>, vector<16x128xbf16>,
    %c0_241 = arith.constant 0 : index
    %c0_242 = arith.constant 0 : index
    %462 = vector.load %arg15[%c0_241, %c0_242] : memref<16x128xf32, #tpu.memory_space<vmem>>, vector<16x128xf32>
    tpu.vector_store %arg15[%c0_241, %c0_242], %456 {strides = array<i32>} : memref<16x128xf32, #tpu.memory_space<vmem>>, vector<16x128xf32>,
    %c8_i32 = arith.constant 8 : i32
    %c0_i32_243 = arith.constant 0 : i32
    %463 = arith.cmpi eq, %arg1, %c0_i32_243 : i32
    %464 = arith.extui %463 : i1 to i32
    %c0_i32_244 = arith.constant 0 : i32
    %465 = arith.cmpi ne, %464, %c0_i32_244 : i32
    scf.if %465 {
      %c0_245 = arith.constant 0 : index
      %c0_246 = arith.constant 0 : index
      %466 = vector.load %arg14[%c0_245, %c0_246] : memref<16x128xbf16, #tpu.memory_space<vmem>>, vector<16x128xbf16>
      %c0_247 = arith.constant 0 : index
      %c0_248 = arith.constant 0 : index
      %467 = vector.load %arg9[%c0_247, %c0_248] : memref<128x128xbf16, #tpu.memory_space<vmem>>, vector<128x128xbf16>
      %cst_249 = arith.constant dense<0.000000e+00> : vector<16x128xf32>
      %468 = tpu.matmul %466, %467, %cst_249 {dimension_numbers = #tpu.dot_dimension_numbers<[1], [0], [0], [1], [0, 0, 1, 1], [], []>} : vector<16x128xbf16>, vector<128x128xbf16>, vector<16x128xf32> -> vector<16x128xf32>
      %c0_250 = arith.constant 0 : index
      %c0_251 = arith.constant 0 : index
      %469 = vector.load %arg10[%c0_250, %c0_251] : memref<1x128xf32, #tpu.memory_space<vmem>>, vector<1x128xf32>
      %470 = vector.broadcast %469 : vector<1x128xf32> to vector<16x128xf32>
      %471 = arith.addf %468, %470 : vector<16x128xf32>
      %c0_252 = arith.constant 0 : index
      %c0_253 = arith.constant 0 : index
      %472 = vector.load %arg11[%c0_252, %c0_253] : memref<16x128xf32, #tpu.memory_space<vmem>>, vector<16x128xf32>
      tpu.vector_store %arg11[%c0_252, %c0_253], %471 {strides = array<i32>} : memref<16x128xf32, #tpu.memory_space<vmem>>, vector<16x128xf32>,
    } else {
    }
    return
  }
  func.func @transform_0(%arg0: i32, %arg1: i32) -> (i32, i32, i32) {
    %c0_i32 = arith.constant 0 : i32
    %c0_i32_0 = arith.constant 0 : i32
    return %arg0, %arg1, %c0_i32 : i32, i32, i32
  }
  func.func @transform_1(%arg0: i32, %arg1: i32) -> (i32, i32) {
    %c0_i32 = arith.constant 0 : i32
    %c0_i32_0 = arith.constant 0 : i32
    %c0_i32_1 = arith.constant 0 : i32
    return %c0_i32, %c0_i32_0 : i32, i32
  }
  func.func @transform_2(%arg0: i32, %arg1: i32) -> (i32, i32) {
    %c0_i32 = arith.constant 0 : i32
    %c0_i32_0 = arith.constant 0 : i32
    %c0_i32_1 = arith.constant 0 : i32
    return %c0_i32, %c0_i32_0 : i32, i32
  }
  func.func @transform_3(%arg0: i32, %arg1: i32) -> (i32, i32) {
    %c0_i32 = arith.constant 0 : i32
    %c0_i32_0 = arith.constant 0 : i32
    %c0_i32_1 = arith.constant 0 : i32
    return %c0_i32, %c0_i32_0 : i32, i32
  }
  func.func @transform_4(%arg0: i32, %arg1: i32) -> (i32, i32) {
    %c0_i32 = arith.constant 0 : i32
    %c0_i32_0 = arith.constant 0 : i32
    %c0_i32_1 = arith.constant 0 : i32
    return %c0_i32, %c0_i32_0 : i32, i32
  }
  func.func @transform_5(%arg0: i32, %arg1: i32) -> (i32, i32) {
    %c0_i32 = arith.constant 0 : i32
    %c0_i32_0 = arith.constant 0 : i32
    %c0_i32_1 = arith.constant 0 : i32
    return %c0_i32, %c0_i32_0 : i32, i32
  }
  func.func @transform_6(%arg0: i32, %arg1: i32) -> (i32, i32) {
    %c0_i32 = arith.constant 0 : i32
    %c0_i32_0 = arith.constant 0 : i32
    %c0_i32_1 = arith.constant 0 : i32
    return %c0_i32, %c0_i32_0 : i32, i32
  }
  func.func @transform_7(%arg0: i32, %arg1: i32) -> (i32, i32) {
    %c0_i32 = arith.constant 0 : i32
    %c0_i32_0 = arith.constant 0 : i32
    %c0_i32_1 = arith.constant 0 : i32
    return %c0_i32, %c0_i32_0 : i32, i32
  }
  func.func @transform_8(%arg0: i32, %arg1: i32) -> (i32, i32) {
    %c0_i32 = arith.constant 0 : i32
    %c0_i32_0 = arith.constant 0 : i32
    %c0_i32_1 = arith.constant 0 : i32
    return %c0_i32, %c0_i32_0 : i32, i32
  }
  func.func @transform_9(%arg0: i32, %arg1: i32) -> (i32, i32) {
    %c0_i32 = arith.constant 0 : i32
    %c0_i32_0 = arith.constant 0 : i32
    return %arg0, %c0_i32 : i32, i32
  }
}

</mosaic_0001>

<llo_original>
// kernel: lstm_mlcq_forward.1
$region0: #{lstm_mlcq_forward.1}
  #allocation0 [shape = 'u32[]', space=smem, size = 0x4, offset = 0x4, fixed_abs, tag = 'smem constant byte address 0x4 - core index']
  #allocation1 [shape = 'u32[144,128]{1,0:T(1,128)}', space=vmem, size = 0x12000, scoped, tag = 'internal scratch']
  #allocation2 [shape = 'bf16[16,128]{1,0:T(16,128)(2,1)}', space=vmem, size = 0x1000, scoped, tag = 'scratch operand']
  #allocation3 [shape = 'f32[16,128]{1,0:T(8,128)}', space=vmem, size = 0x2000, scoped, tag = 'scratch operand']
  #allocation4 [shape = 'bf16[16,128]{1,0:T(16,128)(2,1)}', space=vmem, size = 0x1000, scoped, tag = 'scratch operand']
  #allocation5 [shape = 'f32[16,128]{1,0:T(8,128)}', space=vmem, size = 0x2000, scoped, tag = 'scratch operand']
  #allocation6 [shape = 'bf16[128,512]{1,0:T(16,128)(2,1)}', space=vmem, size = 0x20000, scoped, tag = 'scratch operand']
  %s0 = inlined_call_operand.vmem [shape: bf16[1,128,128], index: 0, kind: input, shape index: {}]
  %s1 = inlined_call_operand.vmem [shape: bf16[128,512], index: 1, kind: input, shape index: {}]
  %s2 = inlined_call_operand.vmem [shape: bf16[128,512], index: 2, kind: input, shape index: {}]
  %s3 = inlined_call_operand.vmem [shape: f32[1,512], index: 3, kind: input, shape index: {}]
  %s4 = inlined_call_operand.vmem [shape: bf16[128,512], index: 4, kind: input, shape index: {}]
  %s5 = inlined_call_operand.vmem [shape: bf16[128,512], index: 5, kind: input, shape index: {}]
  %s6 = inlined_call_operand.vmem [shape: f32[1,512], index: 6, kind: input, shape index: {}]
  %s7 = inlined_call_operand.vmem [shape: bf16[128,128], index: 7, kind: input, shape index: {}]
  %s8 = inlined_call_operand.vmem [shape: f32[1,128], index: 8, kind: input, shape index: {}]
  %s9 = inlined_call_operand.vmem [shape: f32[16,128], index: 9, kind: output, shape index: {}]
  %s10 = sld [smem:[#allocation0]]
  $region54: #{lstm_mlcq_forward.1} parent=0
    _
  %s12 = ssub.s32 1, %s10
  %s13 = scalar_select 0, %s12, %s10
  // Predicated region
  $region2: #{lstm_mlcq_forward.1} parent=0 // pred_check
    _
  $region3: #{lstm_mlcq_forward.1} parent=0 // pred_check_branch
    %15 = sbr.rel (0) target = $region5
  $region4: #{lstm_mlcq_forward.1} parent=0 // pred_region
    _
  $region5: #{lstm_mlcq_forward.1} parent=0 // pred_fallthru
    _
  // Predicated region
  $region6: #{lstm_mlcq_forward.1} parent=0 // pred_check
    _
  $region7: #{lstm_mlcq_forward.1} parent=0 // pred_check_branch
    %17 = sbr.rel (0) target = $region9
  $region8: #{lstm_mlcq_forward.1} parent=0 // pred_region
    _
  $region9: #{lstm_mlcq_forward.1} parent=0 // pred_fallthru
    _
  // Predicated region
  $region10: #{lstm_mlcq_forward.1} parent=0 // pred_check
    _
  $region11: #{lstm_mlcq_forward.1} parent=0 // pred_check_branch
    %19 = sbr.rel (0) target = $region13
  $region12: #{lstm_mlcq_forward.1} parent=0 // pred_region
    _
  $region13: #{lstm_mlcq_forward.1} parent=0 // pred_fallthru
    _
  // Predicated region
  $region14: #{lstm_mlcq_forward.1} parent=0 // pred_check
    _
  $region15: #{lstm_mlcq_forward.1} parent=0 // pred_check_branch
    %21 = sbr.rel (0) target = $region17
  $region16: #{lstm_mlcq_forward.1} parent=0 // pred_region
    _
  $region17: #{lstm_mlcq_forward.1} parent=0 // pred_fallthru
    _
  // Predicated region
  $region18: #{lstm_mlcq_forward.1} parent=0 // pred_check
    _
  $region19: #{lstm_mlcq_forward.1} parent=0 // pred_check_branch
    %23 = sbr.rel (0) target = $region21
  $region20: #{lstm_mlcq_forward.1} parent=0 // pred_region
    _
  $region21: #{lstm_mlcq_forward.1} parent=0 // pred_fallthru
    _
  // Predicated region
  $region22: #{lstm_mlcq_forward.1} parent=0 // pred_check
    _
  $region23: #{lstm_mlcq_forward.1} parent=0 // pred_check_branch
    %25 = sbr.rel (0) target = $region25
  $region24: #{lstm_mlcq_forward.1} parent=0 // pred_region
    _
  $region25: #{lstm_mlcq_forward.1} parent=0 // pred_fallthru
    _
  // Predicated region
  $region26: #{lstm_mlcq_forward.1} parent=0 // pred_check
    _
  $region27: #{lstm_mlcq_forward.1} parent=0 // pred_check_branch
    %27 = sbr.rel (0) target = $region29
  $region28: #{lstm_mlcq_forward.1} parent=0 // pred_region
    _
  $region29: #{lstm_mlcq_forward.1} parent=0 // pred_fallthru
    _
  // Predicated region
  $region30: #{lstm_mlcq_forward.1} parent=0 // pred_check
    _
  $region31: #{lstm_mlcq_forward.1} parent=0 // pred_check_branch
    %29 = sbr.rel (0) target = $region33
  $region32: #{lstm_mlcq_forward.1} parent=0 // pred_region
    _
  $region33: #{lstm_mlcq_forward.1} parent=0 // pred_fallthru
    _
  // Predicated region
  $region34: #{lstm_mlcq_forward.1} parent=0 // pred_check
    _
  $region35: #{lstm_mlcq_forward.1} parent=0 // pred_check_branch
    %31 = sbr.rel (0) target = $region37
  $region36: #{lstm_mlcq_forward.1} parent=0 // pred_region
    _
  $region37: #{lstm_mlcq_forward.1} parent=0 // pred_fallthru
    _
  %p33 = scmp.eq.s32.totalorder 0, 0
  // Predicated region
  $region38: #{lstm_mlcq_forward.1} parent=0 // pred_check
    %p34 = pneg %p33
  $region39: #{lstm_mlcq_forward.1} parent=0 // pred_check_branch
    %36 = sbr.rel (%p34) target = $region41
  $region40: #{lstm_mlcq_forward.1} parent=0 // pred_region
    %37 = vst [vmem:[#allocation2] sm:$0xff] 0
    %38 = vst [vmem:[#allocation3] sm:$0xff] 0.0
    %39 = vst [vmem:[#allocation3 + $0x8] sm:$0xff] 0.0
    %40 = vst [vmem:[#allocation4] sm:$0xff] 0
    %41 = vst [vmem:[#allocation5] sm:$0xff] 0.0
    %42 = vst [vmem:[#allocation5 + $0x8] sm:$0xff] 0.0
  $region41: #{lstm_mlcq_forward.1} parent=0 // pred_fallthru
    _
  %v43 = vld [vmem:[%s0] sm:$0xf]
  %v44 = vld [vmem:[%s0 + $0x4] sm:$0xf]
  %v45 = vld [vmem:[%s0 + $0x8] sm:$0xf]
  %v46 = vld [vmem:[%s0 + $0xc] sm:$0xf]
  %v47 = vld [vmem:[%s0 + $0x10] sm:$0xf]
  %v48 = vld [vmem:[%s0 + $0x14] sm:$0xf]
  %v49 = vld [vmem:[%s0 + $0x18] sm:$0xf]
  %v50 = vld [vmem:[%s0 + $0x1c] sm:$0xf]
  %v51 = vld [vmem:[%s0 + $0x20] sm:$0xf]
  %v52 = vld [vmem:[%s0 + $0x24] sm:$0xf]
  %v53 = vld [vmem:[%s0 + $0x28] sm:$0xf]
  %v54 = vld [vmem:[%s0 + $0x2c] sm:$0xf]
  %v55 = vld [vmem:[%s0 + $0x30] sm:$0xf]
  %v56 = vld [vmem:[%s0 + $0x34] sm:$0xf]
  %v57 = vld [vmem:[%s0 + $0x38] sm:$0xf]
  %v58 = vld [vmem:[%s0 + $0x3c] sm:$0xf]
  %v59 = vld [vmem:[%s1] sm:$0xff]
  %v60 = vld [vmem:[%s1 + $0x8] sm:$0xff]
  %v61 = vld [vmem:[%s1 + $0x10] sm:$0xff]
  %v62 = vld [vmem:[%s1 + $0x18] sm:$0xff]
  %v63 = vld [vmem:[%s1 + $0x20] sm:$0xff]
  %v64 = vld [vmem:[%s1 + $0x28] sm:$0xff]
  %v65 = vld [vmem:[%s1 + $0x30] sm:$0xff]
  %v66 = vld [vmem:[%s1 + $0x38] sm:$0xff]
  %v67 = vld [vmem:[%s1 + $0x40] sm:$0xff]
  %v68 = vld [vmem:[%s1 + $0x48] sm:$0xff]
  %v69 = vld [vmem:[%s1 + $0x50] sm:$0xff]
  %v70 = vld [vmem:[%s1 + $0x58] sm:$0xff]
  %v71 = vld [vmem:[%s1 + $0x60] sm:$0xff]
  %v72 = vld [vmem:[%s1 + $0x68] sm:$0xff]
  %v73 = vld [vmem:[%s1 + $0x70] sm:$0xff]
  %v74 = vld [vmem:[%s1 + $0x78] sm:$0xff]
  %v75 = vld [vmem:[%s1 + $0x80] sm:$0xff]
  %v76 = vld [vmem:[%s1 + $0x88] sm:$0xff]
  %v77 = vld [vmem:[%s1 + $0x90] sm:$0xff]
  %v78 = vld [vmem:[%s1 + $0x98] sm:$0xff]
  %v79 = vld [vmem:[%s1 + $0xa0] sm:$0xff]
  %v80 = vld [vmem:[%s1 + $0xa8] sm:$0xff]
  %v81 = vld [vmem:[%s1 + $0xb0] sm:$0xff]
  %v82 = vld [vmem:[%s1 + $0xb8] sm:$0xff]
  %v83 = vld [vmem:[%s1 + $0xc0] sm:$0xff]
  %v84 = vld [vmem:[%s1 + $0xc8] sm:$0xff]
  %v85 = vld [vmem:[%s1 + $0xd0] sm:$0xff]
  %v86 = vld [vmem:[%s1 + $0xd8] sm:$0xff]
  %v87 = vld [vmem:[%s1 + $0xe0] sm:$0xff]
  %v88 = vld [vmem:[%s1 + $0xe8] sm:$0xff]
  %v89 = vld [vmem:[%s1 + $0xf0] sm:$0xff]
  %v90 = vld [vmem:[%s1 + $0xf8] sm:$0xff]
  %v91 = vld [vmem:[%s3] sm:$0xf]
  %v93 = vlaneseq
  %v94 = vshrl.u32 %v93, 7
  %v95 = vsub.s32 0, %v94
  %v96 = vrot.slane %v91, %v95
  %v97 = vlaneseq
  %v98 = vshrl.u32 %v97, 7
  %v99 = vsub.s32 1, %v98
  %v100 = vrot.slane %v91, %v99
  %v101 = vlaneseq
  %v102 = vshrl.u32 %v101, 7
  %v103 = vsub.s32 2, %v102
  %v104 = vrot.slane %v91, %v103
  %v105 = vlaneseq
  %v106 = vshrl.u32 %v105, 7
  %v107 = vsub.s32 3, %v106
  %v108 = vrot.slane %v91, %v107
  %v129 = vunpack.c.l.b16 %v43
  %v130 = vunpack.c.l.b16 %v44
  %v131 = vunpack.c.l.b16 %v45
  %v132 = vunpack.c.l.b16 %v46
  %v133 = vunpack.c.l.b16 %v47
  %v134 = vunpack.c.l.b16 %v48
  %v135 = vunpack.c.l.b16 %v49
  %v136 = vunpack.c.l.b16 %v50
  %v137 = vunpack.c.l.b16 %v51
  %v138 = vunpack.c.l.b16 %v52
  %v139 = vunpack.c.l.b16 %v53
  %v140 = vunpack.c.l.b16 %v54
  %v141 = vunpack.c.l.b16 %v55
  %v142 = vunpack.c.l.b16 %v56
  %v143 = vunpack.c.l.b16 %v57
  %v144 = vunpack.c.l.b16 %v58
  %v145 = vpack.c.b16 %v130, %v129
  %v146 = vpack.c.b16 %v132, %v131
  %v147 = vpack.c.b16 %v134, %v133
  %v148 = vpack.c.b16 %v136, %v135
  %v149 = vpack.c.b16 %v138, %v137
  %v150 = vpack.c.b16 %v140, %v139
  %v151 = vpack.c.b16 %v142, %v141
  %v152 = vpack.c.b16 %v144, %v143
  %v193 = vunpack.c.l.b16 %v59
  %v194 = vunpack.c.h.b16 %v59
  %v195 = vunpack.c.l.b16 %v60
  %v196 = vunpack.c.h.b16 %v60
  %v197 = vunpack.c.l.b16 %v61
  %v198 = vunpack.c.h.b16 %v61
  %v199 = vunpack.c.l.b16 %v62
  %v200 = vunpack.c.h.b16 %v62
  %v201 = vunpack.c.l.b16 %v63
  %v202 = vunpack.c.h.b16 %v63
  %v203 = vunpack.c.l.b16 %v64
  %v204 = vunpack.c.h.b16 %v64
  %v205 = vunpack.c.l.b16 %v65
  %v206 = vunpack.c.h.b16 %v65
  %v207 = vunpack.c.l.b16 %v66
  %v208 = vunpack.c.h.b16 %v66
  %v209 = vunpack.c.l.b16 %v67
  %v210 = vunpack.c.h.b16 %v67
  %v211 = vunpack.c.l.b16 %v68
  %v212 = vunpack.c.h.b16 %v68
  %v213 = vunpack.c.l.b16 %v69
  %v214 = vunpack.c.h.b16 %v69
  %v215 = vunpack.c.l.b16 %v70
  %v216 = vunpack.c.h.b16 %v70
  %v217 = vunpack.c.l.b16 %v71
  %v218 = vunpack.c.h.b16 %v71
  %v219 = vunpack.c.l.b16 %v72
  %v220 = vunpack.c.h.b16 %v72
  %v221 = vunpack.c.l.b16 %v73
  %v222 = vunpack.c.h.b16 %v73
  %v223 = vunpack.c.l.b16 %v74
  %v224 = vunpack.c.h.b16 %v74
  %v225 = vunpack.c.l.b16 %v75
  %v226 = vunpack.c.h.b16 %v75
  %v227 = vunpack.c.l.b16 %v76
  %v228 = vunpack.c.h.b16 %v76
  %v229 = vunpack.c.l.b16 %v77
  %v230 = vunpack.c.h.b16 %v77
  %v231 = vunpack.c.l.b16 %v78
  %v232 = vunpack.c.h.b16 %v78
  %v233 = vunpack.c.l.b16 %v79
  %v234 = vunpack.c.h.b16 %v79
  %v235 = vunpack.c.l.b16 %v80
  %v236 = vunpack.c.h.b16 %v80
  %v237 = vunpack.c.l.b16 %v81
  %v238 = vunpack.c.h.b16 %v81
  %v239 = vunpack.c.l.b16 %v82
  %v240 = vunpack.c.h.b16 %v82
  %v241 = vunpack.c.l.b16 %v83
  %v242 = vunpack.c.h.b16 %v83
  %v243 = vunpack.c.l.b16 %v84
  %v244 = vunpack.c.h.b16 %v84
  %v245 = vunpack.c.l.b16 %v85
  %v246 = vunpack.c.h.b16 %v85
  %v247 = vunpack.c.l.b16 %v86
  %v248 = vunpack.c.h.b16 %v86
  %v249 = vunpack.c.l.b16 %v87
  %v250 = vunpack.c.h.b16 %v87
  %v251 = vunpack.c.l.b16 %v88
  %v252 = vunpack.c.h.b16 %v88
  %v253 = vunpack.c.l.b16 %v89
  %v254 = vunpack.c.h.b16 %v89
  %v255 = vunpack.c.l.b16 %v90
  %v256 = vunpack.c.h.b16 %v90
  %v257 = vpack.c.b16 %v197, %v193
  %v258 = vpack.c.b16 %v198, %v194
  %v259 = vpack.c.b16 %v199, %v195
  %v260 = vpack.c.b16 %v200, %v196
  %v261 = vpack.c.b16 %v205, %v201
  %v262 = vpack.c.b16 %v206, %v202
  %v263 = vpack.c.b16 %v207, %v203
  %v264 = vpack.c.b16 %v208, %v204
  %v265 = vpack.c.b16 %v213, %v209
  %v266 = vpack.c.b16 %v214, %v210
  %v267 = vpack.c.b16 %v215, %v211
  %v268 = vpack.c.b16 %v216, %v212
  %v269 = vpack.c.b16 %v221, %v217
  %v270 = vpack.c.b16 %v222, %v218
  %v271 = vpack.c.b16 %v223, %v219
  %v272 = vpack.c.b16 %v224, %v220
  %v273 = vpack.c.b16 %v229, %v225
  %v274 = vpack.c.b16 %v230, %v226
  %v275 = vpack.c.b16 %v231, %v227
  %v276 = vpack.c.b16 %v232, %v228
  %v277 = vpack.c.b16 %v237, %v233
  %v278 = vpack.c.b16 %v238, %v234
  %v279 = vpack.c.b16 %v239, %v235
  %v280 = vpack.c.b16 %v240, %v236
  %v281 = vpack.c.b16 %v245, %v241
  %v282 = vpack.c.b16 %v246, %v242
  %v283 = vpack.c.b16 %v247, %v243
  %v284 = vpack.c.b16 %v248, %v244
  %v285 = vpack.c.b16 %v253, %v249
  %v286 = vpack.c.b16 %v254, %v250
  %v287 = vpack.c.b16 %v255, %v251
  %v288 = vpack.c.b16 %v256, %v252
  %321 = vmatprep.subr.bf16.mxu0 %v258
  %322 = vmatpush1.bf16.msra.mxu0 %v257
  %323 = vmatprep.subr.bf16.mxu0 %v262
  %324 = vmatpush1.bf16.msra.mxu0 %v261
  %325 = vmatprep.subr.bf16.mxu0 %v266
  %326 = vmatpush1.bf16.msra.mxu0 %v265
  %327 = vmatprep.subr.bf16.mxu0 %v270
  %328 = vmatpush1.bf16.msra.mxu0 %v269
  %329 = vmatprep.subr.bf16.mxu0 %v274
  %330 = vmatpush1.bf16.msra.mxu0 %v273
  %331 = vmatprep.subr.bf16.mxu0 %v278
  %332 = vmatpush1.bf16.msra.mxu0 %v277
  %333 = vmatprep.subr.bf16.mxu0 %v282
  %334 = vmatpush1.bf16.msra.mxu0 %v281
  %335 = vmatprep.subr.bf16.mxu0 %v286
  %336 = vmatpush1.bf16.msra.mxu0 %v285
  %337 = vmatprep.subr.bf16.mxu0 0
  %338 = vmatpush1.bf16.msra.mxu0 0
  %339 = vmatprep.subr.bf16.mxu0 0
  %340 = vmatpush1.bf16.msra.mxu0 0
  %341 = vmatprep.subr.bf16.mxu0 0
  %342 = vmatpush1.bf16.msra.mxu0 0
  %343 = vmatprep.subr.bf16.mxu0 0
  %344 = vmatpush1.bf16.msra.mxu0 0
  %345 = vmatprep.subr.bf16.mxu0 0
  %346 = vmatpush1.bf16.msra.mxu0 0
  %347 = vmatprep.subr.bf16.mxu0 0
  %348 = vmatpush1.bf16.msra.mxu0 0
  %349 = vmatprep.subr.bf16.mxu0 0
  %350 = vmatpush1.bf16.msra.mxu0 0
  %351 = vmatprep.subr.bf16.mxu0 0
  %352 = vmatpush1.bf16.msra.mxu0 0
  %353 = vmatprep.mubr.bf16.mxu0 0
  %354 = vmatmul.mubr.bf16.gmra.mrb[0].mxu0 %v145
  %v355 = vpop.f32.mrb[0].mxu0
  %v356 = vadd.f32 %v96, %v355
  %v357 = vpop.f32.mrb[0].mxu0
  %v358 = vadd.f32 %v100, %v357
  %v359 = vpop.f32.mrb[0].mxu0
  %v360 = vadd.f32 %v96, %v359
  %v361 = vpop.f32.mrb[0].mxu0
  %v362 = vadd.f32 %v100, %v361
  %363 = vmatprep.mubr.bf16.mxu0 0
  %364 = vmatmul.mubr.bf16.gmra.mrb[0].mxu0 %v146
  %v365 = vpop.f32.mrb[0].mxu0
  %v366 = vadd.f32 %v96, %v365
  %v367 = vpop.f32.mrb[0].mxu0
  %v368 = vadd.f32 %v100, %v367
  %v369 = vpop.f32.mrb[0].mxu0
  %v370 = vadd.f32 %v96, %v369
  %v371 = vpop.f32.mrb[0].mxu0
  %v372 = vadd.f32 %v100, %v371
  %373 = vmatprep.mubr.bf16.mxu0 0
  %374 = vmatmul.mubr.bf16.gmra.mrb[0].mxu0 %v147
  %v375 = vpop.f32.mrb[0].mxu0
  %v376 = vadd.f32 %v96, %v375
  %v377 = vpop.f32.mrb[0].mxu0
  %v378 = vadd.f32 %v100, %v377
  %v379 = vpop.f32.mrb[0].mxu0
  %v380 = vadd.f32 %v96, %v379
  %v381 = vpop.f32.mrb[0].mxu0
  %v382 = vadd.f32 %v100, %v381
  %383 = vmatprep.mubr.bf16.mxu0 0
  %384 = vmatmul.mubr.bf16.gmra.mrb[0].mxu0 %v148
  %v385 = vpop.f32.mrb[0].mxu0
  %v386 = vadd.f32 %v96, %v385
  %v387 = vpop.f32.mrb[0].mxu0
  %v388 = vadd.f32 %v100, %v387
  %v389 = vpop.f32.mrb[0].mxu0
  %v390 = vadd.f32 %v96, %v389
  %v391 = vpop.f32.mrb[0].mxu0
  %v392 = vadd.f32 %v100, %v391
  %393 = vmatprep.mubr.bf16.mxu0 0
  %394 = vmatmul.mubr.bf16.gmra.mrb[0].mxu0 %v149
  %v395 = vpop.f32.mrb[0].mxu0
  %v396 = vadd.f32 %v96, %v395
  %v397 = vpop.f32.mrb[0].mxu0
  %v398 = vadd.f32 %v100, %v397
  %v399 = vpop.f32.mrb[0].mxu0
  %v400 = vadd.f32 %v96, %v399
  %v401 = vpop.f32.mrb[0].mxu0
  %v402 = vadd.f32 %v100, %v401
  %403 = vmatprep.mubr.bf16.mxu0 0
  %404 = vmatmul.mubr.bf16.gmra.mrb[0].mxu0 %v150
  %v405 = vpop.f32.mrb[0].mxu0
  %v406 = vadd.f32 %v96, %v405
  %v407 = vpop.f32.mrb[0].mxu0
  %v408 = vadd.f32 %v100, %v407
  %v409 = vpop.f32.mrb[0].mxu0
  %v410 = vadd.f32 %v96, %v409
  %v411 = vpop.f32.mrb[0].mxu0
  %v412 = vadd.f32 %v100, %v411
  %413 = vmatprep.mubr.bf16.mxu0 0
  %414 = vmatmul.mubr.bf16.gmra.mrb[0].mxu0 %v151
  %v415 = vpop.f32.mrb[0].mxu0
  %v416 = vadd.f32 %v96, %v415
  %v417 = vpop.f32.mrb[0].mxu0
  %v418 = vadd.f32 %v100, %v417
  %v419 = vpop.f32.mrb[0].mxu0
  %v420 = vadd.f32 %v96, %v419
  %v421 = vpop.f32.mrb[0].mxu0
  %v422 = vadd.f32 %v100, %v421
  %423 = vmatprep.mubr.bf16.mxu0 0
  %424 = vmatmul.mubr.bf16.gmra.mrb[0].mxu0 %v152
  %v425 = vpop.f32.mrb[0].mxu0
  %v426 = vadd.f32 %v96, %v425
  %v427 = vpop.f32.mrb[0].mxu0
  %v428 = vadd.f32 %v100, %v427
  %v429 = vpop.f32.mrb[0].mxu0
  %v430 = vadd.f32 %v96, %v429
  %v431 = vpop.f32.mrb[0].mxu0
  %v432 = vadd.f32 %v100, %v431
  %433 = vdwg.mxu0
  %434 = vmatprep.subr.bf16.mxu0 %v260
  %435 = vmatpush1.bf16.msra.mxu0 %v259
  %436 = vmatprep.subr.bf16.mxu0 %v264
  %437 = vmatpush1.bf16.msra.mxu0 %v263
  %438 = vmatprep.subr.bf16.mxu0 %v268
  %439 = vmatpush1.bf16.msra.mxu0 %v267
  %440 = vmatprep.subr.bf16.mxu0 %v272
  %441 = vmatpush1.bf16.msra.mxu0 %v271
  %442 = vmatprep.subr.bf16.mxu0 %v276
  %443 = vmatpush1.bf16.msra.mxu0 %v275
  %444 = vmatprep.subr.bf16.mxu0 %v280
  %445 = vmatpush1.bf16.msra.mxu0 %v279
  %446 = vmatprep.subr.bf16.mxu0 %v284
  %447 = vmatpush1.bf16.msra.mxu0 %v283
  %448 = vmatprep.subr.bf16.mxu0 %v288
  %449 = vmatpush1.bf16.msra.mxu0 %v287
  %450 = vmatprep.subr.bf16.mxu0 0
  %451 = vmatpush1.bf16.msra.mxu0 0
  %452 = vmatprep.subr.bf16.mxu0 0
  %453 = vmatpush1.bf16.msra.mxu0 0
  %454 = vmatprep.subr.bf16.mxu0 0
  %455 = vmatpush1.bf16.msra.mxu0 0
  %456 = vmatprep.subr.bf16.mxu0 0
  %457 = vmatpush1.bf16.msra.mxu0 0
  %458 = vmatprep.subr.bf16.mxu0 0
  %459 = vmatpush1.bf16.msra.mxu0 0
  %460 = vmatprep.subr.bf16.mxu0 0
  %461 = vmatpush1.bf16.msra.mxu0 0
  %462 = vmatprep.subr.bf16.mxu0 0
  %463 = vmatpush1.bf16.msra.mxu0 0
  %464 = vmatprep.subr.bf16.mxu0 0
  %465 = vmatpush1.bf16.msra.mxu0 0
  %466 = vmatprep.mubr.bf16.mxu0 0
  %467 = vmatmul.mubr.bf16.gmra.mrb[0].mxu0 %v145
  %v468 = vpop.f32.mrb[0].mxu0
  %v469 = vadd.f32 %v104, %v468
  %v470 = vpop.f32.mrb[0].mxu0
  %v471 = vadd.f32 %v108, %v470
  %v472 = vpop.f32.mrb[0].mxu0
  %v473 = vadd.f32 %v104, %v472
  %v474 = vpop.f32.mrb[0].mxu0
  %v475 = vadd.f32 %v108, %v474
  %476 = vmatprep.mubr.bf16.mxu0 0
  %477 = vmatmul.mubr.bf16.gmra.mrb[0].mxu0 %v146
  %v478 = vpop.f32.mrb[0].mxu0
  %v479 = vadd.f32 %v104, %v478
  %v480 = vpop.f32.mrb[0].mxu0
  %v481 = vadd.f32 %v108, %v480
  %v482 = vpop.f32.mrb[0].mxu0
  %v483 = vadd.f32 %v104, %v482
  %v484 = vpop.f32.mrb[0].mxu0
  %v485 = vadd.f32 %v108, %v484
  %486 = vmatprep.mubr.bf16.mxu0 0
  %487 = vmatmul.mubr.bf16.gmra.mrb[0].mxu0 %v147
  %v488 = vpop.f32.mrb[0].mxu0
  %v489 = vadd.f32 %v104, %v488
  %v490 = vpop.f32.mrb[0].mxu0
  %v491 = vadd.f32 %v108, %v490
  %v492 = vpop.f32.mrb[0].mxu0
  %v493 = vadd.f32 %v104, %v492
  %v494 = vpop.f32.mrb[0].mxu0
  %v495 = vadd.f32 %v108, %v494
  %496 = vmatprep.mubr.bf16.mxu0 0
  %497 = vmatmul.mubr.bf16.gmra.mrb[0].mxu0 %v148
  %v498 = vpop.f32.mrb[0].mxu0
  %v499 = vadd.f32 %v104, %v498
  %v500 = vpop.f32.mrb[0].mxu0
  %v501 = vadd.f32 %v108, %v500
  %v502 = vpop.f32.mrb[0].mxu0
  %v503 = vadd.f32 %v104, %v502
  %v504 = vpop.f32.mrb[0].mxu0
  %v505 = vadd.f32 %v108, %v504
  %506 = vmatprep.mubr.bf16.mxu0 0
  %507 = vmatmul.mubr.bf16.gmra.mrb[0].mxu0 %v149
  %v508 = vpop.f32.mrb[0].mxu0
  %v509 = vadd.f32 %v104, %v508
  %v510 = vpop.f32.mrb[0].mxu0
  %v511 = vadd.f32 %v108, %v510
  %v512 = vpop.f32.mrb[0].mxu0
  %v513 = vadd.f32 %v104, %v512
  %v514 = vpop.f32.mrb[0].mxu0
  %v515 = vadd.f32 %v108, %v514
  %516 = vmatprep.mubr.bf16.mxu0 0
  %517 = vmatmul.mubr.bf16.gmra.mrb[0].mxu0 %v150
  %v518 = vpop.f32.mrb[0].mxu0
  %v519 = vadd.f32 %v104, %v518
  %v520 = vpop.f32.mrb[0].mxu0
  %v521 = vadd.f32 %v108, %v520
  %v522 = vpop.f32.mrb[0].mxu0
  %v523 = vadd.f32 %v104, %v522
  %v524 = vpop.f32.mrb[0].mxu0
  %v525 = vadd.f32 %v108, %v524
  %526 = vmatprep.mubr.bf16.mxu0 0
  %527 = vmatmul.mubr.bf16.gmra.mrb[0].mxu0 %v151
  %v528 = vpop.f32.mrb[0].mxu0
  %v529 = vadd.f32 %v104, %v528
  %v530 = vpop.f32.mrb[0].mxu0
  %v531 = vadd.f32 %v108, %v530
  %v532 = vpop.f32.mrb[0].mxu0
  %v533 = vadd.f32 %v104, %v532
  %v534 = vpop.f32.mrb[0].mxu0
  %v535 = vadd.f32 %v108, %v534
  %536 = vmatprep.mubr.bf16.mxu0 0
  %537 = vmatmul.mubr.bf16.gmra.mrb[0].mxu0 %v152
  %v538 = vpop.f32.mrb[0].mxu0
  %v539 = vadd.f32 %v104, %v538
  %v540 = vpop.f32.mrb[0].mxu0
  %v541 = vadd.f32 %v108, %v540
  %v542 = vpop.f32.mrb[0].mxu0
  %v543 = vadd.f32 %v104, %v542
  %v544 = vpop.f32.mrb[0].mxu0
  %v545 = vadd.f32 %v108, %v544
  %546 = vdwg.mxu0
  %v547 = vpack.c.bf16 %v360, %v356
  %v548 = vpack.c.bf16 %v362, %v358
  %v549 = vpack.c.bf16 %v473, %v469
  %v550 = vpack.c.bf16 %v475, %v471
  %v551 = vpack.c.bf16 %v370, %v366
  %v552 = vpack.c.bf16 %v372, %v368
  %v553 = vpack.c.bf16 %v483, %v479
  %v554 = vpack.c.bf16 %v485, %v481
  %v555 = vpack.c.bf16 %v380, %v376
  %v556 = vpack.c.bf16 %v382, %v378
  %v557 = vpack.c.bf16 %v493, %v489
  %v558 = vpack.c.bf16 %v495, %v491
  %v559 = vpack.c.bf16 %v390, %v386
  %v560 = vpack.c.bf16 %v392, %v388
  %v561 = vpack.c.bf16 %v503, %v499
  %v562 = vpack.c.bf16 %v505, %v501
  %v563 = vpack.c.bf16 %v400, %v396
  %v564 = vpack.c.bf16 %v402, %v398
  %v565 = vpack.c.bf16 %v513, %v509
  %v566 = vpack.c.bf16 %v515, %v511
  %v567 = vpack.c.bf16 %v410, %v406
  %v568 = vpack.c.bf16 %v412, %v408
  %v569 = vpack.c.bf16 %v523, %v519
  %v570 = vpack.c.bf16 %v525, %v521
  %v571 = vpack.c.bf16 %v420, %v416
  %v572 = vpack.c.bf16 %v422, %v418
  %v573 = vpack.c.bf16 %v533, %v529
  %v574 = vpack.c.bf16 %v535, %v531
  %v575 = vpack.c.bf16 %v430, %v426
  %v576 = vpack.c.bf16 %v432, %v428
  %v577 = vpack.c.bf16 %v543, %v539
  %v578 = vpack.c.bf16 %v545, %v541
  %579 = vst [vmem:[#allocation6] sm:$0xff] %v547
  %580 = vst [vmem:[#allocation6 + $0x8] sm:$0xff] %v548
  %581 = vst [vmem:[#allocation6 + $0x10] sm:$0xff] %v549
  %582 = vst [vmem:[#allocation6 + $0x18] sm:$0xff] %v550
  %583 = vst [vmem:[#allocation6 + $0x20] sm:$0xff] %v551
  %584 = vst [vmem:[#allocation6 + $0x28] sm:$0xff] %v552
  %585 = vst [vmem:[#allocation6 + $0x30] sm:$0xff] %v553
  %586 = vst [vmem:[#allocation6 + $0x38] sm:$0xff] %v554
  %587 = vst [vmem:[#allocation6 + $0x40] sm:$0xff] %v555
  %588 = vst [vmem:[#allocation6 + $0x48] sm:$0xff] %v556
  %589 = vst [vmem:[#allocation6 + $0x50] sm:$0xff] %v557
  %590 = vst [vmem:[#allocation6 + $0x58] sm:$0xff] %v558
  %591 = vst [vmem:[#allocation6 + $0x60] sm:$0xff] %v559
  %592 = vst [vmem:[#allocation6 + $0x68] sm:$0xff] %v560
  %593 = vst [vmem:[#allocation6 + $0x70] sm:$0xff] %v561
  %594 = vst [vmem:[#allocation6 + $0x78] sm:$0xff] %v562
  %595 = vst [vmem:[#allocation6 + $0x80] sm:$0xff] %v563
  %596 = vst [vmem:[#allocation6 + $0x88] sm:$0xff] %v564
  %597 = vst [vmem:[#allocation6 + $0x90] sm:$0xff] %v565
  %598 = vst [vmem:[#allocation6 + $0x98] sm:$0xff] %v566
  %599 = vst [vmem:[#allocation6 + $0xa0] sm:$0xff] %v567
  %600 = vst [vmem:[#allocation6 + $0xa8] sm:$0xff] %v568
  %601 = vst [vmem:[#allocation6 + $0xb0] sm:$0xff] %v569
  %602 = vst [vmem:[#allocation6 + $0xb8] sm:$0xff] %v570
  %603 = vst [vmem:[#allocation6 + $0xc0] sm:$0xff] %v571
  %604 = vst [vmem:[#allocation6 + $0xc8] sm:$0xff] %v572
  %605 = vst [vmem:[#allocation6 + $0xd0] sm:$0xff] %v573
  %606 = vst [vmem:[#allocation6 + $0xd8] sm:$0xff] %v574
  %607 = vst [vmem:[#allocation6 + $0xe0] sm:$0xff] %v575
  %608 = vst [vmem:[#allocation6 + $0xe8] sm:$0xff] %v576
  %609 = vst [vmem:[#allocation6 + $0xf0] sm:$0xff] %v577
  %610 = vst [vmem:[#allocation6 + $0xf8] sm:$0xff] %v578
  %v611 = vld [vmem:[%s6] sm:$0xf]
  %v613 = vlaneseq
  %v614 = vshrl.u32 %v613, 7
  %v615 = vsub.s32 0, %v614
  %v616 = vrot.slane %v611, %v615
  %v617 = vlaneseq
  %v618 = vshrl.u32 %v617, 7
  %v619 = vsub.s32 1, %v618
  %v620 = vrot.slane %v611, %v619
  %v621 = vlaneseq
  %v622 = vshrl.u32 %v621, 7
  %v623 = vsub.s32 2, %v622
  %v624 = vrot.slane %v611, %v623
  %v625 = vlaneseq
  %v626 = vshrl.u32 %v625, 7
  %v627 = vsub.s32 3, %v626
  %v628 = vrot.slane %v611, %v627
  %s633 = smul.u32 0, 4
  %s634 = smul.addr %s633, 8
  %s635 = scalar_lea.vmem [#allocation6], %s634
  %v636 = vld [vmem:[%s635] sm:$0xff]
  %v637 = vld [vmem:[%s635 + $0x8] sm:$0xff]
  %v638 = vld [vmem:[%s635 + $0x10] sm:$0xff]
  %v639 = vld [vmem:[%s635 + $0x18] sm:$0xff]
  %v640 = vld [vmem:[#allocation2] sm:$0xff]
  %v641 = vld [vmem:[%s2] sm:$0xff]
  %v642 = vld [vmem:[%s2 + $0x8] sm:$0xff]
  %v643 = vld [vmem:[%s2 + $0x10] sm:$0xff]
  %v644 = vld [vmem:[%s2 + $0x18] sm:$0xff]
  %v645 = vld [vmem:[%s2 + $0x20] sm:$0xff]
  %v646 = vld [vmem:[%s2 + $0x28] sm:$0xff]
  %v647 = vld [vmem:[%s2 + $0x30] sm:$0xff]
  %v648 = vld [vmem:[%s2 + $0x38] sm:$0xff]
  %v649 = vld [vmem:[%s2 + $0x40] sm:$0xff]
  %v650 = vld [vmem:[%s2 + $0x48] sm:$0xff]
  %v651 = vld [vmem:[%s2 + $0x50] sm:$0xff]
  %v652 = vld [vmem:[%s2 + $0x58] sm:$0xff]
  %v653 = vld [vmem:[%s2 + $0x60] sm:$0xff]
  %v654 = vld [vmem:[%s2 + $0x68] sm:$0xff]
  %v655 = vld [vmem:[%s2 + $0x70] sm:$0xff]
  %v656 = vld [vmem:[%s2 + $0x78] sm:$0xff]
  %v657 = vld [vmem:[%s2 + $0x80] sm:$0xff]
  %v658 = vld [vmem:[%s2 + $0x88] sm:$0xff]
  %v659 = vld [vmem:[%s2 + $0x90] sm:$0xff]
  %v660 = vld [vmem:[%s2 + $0x98] sm:$0xff]
  %v661 = vld [vmem:[%s2 + $0xa0] sm:$0xff]
  %v662 = vld [vmem:[%s2 + $0xa8] sm:$0xff]
  %v663 = vld [vmem:[%s2 + $0xb0] sm:$0xff]
  %v664 = vld [vmem:[%s2 + $0xb8] sm:$0xff]
  %v665 = vld [vmem:[%s2 + $0xc0] sm:$0xff]
  %v666 = vld [vmem:[%s2 + $0xc8] sm:$0xff]
  %v667 = vld [vmem:[%s2 + $0xd0] sm:$0xff]
  %v668 = vld [vmem:[%s2 + $0xd8] sm:$0xff]
  %v669 = vld [vmem:[%s2 + $0xe0] sm:$0xff]
  %v670 = vld [vmem:[%s2 + $0xe8] sm:$0xff]
  %v671 = vld [vmem:[%s2 + $0xf0] sm:$0xff]
  %v672 = vld [vmem:[%s2 + $0xf8] sm:$0xff]
  %v705 = vunpack.c.l.b16 %v641
  %v706 = vunpack.c.h.b16 %v641
  %v707 = vunpack.c.l.b16 %v642
  %v708 = vunpack.c.h.b16 %v642
  %v709 = vunpack.c.l.b16 %v643
  %v710 = vunpack.c.h.b16 %v643
  %v711 = vunpack.c.l.b16 %v644
  %v712 = vunpack.c.h.b16 %v644
  %v713 = vunpack.c.l.b16 %v645
  %v714 = vunpack.c.h.b16 %v645
  %v715 = vunpack.c.l.b16 %v646
  %v716 = vunpack.c.h.b16 %v646
  %v717 = vunpack.c.l.b16 %v647
  %v718 = vunpack.c.h.b16 %v647
  %v719 = vunpack.c.l.b16 %v648
  %v720 = vunpack.c.h.b16 %v648
  %v721 = vunpack.c.l.b16 %v649
  %v722 = vunpack.c.h.b16 %v649
  %v723 = vunpack.c.l.b16 %v650
  %v724 = vunpack.c.h.b16 %v650
  %v725 = vunpack.c.l.b16 %v651
  %v726 = vunpack.c.h.b16 %v651
  %v727 = vunpack.c.l.b16 %v652
  %v728 = vunpack.c.h.b16 %v652
  %v729 = vunpack.c.l.b16 %v653
  %v730 = vunpack.c.h.b16 %v653
  %v731 = vunpack.c.l.b16 %v654
  %v732 = vunpack.c.h.b16 %v654
  %v733 = vunpack.c.l.b16 %v655
  %v734 = vunpack.c.h.b16 %v655
  %v735 = vunpack.c.l.b16 %v656
  %v736 = vunpack.c.h.b16 %v656
  %v737 = vunpack.c.l.b16 %v657
  %v738 = vunpack.c.h.b16 %v657
  %v739 = vunpack.c.l.b16 %v658
  %v740 = vunpack.c.h.b16 %v658
  %v741 = vunpack.c.l.b16 %v659
  %v742 = vunpack.c.h.b16 %v659
  %v743 = vunpack.c.l.b16 %v660
  %v744 = vunpack.c.h.b16 %v660
  %v745 = vunpack.c.l.b16 %v661
  %v746 = vunpack.c.h.b16 %v661
  %v747 = vunpack.c.l.b16 %v662
  %v748 = vunpack.c.h.b16 %v662
  %v749 = vunpack.c.l.b16 %v663
  %v750 = vunpack.c.h.b16 %v663
  %v751 = vunpack.c.l.b16 %v664
  %v752 = vunpack.c.h.b16 %v664
  %v753 = vunpack.c.l.b16 %v665
  %v754 = vunpack.c.h.b16 %v665
  %v755 = vunpack.c.l.b16 %v666
  %v756 = vunpack.c.h.b16 %v666
  %v757 = vunpack.c.l.b16 %v667
  %v758 = vunpack.c.h.b16 %v667
  %v759 = vunpack.c.l.b16 %v668
  %v760 = vunpack.c.h.b16 %v668
  %v761 = vunpack.c.l.b16 %v669
  %v762 = vunpack.c.h.b16 %v669
  %v763 = vunpack.c.l.b16 %v670
  %v764 = vunpack.c.h.b16 %v670
  %v765 = vunpack.c.l.b16 %v671
  %v766 = vunpack.c.h.b16 %v671
  %v767 = vunpack.c.l.b16 %v672
  %v768 = vunpack.c.h.b16 %v672
  %v769 = vpack.c.b16 %v709, %v705
  %v770 = vpack.c.b16 %v710, %v706
  %v771 = vpack.c.b16 %v711, %v707
  %v772 = vpack.c.b16 %v712, %v708
  %v773 = vpack.c.b16 %v717, %v713
  %v774 = vpack.c.b16 %v718, %v714
  %v775 = vpack.c.b16 %v719, %v715
  %v776 = vpack.c.b16 %v720, %v716
  %v777 = vpack.c.b16 %v725, %v721
  %v778 = vpack.c.b16 %v726, %v722
  %v779 = vpack.c.b16 %v727, %v723
  %v780 = vpack.c.b16 %v728, %v724
  %v781 = vpack.c.b16 %v733, %v729
  %v782 = vpack.c.b16 %v734, %v730
  %v783 = vpack.c.b16 %v735, %v731
  %v784 = vpack.c.b16 %v736, %v732
  %v785 = vpack.c.b16 %v741, %v737
  %v786 = vpack.c.b16 %v742, %v738
  %v787 = vpack.c.b16 %v743, %v739
  %v788 = vpack.c.b16 %v744, %v740
  %v789 = vpack.c.b16 %v749, %v745
  %v790 = vpack.c.b16 %v750, %v746
  %v791 = vpack.c.b16 %v751, %v747
  %v792 = vpack.c.b16 %v752, %v748
  %v793 = vpack.c.b16 %v757, %v753
  %v794 = vpack.c.b16 %v758, %v754
  %v795 = vpack.c.b16 %v759, %v755
  %v796 = vpack.c.b16 %v760, %v756
  %v797 = vpack.c.b16 %v765, %v761
  %v798 = vpack.c.b16 %v766, %v762
  %v799 = vpack.c.b16 %v767, %v763
  %v800 = vpack.c.b16 %v768, %v764
  %833 = vmatprep.subr.bf16.mxu0 %v770
  %834 = vmatpush1.bf16.msra.mxu0 %v769
  %835 = vmatprep.subr.bf16.mxu0 %v774
  %836 = vmatpush1.bf16.msra.mxu0 %v773
  %837 = vmatprep.subr.bf16.mxu0 %v778
  %838 = vmatpush1.bf16.msra.mxu0 %v777
  %839 = vmatprep.subr.bf16.mxu0 %v782
  %840 = vmatpush1.bf16.msra.mxu0 %v781
  %841 = vmatprep.subr.bf16.mxu0 %v786
  %842 = vmatpush1.bf16.msra.mxu0 %v785
  %843 = vmatprep.subr.bf16.mxu0 %v790
  %844 = vmatpush1.bf16.msra.mxu0 %v789
  %845 = vmatprep.subr.bf16.mxu0 %v794
  %846 = vmatpush1.bf16.msra.mxu0 %v793
  %847 = vmatprep.subr.bf16.mxu0 %v798
  %848 = vmatpush1.bf16.msra.mxu0 %v797
  %849 = vmatprep.subr.bf16.mxu0 0
  %850 = vmatpush1.bf16.msra.mxu0 0
  %851 = vmatprep.subr.bf16.mxu0 0
  %852 = vmatpush1.bf16.msra.mxu0 0
  %853 = vmatprep.subr.bf16.mxu0 0
  %854 = vmatpush1.bf16.msra.mxu0 0
  %855 = vmatprep.subr.bf16.mxu0 0
  %856 = vmatpush1.bf16.msra.mxu0 0
  %857 = vmatprep.subr.bf16.mxu0 0
  %858 = vmatpush1.bf16.msra.mxu0 0
  %859 = vmatprep.subr.bf16.mxu0 0
  %860 = vmatpush1.bf16.msra.mxu0 0
  %861 = vmatprep.subr.bf16.mxu0 0
  %862 = vmatpush1.bf16.msra.mxu0 0
  %863 = vmatprep.subr.bf16.mxu0 0
  %864 = vmatpush1.bf16.msra.mxu0 0
  %865 = vmatprep.mubr.bf16.mxu0 0
  %866 = vmatmul.mubr.bf16.gmra.mrb[0].mxu0 %v640
  %v867 = vpop.f32.mrb[0].mxu0
  %v868 = vadd.f32 0.0, %v867
  %v869 = vpop.f32.mrb[0].mxu0
  %v870 = vadd.f32 0.0, %v869
  %v871 = vpop.f32.mrb[0].mxu0
  %v872 = vadd.f32 0.0, %v871
  %v873 = vpop.f32.mrb[0].mxu0
  %v874 = vadd.f32 0.0, %v873
  %875 = vdwg.mxu0
  %876 = vmatprep.subr.bf16.mxu0 %v772
  %877 = vmatpush1.bf16.msra.mxu0 %v771
  %878 = vmatprep.subr.bf16.mxu0 %v776
  %879 = vmatpush1.bf16.msra.mxu0 %v775
  %880 = vmatprep.subr.bf16.mxu0 %v780
  %881 = vmatpush1.bf16.msra.mxu0 %v779
  %882 = vmatprep.subr.bf16.mxu0 %v784
  %883 = vmatpush1.bf16.msra.mxu0 %v783
  %884 = vmatprep.subr.bf16.mxu0 %v788
  %885 = vmatpush1.bf16.msra.mxu0 %v787
  %886 = vmatprep.subr.bf16.mxu0 %v792
  %887 = vmatpush1.bf16.msra.mxu0 %v791
  %888 = vmatprep.subr.bf16.mxu0 %v796
  %889 = vmatpush1.bf16.msra.mxu0 %v795
  %890 = vmatprep.subr.bf16.mxu0 %v800
  %891 = vmatpush1.bf16.msra.mxu0 %v799
  %892 = vmatprep.subr.bf16.mxu0 0
  %893 = vmatpush1.bf16.msra.mxu0 0
  %894 = vmatprep.subr.bf16.mxu0 0
  %895 = vmatpush1.bf16.msra.mxu0 0
  %896 = vmatprep.subr.bf16.mxu0 0
  %897 = vmatpush1.bf16.msra.mxu0 0
  %898 = vmatprep.subr.bf16.mxu0 0
  %899 = vmatpush1.bf16.msra.mxu0 0
  %900 = vmatprep.subr.bf16.mxu0 0
  %901 = vmatpush1.bf16.msra.mxu0 0
  %902 = vmatprep.subr.bf16.mxu0 0
  %903 = vmatpush1.bf16.msra.mxu0 0
  %904 = vmatprep.subr.bf16.mxu0 0
  %905 = vmatpush1.bf16.msra.mxu0 0
  %906 = vmatprep.subr.bf16.mxu0 0
  %907 = vmatpush1.bf16.msra.mxu0 0
  %908 = vmatprep.mubr.bf16.mxu0 0
  %909 = vmatmul.mubr.bf16.gmra.mrb[0].mxu0 %v640
  %v910 = vpop.f32.mrb[0].mxu0
  %v911 = vadd.f32 0.0, %v910
  %v912 = vpop.f32.mrb[0].mxu0
  %v913 = vadd.f32 0.0, %v912
  %v914 = vpop.f32.mrb[0].mxu0
  %v915 = vadd.f32 0.0, %v914
  %v916 = vpop.f32.mrb[0].mxu0
  %v917 = vadd.f32 0.0, %v916
  %918 = vdwg.mxu0
  %v919 = vunpack.c.l.bf16 %v636
  %v920 = vunpack.c.l.bf16 %v637
  %v921 = vunpack.c.l.bf16 %v638
  %v922 = vunpack.c.l.bf16 %v639
  %v923 = vunpack.c.h.bf16 %v636
  %v924 = vunpack.c.h.bf16 %v637
  %v925 = vunpack.c.h.bf16 %v638
  %v926 = vunpack.c.h.bf16 %v639
  %v927 = vadd.f32 %v919, %v868
  %v928 = vadd.f32 %v920, %v870
  %v929 = vadd.f32 %v921, %v911
  %v930 = vadd.f32 %v922, %v913
  %v931 = vadd.f32 %v923, %v872
  %v932 = vadd.f32 %v924, %v874
  %v933 = vadd.f32 %v925, %v915
  %v934 = vadd.f32 %v926, %v917
  %v935 = vld [vmem:[#allocation3] sm:$0xff]
  %v936 = vld [vmem:[#allocation3 + $0x8] sm:$0xff]
  %v937 = vxor.u32 %v927, 2147483648
  %v938 = vxor.u32 %v928, 2147483648
  %v939 = vxor.u32 %v929, 2147483648
  %v940 = vxor.u32 %v931, 2147483648
  %v941 = vxor.u32 %v932, 2147483648
  %v942 = vxor.u32 %v933, 2147483648
  %v943 = vmul.f32 %v937, 1.442695
  %v944 = vpow.pop %v943
  %v945 = vmul.f32 %v938, 1.442695
  %v946 = vpow.pop %v945
  %v947 = vmul.f32 %v939, 1.442695
  %v948 = vpow.pop %v947
  %v949 = vmul.f32 %v940, 1.442695
  %v950 = vpow.pop %v949
  %v951 = vmul.f32 %v941, 1.442695
  %v952 = vpow.pop %v951
  %v953 = vmul.f32 %v942, 1.442695
  %v954 = vpow.pop %v953
  %v955 = vadd.f32 %v944, 1.0
  %v956 = vadd.f32 %v946, 1.0
  %v957 = vadd.f32 %v948, 1.0
  %v958 = vadd.f32 %v950, 1.0
  %v959 = vadd.f32 %v952, 1.0
  %v960 = vadd.f32 %v954, 1.0
  %v961 = vrcp.pop %v955
  %v962 = vmul.f32 1.0, %v961
  %v963 = vrcp.pop %v956
  %v964 = vmul.f32 1.0, %v963
  %v965 = vrcp.pop %v957
  %v966 = vmul.f32 1.0, %v965
  %v967 = vrcp.pop %v958
  %v968 = vmul.f32 1.0, %v967
  %v969 = vrcp.pop %v959
  %v970 = vmul.f32 1.0, %v969
  %v971 = vrcp.pop %v960
  %v972 = vmul.f32 1.0, %v971
  %v973 = vtanh.pop %v930
  %v974 = vtanh.pop %v934
  %v975 = vmul.f32 %v964, %v935
  %v976 = vmul.f32 %v970, %v936
  %v977 = vmul.f32 %v962, %v973
  %v978 = vmul.f32 %v968, %v974
  %v979 = vadd.f32 %v975, %v977
  %v980 = vadd.f32 %v976, %v978
  %v981 = vtanh.pop %v979
  %v982 = vtanh.pop %v980
  %v983 = vmul.f32 %v966, %v981
  %v984 = vmul.f32 %v972, %v982
  %v985 = vpack.c.bf16 %v984, %v983
  %986 = vst [vmem:[#allocation2] sm:$0xff] %v985
  %987 = vst [vmem:[#allocation3] sm:$0xff] %v979
  %988 = vst [vmem:[#allocation3 + $0x8] sm:$0xff] %v980
  %v989 = vld [vmem:[#allocation4] sm:$0xff]
  %v990 = vld [vmem:[%s5] sm:$0xff]
  %v991 = vld [vmem:[%s5 + $0x8] sm:$0xff]
  %v992 = vld [vmem:[%s5 + $0x10] sm:$0xff]
  %v993 = vld [vmem:[%s5 + $0x18] sm:$0xff]
  %v994 = vld [vmem:[%s5 + $0x20] sm:$0xff]
  %v995 = vld [vmem:[%s5 + $0x28] sm:$0xff]
  %v996 = vld [vmem:[%s5 + $0x30] sm:$0xff]
  %v997 = vld [vmem:[%s5 + $0x38] sm:$0xff]
  %v998 = vld [vmem:[%s5 + $0x40] sm:$0xff]
  %v999 = vld [vmem:[%s5 + $0x48] sm:$0xff]
  %v1000 = vld [vmem:[%s5 + $0x50] sm:$0xff]
  %v1001 = vld [vmem:[%s5 + $0x58] sm:$0xff]
  %v1002 = vld [vmem:[%s5 + $0x60] sm:$0xff]
  %v1003 = vld [vmem:[%s5 + $0x68] sm:$0xff]
  %v1004 = vld [vmem:[%s5 + $0x70] sm:$0xff]
  %v1005 = vld [vmem:[%s5 + $0x78] sm:$0xff]
  %v1006 = vld [vmem:[%s5 + $0x80] sm:$0xff]
  %v1007 = vld [vmem:[%s5 + $0x88] sm:$0xff]
  %v1008 = vld [vmem:[%s5 + $0x90] sm:$0xff]
  %v1009 = vld [vmem:[%s5 + $0x98] sm:$0xff]
  %v1010 = vld [vmem:[%s5 + $0xa0] sm:$0xff]
  %v1011 = vld [vmem:[%s5 + $0xa8] sm:$0xff]
  %v1012 = vld [vmem:[%s5 + $0xb0] sm:$0xff]
  %v1013 = vld [vmem:[%s5 + $0xb8] sm:$0xff]
  %v1014 = vld [vmem:[%s5 + $0xc0] sm:$0xff]
  %v1015 = vld [vmem:[%s5 + $0xc8] sm:$0xff]
  %v1016 = vld [vmem:[%s5 + $0xd0] sm:$0xff]
  %v1017 = vld [vmem:[%s5 + $0xd8] sm:$0xff]
  %v1018 = vld [vmem:[%s5 + $0xe0] sm:$0xff]
  %v1019 = vld [vmem:[%s5 + $0xe8] sm:$0xff]
  %v1020 = vld [vmem:[%s5 + $0xf0] sm:$0xff]
  %v1021 = vld [vmem:[%s5 + $0xf8] sm:$0xff]
  %v1022 = vld [vmem:[%s4] sm:$0xff]
  %v1023 = vld [vmem:[%s4 + $0x8] sm:$0xff]
  %v1024 = vld [vmem:[%s4 + $0x10] sm:$0xff]
  %v1025 = vld [vmem:[%s4 + $0x18] sm:$0xff]
  %v1026 = vld [vmem:[%s4 + $0x20] sm:$0xff]
  %v1027 = vld [vmem:[%s4 + $0x28] sm:$0xff]
  %v1028 = vld [vmem:[%s4 + $0x30] sm:$0xff]
  %v1029 = vld [vmem:[%s4 + $0x38] sm:$0xff]
  %v1030 = vld [vmem:[%s4 + $0x40] sm:$0xff]
  %v1031 = vld [vmem:[%s4 + $0x48] sm:$0xff]
  %v1032 = vld [vmem:[%s4 + $0x50] sm:$0xff]
  %v1033 = vld [vmem:[%s4 + $0x58] sm:$0xff]
  %v1034 = vld [vmem:[%s4 + $0x60] sm:$0xff]
  %v1035 = vld [vmem:[%s4 + $0x68] sm:$0xff]
  %v1036 = vld [vmem:[%s4 + $0x70] sm:$0xff]
  %v1037 = vld [vmem:[%s4 + $0x78] sm:$0xff]
  %v1038 = vld [vmem:[%s4 + $0x80] sm:$0xff]
  %v1039 = vld [vmem:[%s4 + $0x88] sm:$0xff]
  %v1040 = vld [vmem:[%s4 + $0x90] sm:$0xff]
  %v1041 = vld [vmem:[%s4 + $0x98] sm:$0xff]
  %v1042 = vld [vmem:[%s4 + $0xa0] sm:$0xff]
  %v1043 = vld [vmem:[%s4 + $0xa8] sm:$0xff]
  %v1044 = vld [vmem:[%s4 + $0xb0] sm:$0xff]
  %v1045 = vld [vmem:[%s4 + $0xb8] sm:$0xff]
  %v1046 = vld [vmem:[%s4 + $0xc0] sm:$0xff]
  %v1047 = vld [vmem:[%s4 + $0xc8] sm:$0xff]
  %v1048 = vld [vmem:[%s4 + $0xd0] sm:$0xff]
  %v1049 = vld [vmem:[%s4 + $0xd8] sm:$0xff]
  %v1050 = vld [vmem:[%s4 + $0xe0] sm:$0xff]
  %v1051 = vld [vmem:[%s4 + $0xe8] sm:$0xff]
  %v1052 = vld [vmem:[%s4 + $0xf0] sm:$0xff]
  %v1053 = vld [vmem:[%s4 + $0xf8] sm:$0xff]
  %v1086 = vunpack.c.l.b16 %v1022
  %v1087 = vunpack.c.h.b16 %v1022
  %v1088 = vunpack.c.l.b16 %v1023
  %v1089 = vunpack.c.h.b16 %v1023
  %v1090 = vunpack.c.l.b16 %v1024
  %v1091 = vunpack.c.h.b16 %v1024
  %v1092 = vunpack.c.l.b16 %v1025
  %v1093 = vunpack.c.h.b16 %v1025
  %v1094 = vunpack.c.l.b16 %v1026
  %v1095 = vunpack.c.h.b16 %v1026
  %v1096 = vunpack.c.l.b16 %v1027
  %v1097 = vunpack.c.h.b16 %v1027
  %v1098 = vunpack.c.l.b16 %v1028
  %v1099 = vunpack.c.h.b16 %v1028
  %v1100 = vunpack.c.l.b16 %v1029
  %v1101 = vunpack.c.h.b16 %v1029
  %v1102 = vunpack.c.l.b16 %v1030
  %v1103 = vunpack.c.h.b16 %v1030
  %v1104 = vunpack.c.l.b16 %v1031
  %v1105 = vunpack.c.h.b16 %v1031
  %v1106 = vunpack.c.l.b16 %v1032
  %v1107 = vunpack.c.h.b16 %v1032
  %v1108 = vunpack.c.l.b16 %v1033
  %v1109 = vunpack.c.h.b16 %v1033
  %v1110 = vunpack.c.l.b16 %v1034
  %v1111 = vunpack.c.h.b16 %v1034
  %v1112 = vunpack.c.l.b16 %v1035
  %v1113 = vunpack.c.h.b16 %v1035
  %v1114 = vunpack.c.l.b16 %v1036
  %v1115 = vunpack.c.h.b16 %v1036
  %v1116 = vunpack.c.l.b16 %v1037
  %v1117 = vunpack.c.h.b16 %v1037
  %v1118 = vunpack.c.l.b16 %v1038
  %v1119 = vunpack.c.h.b16 %v1038
  %v1120 = vunpack.c.l.b16 %v1039
  %v1121 = vunpack.c.h.b16 %v1039
  %v1122 = vunpack.c.l.b16 %v1040
  %v1123 = vunpack.c.h.b16 %v1040
  %v1124 = vunpack.c.l.b16 %v1041
  %v1125 = vunpack.c.h.b16 %v1041
  %v1126 = vunpack.c.l.b16 %v1042
  %v1127 = vunpack.c.h.b16 %v1042
  %v1128 = vunpack.c.l.b16 %v1043
  %v1129 = vunpack.c.h.b16 %v1043
  %v1130 = vunpack.c.l.b16 %v1044
  %v1131 = vunpack.c.h.b16 %v1044
  %v1132 = vunpack.c.l.b16 %v1045
  %v1133 = vunpack.c.h.b16 %v1045
  %v1134 = vunpack.c.l.b16 %v1046
  %v1135 = vunpack.c.h.b16 %v1046
  %v1136 = vunpack.c.l.b16 %v1047
  %v1137 = vunpack.c.h.b16 %v1047
  %v1138 = vunpack.c.l.b16 %v1048
  %v1139 = vunpack.c.h.b16 %v1048
  %v1140 = vunpack.c.l.b16 %v1049
  %v1141 = vunpack.c.h.b16 %v1049
  %v1142 = vunpack.c.l.b16 %v1050
  %v1143 = vunpack.c.h.b16 %v1050
  %v1144 = vunpack.c.l.b16 %v1051
  %v1145 = vunpack.c.h.b16 %v1051
  %v1146 = vunpack.c.l.b16 %v1052
  %v1147 = vunpack.c.h.b16 %v1052
  %v1148 = vunpack.c.l.b16 %v1053
  %v1149 = vunpack.c.h.b16 %v1053
  %v1150 = vpack.c.b16 %v1090, %v1086
  %v1151 = vpack.c.b16 %v1091, %v1087
  %v1152 = vpack.c.b16 %v1092, %v1088
  %v1153 = vpack.c.b16 %v1093, %v1089
  %v1154 = vpack.c.b16 %v1098, %v1094
  %v1155 = vpack.c.b16 %v1099, %v1095
  %v1156 = vpack.c.b16 %v1100, %v1096
  %v1157 = vpack.c.b16 %v1101, %v1097
  %v1158 = vpack.c.b16 %v1106, %v1102
  %v1159 = vpack.c.b16 %v1107, %v1103
  %v1160 = vpack.c.b16 %v1108, %v1104
  %v1161 = vpack.c.b16 %v1109, %v1105
  %v1162 = vpack.c.b16 %v1114, %v1110
  %v1163 = vpack.c.b16 %v1115, %v1111
  %v1164 = vpack.c.b16 %v1116, %v1112
  %v1165 = vpack.c.b16 %v1117, %v1113
  %v1166 = vpack.c.b16 %v1122, %v1118
  %v1167 = vpack.c.b16 %v1123, %v1119
  %v1168 = vpack.c.b16 %v1124, %v1120
  %v1169 = vpack.c.b16 %v1125, %v1121
  %v1170 = vpack.c.b16 %v1130, %v1126
  %v1171 = vpack.c.b16 %v1131, %v1127
  %v1172 = vpack.c.b16 %v1132, %v1128
  %v1173 = vpack.c.b16 %v1133, %v1129
  %v1174 = vpack.c.b16 %v1138, %v1134
  %v1175 = vpack.c.b16 %v1139, %v1135
  %v1176 = vpack.c.b16 %v1140, %v1136
  %v1177 = vpack.c.b16 %v1141, %v1137
  %v1178 = vpack.c.b16 %v1146, %v1142
  %v1179 = vpack.c.b16 %v1147, %v1143
  %v1180 = vpack.c.b16 %v1148, %v1144
  %v1181 = vpack.c.b16 %v1149, %v1145
  %1214 = vmatprep.subr.bf16.mxu0 %v1151
  %1215 = vmatpush1.bf16.msra.mxu0 %v1150
  %1216 = vmatprep.subr.bf16.mxu0 %v1155
  %1217 = vmatpush1.bf16.msra.mxu0 %v1154
  %1218 = vmatprep.subr.bf16.mxu0 %v1159
  %1219 = vmatpush1.bf16.msra.mxu0 %v1158
  %1220 = vmatprep.subr.bf16.mxu0 %v1163
  %1221 = vmatpush1.bf16.msra.mxu0 %v1162
  %1222 = vmatprep.subr.bf16.mxu0 %v1167
  %1223 = vmatpush1.bf16.msra.mxu0 %v1166
  %1224 = vmatprep.subr.bf16.mxu0 %v1171
  %1225 = vmatpush1.bf16.msra.mxu0 %v1170
  %1226 = vmatprep.subr.bf16.mxu0 %v1175
  %1227 = vmatpush1.bf16.msra.mxu0 %v1174
  %1228 = vmatprep.subr.bf16.mxu0 %v1179
  %1229 = vmatpush1.bf16.msra.mxu0 %v1178
  %1230 = vmatprep.subr.bf16.mxu0 0
  %1231 = vmatpush1.bf16.msra.mxu0 0
  %1232 = vmatprep.subr.bf16.mxu0 0
  %1233 = vmatpush1.bf16.msra.mxu0 0
  %1234 = vmatprep.subr.bf16.mxu0 0
  %1235 = vmatpush1.bf16.msra.mxu0 0
  %1236 = vmatprep.subr.bf16.mxu0 0
  %1237 = vmatpush1.bf16.msra.mxu0 0
  %1238 = vmatprep.subr.bf16.mxu0 0
  %1239 = vmatpush1.bf16.msra.mxu0 0
  %1240 = vmatprep.subr.bf16.mxu0 0
  %1241 = vmatpush1.bf16.msra.mxu0 0
  %1242 = vmatprep.subr.bf16.mxu0 0
  %1243 = vmatpush1.bf16.msra.mxu0 0
  %1244 = vmatprep.subr.bf16.mxu0 0
  %1245 = vmatpush1.bf16.msra.mxu0 0
  %1246 = vmatprep.mubr.bf16.mxu0 0
  %1247 = vmatmul.mubr.bf16.gmra.mrb[0].mxu0 %v985
  %v1248 = vpop.f32.mrb[0].mxu0
  %v1249 = vadd.f32 0.0, %v1248
  %v1250 = vpop.f32.mrb[0].mxu0
  %v1251 = vadd.f32 0.0, %v1250
  %v1252 = vpop.f32.mrb[0].mxu0
  %v1253 = vadd.f32 0.0, %v1252
  %v1254 = vpop.f32.mrb[0].mxu0
  %v1255 = vadd.f32 0.0, %v1254
  %1256 = vdwg.mxu0
  %1257 = vmatprep.subr.bf16.mxu0 %v1153
  %1258 = vmatpush1.bf16.msra.mxu0 %v1152
  %1259 = vmatprep.subr.bf16.mxu0 %v1157
  %1260 = vmatpush1.bf16.msra.mxu0 %v1156
  %1261 = vmatprep.subr.bf16.mxu0 %v1161
  %1262 = vmatpush1.bf16.msra.mxu0 %v1160
  %1263 = vmatprep.subr.bf16.mxu0 %v1165
  %1264 = vmatpush1.bf16.msra.mxu0 %v1164
  %1265 = vmatprep.subr.bf16.mxu0 %v1169
  %1266 = vmatpush1.bf16.msra.mxu0 %v1168
  %1267 = vmatprep.subr.bf16.mxu0 %v1173
  %1268 = vmatpush1.bf16.msra.mxu0 %v1172
  %1269 = vmatprep.subr.bf16.mxu0 %v1177
  %1270 = vmatpush1.bf16.msra.mxu0 %v1176
  %1271 = vmatprep.subr.bf16.mxu0 %v1181
  %1272 = vmatpush1.bf16.msra.mxu0 %v1180
  %1273 = vmatprep.subr.bf16.mxu0 0
  %1274 = vmatpush1.bf16.msra.mxu0 0
  %1275 = vmatprep.subr.bf16.mxu0 0
  %1276 = vmatpush1.bf16.msra.mxu0 0
  %1277 = vmatprep.subr.bf16.mxu0 0
  %1278 = vmatpush1.bf16.msra.mxu0 0
  %1279 = vmatprep.subr.bf16.mxu0 0
  %1280 = vmatpush1.bf16.msra.mxu0 0
  %1281 = vmatprep.subr.bf16.mxu0 0
  %1282 = vmatpush1.bf16.msra.mxu0 0
  %1283 = vmatprep.subr.bf16.mxu0 0
  %1284 = vmatpush1.bf16.msra.mxu0 0
  %1285 = vmatprep.subr.bf16.mxu0 0
  %1286 = vmatpush1.bf16.msra.mxu0 0
  %1287 = vmatprep.subr.bf16.mxu0 0
  %1288 = vmatpush1.bf16.msra.mxu0 0
  %1289 = vmatprep.mubr.bf16.mxu0 0
  %1290 = vmatmul.mubr.bf16.gmra.mrb[0].mxu0 %v985
  %v1291 = vpop.f32.mrb[0].mxu0
  %v1292 = vadd.f32 0.0, %v1291
  %v1293 = vpop.f32.mrb[0].mxu0
  %v1294 = vadd.f32 0.0, %v1293
  %v1295 = vpop.f32.mrb[0].mxu0
  %v1296 = vadd.f32 0.0, %v1295
  %v1297 = vpop.f32.mrb[0].mxu0
  %v1298 = vadd.f32 0.0, %v1297
  %1299 = vdwg.mxu0
  %v1332 = vunpack.c.l.b16 %v990
  %v1333 = vunpack.c.h.b16 %v990
  %v1334 = vunpack.c.l.b16 %v991
  %v1335 = vunpack.c.h.b16 %v991
  %v1336 = vunpack.c.l.b16 %v992
  %v1337 = vunpack.c.h.b16 %v992
  %v1338 = vunpack.c.l.b16 %v993
  %v1339 = vunpack.c.h.b16 %v993
  %v1340 = vunpack.c.l.b16 %v994
  %v1341 = vunpack.c.h.b16 %v994
  %v1342 = vunpack.c.l.b16 %v995
  %v1343 = vunpack.c.h.b16 %v995
  %v1344 = vunpack.c.l.b16 %v996
  %v1345 = vunpack.c.h.b16 %v996
  %v1346 = vunpack.c.l.b16 %v997
  %v1347 = vunpack.c.h.b16 %v997
  %v1348 = vunpack.c.l.b16 %v998
  %v1349 = vunpack.c.h.b16 %v998
  %v1350 = vunpack.c.l.b16 %v999
  %v1351 = vunpack.c.h.b16 %v999
  %v1352 = vunpack.c.l.b16 %v1000
  %v1353 = vunpack.c.h.b16 %v1000
  %v1354 = vunpack.c.l.b16 %v1001
  %v1355 = vunpack.c.h.b16 %v1001
  %v1356 = vunpack.c.l.b16 %v1002
  %v1357 = vunpack.c.h.b16 %v1002
  %v1358 = vunpack.c.l.b16 %v1003
  %v1359 = vunpack.c.h.b16 %v1003
  %v1360 = vunpack.c.l.b16 %v1004
  %v1361 = vunpack.c.h.b16 %v1004
  %v1362 = vunpack.c.l.b16 %v1005
  %v1363 = vunpack.c.h.b16 %v1005
  %v1364 = vunpack.c.l.b16 %v1006
  %v1365 = vunpack.c.h.b16 %v1006
  %v1366 = vunpack.c.l.b16 %v1007
  %v1367 = vunpack.c.h.b16 %v1007
  %v1368 = vunpack.c.l.b16 %v1008
  %v1369 = vunpack.c.h.b16 %v1008
  %v1370 = vunpack.c.l.b16 %v1009
  %v1371 = vunpack.c.h.b16 %v1009
  %v1372 = vunpack.c.l.b16 %v1010
  %v1373 = vunpack.c.h.b16 %v1010
  %v1374 = vunpack.c.l.b16 %v1011
  %v1375 = vunpack.c.h.b16 %v1011
  %v1376 = vunpack.c.l.b16 %v1012
  %v1377 = vunpack.c.h.b16 %v1012
  %v1378 = vunpack.c.l.b16 %v1013
  %v1379 = vunpack.c.h.b16 %v1013
  %v1380 = vunpack.c.l.b16 %v1014
  %v1381 = vunpack.c.h.b16 %v1014
  %v1382 = vunpack.c.l.b16 %v1015
  %v1383 = vunpack.c.h.b16 %v1015
  %v1384 = vunpack.c.l.b16 %v1016
  %v1385 = vunpack.c.h.b16 %v1016
  %v1386 = vunpack.c.l.b16 %v1017
  %v1387 = vunpack.c.h.b16 %v1017
  %v1388 = vunpack.c.l.b16 %v1018
  %v1389 = vunpack.c.h.b16 %v1018
  %v1390 = vunpack.c.l.b16 %v1019
  %v1391 = vunpack.c.h.b16 %v1019
  %v1392 = vunpack.c.l.b16 %v1020
  %v1393 = vunpack.c.h.b16 %v1020
  %v1394 = vunpack.c.l.b16 %v1021
  %v1395 = vunpack.c.h.b16 %v1021
  %v1396 = vpack.c.b16 %v1336, %v1332
  %v1397 = vpack.c.b16 %v1337, %v1333
  %v1398 = vpack.c.b16 %v1338, %v1334
  %v1399 = vpack.c.b16 %v1339, %v1335
  %v1400 = vpack.c.b16 %v1344, %v1340
  %v1401 = vpack.c.b16 %v1345, %v1341
  %v1402 = vpack.c.b16 %v1346, %v1342
  %v1403 = vpack.c.b16 %v1347, %v1343
  %v1404 = vpack.c.b16 %v1352, %v1348
  %v1405 = vpack.c.b16 %v1353, %v1349
  %v1406 = vpack.c.b16 %v1354, %v1350
  %v1407 = vpack.c.b16 %v1355, %v1351
  %v1408 = vpack.c.b16 %v1360, %v1356
  %v1409 = vpack.c.b16 %v1361, %v1357
  %v1410 = vpack.c.b16 %v1362, %v1358
  %v1411 = vpack.c.b16 %v1363, %v1359
  %v1412 = vpack.c.b16 %v1368, %v1364
  %v1413 = vpack.c.b16 %v1369, %v1365
  %v1414 = vpack.c.b16 %v1370, %v1366
  %v1415 = vpack.c.b16 %v1371, %v1367
  %v1416 = vpack.c.b16 %v1376, %v1372
  %v1417 = vpack.c.b16 %v1377, %v1373
  %v1418 = vpack.c.b16 %v1378, %v1374
  %v1419 = vpack.c.b16 %v1379, %v1375
  %v1420 = vpack.c.b16 %v1384, %v1380
  %v1421 = vpack.c.b16 %v1385, %v1381
  %v1422 = vpack.c.b16 %v1386, %v1382
  %v1423 = vpack.c.b16 %v1387, %v1383
  %v1424 = vpack.c.b16 %v1392, %v1388
  %v1425 = vpack.c.b16 %v1393, %v1389
  %v1426 = vpack.c.b16 %v1394, %v1390
  %v1427 = vpack.c.b16 %v1395, %v1391
  %1460 = vmatprep.subr.bf16.mxu0 %v1397
  %1461 = vmatpush1.bf16.msra.mxu0 %v1396
  %1462 = vmatprep.subr.bf16.mxu0 %v1401
  %1463 = vmatpush1.bf16.msra.mxu0 %v1400
  %1464 = vmatprep.subr.bf16.mxu0 %v1405
  %1465 = vmatpush1.bf16.msra.mxu0 %v1404
  %1466 = vmatprep.subr.bf16.mxu0 %v1409
  %1467 = vmatpush1.bf16.msra.mxu0 %v1408
  %1468 = vmatprep.subr.bf16.mxu0 %v1413
  %1469 = vmatpush1.bf16.msra.mxu0 %v1412
  %1470 = vmatprep.subr.bf16.mxu0 %v1417
  %1471 = vmatpush1.bf16.msra.mxu0 %v1416
  %1472 = vmatprep.subr.bf16.mxu0 %v1421
  %1473 = vmatpush1.bf16.msra.mxu0 %v1420
  %1474 = vmatprep.subr.bf16.mxu0 %v1425
  %1475 = vmatpush1.bf16.msra.mxu0 %v1424
  %1476 = vmatprep.subr.bf16.mxu0 0
  %1477 = vmatpush1.bf16.msra.mxu0 0
  %1478 = vmatprep.subr.bf16.mxu0 0
  %1479 = vmatpush1.bf16.msra.mxu0 0
  %1480 = vmatprep.subr.bf16.mxu0 0
  %1481 = vmatpush1.bf16.msra.mxu0 0
  %1482 = vmatprep.subr.bf16.mxu0 0
  %1483 = vmatpush1.bf16.msra.mxu0 0
  %1484 = vmatprep.subr.bf16.mxu0 0
  %1485 = vmatpush1.bf16.msra.mxu0 0
  %1486 = vmatprep.subr.bf16.mxu0 0
  %1487 = vmatpush1.bf16.msra.mxu0 0
  %1488 = vmatprep.subr.bf16.mxu0 0
  %1489 = vmatpush1.bf16.msra.mxu0 0
  %1490 = vmatprep.subr.bf16.mxu0 0
  %1491 = vmatpush1.bf16.msra.mxu0 0
  %1492 = vmatprep.mubr.bf16.mxu0 0
  %1493 = vmatmul.mubr.bf16.gmra.mrb[0].mxu0 %v989
  %v1494 = vpop.f32.mrb[0].mxu0
  %v1495 = vadd.f32 %v1249, %v1494
  %v1496 = vpop.f32.mrb[0].mxu0
  %v1497 = vadd.f32 %v1251, %v1496
  %v1498 = vpop.f32.mrb[0].mxu0
  %v1499 = vadd.f32 %v1253, %v1498
  %v1500 = vpop.f32.mrb[0].mxu0
  %v1501 = vadd.f32 %v1255, %v1500
  %1502 = vdwg.mxu0
  %1503 = vmatprep.subr.bf16.mxu0 %v1399
  %1504 = vmatpush1.bf16.msra.mxu0 %v1398
  %1505 = vmatprep.subr.bf16.mxu0 %v1403
  %1506 = vmatpush1.bf16.msra.mxu0 %v1402
  %1507 = vmatprep.subr.bf16.mxu0 %v1407
  %1508 = vmatpush1.bf16.msra.mxu0 %v1406
  %1509 = vmatprep.subr.bf16.mxu0 %v1411
  %1510 = vmatpush1.bf16.msra.mxu0 %v1410
  %1511 = vmatprep.subr.bf16.mxu0 %v1415
  %1512 = vmatpush1.bf16.msra.mxu0 %v1414
  %1513 = vmatprep.subr.bf16.mxu0 %v1419
  %1514 = vmatpush1.bf16.msra.mxu0 %v1418
  %1515 = vmatprep.subr.bf16.mxu0 %v1423
  %1516 = vmatpush1.bf16.msra.mxu0 %v1422
  %1517 = vmatprep.subr.bf16.mxu0 %v1427
  %1518 = vmatpush1.bf16.msra.mxu0 %v1426
  %1519 = vmatprep.subr.bf16.mxu0 0
  %1520 = vmatpush1.bf16.msra.mxu0 0
  %1521 = vmatprep.subr.bf16.mxu0 0
  %1522 = vmatpush1.bf16.msra.mxu0 0
  %1523 = vmatprep.subr.bf16.mxu0 0
  %1524 = vmatpush1.bf16.msra.mxu0 0
  %1525 = vmatprep.subr.bf16.mxu0 0
  %1526 = vmatpush1.bf16.msra.mxu0 0
  %1527 = vmatprep.subr.bf16.mxu0 0
  %1528 = vmatpush1.bf16.msra.mxu0 0
  %1529 = vmatprep.subr.bf16.mxu0 0
  %1530 = vmatpush1.bf16.msra.mxu0 0
  %1531 = vmatprep.subr.bf16.mxu0 0
  %1532 = vmatpush1.bf16.msra.mxu0 0
  %1533 = vmatprep.subr.bf16.mxu0 0
  %1534 = vmatpush1.bf16.msra.mxu0 0
  %1535 = vmatprep.mubr.bf16.mxu0 0
  %1536 = vmatmul.mubr.bf16.gmra.mrb[0].mxu0 %v989
  %v1537 = vpop.f32.mrb[0].mxu0
  %v1538 = vadd.f32 %v1292, %v1537
  %v1539 = vpop.f32.mrb[0].mxu0
  %v1540 = vadd.f32 %v1294, %v1539
  %v1541 = vpop.f32.mrb[0].mxu0
  %v1542 = vadd.f32 %v1296, %v1541
  %v1543 = vpop.f32.mrb[0].mxu0
  %v1544 = vadd.f32 %v1298, %v1543
  %1545 = vdwg.mxu0
  %v1546 = vadd.f32 %v1495, %v616
  %v1547 = vadd.f32 %v1497, %v620
  %v1548 = vadd.f32 %v1538, %v624
  %v1549 = vadd.f32 %v1540, %v628
  %v1550 = vadd.f32 %v1499, %v616
  %v1551 = vadd.f32 %v1501, %v620
  %v1552 = vadd.f32 %v1542, %v624
  %v1553 = vadd.f32 %v1544, %v628
  %v1554 = vld [vmem:[#allocation5] sm:$0xff]
  %v1555 = vld [vmem:[#allocation5 + $0x8] sm:$0xff]
  %v1556 = vxor.u32 %v1546, 2147483648
  %v1557 = vxor.u32 %v1547, 2147483648
  %v1558 = vxor.u32 %v1548, 2147483648
  %v1559 = vxor.u32 %v1550, 2147483648
  %v1560 = vxor.u32 %v1551, 2147483648
  %v1561 = vxor.u32 %v1552, 2147483648
  %v1562 = vmul.f32 %v1556, 1.442695
  %v1563 = vpow.pop %v1562
  %v1564 = vmul.f32 %v1557, 1.442695
  %v1565 = vpow.pop %v1564
  %v1566 = vmul.f32 %v1558, 1.442695
  %v1567 = vpow.pop %v1566
  %v1568 = vmul.f32 %v1559, 1.442695
  %v1569 = vpow.pop %v1568
  %v1570 = vmul.f32 %v1560, 1.442695
  %v1571 = vpow.pop %v1570
  %v1572 = vmul.f32 %v1561, 1.442695
  %v1573 = vpow.pop %v1572
  %v1574 = vadd.f32 %v1563, 1.0
  %v1575 = vadd.f32 %v1565, 1.0
  %v1576 = vadd.f32 %v1567, 1.0
  %v1577 = vadd.f32 %v1569, 1.0
  %v1578 = vadd.f32 %v1571, 1.0
  %v1579 = vadd.f32 %v1573, 1.0
  %v1580 = vrcp.pop %v1574
  %v1581 = vmul.f32 1.0, %v1580
  %v1582 = vrcp.pop %v1575
  %v1583 = vmul.f32 1.0, %v1582
  %v1584 = vrcp.pop %v1576
  %v1585 = vmul.f32 1.0, %v1584
  %v1586 = vrcp.pop %v1577
  %v1587 = vmul.f32 1.0, %v1586
  %v1588 = vrcp.pop %v1578
  %v1589 = vmul.f32 1.0, %v1588
  %v1590 = vrcp.pop %v1579
  %v1591 = vmul.f32 1.0, %v1590
  %v1592 = vtanh.pop %v1549
  %v1593 = vtanh.pop %v1553
  %v1594 = vmul.f32 %v1583, %v1554
  %v1595 = vmul.f32 %v1589, %v1555
  %v1596 = vmul.f32 %v1581, %v1592
  %v1597 = vmul.f32 %v1587, %v1593
  %v1598 = vadd.f32 %v1594, %v1596
  %v1599 = vadd.f32 %v1595, %v1597
  %v1600 = vtanh.pop %v1598
  %v1601 = vtanh.pop %v1599
  %v1602 = vmul.f32 %v1585, %v1600
  %v1603 = vmul.f32 %v1591, %v1601
  %v1604 = vpack.c.bf16 %v1603, %v1602
  %1605 = vst [vmem:[#allocation4] sm:$0xff] %v1604
  %1606 = vst [vmem:[#allocation5] sm:$0xff] %v1598
  %1607 = vst [vmem:[#allocation5 + $0x8] sm:$0xff] %v1599
  %s1608 = smul.u32 1, 4
  %s1609 = smul.addr %s1608, 8
  %s1610 = scalar_lea.vmem [#allocation6], %s1609
  %v1611 = vld [vmem:[%s1610] sm:$0xff]
  %v1612 = vld [vmem:[%s1610 + $0x8] sm:$0xff]
  %v1613 = vld [vmem:[%s1610 + $0x10] sm:$0xff]
  %v1614 = vld [vmem:[%s1610 + $0x18] sm:$0xff]
  %v1615 = vld [vmem:[#allocation2] sm:$0xff]
  %v1616 = vld [vmem:[%s2] sm:$0xff]
  %v1617 = vld [vmem:[%s2 + $0x8] sm:$0xff]
  %v1618 = vld [vmem:[%s2 + $0x10] sm:$0xff]
  %v1619 = vld [vmem:[%s2 + $0x18] sm:$0xff]
  %v1620 = vld [vmem:[%s2 + $0x20] sm:$0xff]
  %v1621 = vld [vmem:[%s2 + $0x28] sm:$0xff]
  %v1622 = vld [vmem:[%s2 + $0x30] sm:$0xff]
  %v1623 = vld [vmem:[%s2 + $0x38] sm:$0xff]
  %v1624 = vld [vmem:[%s2 + $0x40] sm:$0xff]
  %v1625 = vld [vmem:[%s2 + $0x48] sm:$0xff]
  %v1626 = vld [vmem:[%s2 + $0x50] sm:$0xff]
  %v1627 = vld [vmem:[%s2 + $0x58] sm:$0xff]
  %v1628 = vld [vmem:[%s2 + $0x60] sm:$0xff]
  %v1629 = vld [vmem:[%s2 + $0x68] sm:$0xff]
  %v1630 = vld [vmem:[%s2 + $0x70] sm:$0xff]
  %v1631 = vld [vmem:[%s2 + $0x78] sm:$0xff]
  %v1632 = vld [vmem:[%s2 + $0x80] sm:$0xff]
  %v1633 = vld [vmem:[%s2 + $0x88] sm:$0xff]
  %v1634 = vld [vmem:[%s2 + $0x90] sm:$0xff]
  %v1635 = vld [vmem:[%s2 + $0x98] sm:$0xff]
  %v1636 = vld [vmem:[%s2 + $0xa0] sm:$0xff]
  %v1637 = vld [vmem:[%s2 + $0xa8] sm:$0xff]
  %v1638 = vld [vmem:[%s2 + $0xb0] sm:$0xff]
  %v1639 = vld [vmem:[%s2 + $0xb8] sm:$0xff]
  %v1640 = vld [vmem:[%s2 + $0xc0] sm:$0xff]
  %v1641 = vld [vmem:[%s2 + $0xc8] sm:$0xff]
  %v1642 = vld [vmem:[%s2 + $0xd0] sm:$0xff]
  %v1643 = vld [vmem:[%s2 + $0xd8] sm:$0xff]
  %v1644 = vld [vmem:[%s2 + $0xe0] sm:$0xff]
  %v1645 = vld [vmem:[%s2 + $0xe8] sm:$0xff]
  %v1646 = vld [vmem:[%s2 + $0xf0] sm:$0xff]
  %v1647 = vld [vmem:[%s2 + $0xf8] sm:$0xff]
  %v1680 = vunpack.c.l.b16 %v1616
  %v1681 = vunpack.c.h.b16 %v1616
  %v1682 = vunpack.c.l.b16 %v1617
  %v1683 = vunpack.c.h.b16 %v1617
  %v1684 = vunpack.c.l.b16 %v1618
  %v1685 = vunpack.c.h.b16 %v1618
  %v1686 = vunpack.c.l.b16 %v1619
  %v1687 = vunpack.c.h.b16 %v1619
  %v1688 = vunpack.c.l.b16 %v1620
  %v1689 = vunpack.c.h.b16 %v1620
  %v1690 = vunpack.c.l.b16 %v1621
  %v1691 = vunpack.c.h.b16 %v1621
  %v1692 = vunpack.c.l.b16 %v1622
  %v1693 = vunpack.c.h.b16 %v1622
  %v1694 = vunpack.c.l.b16 %v1623
  %v1695 = vunpack.c.h.b16 %v1623
  %v1696 = vunpack.c.l.b16 %v1624
  %v1697 = vunpack.c.h.b16 %v1624
  %v1698 = vunpack.c.l.b16 %v1625
  %v1699 = vunpack.c.h.b16 %v1625
  %v1700 = vunpack.c.l.b16 %v1626
  %v1701 = vunpack.c.h.b16 %v1626
  %v1702 = vunpack.c.l.b16 %v1627
  %v1703 = vunpack.c.h.b16 %v1627
  %v1704 = vunpack.c.l.b16 %v1628
  %v1705 = vunpack.c.h.b16 %v1628
  %v1706 = vunpack.c.l.b16 %v1629
  %v1707 = vunpack.c.h.b16 %v1629
  %v1708 = vunpack.c.l.b16 %v1630
  %v1709 = vunpack.c.h.b16 %v1630
  %v1710 = vunpack.c.l.b16 %v1631
  %v1711 = vunpack.c.h.b16 %v1631
  %v1712 = vunpack.c.l.b16 %v1632
  %v1713 = vunpack.c.h.b16 %v1632
  %v1714 = vunpack.c.l.b16 %v1633
  %v1715 = vunpack.c.h.b16 %v1633
  %v1716 = vunpack.c.l.b16 %v1634
  %v1717 = vunpack.c.h.b16 %v1634
  %v1718 = vunpack.c.l.b16 %v1635
  %v1719 = vunpack.c.h.b16 %v1635
  %v1720 = vunpack.c.l.b16 %v1636
  %v1721 = vunpack.c.h.b16 %v1636
  %v1722 = vunpack.c.l.b16 %v1637
  %v1723 = vunpack.c.h.b16 %v1637
  %v1724 = vunpack.c.l.b16 %v1638
  %v1725 = vunpack.c.h.b16 %v1638
  %v1726 = vunpack.c.l.b16 %v1639
  %v1727 = vunpack.c.h.b16 %v1639
  %v1728 = vunpack.c.l.b16 %v1640
  %v1729 = vunpack.c.h.b16 %v1640
  %v1730 = vunpack.c.l.b16 %v1641
  %v1731 = vunpack.c.h.b16 %v1641
  %v1732 = vunpack.c.l.b16 %v1642
  %v1733 = vunpack.c.h.b16 %v1642
  %v1734 = vunpack.c.l.b16 %v1643
  %v1735 = vunpack.c.h.b16 %v1643
  %v1736 = vunpack.c.l.b16 %v1644
  %v1737 = vunpack.c.h.b16 %v1644
  %v1738 = vunpack.c.l.b16 %v1645
  %v1739 = vunpack.c.h.b16 %v1645
  %v1740 = vunpack.c.l.b16 %v1646
  %v1741 = vunpack.c.h.b16 %v1646
  %v1742 = vunpack.c.l.b16 %v1647
  %v1743 = vunpack.c.h.b16 %v1647
  %v1744 = vpack.c.b16 %v1684, %v1680
  %v1745 = vpack.c.b16 %v1685, %v1681
  %v1746 = vpack.c.b16 %v1686, %v1682
  %v1747 = vpack.c.b16 %v1687, %v1683
  %v1748 = vpack.c.b16 %v1692, %v1688
  %v1749 = vpack.c.b16 %v1693, %v1689
  %v1750 = vpack.c.b16 %v1694, %v1690
  %v1751 = vpack.c.b16 %v1695, %v1691
  %v1752 = vpack.c.b16 %v1700, %v1696
  %v1753 = vpack.c.b16 %v1701, %v1697
  %v1754 = vpack.c.b16 %v1702, %v1698
  %v1755 = vpack.c.b16 %v1703, %v1699
  %v1756 = vpack.c.b16 %v1708, %v1704
  %v1757 = vpack.c.b16 %v1709, %v1705
  %v1758 = vpack.c.b16 %v1710, %v1706
  %v1759 = vpack.c.b16 %v1711, %v1707
  %v1760 = vpack.c.b16 %v1716, %v1712
  %v1761 = vpack.c.b16 %v1717, %v1713
  %v1762 = vpack.c.b16 %v1718, %v1714
  %v1763 = vpack.c.b16 %v1719, %v1715
  %v1764 = vpack.c.b16 %v1724, %v1720
  %v1765 = vpack.c.b16 %v1725, %v1721
  %v1766 = vpack.c.b16 %v1726, %v1722
  %v1767 = vpack.c.b16 %v1727, %v1723
  %v1768 = vpack.c.b16 %v1732, %v1728
  %v1769 = vpack.c.b16 %v1733, %v1729
  %v1770 = vpack.c.b16 %v1734, %v1730
  %v1771 = vpack.c.b16 %v1735, %v1731
  %v1772 = vpack.c.b16 %v1740, %v1736
  %v1773 = vpack.c.b16 %v1741, %v1737
  %v1774 = vpack.c.b16 %v1742, %v1738
  %v1775 = vpack.c.b16 %v1743, %v1739
  %1808 = vmatprep.subr.bf16.mxu0 %v1745
  %1809 = vmatpush1.bf16.msra.mxu0 %v1744
  %1810 = vmatprep.subr.bf16.mxu0 %v1749
  %1811 = vmatpush1.bf16.msra.mxu0 %v1748
  %1812 = vmatprep.subr.bf16.mxu0 %v1753
  %1813 = vmatpush1.bf16.msra.mxu0 %v1752
  %1814 = vmatprep.subr.bf16.mxu0 %v1757
  %1815 = vmatpush1.bf16.msra.mxu0 %v1756
  %1816 = vmatprep.subr.bf16.mxu0 %v1761
  %1817 = vmatpush1.bf16.msra.mxu0 %v1760
  %1818 = vmatprep.subr.bf16.mxu0 %v1765
  %1819 = vmatpush1.bf16.msra.mxu0 %v1764
  %1820 = vmatprep.subr.bf16.mxu0 %v1769
  %1821 = vmatpush1.bf16.msra.mxu0 %v1768
  %1822 = vmatprep.subr.bf16.mxu0 %v1773
  %1823 = vmatpush1.bf16.msra.mxu0 %v1772
  %1824 = vmatprep.subr.bf16.mxu0 0
  %1825 = vmatpush1.bf16.msra.mxu0 0
  %1826 = vmatprep.subr.bf16.mxu0 0
  %1827 = vmatpush1.bf16.msra.mxu0 0
  %1828 = vmatprep.subr.bf16.mxu0 0
  %1829 = vmatpush1.bf16.msra.mxu0 0
  %1830 = vmatprep.subr.bf16.mxu0 0
  %1831 = vmatpush1.bf16.msra.mxu0 0
  %1832 = vmatprep.subr.bf16.mxu0 0
  %1833 = vmatpush1.bf16.msra.mxu0 0
  %1834 = vmatprep.subr.bf16.mxu0 0
  %1835 = vmatpush1.bf16.msra.mxu0 0
  %1836 = vmatprep.subr.bf16.mxu0 0
  %1837 = vmatpush1.bf16.msra.mxu0 0
  %1838 = vmatprep.subr.bf16.mxu0 0
  %1839 = vmatpush1.bf16.msra.mxu0 0
  %1840 = vmatprep.mubr.bf16.mxu0 0
  %1841 = vmatmul.mubr.bf16.gmra.mrb[0].mxu0 %v1615
  %v1842 = vpop.f32.mrb[0].mxu0
  %v1843 = vadd.f32 0.0, %v1842
  %v1844 = vpop.f32.mrb[0].mxu0
  %v1845 = vadd.f32 0.0, %v1844
  %v1846 = vpop.f32.mrb[0].mxu0
  %v1847 = vadd.f32 0.0, %v1846
  %v1848 = vpop.f32.mrb[0].mxu0
  %v1849 = vadd.f32 0.0, %v1848
  %1850 = vdwg.mxu0
  %1851 = vmatprep.subr.bf16.mxu0 %v1747
  %1852 = vmatpush1.bf16.msra.mxu0 %v1746
  %1853 = vmatprep.subr.bf16.mxu0 %v1751
  %1854 = vmatpush1.bf16.msra.mxu0 %v1750
  %1855 = vmatprep.subr.bf16.mxu0 %v1755
  %1856 = vmatpush1.bf16.msra.mxu0 %v1754
  %1857 = vmatprep.subr.bf16.mxu0 %v1759
  %1858 = vmatpush1.bf16.msra.mxu0 %v1758
  %1859 = vmatprep.subr.bf16.mxu0 %v1763
  %1860 = vmatpush1.bf16.msra.mxu0 %v1762
  %1861 = vmatprep.subr.bf16.mxu0 %v1767
  %1862 = vmatpush1.bf16.msra.mxu0 %v1766
  %1863 = vmatprep.subr.bf16.mxu0 %v1771
  %1864 = vmatpush1.bf16.msra.mxu0 %v1770
  %1865 = vmatprep.subr.bf16.mxu0 %v1775
  %1866 = vmatpush1.bf16.msra.mxu0 %v1774
  %1867 = vmatprep.subr.bf16.mxu0 0
  %1868 = vmatpush1.bf16.msra.mxu0 0
  %1869 = vmatprep.subr.bf16.mxu0 0
  %1870 = vmatpush1.bf16.msra.mxu0 0
  %1871 = vmatprep.subr.bf16.mxu0 0
  %1872 = vmatpush1.bf16.msra.mxu0 0
  %1873 = vmatprep.subr.bf16.mxu0 0
  %1874 = vmatpush1.bf16.msra.mxu0 0
  %1875 = vmatprep.subr.bf16.mxu0 0
  %1876 = vmatpush1.bf16.msra.mxu0 0
  %1877 = vmatprep.subr.bf16.mxu0 0
  %1878 = vmatpush1.bf16.msra.mxu0 0
  %1879 = vmatprep.subr.bf16.mxu0 0
  %1880 = vmatpush1.bf16.msra.mxu0 0
  %1881 = vmatprep.subr.bf16.mxu0 0
  %1882 = vmatpush1.bf16.msra.mxu0 0
  %1883 = vmatprep.mubr.bf16.mxu0 0
  %1884 = vmatmul.mubr.bf16.gmra.mrb[0].mxu0 %v1615
  %v1885 = vpop.f32.mrb[0].mxu0
  %v1886 = vadd.f32 0.0, %v1885
  %v1887 = vpop.f32.mrb[0].mxu0
  %v1888 = vadd.f32 0.0, %v1887
  %v1889 = vpop.f32.mrb[0].mxu0
  %v1890 = vadd.f32 0.0, %v1889
  %v1891 = vpop.f32.mrb[0].mxu0
  %v1892 = vadd.f32 0.0, %v1891
  %1893 = vdwg.mxu0
  %v1894 = vunpack.c.l.bf16 %v1611
  %v1895 = vunpack.c.l.bf16 %v1612
  %v1896 = vunpack.c.l.bf16 %v1613
  %v1897 = vunpack.c.l.bf16 %v1614
  %v1898 = vunpack.c.h.bf16 %v1611
  %v1899 = vunpack.c.h.bf16 %v1612
  %v1900 = vunpack.c.h.bf16 %v1613
  %v1901 = vunpack.c.h.bf16 %v1614
  %v1902 = vadd.f32 %v1894, %v1843
  %v1903 = vadd.f32 %v1895, %v1845
  %v1904 = vadd.f32 %v1896, %v1886
  %v1905 = vadd.f32 %v1897, %v1888
  %v1906 = vadd.f32 %v1898, %v1847
  %v1907 = vadd.f32 %v1899, %v1849
  %v1908 = vadd.f32 %v1900, %v1890
  %v1909 = vadd.f32 %v1901, %v1892
  %v1910 = vld [vmem:[#allocation3] sm:$0xff]
  %v1911 = vld [vmem:[#allocation3 + $0x8] sm:$0xff]
  %v1912 = vxor.u32 %v1902, 2147483648
  %v1913 = vxor.u32 %v1903, 2147483648
  %v1914 = vxor.u32 %v1904, 2147483648
  %v1915 = vxor.u32 %v1906, 2147483648
  %v1916 = vxor.u32 %v1907, 2147483648
  %v1917 = vxor.u32 %v1908, 2147483648
  %v1918 = vmul.f32 %v1912, 1.442695
  %v1919 = vpow.pop %v1918
  %v1920 = vmul.f32 %v1913, 1.442695
  %v1921 = vpow.pop %v1920
  %v1922 = vmul.f32 %v1914, 1.442695
  %v1923 = vpow.pop %v1922
  %v1924 = vmul.f32 %v1915, 1.442695
  %v1925 = vpow.pop %v1924
  %v1926 = vmul.f32 %v1916, 1.442695
  %v1927 = vpow.pop %v1926
  %v1928 = vmul.f32 %v1917, 1.442695
  %v1929 = vpow.pop %v1928
  %v1930 = vadd.f32 %v1919, 1.0
  %v1931 = vadd.f32 %v1921, 1.0
  %v1932 = vadd.f32 %v1923, 1.0
  %v1933 = vadd.f32 %v1925, 1.0
  %v1934 = vadd.f32 %v1927, 1.0
  %v1935 = vadd.f32 %v1929, 1.0
  %v1936 = vrcp.pop %v1930
  %v1937 = vmul.f32 1.0, %v1936
  %v1938 = vrcp.pop %v1931
  %v1939 = vmul.f32 1.0, %v1938
  %v1940 = vrcp.pop %v1932
  %v1941 = vmul.f32 1.0, %v1940
  %v1942 = vrcp.pop %v1933
  %v1943 = vmul.f32 1.0, %v1942
  %v1944 = vrcp.pop %v1934
  %v1945 = vmul.f32 1.0, %v1944
  %v1946 = vrcp.pop %v1935
  %v1947 = vmul.f32 1.0, %v1946
  %v1948 = vtanh.pop %v1905
  %v1949 = vtanh.pop %v1909
  %v1950 = vmul.f32 %v1939, %v1910
  %v1951 = vmul.f32 %v1945, %v1911
  %v1952 = vmul.f32 %v1937, %v1948
  %v1953 = vmul.f32 %v1943, %v1949
  %v1954 = vadd.f32 %v1950, %v1952
  %v1955 = vadd.f32 %v1951, %v1953
  %v1956 = vtanh.pop %v1954
  %v1957 = vtanh.pop %v1955
  %v1958 = vmul.f32 %v1941, %v1956
  %v1959 = vmul.f32 %v1947, %v1957
  %v1960 = vpack.c.bf16 %v1959, %v1958
  %1961 = vst [vmem:[#allocation2] sm:$0xff] %v1960
  %1962 = vst [vmem:[#allocation3] sm:$0xff] %v1954
  %1963 = vst [vmem:[#allocation3 + $0x8] sm:$0xff] %v1955
  %v1964 = vld [vmem:[#allocation4] sm:$0xff]
  %v1965 = vld [vmem:[%s5] sm:$0xff]
  %v1966 = vld [vmem:[%s5 + $0x8] sm:$0xff]
  %v1967 = vld [vmem:[%s5 + $0x10] sm:$0xff]
  %v1968 = vld [vmem:[%s5 + $0x18] sm:$0xff]
  %v1969 = vld [vmem:[%s5 + $0x20] sm:$0xff]
  %v1970 = vld [vmem:[%s5 + $0x28] sm:$0xff]
  %v1971 = vld [vmem:[%s5 + $0x30] sm:$0xff]
  %v1972 = vld [vmem:[%s5 + $0x38] sm:$0xff]
  %v1973 = vld [vmem:[%s5 + $0x40] sm:$0xff]
  %v1974 = vld [vmem:[%s5 + $0x48] sm:$0xff]
  %v1975 = vld [vmem:[%s5 + $0x50] sm:$0xff]
  %v1976 = vld [vmem:[%s5 + $0x58] sm:$0xff]
  %v1977 = vld [vmem:[%s5 + $0x60] sm:$0xff]
  %v1978 = vld [vmem:[%s5 + $0x68] sm:$0xff]
  %v1979 = vld [vmem:[%s5 + $0x70] sm:$0xff]
  %v1980 = vld [vmem:[%s5 + $0x78] sm:$0xff]
  %v1981 = vld [vmem:[%s5 + $0x80] sm:$0xff]
  %v1982 = vld [vmem:[%s5 + $0x88] sm:$0xff]
  %v1983 = vld [vmem:[%s5 + $0x90] sm:$0xff]
  %v1984 = vld [vmem:[%s5 + $0x98] sm:$0xff]
  %v1985 = vld [vmem:[%s5 + $0xa0] sm:$0xff]
  %v1986 = vld [vmem:[%s5 + $0xa8] sm:$0xff]
  %v1987 = vld [vmem:[%s5 + $0xb0] sm:$0xff]
  %v1988 = vld [vmem:[%s5 + $0xb8] sm:$0xff]
  %v1989 = vld [vmem:[%s5 + $0xc0] sm:$0xff]
  %v1990 = vld [vmem:[%s5 + $0xc8] sm:$0xff]
  %v1991 = vld [vmem:[%s5 + $0xd0] sm:$0xff]
  %v1992 = vld [vmem:[%s5 + $0xd8] sm:$0xff]
  %v1993 = vld [vmem:[%s5 + $0xe0] sm:$0xff]
  %v1994 = vld [vmem:[%s5 + $0xe8] sm:$0xff]
  %v1995 = vld [vmem:[%s5 + $0xf0] sm:$0xff]
  %v1996 = vld [vmem:[%s5 + $0xf8] sm:$0xff]
  %v1997 = vld [vmem:[%s4] sm:$0xff]
  %v1998 = vld [vmem:[%s4 + $0x8] sm:$0xff]
  %v1999 = vld [vmem:[%s4 + $0x10] sm:$0xff]
  %v2000 = vld [vmem:[%s4 + $0x18] sm:$0xff]
  %v2001 = vld [vmem:[%s4 + $0x20] sm:$0xff]
  %v2002 = vld [vmem:[%s4 + $0x28] sm:$0xff]
  %v2003 = vld [vmem:[%s4 + $0x30] sm:$0xff]
  %v2004 = vld [vmem:[%s4 + $0x38] sm:$0xff]
  %v2005 = vld [vmem:[%s4 + $0x40] sm:$0xff]
  %v2006 = vld [vmem:[%s4 + $0x48] sm:$0xff]
  %v2007 = vld [vmem:[%s4 + $0x50] sm:$0xff]
  %v2008 = vld [vmem:[%s4 + $0x58] sm:$0xff]
  %v2009 = vld [vmem:[%s4 + $0x60] sm:$0xff]
  %v2010 = vld [vmem:[%s4 + $0x68] sm:$0xff]
  %v2011 = vld [vmem:[%s4 + $0x70] sm:$0xff]
  %v2012 = vld [vmem:[%s4 + $0x78] sm:$0xff]
  %v2013 = vld [vmem:[%s4 + $0x80] sm:$0xff]
  %v2014 = vld [vmem:[%s4 + $0x88] sm:$0xff]
  %v2015 = vld [vmem:[%s4 + $0x90] sm:$0xff]
  %v2016 = vld [vmem:[%s4 + $0x98] sm:$0xff]
  %v2017 = vld [vmem:[%s4 + $0xa0] sm:$0xff]
  %v2018 = vld [vmem:[%s4 + $0xa8] sm:$0xff]
  %v2019 = vld [vmem:[%s4 + $0xb0] sm:$0xff]
  %v2020 = vld [vmem:[%s4 + $0xb8] sm:$0xff]
  %v2021 = vld [vmem:[%s4 + $0xc0] sm:$0xff]
  %v2022 = vld [vmem:[%s4 + $0xc8] sm:$0xff]
  %v2023 = vld [vmem:[%s4 + $0xd0] sm:$0xff]
  %v2024 = vld [vmem:[%s4 + $0xd8] sm:$0xff]
  %v2025 = vld [vmem:[%s4 + $0xe0] sm:$0xff]
  %v2026 = vld [vmem:[%s4 + $0xe8] sm:$0xff]
  %v2027 = vld [vmem:[%s4 + $0xf0] sm:$0xff]
  %v2028 = vld [vmem:[%s4 + $0xf8] sm:$0xff]
  %v2061 = vunpack.c.l.b16 %v1997
  %v2062 = vunpack.c.h.b16 %v1997
  %v2063 = vunpack.c.l.b16 %v1998
  %v2064 = vunpack.c.h.b16 %v1998
  %v2065 = vunpack.c.l.b16 %v1999
  %v2066 = vunpack.c.h.b16 %v1999
  %v2067 = vunpack.c.l.b16 %v2000
  %v2068 = vunpack.c.h.b16 %v2000
  %v2069 = vunpack.c.l.b16 %v2001
  %v2070 = vunpack.c.h.b16 %v2001
  %v2071 = vunpack.c.l.b16 %v2002
  %v2072 = vunpack.c.h.b16 %v2002
  %v2073 = vunpack.c.l.b16 %v2003
  %v2074 = vunpack.c.h.b16 %v2003
  %v2075 = vunpack.c.l.b16 %v2004
  %v2076 = vunpack.c.h.b16 %v2004
  %v2077 = vunpack.c.l.b16 %v2005
  %v2078 = vunpack.c.h.b16 %v2005
  %v2079 = vunpack.c.l.b16 %v2006
  %v2080 = vunpack.c.h.b16 %v2006
  %v2081 = vunpack.c.l.b16 %v2007
  %v2082 = vunpack.c.h.b16 %v2007
  %v2083 = vunpack.c.l.b16 %v2008
  %v2084 = vunpack.c.h.b16 %v2008
  %v2085 = vunpack.c.l.b16 %v2009
  %v2086 = vunpack.c.h.b16 %v2009
  %v2087 = vunpack.c.l.b16 %v2010
  %v2088 = vunpack.c.h.b16 %v2010
  %v2089 = vunpack.c.l.b16 %v2011
  %v2090 = vunpack.c.h.b16 %v2011
  %v2091 = vunpack.c.l.b16 %v2012
  %v2092 = vunpack.c.h.b16 %v2012
  %v2093 = vunpack.c.l.b16 %v2013
  %v2094 = vunpack.c.h.b16 %v2013
  %v2095 = vunpack.c.l.b16 %v2014
  %v2096 = vunpack.c.h.b16 %v2014
  %v2097 = vunpack.c.l.b16 %v2015
  %v2098 = vunpack.c.h.b16 %v2015
  %v2099 = vunpack.c.l.b16 %v2016
  %v2100 = vunpack.c.h.b16 %v2016
  %v2101 = vunpack.c.l.b16 %v2017
  %v2102 = vunpack.c.h.b16 %v2017
  %v2103 = vunpack.c.l.b16 %v2018
  %v2104 = vunpack.c.h.b16 %v2018
  %v2105 = vunpack.c.l.b16 %v2019
  %v2106 = vunpack.c.h.b16 %v2019
  %v2107 = vunpack.c.l.b16 %v2020
  %v2108 = vunpack.c.h.b16 %v2020
  %v2109 = vunpack.c.l.b16 %v2021
  %v2110 = vunpack.c.h.b16 %v2021
  %v2111 = vunpack.c.l.b16 %v2022
  %v2112 = vunpack.c.h.b16 %v2022
  %v2113 = vunpack.c.l.b16 %v2023
  %v2114 = vunpack.c.h.b16 %v2023
  %v2115 = vunpack.c.l.b16 %v2024
  %v2116 = vunpack.c.h.b16 %v2024
  %v2117 = vunpack.c.l.b16 %v2025
  %v2118 = vunpack.c.h.b16 %v2025
  %v2119 = vunpack.c.l.b16 %v2026
  %v2120 = vunpack.c.h.b16 %v2026
  %v2121 = vunpack.c.l.b16 %v2027
  %v2122 = vunpack.c.h.b16 %v2027
  %v2123 = vunpack.c.l.b16 %v2028
  %v2124 = vunpack.c.h.b16 %v2028
  %v2125 = vpack.c.b16 %v2065, %v2061
  %v2126 = vpack.c.b16 %v2066, %v2062
  %v2127 = vpack.c.b16 %v2067, %v2063
  %v2128 = vpack.c.b16 %v2068, %v2064
  %v2129 = vpack.c.b16 %v2073, %v2069
  %v2130 = vpack.c.b16 %v2074, %v2070
  %v2131 = vpack.c.b16 %v2075, %v2071
  %v2132 = vpack.c.b16 %v2076, %v2072
  %v2133 = vpack.c.b16 %v2081, %v2077
  %v2134 = vpack.c.b16 %v2082, %v2078
  %v2135 = vpack.c.b16 %v2083, %v2079
  %v2136 = vpack.c.b16 %v2084, %v2080
  %v2137 = vpack.c.b16 %v2089, %v2085
  %v2138 = vpack.c.b16 %v2090, %v2086
  %v2139 = vpack.c.b16 %v2091, %v2087
  %v2140 = vpack.c.b16 %v2092, %v2088
  %v2141 = vpack.c.b16 %v2097, %v2093
  %v2142 = vpack.c.b16 %v2098, %v2094
  %v2143 = vpack.c.b16 %v2099, %v2095
  %v2144 = vpack.c.b16 %v2100, %v2096
  %v2145 = vpack.c.b16 %v2105, %v2101
  %v2146 = vpack.c.b16 %v2106, %v2102
  %v2147 = vpack.c.b16 %v2107, %v2103
  %v2148 = vpack.c.b16 %v2108, %v2104
  %v2149 = vpack.c.b16 %v2113, %v2109
  %v2150 = vpack.c.b16 %v2114, %v2110
  %v2151 = vpack.c.b16 %v2115, %v2111
  %v2152 = vpack.c.b16 %v2116, %v2112
  %v2153 = vpack.c.b16 %v2121, %v2117
  %v2154 = vpack.c.b16 %v2122, %v2118
  %v2155 = vpack.c.b16 %v2123, %v2119
  %v2156 = vpack.c.b16 %v2124, %v2120
  %2189 = vmatprep.subr.bf16.mxu0 %v2126
  %2190 = vmatpush1.bf16.msra.mxu0 %v2125
  %2191 = vmatprep.subr.bf16.mxu0 %v2130
  %2192 = vmatpush1.bf16.msra.mxu0 %v2129
  %2193 = vmatprep.subr.bf16.mxu0 %v2134
  %2194 = vmatpush1.bf16.msra.mxu0 %v2133
  %2195 = vmatprep.subr.bf16.mxu0 %v2138
  %2196 = vmatpush1.bf16.msra.mxu0 %v2137
  %2197 = vmatprep.subr.bf16.mxu0 %v2142
  %2198 = vmatpush1.bf16.msra.mxu0 %v2141
  %2199 = vmatprep.subr.bf16.mxu0 %v2146
  %2200 = vmatpush1.bf16.msra.mxu0 %v2145
  %2201 = vmatprep.subr.bf16.mxu0 %v2150
  %2202 = vmatpush1.bf16.msra.mxu0 %v2149
  %2203 = vmatprep.subr.bf16.mxu0 %v2154
  %2204 = vmatpush1.bf16.msra.mxu0 %v2153
  %2205 = vmatprep.subr.bf16.mxu0 0
  %2206 = vmatpush1.bf16.msra.mxu0 0
  %2207 = vmatprep.subr.bf16.mxu0 0
  %2208 = vmatpush1.bf16.msra.mxu0 0
  %2209 = vmatprep.subr.bf16.mxu0 0
  %2210 = vmatpush1.bf16.msra.mxu0 0
  %2211 = vmatprep.subr.bf16.mxu0 0
  %2212 = vmatpush1.bf16.msra.mxu0 0
  %2213 = vmatprep.subr.bf16.mxu0 0
  %2214 = vmatpush1.bf16.msra.mxu0 0
  %2215 = vmatprep.subr.bf16.mxu0 0
  %2216 = vmatpush1.bf16.msra.mxu0 0
  %2217 = vmatprep.subr.bf16.mxu0 0
  %2218 = vmatpush1.bf16.msra.mxu0 0
  %2219 = vmatprep.subr.bf16.mxu0 0
  %2220 = vmatpush1.bf16.msra.mxu0 0
  %2221 = vmatprep.mubr.bf16.mxu0 0
  %2222 = vmatmul.mubr.bf16.gmra.mrb[0].mxu0 %v1960
  %v2223 = vpop.f32.mrb[0].mxu0
  %v2224 = vadd.f32 0.0, %v2223
  %v2225 = vpop.f32.mrb[0].mxu0
  %v2226 = vadd.f32 0.0, %v2225
  %v2227 = vpop.f32.mrb[0].mxu0
  %v2228 = vadd.f32 0.0, %v2227
  %v2229 = vpop.f32.mrb[0].mxu0
  %v2230 = vadd.f32 0.0, %v2229
  %2231 = vdwg.mxu0
  %2232 = vmatprep.subr.bf16.mxu0 %v2128
  %2233 = vmatpush1.bf16.msra.mxu0 %v2127
  %2234 = vmatprep.subr.bf16.mxu0 %v2132
  %2235 = vmatpush1.bf16.msra.mxu0 %v2131
  %2236 = vmatprep.subr.bf16.mxu0 %v2136
  %2237 = vmatpush1.bf16.msra.mxu0 %v2135
  %2238 = vmatprep.subr.bf16.mxu0 %v2140
  %2239 = vmatpush1.bf16.msra.mxu0 %v2139
  %2240 = vmatprep.subr.bf16.mxu0 %v2144
  %2241 = vmatpush1.bf16.msra.mxu0 %v2143
  %2242 = vmatprep.subr.bf16.mxu0 %v2148
  %2243 = vmatpush1.bf16.msra.mxu0 %v2147
  %2244 = vmatprep.subr.bf16.mxu0 %v2152
  %2245 = vmatpush1.bf16.msra.mxu0 %v2151
  %2246 = vmatprep.subr.bf16.mxu0 %v2156
  %2247 = vmatpush1.bf16.msra.mxu0 %v2155
  %2248 = vmatprep.subr.bf16.mxu0 0
  %2249 = vmatpush1.bf16.msra.mxu0 0
  %2250 = vmatprep.subr.bf16.mxu0 0
  %2251 = vmatpush1.bf16.msra.mxu0 0
  %2252 = vmatprep.subr.bf16.mxu0 0
  %2253 = vmatpush1.bf16.msra.mxu0 0
  %2254 = vmatprep.subr.bf16.mxu0 0
  %2255 = vmatpush1.bf16.msra.mxu0 0
  %2256 = vmatprep.subr.bf16.mxu0 0
  %2257 = vmatpush1.bf16.msra.mxu0 0
  %2258 = vmatprep.subr.bf16.mxu0 0
  %2259 = vmatpush1.bf16.msra.mxu0 0
  %2260 = vmatprep.subr.bf16.mxu0 0
  %2261 = vmatpush1.bf16.msra.mxu0 0
  %2262 = vmatprep.subr.bf16.mxu0 0
  %2263 = vmatpush1.bf16.msra.mxu0 0
  %2264 = vmatprep.mubr.bf16.mxu0 0
  %2265 = vmatmul.mubr.bf16.gmra.mrb[0].mxu0 %v1960
  %v2266 = vpop.f32.mrb[0].mxu0
  %v2267 = vadd.f32 0.0, %v2266
  %v2268 = vpop.f32.mrb[0].mxu0
  %v2269 = vadd.f32 0.0, %v2268
  %v2270 = vpop.f32.mrb[0].mxu0
  %v2271 = vadd.f32 0.0, %v2270
  %v2272 = vpop.f32.mrb[0].mxu0
  %v2273 = vadd.f32 0.0, %v2272
  %2274 = vdwg.mxu0
  %v2307 = vunpack.c.l.b16 %v1965
  %v2308 = vunpack.c.h.b16 %v1965
  %v2309 = vunpack.c.l.b16 %v1966
  %v2310 = vunpack.c.h.b16 %v1966
  %v2311 = vunpack.c.l.b16 %v1967
  %v2312 = vunpack.c.h.b16 %v1967
  %v2313 = vunpack.c.l.b16 %v1968
  %v2314 = vunpack.c.h.b16 %v1968
  %v2315 = vunpack.c.l.b16 %v1969
  %v2316 = vunpack.c.h.b16 %v1969
  %v2317 = vunpack.c.l.b16 %v1970
  %v2318 = vunpack.c.h.b16 %v1970
  %v2319 = vunpack.c.l.b16 %v1971
  %v2320 = vunpack.c.h.b16 %v1971
  %v2321 = vunpack.c.l.b16 %v1972
  %v2322 = vunpack.c.h.b16 %v1972
  %v2323 = vunpack.c.l.b16 %v1973
  %v2324 = vunpack.c.h.b16 %v1973
  %v2325 = vunpack.c.l.b16 %v1974
  %v2326 = vunpack.c.h.b16 %v1974
  %v2327 = vunpack.c.l.b16 %v1975
  %v2328 = vunpack.c.h.b16 %v1975
  %v2329 = vunpack.c.l.b16 %v1976
  %v2330 = vunpack.c.h.b16 %v1976
  %v2331 = vunpack.c.l.b16 %v1977
  %v2332 = vunpack.c.h.b16 %v1977
  %v2333 = vunpack.c.l.b16 %v1978
  %v2334 = vunpack.c.h.b16 %v1978
  %v2335 = vunpack.c.l.b16 %v1979
  %v2336 = vunpack.c.h.b16 %v1979
  %v2337 = vunpack.c.l.b16 %v1980
  %v2338 = vunpack.c.h.b16 %v1980
  %v2339 = vunpack.c.l.b16 %v1981
  %v2340 = vunpack.c.h.b16 %v1981
  %v2341 = vunpack.c.l.b16 %v1982
  %v2342 = vunpack.c.h.b16 %v1982
  %v2343 = vunpack.c.l.b16 %v1983
  %v2344 = vunpack.c.h.b16 %v1983
  %v2345 = vunpack.c.l.b16 %v1984
  %v2346 = vunpack.c.h.b16 %v1984
  %v2347 = vunpack.c.l.b16 %v1985
  %v2348 = vunpack.c.h.b16 %v1985
  %v2349 = vunpack.c.l.b16 %v1986
  %v2350 = vunpack.c.h.b16 %v1986
  %v2351 = vunpack.c.l.b16 %v1987
  %v2352 = vunpack.c.h.b16 %v1987
  %v2353 = vunpack.c.l.b16 %v1988
  %v2354 = vunpack.c.h.b16 %v1988
  %v2355 = vunpack.c.l.b16 %v1989
  %v2356 = vunpack.c.h.b16 %v1989
  %v2357 = vunpack.c.l.b16 %v1990
  %v2358 = vunpack.c.h.b16 %v1990
  %v2359 = vunpack.c.l.b16 %v1991
  %v2360 = vunpack.c.h.b16 %v1991
  %v2361 = vunpack.c.l.b16 %v1992
  %v2362 = vunpack.c.h.b16 %v1992
  %v2363 = vunpack.c.l.b16 %v1993
  %v2364 = vunpack.c.h.b16 %v1993
  %v2365 = vunpack.c.l.b16 %v1994
  %v2366 = vunpack.c.h.b16 %v1994
  %v2367 = vunpack.c.l.b16 %v1995
  %v2368 = vunpack.c.h.b16 %v1995
  %v2369 = vunpack.c.l.b16 %v1996
  %v2370 = vunpack.c.h.b16 %v1996
  %v2371 = vpack.c.b16 %v2311, %v2307
  %v2372 = vpack.c.b16 %v2312, %v2308
  %v2373 = vpack.c.b16 %v2313, %v2309
  %v2374 = vpack.c.b16 %v2314, %v2310
  %v2375 = vpack.c.b16 %v2319, %v2315
  %v2376 = vpack.c.b16 %v2320, %v2316
  %v2377 = vpack.c.b16 %v2321, %v2317
  %v2378 = vpack.c.b16 %v2322, %v2318
  %v2379 = vpack.c.b16 %v2327, %v2323
  %v2380 = vpack.c.b16 %v2328, %v2324
  %v2381 = vpack.c.b16 %v2329, %v2325
  %v2382 = vpack.c.b16 %v2330, %v2326
  %v2383 = vpack.c.b16 %v2335, %v2331
  %v2384 = vpack.c.b16 %v2336, %v2332
  %v2385 = vpack.c.b16 %v2337, %v2333
  %v2386 = vpack.c.b16 %v2338, %v2334
  %v2387 = vpack.c.b16 %v2343, %v2339
  %v2388 = vpack.c.b16 %v2344, %v2340
  %v2389 = vpack.c.b16 %v2345, %v2341
  %v2390 = vpack.c.b16 %v2346, %v2342
  %v2391 = vpack.c.b16 %v2351, %v2347
  %v2392 = vpack.c.b16 %v2352, %v2348
  %v2393 = vpack.c.b16 %v2353, %v2349
  %v2394 = vpack.c.b16 %v2354, %v2350
  %v2395 = vpack.c.b16 %v2359, %v2355
  %v2396 = vpack.c.b16 %v2360, %v2356
  %v2397 = vpack.c.b16 %v2361, %v2357
  %v2398 = vpack.c.b16 %v2362, %v2358
  %v2399 = vpack.c.b16 %v2367, %v2363
  %v2400 = vpack.c.b16 %v2368, %v2364
  %v2401 = vpack.c.b16 %v2369, %v2365
  %v2402 = vpack.c.b16 %v2370, %v2366
  %2435 = vmatprep.subr.bf16.mxu0 %v2372
  %2436 = vmatpush1.bf16.msra.mxu0 %v2371
  %2437 = vmatprep.subr.bf16.mxu0 %v2376
  %2438 = vmatpush1.bf16.msra.mxu0 %v2375
  %2439 = vmatprep.subr.bf16.mxu0 %v2380
  %2440 = vmatpush1.bf16.msra.mxu0 %v2379
  %2441 = vmatprep.subr.bf16.mxu0 %v2384
  %2442 = vmatpush1.bf16.msra.mxu0 %v2383
  %2443 = vmatprep.subr.bf16.mxu0 %v2388
  %2444 = vmatpush1.bf16.msra.mxu0 %v2387
  %2445 = vmatprep.subr.bf16.mxu0 %v2392
  %2446 = vmatpush1.bf16.msra.mxu0 %v2391
  %2447 = vmatprep.subr.bf16.mxu0 %v2396
  %2448 = vmatpush1.bf16.msra.mxu0 %v2395
  %2449 = vmatprep.subr.bf16.mxu0 %v2400
  %2450 = vmatpush1.bf16.msra.mxu0 %v2399
  %2451 = vmatprep.subr.bf16.mxu0 0
  %2452 = vmatpush1.bf16.msra.mxu0 0
  %2453 = vmatprep.subr.bf16.mxu0 0
  %2454 = vmatpush1.bf16.msra.mxu0 0
  %2455 = vmatprep.subr.bf16.mxu0 0
  %2456 = vmatpush1.bf16.msra.mxu0 0
  %2457 = vmatprep.subr.bf16.mxu0 0
  %2458 = vmatpush1.bf16.msra.mxu0 0
  %2459 = vmatprep.subr.bf16.mxu0 0
  %2460 = vmatpush1.bf16.msra.mxu0 0
  %2461 = vmatprep.subr.bf16.mxu0 0
  %2462 = vmatpush1.bf16.msra.mxu0 0
  %2463 = vmatprep.subr.bf16.mxu0 0
  %2464 = vmatpush1.bf16.msra.mxu0 0
  %2465 = vmatprep.subr.bf16.mxu0 0
  %2466 = vmatpush1.bf16.msra.mxu0 0
  %2467 = vmatprep.mubr.bf16.mxu0 0
  %2468 = vmatmul.mubr.bf16.gmra.mrb[0].mxu0 %v1964
  %v2469 = vpop.f32.mrb[0].mxu0
  %v2470 = vadd.f32 %v2224, %v2469
  %v2471 = vpop.f32.mrb[0].mxu0
  %v2472 = vadd.f32 %v2226, %v2471
  %v2473 = vpop.f32.mrb[0].mxu0
  %v2474 = vadd.f32 %v2228, %v2473
  %v2475 = vpop.f32.mrb[0].mxu0
  %v2476 = vadd.f32 %v2230, %v2475
  %2477 = vdwg.mxu0
  %2478 = vmatprep.subr.bf16.mxu0 %v2374
  %2479 = vmatpush1.bf16.msra.mxu0 %v2373
  %2480 = vmatprep.subr.bf16.mxu0 %v2378
  %2481 = vmatpush1.bf16.msra.mxu0 %v2377
  %2482 = vmatprep.subr.bf16.mxu0 %v2382
  %2483 = vmatpush1.bf16.msra.mxu0 %v2381
  %2484 = vmatprep.subr.bf16.mxu0 %v2386
  %2485 = vmatpush1.bf16.msra.mxu0 %v2385
  %2486 = vmatprep.subr.bf16.mxu0 %v2390
  %2487 = vmatpush1.bf16.msra.mxu0 %v2389
  %2488 = vmatprep.subr.bf16.mxu0 %v2394
  %2489 = vmatpush1.bf16.msra.mxu0 %v2393
  %2490 = vmatprep.subr.bf16.mxu0 %v2398
  %2491 = vmatpush1.bf16.msra.mxu0 %v2397
  %2492 = vmatprep.subr.bf16.mxu0 %v2402
  %2493 = vmatpush1.bf16.msra.mxu0 %v2401
  %2494 = vmatprep.subr.bf16.mxu0 0
  %2495 = vmatpush1.bf16.msra.mxu0 0
  %2496 = vmatprep.subr.bf16.mxu0 0
  %2497 = vmatpush1.bf16.msra.mxu0 0
  %2498 = vmatprep.subr.bf16.mxu0 0
  %2499 = vmatpush1.bf16.msra.mxu0 0
  %2500 = vmatprep.subr.bf16.mxu0 0
  %2501 = vmatpush1.bf16.msra.mxu0 0
  %2502 = vmatprep.subr.bf16.mxu0 0
  %2503 = vmatpush1.bf16.msra.mxu0 0
  %2504 = vmatprep.subr.bf16.mxu0 0
  %2505 = vmatpush1.bf16.msra.mxu0 0
  %2506 = vmatprep.subr.bf16.mxu0 0
  %2507 = vmatpush1.bf16.msra.mxu0 0
  %2508 = vmatprep.subr.bf16.mxu0 0
  %2509 = vmatpush1.bf16.msra.mxu0 0
  %2510 = vmatprep.mubr.bf16.mxu0 0
  %2511 = vmatmul.mubr.bf16.gmra.mrb[0].mxu0 %v1964
  %v2512 = vpop.f32.mrb[0].mxu0
  %v2513 = vadd.f32 %v2267, %v2512
  %v2514 = vpop.f32.mrb[0].mxu0
  %v2515 = vadd.f32 %v2269, %v2514
  %v2516 = vpop.f32.mrb[0].mxu0
  %v2517 = vadd.f32 %v2271, %v2516
  %v2518 = vpop.f32.mrb[0].mxu0
  %v2519 = vadd.f32 %v2273, %v2518
  %2520 = vdwg.mxu0
  %v2521 = vadd.f32 %v2470, %v616
  %v2522 = vadd.f32 %v2472, %v620
  %v2523 = vadd.f32 %v2513, %v624
  %v2524 = vadd.f32 %v2515, %v628
  %v2525 = vadd.f32 %v2474, %v616
  %v2526 = vadd.f32 %v2476, %v620
  %v2527 = vadd.f32 %v2517, %v624
  %v2528 = vadd.f32 %v2519, %v628
  %v2529 = vld [vmem:[#allocation5] sm:$0xff]
  %v2530 = vld [vmem:[#allocation5 + $0x8] sm:$0xff]
  %v2531 = vxor.u32 %v2521, 2147483648
  %v2532 = vxor.u32 %v2522, 2147483648
  %v2533 = vxor.u32 %v2523, 2147483648
  %v2534 = vxor.u32 %v2525, 2147483648
  %v2535 = vxor.u32 %v2526, 2147483648
  %v2536 = vxor.u32 %v2527, 2147483648
  %v2537 = vmul.f32 %v2531, 1.442695
  %v2538 = vpow.pop %v2537
  %v2539 = vmul.f32 %v2532, 1.442695
  %v2540 = vpow.pop %v2539
  %v2541 = vmul.f32 %v2533, 1.442695
  %v2542 = vpow.pop %v2541
  %v2543 = vmul.f32 %v2534, 1.442695
  %v2544 = vpow.pop %v2543
  %v2545 = vmul.f32 %v2535, 1.442695
  %v2546 = vpow.pop %v2545
  %v2547 = vmul.f32 %v2536, 1.442695
  %v2548 = vpow.pop %v2547
  %v2549 = vadd.f32 %v2538, 1.0
  %v2550 = vadd.f32 %v2540, 1.0
  %v2551 = vadd.f32 %v2542, 1.0
  %v2552 = vadd.f32 %v2544, 1.0
  %v2553 = vadd.f32 %v2546, 1.0
  %v2554 = vadd.f32 %v2548, 1.0
  %v2555 = vrcp.pop %v2549
  %v2556 = vmul.f32 1.0, %v2555
  %v2557 = vrcp.pop %v2550
  %v2558 = vmul.f32 1.0, %v2557
  %v2559 = vrcp.pop %v2551
  %v2560 = vmul.f32 1.0, %v2559
  %v2561 = vrcp.pop %v2552
  %v2562 = vmul.f32 1.0, %v2561
  %v2563 = vrcp.pop %v2553
  %v2564 = vmul.f32 1.0, %v2563
  %v2565 = vrcp.pop %v2554
  %v2566 = vmul.f32 1.0, %v2565
  %v2567 = vtanh.pop %v2524
  %v2568 = vtanh.pop %v2528
  %v2569 = vmul.f32 %v2558, %v2529
  %v2570 = vmul.f32 %v2564, %v2530
  %v2571 = vmul.f32 %v2556, %v2567
  %v2572 = vmul.f32 %v2562, %v2568
  %v2573 = vadd.f32 %v2569, %v2571
  %v2574 = vadd.f32 %v2570, %v2572
  %v2575 = vtanh.pop %v2573
  %v2576 = vtanh.pop %v2574
  %v2577 = vmul.f32 %v2560, %v2575
  %v2578 = vmul.f32 %v2566, %v2576
  %v2579 = vpack.c.bf16 %v2578, %v2577
  %2580 = vst [vmem:[#allocation4] sm:$0xff] %v2579
  %2581 = vst [vmem:[#allocation5] sm:$0xff] %v2573
  %2582 = vst [vmem:[#allocation5 + $0x8] sm:$0xff] %v2574
  %s2583 = smul.u32 2, 4
  %s2584 = smul.addr %s2583, 8
  %s2585 = scalar_lea.vmem [#allocation6], %s2584
  %v2586 = vld [vmem:[%s2585] sm:$0xff]
  %v2587 = vld [vmem:[%s2585 + $0x8] sm:$0xff]
  %v2588 = vld [vmem:[%s2585 + $0x10] sm:$0xff]
  %v2589 = vld [vmem:[%s2585 + $0x18] sm:$0xff]
  %v2590 = vld [vmem:[#allocation2] sm:$0xff]
  %v2591 = vld [vmem:[%s2] sm:$0xff]
  %v2592 = vld [vmem:[%s2 + $0x8] sm:$0xff]
  %v2593 = vld [vmem:[%s2 + $0x10] sm:$0xff]
  %v2594 = vld [vmem:[%s2 + $0x18] sm:$0xff]
  %v2595 = vld [vmem:[%s2 + $0x20] sm:$0xff]
  %v2596 = vld [vmem:[%s2 + $0x28] sm:$0xff]
  %v2597 = vld [vmem:[%s2 + $0x30] sm:$0xff]
  %v2598 = vld [vmem:[%s2 + $0x38] sm:$0xff]
  %v2599 = vld [vmem:[%s2 + $0x40] sm:$0xff]
  %v2600 = vld [vmem:[%s2 + $0x48] sm:$0xff]
  %v2601 = vld [vmem:[%s2 + $0x50] sm:$0xff]
  %v2602 = vld [vmem:[%s2 + $0x58] sm:$0xff]
  %v2603 = vld [vmem:[%s2 + $0x60] sm:$0xff]
  %v2604 = vld [vmem:[%s2 + $0x68] sm:$0xff]
  %v2605 = vld [vmem:[%s2 + $0x70] sm:$0xff]
  %v2606 = vld [vmem:[%s2 + $0x78] sm:$0xff]
  %v2607 = vld [vmem:[%s2 + $0x80] sm:$0xff]
  %v2608 = vld [vmem:[%s2 + $0x88] sm:$0xff]
  %v2609 = vld [vmem:[%s2 + $0x90] sm:$0xff]
  %v2610 = vld [vmem:[%s2 + $0x98] sm:$0xff]
  %v2611 = vld [vmem:[%s2 + $0xa0] sm:$0xff]
  %v2612 = vld [vmem:[%s2 + $0xa8] sm:$0xff]
  %v2613 = vld [vmem:[%s2 + $0xb0] sm:$0xff]
  %v2614 = vld [vmem:[%s2 + $0xb8] sm:$0xff]
  %v2615 = vld [vmem:[%s2 + $0xc0] sm:$0xff]
  %v2616 = vld [vmem:[%s2 + $0xc8] sm:$0xff]
  %v2617 = vld [vmem:[%s2 + $0xd0] sm:$0xff]
  %v2618 = vld [vmem:[%s2 + $0xd8] sm:$0xff]
  %v2619 = vld [vmem:[%s2 + $0xe0] sm:$0xff]
  %v2620 = vld [vmem:[%s2 + $0xe8] sm:$0xff]
  %v2621 = vld [vmem:[%s2 + $0xf0] sm:$0xff]
  %v2622 = vld [vmem:[%s2 + $0xf8] sm:$0xff]
  %v2655 = vunpack.c.l.b16 %v2591
  %v2656 = vunpack.c.h.b16 %v2591
  %v2657 = vunpack.c.l.b16 %v2592
  %v2658 = vunpack.c.h.b16 %v2592
  %v2659 = vunpack.c.l.b16 %v2593
  %v2660 = vunpack.c.h.b16 %v2593
  %v2661 = vunpack.c.l.b16 %v2594
  %v2662 = vunpack.c.h.b16 %v2594
  %v2663 = vunpack.c.l.b16 %v2595
  %v2664 = vunpack.c.h.b16 %v2595
  %v2665 = vunpack.c.l.b16 %v2596
  %v2666 = vunpack.c.h.b16 %v2596
  %v2667 = vunpack.c.l.b16 %v2597
  %v2668 = vunpack.c.h.b16 %v2597
  %v2669 = vunpack.c.l.b16 %v2598
  %v2670 = vunpack.c.h.b16 %v2598
  %v2671 = vunpack.c.l.b16 %v2599
  %v2672 = vunpack.c.h.b16 %v2599
  %v2673 = vunpack.c.l.b16 %v2600
  %v2674 = vunpack.c.h.b16 %v2600
  %v2675 = vunpack.c.l.b16 %v2601
  %v2676 = vunpack.c.h.b16 %v2601
  %v2677 = vunpack.c.l.b16 %v2602
  %v2678 = vunpack.c.h.b16 %v2602
  %v2679 = vunpack.c.l.b16 %v2603
  %v2680 = vunpack.c.h.b16 %v2603
  %v2681 = vunpack.c.l.b16 %v2604
  %v2682 = vunpack.c.h.b16 %v2604
  %v2683 = vunpack.c.l.b16 %v2605
  %v2684 = vunpack.c.h.b16 %v2605
  %v2685 = vunpack.c.l.b16 %v2606
  %v2686 = vunpack.c.h.b16 %v2606
  %v2687 = vunpack.c.l.b16 %v2607
  %v2688 = vunpack.c.h.b16 %v2607
  %v2689 = vunpack.c.l.b16 %v2608
  %v2690 = vunpack.c.h.b16 %v2608
  %v2691 = vunpack.c.l.b16 %v2609
  %v2692 = vunpack.c.h.b16 %v2609
  %v2693 = vunpack.c.l.b16 %v2610
  %v2694 = vunpack.c.h.b16 %v2610
  %v2695 = vunpack.c.l.b16 %v2611
  %v2696 = vunpack.c.h.b16 %v2611
  %v2697 = vunpack.c.l.b16 %v2612
  %v2698 = vunpack.c.h.b16 %v2612
  %v2699 = vunpack.c.l.b16 %v2613
  %v2700 = vunpack.c.h.b16 %v2613
  %v2701 = vunpack.c.l.b16 %v2614
  %v2702 = vunpack.c.h.b16 %v2614
  %v2703 = vunpack.c.l.b16 %v2615
  %v2704 = vunpack.c.h.b16 %v2615
  %v2705 = vunpack.c.l.b16 %v2616
  %v2706 = vunpack.c.h.b16 %v2616
  %v2707 = vunpack.c.l.b16 %v2617
  %v2708 = vunpack.c.h.b16 %v2617
  %v2709 = vunpack.c.l.b16 %v2618
  %v2710 = vunpack.c.h.b16 %v2618
  %v2711 = vunpack.c.l.b16 %v2619
  %v2712 = vunpack.c.h.b16 %v2619
  %v2713 = vunpack.c.l.b16 %v2620
  %v2714 = vunpack.c.h.b16 %v2620
  %v2715 = vunpack.c.l.b16 %v2621
  %v2716 = vunpack.c.h.b16 %v2621
  %v2717 = vunpack.c.l.b16 %v2622
  %v2718 = vunpack.c.h.b16 %v2622
  %v2719 = vpack.c.b16 %v2659, %v2655
  %v2720 = vpack.c.b16 %v2660, %v2656
  %v2721 = vpack.c.b16 %v2661, %v2657
  %v2722 = vpack.c.b16 %v2662, %v2658
  %v2723 = vpack.c.b16 %v2667, %v2663
  %v2724 = vpack.c.b16 %v2668, %v2664
  %v2725 = vpack.c.b16 %v2669, %v2665
  %v2726 = vpack.c.b16 %v2670, %v2666
  %v2727 = vpack.c.b16 %v2675, %v2671
  %v2728 = vpack.c.b16 %v2676, %v2672
  %v2729 = vpack.c.b16 %v2677, %v2673
  %v2730 = vpack.c.b16 %v2678, %v2674
  %v2731 = vpack.c.b16 %v2683, %v2679
  %v2732 = vpack.c.b16 %v2684, %v2680
  %v2733 = vpack.c.b16 %v2685, %v2681
  %v2734 = vpack.c.b16 %v2686, %v2682
  %v2735 = vpack.c.b16 %v2691, %v2687
  %v2736 = vpack.c.b16 %v2692, %v2688
  %v2737 = vpack.c.b16 %v2693, %v2689
  %v2738 = vpack.c.b16 %v2694, %v2690
  %v2739 = vpack.c.b16 %v2699, %v2695
  %v2740 = vpack.c.b16 %v2700, %v2696
  %v2741 = vpack.c.b16 %v2701, %v2697
  %v2742 = vpack.c.b16 %v2702, %v2698
  %v2743 = vpack.c.b16 %v2707, %v2703
  %v2744 = vpack.c.b16 %v2708, %v2704
  %v2745 = vpack.c.b16 %v2709, %v2705
  %v2746 = vpack.c.b16 %v2710, %v2706
  %v2747 = vpack.c.b16 %v2715, %v2711
  %v2748 = vpack.c.b16 %v2716, %v2712
  %v2749 = vpack.c.b16 %v2717, %v2713
  %v2750 = vpack.c.b16 %v2718, %v2714
  %2783 = vmatprep.subr.bf16.mxu0 %v2720
  %2784 = vmatpush1.bf16.msra.mxu0 %v2719
  %2785 = vmatprep.subr.bf16.mxu0 %v2724
  %2786 = vmatpush1.bf16.msra.mxu0 %v2723
  %2787 = vmatprep.subr.bf16.mxu0 %v2728
  %2788 = vmatpush1.bf16.msra.mxu0 %v2727
  %2789 = vmatprep.subr.bf16.mxu0 %v2732
  %2790 = vmatpush1.bf16.msra.mxu0 %v2731
  %2791 = vmatprep.subr.bf16.mxu0 %v2736
  %2792 = vmatpush1.bf16.msra.mxu0 %v2735
  %2793 = vmatprep.subr.bf16.mxu0 %v2740
  %2794 = vmatpush1.bf16.msra.mxu0 %v2739
  %2795 = vmatprep.subr.bf16.mxu0 %v2744
  %2796 = vmatpush1.bf16.msra.mxu0 %v2743
  %2797 = vmatprep.subr.bf16.mxu0 %v2748
  %2798 = vmatpush1.bf16.msra.mxu0 %v2747
  %2799 = vmatprep.subr.bf16.mxu0 0
  %2800 = vmatpush1.bf16.msra.mxu0 0
  %2801 = vmatprep.subr.bf16.mxu0 0
  %2802 = vmatpush1.bf16.msra.mxu0 0
  %2803 = vmatprep.subr.bf16.mxu0 0
  %2804 = vmatpush1.bf16.msra.mxu0 0
  %2805 = vmatprep.subr.bf16.mxu0 0
  %2806 = vmatpush1.bf16.msra.mxu0 0
  %2807 = vmatprep.subr.bf16.mxu0 0
  %2808 = vmatpush1.bf16.msra.mxu0 0
  %2809 = vmatprep.subr.bf16.mxu0 0
  %2810 = vmatpush1.bf16.msra.mxu0 0
  %2811 = vmatprep.subr.bf16.mxu0 0
  %2812 = vmatpush1.bf16.msra.mxu0 0
  %2813 = vmatprep.subr.bf16.mxu0 0
  %2814 = vmatpush1.bf16.msra.mxu0 0
  %2815 = vmatprep.mubr.bf16.mxu0 0
  %2816 = vmatmul.mubr.bf16.gmra.mrb[0].mxu0 %v2590
  %v2817 = vpop.f32.mrb[0].mxu0
  %v2818 = vadd.f32 0.0, %v2817
  %v2819 = vpop.f32.mrb[0].mxu0
  %v2820 = vadd.f32 0.0, %v2819
  %v2821 = vpop.f32.mrb[0].mxu0
  %v2822 = vadd.f32 0.0, %v2821
  %v2823 = vpop.f32.mrb[0].mxu0
  %v2824 = vadd.f32 0.0, %v2823
  %2825 = vdwg.mxu0
  %2826 = vmatprep.subr.bf16.mxu0 %v2722
  %2827 = vmatpush1.bf16.msra.mxu0 %v2721
  %2828 = vmatprep.subr.bf16.mxu0 %v2726
  %2829 = vmatpush1.bf16.msra.mxu0 %v2725
  %2830 = vmatprep.subr.bf16.mxu0 %v2730
  %2831 = vmatpush1.bf16.msra.mxu0 %v2729
  %2832 = vmatprep.subr.bf16.mxu0 %v2734
  %2833 = vmatpush1.bf16.msra.mxu0 %v2733
  %2834 = vmatprep.subr.bf16.mxu0 %v2738
  %2835 = vmatpush1.bf16.msra.mxu0 %v2737
  %2836 = vmatprep.subr.bf16.mxu0 %v2742
  %2837 = vmatpush1.bf16.msra.mxu0 %v2741
  %2838 = vmatprep.subr.bf16.mxu0 %v2746
  %2839 = vmatpush1.bf16.msra.mxu0 %v2745
  %2840 = vmatprep.subr.bf16.mxu0 %v2750
  %2841 = vmatpush1.bf16.msra.mxu0 %v2749
  %2842 = vmatprep.subr.bf16.mxu0 0
  %2843 = vmatpush1.bf16.msra.mxu0 0
  %2844 = vmatprep.subr.bf16.mxu0 0
  %2845 = vmatpush1.bf16.msra.mxu0 0
  %2846 = vmatprep.subr.bf16.mxu0 0
  %2847 = vmatpush1.bf16.msra.mxu0 0
  %2848 = vmatprep.subr.bf16.mxu0 0
  %2849 = vmatpush1.bf16.msra.mxu0 0
  %2850 = vmatprep.subr.bf16.mxu0 0
  %2851 = vmatpush1.bf16.msra.mxu0 0
  %2852 = vmatprep.subr.bf16.mxu0 0
  %2853 = vmatpush1.bf16.msra.mxu0 0
  %2854 = vmatprep.subr.bf16.mxu0 0
  %2855 = vmatpush1.bf16.msra.mxu0 0
  %2856 = vmatprep.subr.bf16.mxu0 0
  %2857 = vmatpush1.bf16.msra.mxu0 0
  %2858 = vmatprep.mubr.bf16.mxu0 0
  %2859 = vmatmul.mubr.bf16.gmra.mrb[0].mxu0 %v2590
  %v2860 = vpop.f32.mrb[0].mxu0
  %v2861 = vadd.f32 0.0, %v2860
  %v2862 = vpop.f32.mrb[0].mxu0
  %v2863 = vadd.f32 0.0, %v2862
  %v2864 = vpop.f32.mrb[0].mxu0
  %v2865 = vadd.f32 0.0, %v2864
  %v2866 = vpop.f32.mrb[0].mxu0
  %v2867 = vadd.f32 0.0, %v2866
  %2868 = vdwg.mxu0
  %v2869 = vunpack.c.l.bf16 %v2586
  %v2870 = vunpack.c.l.bf16 %v2587
  %v2871 = vunpack.c.l.bf16 %v2588
  %v2872 = vunpack.c.l.bf16 %v2589
  %v2873 = vunpack.c.h.bf16 %v2586
  %v2874 = vunpack.c.h.bf16 %v2587
  %v2875 = vunpack.c.h.bf16 %v2588
  %v2876 = vunpack.c.h.bf16 %v2589
  %v2877 = vadd.f32 %v2869, %v2818
  %v2878 = vadd.f32 %v2870, %v2820
  %v2879 = vadd.f32 %v2871, %v2861
  %v2880 = vadd.f32 %v2872, %v2863
  %v2881 = vadd.f32 %v2873, %v2822
  %v2882 = vadd.f32 %v2874, %v2824
  %v2883 = vadd.f32 %v2875, %v2865
  %v2884 = vadd.f32 %v2876, %v2867
  %v2885 = vld [vmem:[#allocation3] sm:$0xff]
  %v2886 = vld [vmem:[#allocation3 + $0x8] sm:$0xff]
  %v2887 = vxor.u32 %v2877, 2147483648
  %v2888 = vxor.u32 %v2878, 2147483648
  %v2889 = vxor.u32 %v2879, 2147483648
  %v2890 = vxor.u32 %v2881, 2147483648
  %v2891 = vxor.u32 %v2882, 2147483648
  %v2892 = vxor.u32 %v2883, 2147483648
  %v2893 = vmul.f32 %v2887, 1.442695
  %v2894 = vpow.pop %v2893
  %v2895 = vmul.f32 %v2888, 1.442695
  %v2896 = vpow.pop %v2895
  %v2897 = vmul.f32 %v2889, 1.442695
  %v2898 = vpow.pop %v2897
  %v2899 = vmul.f32 %v2890, 1.442695
  %v2900 = vpow.pop %v2899
  %v2901 = vmul.f32 %v2891, 1.442695
  %v2902 = vpow.pop %v2901
  %v2903 = vmul.f32 %v2892, 1.442695
  %v2904 = vpow.pop %v2903
  %v2905 = vadd.f32 %v2894, 1.0
  %v2906 = vadd.f32 %v2896, 1.0
  %v2907 = vadd.f32 %v2898, 1.0
  %v2908 = vadd.f32 %v2900, 1.0
  %v2909 = vadd.f32 %v2902, 1.0
  %v2910 = vadd.f32 %v2904, 1.0
  %v2911 = vrcp.pop %v2905
  %v2912 = vmul.f32 1.0, %v2911
  %v2913 = vrcp.pop %v2906
  %v2914 = vmul.f32 1.0, %v2913
  %v2915 = vrcp.pop %v2907
  %v2916 = vmul.f32 1.0, %v2915
  %v2917 = vrcp.pop %v2908
  %v2918 = vmul.f32 1.0, %v2917
  %v2919 = vrcp.pop %v2909
  %v2920 = vmul.f32 1.0, %v2919
  %v2921 = vrcp.pop %v2910
  %v2922 = vmul.f32 1.0, %v2921
  %v2923 = vtanh.pop %v2880
  %v2924 = vtanh.pop %v2884
  %v2925 = vmul.f32 %v2914, %v2885
  %v2926 = vmul.f32 %v2920, %v2886
  %v2927 = vmul.f32 %v2912, %v2923
  %v2928 = vmul.f32 %v2918, %v2924
  %v2929 = vadd.f32 %v2925, %v2927
  %v2930 = vadd.f32 %v2926, %v2928
  %v2931 = vtanh.pop %v2929
  %v2932 = vtanh.pop %v2930
  %v2933 = vmul.f32 %v2916, %v2931
  %v2934 = vmul.f32 %v2922, %v2932
  %v2935 = vpack.c.bf16 %v2934, %v2933
  %2936 = vst [vmem:[#allocation2] sm:$0xff] %v2935
  %2937 = vst [vmem:[#allocation3] sm:$0xff] %v2929
  %2938 = vst [vmem:[#allocation3 + $0x8] sm:$0xff] %v2930
  %v2939 = vld [vmem:[#allocation4] sm:$0xff]
  %v2940 = vld [vmem:[%s5] sm:$0xff]
  %v2941 = vld [vmem:[%s5 + $0x8] sm:$0xff]
  %v2942 = vld [vmem:[%s5 + $0x10] sm:$0xff]
  %v2943 = vld [vmem:[%s5 + $0x18] sm:$0xff]
  %v2944 = vld [vmem:[%s5 + $0x20] sm:$0xff]
  %v2945 = vld [vmem:[%s5 + $0x28] sm:$0xff]
  %v2946 = vld [vmem:[%s5 + $0x30] sm:$0xff]
  %v2947 = vld [vmem:[%s5 + $0x38] sm:$0xff]
  %v2948 = vld [vmem:[%s5 + $0x40] sm:$0xff]
  %v2949 = vld [vmem:[%s5 + $0x48] sm:$0xff]
  %v2950 = vld [vmem:[%s5 + $0x50] sm:$0xff]
  %v2951 = vld [vmem:[%s5 + $0x58] sm:$0xff]
  %v2952 = vld [vmem:[%s5 + $0x60] sm:$0xff]
  %v2953 = vld [vmem:[%s5 + $0x68] sm:$0xff]
  %v2954 = vld [vmem:[%s5 + $0x70] sm:$0xff]
  %v2955 = vld [vmem:[%s5 + $0x78] sm:$0xff]
  %v2956 = vld [vmem:[%s5 + $0x80] sm:$0xff]
  %v2957 = vld [vmem:[%s5 + $0x88] sm:$0xff]
  %v2958 = vld [vmem:[%s5 + $0x90] sm:$0xff]
  %v2959 = vld [vmem:[%s5 + $0x98] sm:$0xff]
  %v2960 = vld [vmem:[%s5 + $0xa0] sm:$0xff]
  %v2961 = vld [vmem:[%s5 + $0xa8] sm:$0xff]
  %v2962 = vld [vmem:[%s5 + $0xb0] sm:$0xff]
  %v2963 = vld [vmem:[%s5 + $0xb8] sm:$0xff]
  %v2964 = vld [vmem:[%s5 + $0xc0] sm:$0xff]
  %v2965 = vld [vmem:[%s5 + $0xc8] sm:$0xff]
  %v2966 = vld [vmem:[%s5 + $0xd0] sm:$0xff]
  %v2967 = vld [vmem:[%s5 + $0xd8] sm:$0xff]
  %v2968 = vld [vmem:[%s5 + $0xe0] sm:$0xff]
  %v2969 = vld [vmem:[%s5 + $0xe8] sm:$0xff]
  %v2970 = vld [vmem:[%s5 + $0xf0] sm:$0xff]
  %v2971 = vld [vmem:[%s5 + $0xf8] sm:$0xff]
  %v2972 = vld [vmem:[%s4] sm:$0xff]
  %v2973 = vld [vmem:[%s4 + $0x8] sm:$0xff]
  %v2974 = vld [vmem:[%s4 + $0x10] sm:$0xff]
  %v2975 = vld [vmem:[%s4 + $0x18] sm:$0xff]
  %v2976 = vld [vmem:[%s4 + $0x20] sm:$0xff]
  %v2977 = vld [vmem:[%s4 + $0x28] sm:$0xff]
  %v2978 = vld [vmem:[%s4 + $0x30] sm:$0xff]
  %v2979 = vld [vmem:[%s4 + $0x38] sm:$0xff]
  %v2980 = vld [vmem:[%s4 + $0x40] sm:$0xff]
  %v2981 = vld [vmem:[%s4 + $0x48] sm:$0xff]
  %v2982 = vld [vmem:[%s4 + $0x50] sm:$0xff]
  %v2983 = vld [vmem:[%s4 + $0x58] sm:$0xff]
  %v2984 = vld [vmem:[%s4 + $0x60] sm:$0xff]
  %v2985 = vld [vmem:[%s4 + $0x68] sm:$0xff]
  %v2986 = vld [vmem:[%s4 + $0x70] sm:$0xff]
  %v2987 = vld [vmem:[%s4 + $0x78] sm:$0xff]
  %v2988 = vld [vmem:[%s4 + $0x80] sm:$0xff]
  %v2989 = vld [vmem:[%s4 + $0x88] sm:$0xff]
  %v2990 = vld [vmem:[%s4 + $0x90] sm:$0xff]
  %v2991 = vld [vmem:[%s4 + $0x98] sm:$0xff]
  %v2992 = vld [vmem:[%s4 + $0xa0] sm:$0xff]
  %v2993 = vld [vmem:[%s4 + $0xa8] sm:$0xff]
  %v2994 = vld [vmem:[%s4 + $0xb0] sm:$0xff]
  %v2995 = vld [vmem:[%s4 + $0xb8] sm:$0xff]
  %v2996 = vld [vmem:[%s4 + $0xc0] sm:$0xff]
  %v2997 = vld [vmem:[%s4 + $0xc8] sm:$0xff]
  %v2998 = vld [vmem:[%s4 + $0xd0] sm:$0xff]
  %v2999 = vld [vmem:[%s4 + $0xd8] sm:$0xff]
  %v3000 = vld [vmem:[%s4 + $0xe0] sm:$0xff]
  %v3001 = vld [vmem:[%s4 + $0xe8] sm:$0xff]
  %v3002 = vld [vmem:[%s4 + $0xf0] sm:$0xff]
  %v3003 = vld [vmem:[%s4 + $0xf8] sm:$0xff]
  %v3036 = vunpack.c.l.b16 %v2972
  %v3037 = vunpack.c.h.b16 %v2972
  %v3038 = vunpack.c.l.b16 %v2973
  %v3039 = vunpack.c.h.b16 %v2973
  %v3040 = vunpack.c.l.b16 %v2974
  %v3041 = vunpack.c.h.b16 %v2974
  %v3042 = vunpack.c.l.b16 %v2975
  %v3043 = vunpack.c.h.b16 %v2975
  %v3044 = vunpack.c.l.b16 %v2976
  %v3045 = vunpack.c.h.b16 %v2976
  %v3046 = vunpack.c.l.b16 %v2977
  %v3047 = vunpack.c.h.b16 %v2977
  %v3048 = vunpack.c.l.b16 %v2978
  %v3049 = vunpack.c.h.b16 %v2978
  %v3050 = vunpack.c.l.b16 %v2979
  %v3051 = vunpack.c.h.b16 %v2979
  %v3052 = vunpack.c.l.b16 %v2980
  %v3053 = vunpack.c.h.b16 %v2980
  %v3054 = vunpack.c.l.b16 %v2981
  %v3055 = vunpack.c.h.b16 %v2981
  %v3056 = vunpack.c.l.b16 %v2982
  %v3057 = vunpack.c.h.b16 %v2982
  %v3058 = vunpack.c.l.b16 %v2983
  %v3059 = vunpack.c.h.b16 %v2983
  %v3060 = vunpack.c.l.b16 %v2984
  %v3061 = vunpack.c.h.b16 %v2984
  %v3062 = vunpack.c.l.b16 %v2985
  %v3063 = vunpack.c.h.b16 %v2985
  %v3064 = vunpack.c.l.b16 %v2986
  %v3065 = vunpack.c.h.b16 %v2986
  %v3066 = vunpack.c.l.b16 %v2987
  %v3067 = vunpack.c.h.b16 %v2987
  %v3068 = vunpack.c.l.b16 %v2988
  %v3069 = vunpack.c.h.b16 %v2988
  %v3070 = vunpack.c.l.b16 %v2989
  %v3071 = vunpack.c.h.b16 %v2989
  %v3072 = vunpack.c.l.b16 %v2990
  %v3073 = vunpack.c.h.b16 %v2990
  %v3074 = vunpack.c.l.b16 %v2991
  %v3075 = vunpack.c.h.b16 %v2991
  %v3076 = vunpack.c.l.b16 %v2992
  %v3077 = vunpack.c.h.b16 %v2992
  %v3078 = vunpack.c.l.b16 %v2993
  %v3079 = vunpack.c.h.b16 %v2993
  %v3080 = vunpack.c.l.b16 %v2994
  %v3081 = vunpack.c.h.b16 %v2994
  %v3082 = vunpack.c.l.b16 %v2995
  %v3083 = vunpack.c.h.b16 %v2995
  %v3084 = vunpack.c.l.b16 %v2996
  %v3085 = vunpack.c.h.b16 %v2996
  %v3086 = vunpack.c.l.b16 %v2997
  %v3087 = vunpack.c.h.b16 %v2997
  %v3088 = vunpack.c.l.b16 %v2998
  %v3089 = vunpack.c.h.b16 %v2998
  %v3090 = vunpack.c.l.b16 %v2999
  %v3091 = vunpack.c.h.b16 %v2999
  %v3092 = vunpack.c.l.b16 %v3000
  %v3093 = vunpack.c.h.b16 %v3000
  %v3094 = vunpack.c.l.b16 %v3001
  %v3095 = vunpack.c.h.b16 %v3001
  %v3096 = vunpack.c.l.b16 %v3002
  %v3097 = vunpack.c.h.b16 %v3002
  %v3098 = vunpack.c.l.b16 %v3003
  %v3099 = vunpack.c.h.b16 %v3003
  %v3100 = vpack.c.b16 %v3040, %v3036
  %v3101 = vpack.c.b16 %v3041, %v3037
  %v3102 = vpack.c.b16 %v3042, %v3038
  %v3103 = vpack.c.b16 %v3043, %v3039
  %v3104 = vpack.c.b16 %v3048, %v3044
  %v3105 = vpack.c.b16 %v3049, %v3045
  %v3106 = vpack.c.b16 %v3050, %v3046
  %v3107 = vpack.c.b16 %v3051, %v3047
  %v3108 = vpack.c.b16 %v3056, %v3052
  %v3109 = vpack.c.b16 %v3057, %v3053
  %v3110 = vpack.c.b16 %v3058, %v3054
  %v3111 = vpack.c.b16 %v3059, %v3055
  %v3112 = vpack.c.b16 %v3064, %v3060
  %v3113 = vpack.c.b16 %v3065, %v3061
  %v3114 = vpack.c.b16 %v3066, %v3062
  %v3115 = vpack.c.b16 %v3067, %v3063
  %v3116 = vpack.c.b16 %v3072, %v3068
  %v3117 = vpack.c.b16 %v3073, %v3069
  %v3118 = vpack.c.b16 %v3074, %v3070
  %v3119 = vpack.c.b16 %v3075, %v3071
  %v3120 = vpack.c.b16 %v3080, %v3076
  %v3121 = vpack.c.b16 %v3081, %v3077
  %v3122 = vpack.c.b16 %v3082, %v3078
  %v3123 = vpack.c.b16 %v3083, %v3079
  %v3124 = vpack.c.b16 %v3088, %v3084
  %v3125 = vpack.c.b16 %v3089, %v3085
  %v3126 = vpack.c.b16 %v3090, %v3086
  %v3127 = vpack.c.b16 %v3091, %v3087
  %v3128 = vpack.c.b16 %v3096, %v3092
  %v3129 = vpack.c.b16 %v3097, %v3093
  %v3130 = vpack.c.b16 %v3098, %v3094
  %v3131 = vpack.c.b16 %v3099, %v3095
  %3164 = vmatprep.subr.bf16.mxu0 %v3101
  %3165 = vmatpush1.bf16.msra.mxu0 %v3100
  %3166 = vmatprep.subr.bf16.mxu0 %v3105
  %3167 = vmatpush1.bf16.msra.mxu0 %v3104
  %3168 = vmatprep.subr.bf16.mxu0 %v3109
  %3169 = vmatpush1.bf16.msra.mxu0 %v3108
  %3170 = vmatprep.subr.bf16.mxu0 %v3113
  %3171 = vmatpush1.bf16.msra.mxu0 %v3112
  %3172 = vmatprep.subr.bf16.mxu0 %v3117
  %3173 = vmatpush1.bf16.msra.mxu0 %v3116
  %3174 = vmatprep.subr.bf16.mxu0 %v3121
  %3175 = vmatpush1.bf16.msra.mxu0 %v3120
  %3176 = vmatprep.subr.bf16.mxu0 %v3125
  %3177 = vmatpush1.bf16.msra.mxu0 %v3124
  %3178 = vmatprep.subr.bf16.mxu0 %v3129
  %3179 = vmatpush1.bf16.msra.mxu0 %v3128
  %3180 = vmatprep.subr.bf16.mxu0 0
  %3181 = vmatpush1.bf16.msra.mxu0 0
  %3182 = vmatprep.subr.bf16.mxu0 0
  %3183 = vmatpush1.bf16.msra.mxu0 0
  %3184 = vmatprep.subr.bf16.mxu0 0
  %3185 = vmatpush1.bf16.msra.mxu0 0
  %3186 = vmatprep.subr.bf16.mxu0 0
  %3187 = vmatpush1.bf16.msra.mxu0 0
  %3188 = vmatprep.subr.bf16.mxu0 0
  %3189 = vmatpush1.bf16.msra.mxu0 0
  %3190 = vmatprep.subr.bf16.mxu0 0
  %3191 = vmatpush1.bf16.msra.mxu0 0
  %3192 = vmatprep.subr.bf16.mxu0 0
  %3193 = vmatpush1.bf16.msra.mxu0 0
  %3194 = vmatprep.subr.bf16.mxu0 0
  %3195 = vmatpush1.bf16.msra.mxu0 0
  %3196 = vmatprep.mubr.bf16.mxu0 0
  %3197 = vmatmul.mubr.bf16.gmra.mrb[0].mxu0 %v2935
  %v3198 = vpop.f32.mrb[0].mxu0
  %v3199 = vadd.f32 0.0, %v3198
  %v3200 = vpop.f32.mrb[0].mxu0
  %v3201 = vadd.f32 0.0, %v3200
  %v3202 = vpop.f32.mrb[0].mxu0
  %v3203 = vadd.f32 0.0, %v3202
  %v3204 = vpop.f32.mrb[0].mxu0
  %v3205 = vadd.f32 0.0, %v3204
  %3206 = vdwg.mxu0
  %3207 = vmatprep.subr.bf16.mxu0 %v3103
  %3208 = vmatpush1.bf16.msra.mxu0 %v3102
  %3209 = vmatprep.subr.bf16.mxu0 %v3107
  %3210 = vmatpush1.bf16.msra.mxu0 %v3106
  %3211 = vmatprep.subr.bf16.mxu0 %v3111
  %3212 = vmatpush1.bf16.msra.mxu0 %v3110
  %3213 = vmatprep.subr.bf16.mxu0 %v3115
  %3214 = vmatpush1.bf16.msra.mxu0 %v3114
  %3215 = vmatprep.subr.bf16.mxu0 %v3119
  %3216 = vmatpush1.bf16.msra.mxu0 %v3118
  %3217 = vmatprep.subr.bf16.mxu0 %v3123
  %3218 = vmatpush1.bf16.msra.mxu0 %v3122
  %3219 = vmatprep.subr.bf16.mxu0 %v3127
  %3220 = vmatpush1.bf16.msra.mxu0 %v3126
  %3221 = vmatprep.subr.bf16.mxu0 %v3131
  %3222 = vmatpush1.bf16.msra.mxu0 %v3130
  %3223 = vmatprep.subr.bf16.mxu0 0
  %3224 = vmatpush1.bf16.msra.mxu0 0
  %3225 = vmatprep.subr.bf16.mxu0 0
  %3226 = vmatpush1.bf16.msra.mxu0 0
  %3227 = vmatprep.subr.bf16.mxu0 0
  %3228 = vmatpush1.bf16.msra.mxu0 0
  %3229 = vmatprep.subr.bf16.mxu0 0
  %3230 = vmatpush1.bf16.msra.mxu0 0
  %3231 = vmatprep.subr.bf16.mxu0 0
  %3232 = vmatpush1.bf16.msra.mxu0 0
  %3233 = vmatprep.subr.bf16.mxu0 0
  %3234 = vmatpush1.bf16.msra.mxu0 0
  %3235 = vmatprep.subr.bf16.mxu0 0
  %3236 = vmatpush1.bf16.msra.mxu0 0
  %3237 = vmatprep.subr.bf16.mxu0 0
  %3238 = vmatpush1.bf16.msra.mxu0 0
  %3239 = vmatprep.mubr.bf16.mxu0 0
  %3240 = vmatmul.mubr.bf16.gmra.mrb[0].mxu0 %v2935
  %v3241 = vpop.f32.mrb[0].mxu0
  %v3242 = vadd.f32 0.0, %v3241
  %v3243 = vpop.f32.mrb[0].mxu0
  %v3244 = vadd.f32 0.0, %v3243
  %v3245 = vpop.f32.mrb[0].mxu0
  %v3246 = vadd.f32 0.0, %v3245
  %v3247 = vpop.f32.mrb[0].mxu0
  %v3248 = vadd.f32 0.0, %v3247
  %3249 = vdwg.mxu0
  %v3282 = vunpack.c.l.b16 %v2940
  %v3283 = vunpack.c.h.b16 %v2940
  %v3284 = vunpack.c.l.b16 %v2941
  %v3285 = vunpack.c.h.b16 %v2941
  %v3286 = vunpack.c.l.b16 %v2942
  %v3287 = vunpack.c.h.b16 %v2942
  %v3288 = vunpack.c.l.b16 %v2943
  %v3289 = vunpack.c.h.b16 %v2943
  %v3290 = vunpack.c.l.b16 %v2944
  %v3291 = vunpack.c.h.b16 %v2944
  %v3292 = vunpack.c.l.b16 %v2945
  %v3293 = vunpack.c.h.b16 %v2945
  %v3294 = vunpack.c.l.b16 %v2946
  %v3295 = vunpack.c.h.b16 %v2946
  %v3296 = vunpack.c.l.b16 %v2947
  %v3297 = vunpack.c.h.b16 %v2947
  %v3298 = vunpack.c.l.b16 %v2948
  %v3299 = vunpack.c.h.b16 %v2948
  %v3300 = vunpack.c.l.b16 %v2949
  %v3301 = vunpack.c.h.b16 %v2949
  %v3302 = vunpack.c.l.b16 %v2950
  %v3303 = vunpack.c.h.b16 %v2950
  %v3304 = vunpack.c.l.b16 %v2951
  %v3305 = vunpack.c.h.b16 %v2951
  %v3306 = vunpack.c.l.b16 %v2952
  %v3307 = vunpack.c.h.b16 %v2952
  %v3308 = vunpack.c.l.b16 %v2953
  %v3309 = vunpack.c.h.b16 %v2953
  %v3310 = vunpack.c.l.b16 %v2954
  %v3311 = vunpack.c.h.b16 %v2954
  %v3312 = vunpack.c.l.b16 %v2955
  %v3313 = vunpack.c.h.b16 %v2955
  %v3314 = vunpack.c.l.b16 %v2956
  %v3315 = vunpack.c.h.b16 %v2956
  %v3316 = vunpack.c.l.b16 %v2957
  %v3317 = vunpack.c.h.b16 %v2957
  %v3318 = vunpack.c.l.b16 %v2958
  %v3319 = vunpack.c.h.b16 %v2958
  %v3320 = vunpack.c.l.b16 %v2959
  %v3321 = vunpack.c.h.b16 %v2959
  %v3322 = vunpack.c.l.b16 %v2960
  %v3323 = vunpack.c.h.b16 %v2960
  %v3324 = vunpack.c.l.b16 %v2961
  %v3325 = vunpack.c.h.b16 %v2961
  %v3326 = vunpack.c.l.b16 %v2962
  %v3327 = vunpack.c.h.b16 %v2962
  %v3328 = vunpack.c.l.b16 %v2963
  %v3329 = vunpack.c.h.b16 %v2963
  %v3330 = vunpack.c.l.b16 %v2964
  %v3331 = vunpack.c.h.b16 %v2964
  %v3332 = vunpack.c.l.b16 %v2965
  %v3333 = vunpack.c.h.b16 %v2965
  %v3334 = vunpack.c.l.b16 %v2966
  %v3335 = vunpack.c.h.b16 %v2966
  %v3336 = vunpack.c.l.b16 %v2967
  %v3337 = vunpack.c.h.b16 %v2967
  %v3338 = vunpack.c.l.b16 %v2968
  %v3339 = vunpack.c.h.b16 %v2968
  %v3340 = vunpack.c.l.b16 %v2969
  %v3341 = vunpack.c.h.b16 %v2969
  %v3342 = vunpack.c.l.b16 %v2970
  %v3343 = vunpack.c.h.b16 %v2970
  %v3344 = vunpack.c.l.b16 %v2971
  %v3345 = vunpack.c.h.b16 %v2971
  %v3346 = vpack.c.b16 %v3286, %v3282
  %v3347 = vpack.c.b16 %v3287, %v3283
  %v3348 = vpack.c.b16 %v3288, %v3284
  %v3349 = vpack.c.b16 %v3289, %v3285
  %v3350 = vpack.c.b16 %v3294, %v3290
  %v3351 = vpack.c.b16 %v3295, %v3291
  %v3352 = vpack.c.b16 %v3296, %v3292
  %v3353 = vpack.c.b16 %v3297, %v3293
  %v3354 = vpack.c.b16 %v3302, %v3298
  %v3355 = vpack.c.b16 %v3303, %v3299
  %v3356 = vpack.c.b16 %v3304, %v3300
  %v3357 = vpack.c.b16 %v3305, %v3301
  %v3358 = vpack.c.b16 %v3310, %v3306
  %v3359 = vpack.c.b16 %v3311, %v3307
  %v3360 = vpack.c.b16 %v3312, %v3308
  %v3361 = vpack.c.b16 %v3313, %v3309
  %v3362 = vpack.c.b16 %v3318, %v3314
  %v3363 = vpack.c.b16 %v3319, %v3315
  %v3364 = vpack.c.b16 %v3320, %v3316
  %v3365 = vpack.c.b16 %v3321, %v3317
  %v3366 = vpack.c.b16 %v3326, %v3322
  %v3367 = vpack.c.b16 %v3327, %v3323
  %v3368 = vpack.c.b16 %v3328, %v3324
  %v3369 = vpack.c.b16 %v3329, %v3325
  %v3370 = vpack.c.b16 %v3334, %v3330
  %v3371 = vpack.c.b16 %v3335, %v3331
  %v3372 = vpack.c.b16 %v3336, %v3332
  %v3373 = vpack.c.b16 %v3337, %v3333
  %v3374 = vpack.c.b16 %v3342, %v3338
  %v3375 = vpack.c.b16 %v3343, %v3339
  %v3376 = vpack.c.b16 %v3344, %v3340
  %v3377 = vpack.c.b16 %v3345, %v3341
  %3410 = vmatprep.subr.bf16.mxu0 %v3347
  %3411 = vmatpush1.bf16.msra.mxu0 %v3346
  %3412 = vmatprep.subr.bf16.mxu0 %v3351
  %3413 = vmatpush1.bf16.msra.mxu0 %v3350
  %3414 = vmatprep.subr.bf16.mxu0 %v3355
  %3415 = vmatpush1.bf16.msra.mxu0 %v3354
  %3416 = vmatprep.subr.bf16.mxu0 %v3359
  %3417 = vmatpush1.bf16.msra.mxu0 %v3358
  %3418 = vmatprep.subr.bf16.mxu0 %v3363
  %3419 = vmatpush1.bf16.msra.mxu0 %v3362
  %3420 = vmatprep.subr.bf16.mxu0 %v3367
  %3421 = vmatpush1.bf16.msra.mxu0 %v3366
  %3422 = vmatprep.subr.bf16.mxu0 %v3371
  %3423 = vmatpush1.bf16.msra.mxu0 %v3370
  %3424 = vmatprep.subr.bf16.mxu0 %v3375
  %3425 = vmatpush1.bf16.msra.mxu0 %v3374
  %3426 = vmatprep.subr.bf16.mxu0 0
  %3427 = vmatpush1.bf16.msra.mxu0 0
  %3428 = vmatprep.subr.bf16.mxu0 0
  %3429 = vmatpush1.bf16.msra.mxu0 0
  %3430 = vmatprep.subr.bf16.mxu0 0
  %3431 = vmatpush1.bf16.msra.mxu0 0
  %3432 = vmatprep.subr.bf16.mxu0 0
  %3433 = vmatpush1.bf16.msra.mxu0 0
  %3434 = vmatprep.subr.bf16.mxu0 0
  %3435 = vmatpush1.bf16.msra.mxu0 0
  %3436 = vmatprep.subr.bf16.mxu0 0
  %3437 = vmatpush1.bf16.msra.mxu0 0
  %3438 = vmatprep.subr.bf16.mxu0 0
  %3439 = vmatpush1.bf16.msra.mxu0 0
  %3440 = vmatprep.subr.bf16.mxu0 0
  %3441 = vmatpush1.bf16.msra.mxu0 0
  %3442 = vmatprep.mubr.bf16.mxu0 0
  %3443 = vmatmul.mubr.bf16.gmra.mrb[0].mxu0 %v2939
  %v3444 = vpop.f32.mrb[0].mxu0
  %v3445 = vadd.f32 %v3199, %v3444
  %v3446 = vpop.f32.mrb[0].mxu0
  %v3447 = vadd.f32 %v3201, %v3446
  %v3448 = vpop.f32.mrb[0].mxu0
  %v3449 = vadd.f32 %v3203, %v3448
  %v3450 = vpop.f32.mrb[0].mxu0
  %v3451 = vadd.f32 %v3205, %v3450
  %3452 = vdwg.mxu0
  %3453 = vmatprep.subr.bf16.mxu0 %v3349
  %3454 = vmatpush1.bf16.msra.mxu0 %v3348
  %3455 = vmatprep.subr.bf16.mxu0 %v3353
  %3456 = vmatpush1.bf16.msra.mxu0 %v3352
  %3457 = vmatprep.subr.bf16.mxu0 %v3357
  %3458 = vmatpush1.bf16.msra.mxu0 %v3356
  %3459 = vmatprep.subr.bf16.mxu0 %v3361
  %3460 = vmatpush1.bf16.msra.mxu0 %v3360
  %3461 = vmatprep.subr.bf16.mxu0 %v3365
  %3462 = vmatpush1.bf16.msra.mxu0 %v3364
  %3463 = vmatprep.subr.bf16.mxu0 %v3369
  %3464 = vmatpush1.bf16.msra.mxu0 %v3368
  %3465 = vmatprep.subr.bf16.mxu0 %v3373
  %3466 = vmatpush1.bf16.msra.mxu0 %v3372
  %3467 = vmatprep.subr.bf16.mxu0 %v3377
  %3468 = vmatpush1.bf16.msra.mxu0 %v3376
  %3469 = vmatprep.subr.bf16.mxu0 0
  %3470 = vmatpush1.bf16.msra.mxu0 0
  %3471 = vmatprep.subr.bf16.mxu0 0
  %3472 = vmatpush1.bf16.msra.mxu0 0
  %3473 = vmatprep.subr.bf16.mxu0 0
  %3474 = vmatpush1.bf16.msra.mxu0 0
  %3475 = vmatprep.subr.bf16.mxu0 0
  %3476 = vmatpush1.bf16.msra.mxu0 0
  %3477 = vmatprep.subr.bf16.mxu0 0
  %3478 = vmatpush1.bf16.msra.mxu0 0
  %3479 = vmatprep.subr.bf16.mxu0 0
  %3480 = vmatpush1.bf16.msra.mxu0 0
  %3481 = vmatprep.subr.bf16.mxu0 0
  %3482 = vmatpush1.bf16.msra.mxu0 0
  %3483 = vmatprep.subr.bf16.mxu0 0
  %3484 = vmatpush1.bf16.msra.mxu0 0
  %3485 = vmatprep.mubr.bf16.mxu0 0
  %3486 = vmatmul.mubr.bf16.gmra.mrb[0].mxu0 %v2939
  %v3487 = vpop.f32.mrb[0].mxu0
  %v3488 = vadd.f32 %v3242, %v3487
  %v3489 = vpop.f32.mrb[0].mxu0
  %v3490 = vadd.f32 %v3244, %v3489
  %v3491 = vpop.f32.mrb[0].mxu0
  %v3492 = vadd.f32 %v3246, %v3491
  %v3493 = vpop.f32.mrb[0].mxu0
  %v3494 = vadd.f32 %v3248, %v3493
  %3495 = vdwg.mxu0
  %v3496 = vadd.f32 %v3445, %v616
  %v3497 = vadd.f32 %v3447, %v620
  %v3498 = vadd.f32 %v3488, %v624
  %v3499 = vadd.f32 %v3490, %v628
  %v3500 = vadd.f32 %v3449, %v616
  %v3501 = vadd.f32 %v3451, %v620
  %v3502 = vadd.f32 %v3492, %v624
  %v3503 = vadd.f32 %v3494, %v628
  %v3504 = vld [vmem:[#allocation5] sm:$0xff]
  %v3505 = vld [vmem:[#allocation5 + $0x8] sm:$0xff]
  %v3506 = vxor.u32 %v3496, 2147483648
  %v3507 = vxor.u32 %v3497, 2147483648
  %v3508 = vxor.u32 %v3498, 2147483648
  %v3509 = vxor.u32 %v3500, 2147483648
  %v3510 = vxor.u32 %v3501, 2147483648
  %v3511 = vxor.u32 %v3502, 2147483648
  %v3512 = vmul.f32 %v3506, 1.442695
  %v3513 = vpow.pop %v3512
  %v3514 = vmul.f32 %v3507, 1.442695
  %v3515 = vpow.pop %v3514
  %v3516 = vmul.f32 %v3508, 1.442695
  %v3517 = vpow.pop %v3516
  %v3518 = vmul.f32 %v3509, 1.442695
  %v3519 = vpow.pop %v3518
  %v3520 = vmul.f32 %v3510, 1.442695
  %v3521 = vpow.pop %v3520
  %v3522 = vmul.f32 %v3511, 1.442695
  %v3523 = vpow.pop %v3522
  %v3524 = vadd.f32 %v3513, 1.0
  %v3525 = vadd.f32 %v3515, 1.0
  %v3526 = vadd.f32 %v3517, 1.0
  %v3527 = vadd.f32 %v3519, 1.0
  %v3528 = vadd.f32 %v3521, 1.0
  %v3529 = vadd.f32 %v3523, 1.0
  %v3530 = vrcp.pop %v3524
  %v3531 = vmul.f32 1.0, %v3530
  %v3532 = vrcp.pop %v3525
  %v3533 = vmul.f32 1.0, %v3532
  %v3534 = vrcp.pop %v3526
  %v3535 = vmul.f32 1.0, %v3534
  %v3536 = vrcp.pop %v3527
  %v3537 = vmul.f32 1.0, %v3536
  %v3538 = vrcp.pop %v3528
  %v3539 = vmul.f32 1.0, %v3538
  %v3540 = vrcp.pop %v3529
  %v3541 = vmul.f32 1.0, %v3540
  %v3542 = vtanh.pop %v3499
  %v3543 = vtanh.pop %v3503
  %v3544 = vmul.f32 %v3533, %v3504
  %v3545 = vmul.f32 %v3539, %v3505
  %v3546 = vmul.f32 %v3531, %v3542
  %v3547 = vmul.f32 %v3537, %v3543
  %v3548 = vadd.f32 %v3544, %v3546
  %v3549 = vadd.f32 %v3545, %v3547
  %v3550 = vtanh.pop %v3548
  %v3551 = vtanh.pop %v3549
  %v3552 = vmul.f32 %v3535, %v3550
  %v3553 = vmul.f32 %v3541, %v3551
  %v3554 = vpack.c.bf16 %v3553, %v3552
  %3555 = vst [vmem:[#allocation4] sm:$0xff] %v3554
  %3556 = vst [vmem:[#allocation5] sm:$0xff] %v3548
  %3557 = vst [vmem:[#allocation5 + $0x8] sm:$0xff] %v3549
  %s3558 = smul.u32 3, 4
  %s3559 = smul.addr %s3558, 8
  %s3560 = scalar_lea.vmem [#allocation6], %s3559
  %v3561 = vld [vmem:[%s3560] sm:$0xff]
  %v3562 = vld [vmem:[%s3560 + $0x8] sm:$0xff]
  %v3563 = vld [vmem:[%s3560 + $0x10] sm:$0xff]
  %v3564 = vld [vmem:[%s3560 + $0x18] sm:$0xff]
  %v3565 = vld [vmem:[#allocation2] sm:$0xff]
  %v3566 = vld [vmem:[%s2] sm:$0xff]
  %v3567 = vld [vmem:[%s2 + $0x8] sm:$0xff]
  %v3568 = vld [vmem:[%s2 + $0x10] sm:$0xff]
  %v3569 = vld [vmem:[%s2 + $0x18] sm:$0xff]
  %v3570 = vld [vmem:[%s2 + $0x20] sm:$0xff]
  %v3571 = vld [vmem:[%s2 + $0x28] sm:$0xff]
  %v3572 = vld [vmem:[%s2 + $0x30] sm:$0xff]
  %v3573 = vld [vmem:[%s2 + $0x38] sm:$0xff]
  %v3574 = vld [vmem:[%s2 + $0x40] sm:$0xff]
  %v3575 = vld [vmem:[%s2 + $0x48] sm:$0xff]
  %v3576 = vld [vmem:[%s2 + $0x50] sm:$0xff]
  %v3577 = vld [vmem:[%s2 + $0x58] sm:$0xff]
  %v3578 = vld [vmem:[%s2 + $0x60] sm:$0xff]
  %v3579 = vld [vmem:[%s2 + $0x68] sm:$0xff]
  %v3580 = vld [vmem:[%s2 + $0x70] sm:$0xff]
  %v3581 = vld [vmem:[%s2 + $0x78] sm:$0xff]
  %v3582 = vld [vmem:[%s2 + $0x80] sm:$0xff]
  %v3583 = vld [vmem:[%s2 + $0x88] sm:$0xff]
  %v3584 = vld [vmem:[%s2 + $0x90] sm:$0xff]
  %v3585 = vld [vmem:[%s2 + $0x98] sm:$0xff]
  %v3586 = vld [vmem:[%s2 + $0xa0] sm:$0xff]
  %v3587 = vld [vmem:[%s2 + $0xa8] sm:$0xff]
  %v3588 = vld [vmem:[%s2 + $0xb0] sm:$0xff]
  %v3589 = vld [vmem:[%s2 + $0xb8] sm:$0xff]
  %v3590 = vld [vmem:[%s2 + $0xc0] sm:$0xff]
  %v3591 = vld [vmem:[%s2 + $0xc8] sm:$0xff]
  %v3592 = vld [vmem:[%s2 + $0xd0] sm:$0xff]
  %v3593 = vld [vmem:[%s2 + $0xd8] sm:$0xff]
  %v3594 = vld [vmem:[%s2 + $0xe0] sm:$0xff]
  %v3595 = vld [vmem:[%s2 + $0xe8] sm:$0xff]
  %v3596 = vld [vmem:[%s2 + $0xf0] sm:$0xff]
  %v3597 = vld [vmem:[%s2 + $0xf8] sm:$0xff]
  %v3630 = vunpack.c.l.b16 %v3566
  %v3631 = vunpack.c.h.b16 %v3566
  %v3632 = vunpack.c.l.b16 %v3567
  %v3633 = vunpack.c.h.b16 %v3567
  %v3634 = vunpack.c.l.b16 %v3568
  %v3635 = vunpack.c.h.b16 %v3568
  %v3636 = vunpack.c.l.b16 %v3569
  %v3637 = vunpack.c.h.b16 %v3569
  %v3638 = vunpack.c.l.b16 %v3570
  %v3639 = vunpack.c.h.b16 %v3570
  %v3640 = vunpack.c.l.b16 %v3571
  %v3641 = vunpack.c.h.b16 %v3571
  %v3642 = vunpack.c.l.b16 %v3572
  %v3643 = vunpack.c.h.b16 %v3572
  %v3644 = vunpack.c.l.b16 %v3573
  %v3645 = vunpack.c.h.b16 %v3573
  %v3646 = vunpack.c.l.b16 %v3574
  %v3647 = vunpack.c.h.b16 %v3574
  %v3648 = vunpack.c.l.b16 %v3575
  %v3649 = vunpack.c.h.b16 %v3575
  %v3650 = vunpack.c.l.b16 %v3576
  %v3651 = vunpack.c.h.b16 %v3576
  %v3652 = vunpack.c.l.b16 %v3577
  %v3653 = vunpack.c.h.b16 %v3577
  %v3654 = vunpack.c.l.b16 %v3578
  %v3655 = vunpack.c.h.b16 %v3578
  %v3656 = vunpack.c.l.b16 %v3579
  %v3657 = vunpack.c.h.b16 %v3579
  %v3658 = vunpack.c.l.b16 %v3580
  %v3659 = vunpack.c.h.b16 %v3580
  %v3660 = vunpack.c.l.b16 %v3581
  %v3661 = vunpack.c.h.b16 %v3581
  %v3662 = vunpack.c.l.b16 %v3582
  %v3663 = vunpack.c.h.b16 %v3582
  %v3664 = vunpack.c.l.b16 %v3583
  %v3665 = vunpack.c.h.b16 %v3583
  %v3666 = vunpack.c.l.b16 %v3584
  %v3667 = vunpack.c.h.b16 %v3584
  %v3668 = vunpack.c.l.b16 %v3585
  %v3669 = vunpack.c.h.b16 %v3585
  %v3670 = vunpack.c.l.b16 %v3586
  %v3671 = vunpack.c.h.b16 %v3586
  %v3672 = vunpack.c.l.b16 %v3587
  %v3673 = vunpack.c.h.b16 %v3587
  %v3674 = vunpack.c.l.b16 %v3588
  %v3675 = vunpack.c.h.b16 %v3588
  %v3676 = vunpack.c.l.b16 %v3589
  %v3677 = vunpack.c.h.b16 %v3589
  %v3678 = vunpack.c.l.b16 %v3590
  %v3679 = vunpack.c.h.b16 %v3590
  %v3680 = vunpack.c.l.b16 %v3591
  %v3681 = vunpack.c.h.b16 %v3591
  %v3682 = vunpack.c.l.b16 %v3592
  %v3683 = vunpack.c.h.b16 %v3592
  %v3684 = vunpack.c.l.b16 %v3593
  %v3685 = vunpack.c.h.b16 %v3593
  %v3686 = vunpack.c.l.b16 %v3594
  %v3687 = vunpack.c.h.b16 %v3594
  %v3688 = vunpack.c.l.b16 %v3595
  %v3689 = vunpack.c.h.b16 %v3595
  %v3690 = vunpack.c.l.b16 %v3596
  %v3691 = vunpack.c.h.b16 %v3596
  %v3692 = vunpack.c.l.b16 %v3597
  %v3693 = vunpack.c.h.b16 %v3597
  %v3694 = vpack.c.b16 %v3634, %v3630
  %v3695 = vpack.c.b16 %v3635, %v3631
  %v3696 = vpack.c.b16 %v3636, %v3632
  %v3697 = vpack.c.b16 %v3637, %v3633
  %v3698 = vpack.c.b16 %v3642, %v3638
  %v3699 = vpack.c.b16 %v3643, %v3639
  %v3700 = vpack.c.b16 %v3644, %v3640
  %v3701 = vpack.c.b16 %v3645, %v3641
  %v3702 = vpack.c.b16 %v3650, %v3646
  %v3703 = vpack.c.b16 %v3651, %v3647
  %v3704 = vpack.c.b16 %v3652, %v3648
  %v3705 = vpack.c.b16 %v3653, %v3649
  %v3706 = vpack.c.b16 %v3658, %v3654
  %v3707 = vpack.c.b16 %v3659, %v3655
  %v3708 = vpack.c.b16 %v3660, %v3656
  %v3709 = vpack.c.b16 %v3661, %v3657
  %v3710 = vpack.c.b16 %v3666, %v3662
  %v3711 = vpack.c.b16 %v3667, %v3663
  %v3712 = vpack.c.b16 %v3668, %v3664
  %v3713 = vpack.c.b16 %v3669, %v3665
  %v3714 = vpack.c.b16 %v3674, %v3670
  %v3715 = vpack.c.b16 %v3675, %v3671
  %v3716 = vpack.c.b16 %v3676, %v3672
  %v3717 = vpack.c.b16 %v3677, %v3673
  %v3718 = vpack.c.b16 %v3682, %v3678
  %v3719 = vpack.c.b16 %v3683, %v3679
  %v3720 = vpack.c.b16 %v3684, %v3680
  %v3721 = vpack.c.b16 %v3685, %v3681
  %v3722 = vpack.c.b16 %v3690, %v3686
  %v3723 = vpack.c.b16 %v3691, %v3687
  %v3724 = vpack.c.b16 %v3692, %v3688
  %v3725 = vpack.c.b16 %v3693, %v3689
  %3758 = vmatprep.subr.bf16.mxu0 %v3695
  %3759 = vmatpush1.bf16.msra.mxu0 %v3694
  %3760 = vmatprep.subr.bf16.mxu0 %v3699
  %3761 = vmatpush1.bf16.msra.mxu0 %v3698
  %3762 = vmatprep.subr.bf16.mxu0 %v3703
  %3763 = vmatpush1.bf16.msra.mxu0 %v3702
  %3764 = vmatprep.subr.bf16.mxu0 %v3707
  %3765 = vmatpush1.bf16.msra.mxu0 %v3706
  %3766 = vmatprep.subr.bf16.mxu0 %v3711
  %3767 = vmatpush1.bf16.msra.mxu0 %v3710
  %3768 = vmatprep.subr.bf16.mxu0 %v3715
  %3769 = vmatpush1.bf16.msra.mxu0 %v3714
  %3770 = vmatprep.subr.bf16.mxu0 %v3719
  %3771 = vmatpush1.bf16.msra.mxu0 %v3718
  %3772 = vmatprep.subr.bf16.mxu0 %v3723
  %3773 = vmatpush1.bf16.msra.mxu0 %v3722
  %3774 = vmatprep.subr.bf16.mxu0 0
  %3775 = vmatpush1.bf16.msra.mxu0 0
  %3776 = vmatprep.subr.bf16.mxu0 0
  %3777 = vmatpush1.bf16.msra.mxu0 0
  %3778 = vmatprep.subr.bf16.mxu0 0
  %3779 = vmatpush1.bf16.msra.mxu0 0
  %3780 = vmatprep.subr.bf16.mxu0 0
  %3781 = vmatpush1.bf16.msra.mxu0 0
  %3782 = vmatprep.subr.bf16.mxu0 0
  %3783 = vmatpush1.bf16.msra.mxu0 0
  %3784 = vmatprep.subr.bf16.mxu0 0
  %3785 = vmatpush1.bf16.msra.mxu0 0
  %3786 = vmatprep.subr.bf16.mxu0 0
  %3787 = vmatpush1.bf16.msra.mxu0 0
  %3788 = vmatprep.subr.bf16.mxu0 0
  %3789 = vmatpush1.bf16.msra.mxu0 0
  %3790 = vmatprep.mubr.bf16.mxu0 0
  %3791 = vmatmul.mubr.bf16.gmra.mrb[0].mxu0 %v3565
  %v3792 = vpop.f32.mrb[0].mxu0
  %v3793 = vadd.f32 0.0, %v3792
  %v3794 = vpop.f32.mrb[0].mxu0
  %v3795 = vadd.f32 0.0, %v3794
  %v3796 = vpop.f32.mrb[0].mxu0
  %v3797 = vadd.f32 0.0, %v3796
  %v3798 = vpop.f32.mrb[0].mxu0
  %v3799 = vadd.f32 0.0, %v3798
  %3800 = vdwg.mxu0
  %3801 = vmatprep.subr.bf16.mxu0 %v3697
  %3802 = vmatpush1.bf16.msra.mxu0 %v3696
  %3803 = vmatprep.subr.bf16.mxu0 %v3701
  %3804 = vmatpush1.bf16.msra.mxu0 %v3700
  %3805 = vmatprep.subr.bf16.mxu0 %v3705
  %3806 = vmatpush1.bf16.msra.mxu0 %v3704
  %3807 = vmatprep.subr.bf16.mxu0 %v3709
  %3808 = vmatpush1.bf16.msra.mxu0 %v3708
  %3809 = vmatprep.subr.bf16.mxu0 %v3713
  %3810 = vmatpush1.bf16.msra.mxu0 %v3712
  %3811 = vmatprep.subr.bf16.mxu0 %v3717
  %3812 = vmatpush1.bf16.msra.mxu0 %v3716
  %3813 = vmatprep.subr.bf16.mxu0 %v3721
  %3814 = vmatpush1.bf16.msra.mxu0 %v3720
  %3815 = vmatprep.subr.bf16.mxu0 %v3725
  %3816 = vmatpush1.bf16.msra.mxu0 %v3724
  %3817 = vmatprep.subr.bf16.mxu0 0
  %3818 = vmatpush1.bf16.msra.mxu0 0
  %3819 = vmatprep.subr.bf16.mxu0 0
  %3820 = vmatpush1.bf16.msra.mxu0 0
  %3821 = vmatprep.subr.bf16.mxu0 0
  %3822 = vmatpush1.bf16.msra.mxu0 0
  %3823 = vmatprep.subr.bf16.mxu0 0
  %3824 = vmatpush1.bf16.msra.mxu0 0
  %3825 = vmatprep.subr.bf16.mxu0 0
  %3826 = vmatpush1.bf16.msra.mxu0 0
  %3827 = vmatprep.subr.bf16.mxu0 0
  %3828 = vmatpush1.bf16.msra.mxu0 0
  %3829 = vmatprep.subr.bf16.mxu0 0
  %3830 = vmatpush1.bf16.msra.mxu0 0
  %3831 = vmatprep.subr.bf16.mxu0 0
  %3832 = vmatpush1.bf16.msra.mxu0 0
  %3833 = vmatprep.mubr.bf16.mxu0 0
  %3834 = vmatmul.mubr.bf16.gmra.mrb[0].mxu0 %v3565
  %v3835 = vpop.f32.mrb[0].mxu0
  %v3836 = vadd.f32 0.0, %v3835
  %v3837 = vpop.f32.mrb[0].mxu0
  %v3838 = vadd.f32 0.0, %v3837
  %v3839 = vpop.f32.mrb[0].mxu0
  %v3840 = vadd.f32 0.0, %v3839
  %v3841 = vpop.f32.mrb[0].mxu0
  %v3842 = vadd.f32 0.0, %v3841
  %3843 = vdwg.mxu0
  %v3844 = vunpack.c.l.bf16 %v3561
  %v3845 = vunpack.c.l.bf16 %v3562
  %v3846 = vunpack.c.l.bf16 %v3563
  %v3847 = vunpack.c.l.bf16 %v3564
  %v3848 = vunpack.c.h.bf16 %v3561
  %v3849 = vunpack.c.h.bf16 %v3562
  %v3850 = vunpack.c.h.bf16 %v3563
  %v3851 = vunpack.c.h.bf16 %v3564
  %v3852 = vadd.f32 %v3844, %v3793
  %v3853 = vadd.f32 %v3845, %v3795
  %v3854 = vadd.f32 %v3846, %v3836
  %v3855 = vadd.f32 %v3847, %v3838
  %v3856 = vadd.f32 %v3848, %v3797
  %v3857 = vadd.f32 %v3849, %v3799
  %v3858 = vadd.f32 %v3850, %v3840
  %v3859 = vadd.f32 %v3851, %v3842
  %v3860 = vld [vmem:[#allocation3] sm:$0xff]
  %v3861 = vld [vmem:[#allocation3 + $0x8] sm:$0xff]
  %v3862 = vxor.u32 %v3852, 2147483648
  %v3863 = vxor.u32 %v3853, 2147483648
  %v3864 = vxor.u32 %v3854, 2147483648
  %v3865 = vxor.u32 %v3856, 2147483648
  %v3866 = vxor.u32 %v3857, 2147483648
  %v3867 = vxor.u32 %v3858, 2147483648
  %v3868 = vmul.f32 %v3862, 1.442695
  %v3869 = vpow.pop %v3868
  %v3870 = vmul.f32 %v3863, 1.442695
  %v3871 = vpow.pop %v3870
  %v3872 = vmul.f32 %v3864, 1.442695
  %v3873 = vpow.pop %v3872
  %v3874 = vmul.f32 %v3865, 1.442695
  %v3875 = vpow.pop %v3874
  %v3876 = vmul.f32 %v3866, 1.442695
  %v3877 = vpow.pop %v3876
  %v3878 = vmul.f32 %v3867, 1.442695
  %v3879 = vpow.pop %v3878
  %v3880 = vadd.f32 %v3869, 1.0
  %v3881 = vadd.f32 %v3871, 1.0
  %v3882 = vadd.f32 %v3873, 1.0
  %v3883 = vadd.f32 %v3875, 1.0
  %v3884 = vadd.f32 %v3877, 1.0
  %v3885 = vadd.f32 %v3879, 1.0
  %v3886 = vrcp.pop %v3880
  %v3887 = vmul.f32 1.0, %v3886
  %v3888 = vrcp.pop %v3881
  %v3889 = vmul.f32 1.0, %v3888
  %v3890 = vrcp.pop %v3882
  %v3891 = vmul.f32 1.0, %v3890
  %v3892 = vrcp.pop %v3883
  %v3893 = vmul.f32 1.0, %v3892
  %v3894 = vrcp.pop %v3884
  %v3895 = vmul.f32 1.0, %v3894
  %v3896 = vrcp.pop %v3885
  %v3897 = vmul.f32 1.0, %v3896
  %v3898 = vtanh.pop %v3855
  %v3899 = vtanh.pop %v3859
  %v3900 = vmul.f32 %v3889, %v3860
  %v3901 = vmul.f32 %v3895, %v3861
  %v3902 = vmul.f32 %v3887, %v3898
  %v3903 = vmul.f32 %v3893, %v3899
  %v3904 = vadd.f32 %v3900, %v3902
  %v3905 = vadd.f32 %v3901, %v3903
  %v3906 = vtanh.pop %v3904
  %v3907 = vtanh.pop %v3905
  %v3908 = vmul.f32 %v3891, %v3906
  %v3909 = vmul.f32 %v3897, %v3907
  %v3910 = vpack.c.bf16 %v3909, %v3908
  %3911 = vst [vmem:[#allocation2] sm:$0xff] %v3910
  %3912 = vst [vmem:[#allocation3] sm:$0xff] %v3904
  %3913 = vst [vmem:[#allocation3 + $0x8] sm:$0xff] %v3905
  %v3914 = vld [vmem:[#allocation4] sm:$0xff]
  %v3915 = vld [vmem:[%s5] sm:$0xff]
  %v3916 = vld [vmem:[%s5 + $0x8] sm:$0xff]
  %v3917 = vld [vmem:[%s5 + $0x10] sm:$0xff]
  %v3918 = vld [vmem:[%s5 + $0x18] sm:$0xff]
  %v3919 = vld [vmem:[%s5 + $0x20] sm:$0xff]
  %v3920 = vld [vmem:[%s5 + $0x28] sm:$0xff]
  %v3921 = vld [vmem:[%s5 + $0x30] sm:$0xff]
  %v3922 = vld [vmem:[%s5 + $0x38] sm:$0xff]
  %v3923 = vld [vmem:[%s5 + $0x40] sm:$0xff]
  %v3924 = vld [vmem:[%s5 + $0x48] sm:$0xff]
  %v3925 = vld [vmem:[%s5 + $0x50] sm:$0xff]
  %v3926 = vld [vmem:[%s5 + $0x58] sm:$0xff]
  %v3927 = vld [vmem:[%s5 + $0x60] sm:$0xff]
  %v3928 = vld [vmem:[%s5 + $0x68] sm:$0xff]
  %v3929 = vld [vmem:[%s5 + $0x70] sm:$0xff]
  %v3930 = vld [vmem:[%s5 + $0x78] sm:$0xff]
  %v3931 = vld [vmem:[%s5 + $0x80] sm:$0xff]
  %v3932 = vld [vmem:[%s5 + $0x88] sm:$0xff]
  %v3933 = vld [vmem:[%s5 + $0x90] sm:$0xff]
  %v3934 = vld [vmem:[%s5 + $0x98] sm:$0xff]
  %v3935 = vld [vmem:[%s5 + $0xa0] sm:$0xff]
  %v3936 = vld [vmem:[%s5 + $0xa8] sm:$0xff]
  %v3937 = vld [vmem:[%s5 + $0xb0] sm:$0xff]
  %v3938 = vld [vmem:[%s5 + $0xb8] sm:$0xff]
  %v3939 = vld [vmem:[%s5 + $0xc0] sm:$0xff]
  %v3940 = vld [vmem:[%s5 + $0xc8] sm:$0xff]
  %v3941 = vld [vmem:[%s5 + $0xd0] sm:$0xff]
  %v3942 = vld [vmem:[%s5 + $0xd8] sm:$0xff]
  %v3943 = vld [vmem:[%s5 + $0xe0] sm:$0xff]
  %v3944 = vld [vmem:[%s5 + $0xe8] sm:$0xff]
  %v3945 = vld [vmem:[%s5 + $0xf0] sm:$0xff]
  %v3946 = vld [vmem:[%s5 + $0xf8] sm:$0xff]
  %v3947 = vld [vmem:[%s4] sm:$0xff]
  %v3948 = vld [vmem:[%s4 + $0x8] sm:$0xff]
  %v3949 = vld [vmem:[%s4 + $0x10] sm:$0xff]
  %v3950 = vld [vmem:[%s4 + $0x18] sm:$0xff]
  %v3951 = vld [vmem:[%s4 + $0x20] sm:$0xff]
  %v3952 = vld [vmem:[%s4 + $0x28] sm:$0xff]
  %v3953 = vld [vmem:[%s4 + $0x30] sm:$0xff]
  %v3954 = vld [vmem:[%s4 + $0x38] sm:$0xff]
  %v3955 = vld [vmem:[%s4 + $0x40] sm:$0xff]
  %v3956 = vld [vmem:[%s4 + $0x48] sm:$0xff]
  %v3957 = vld [vmem:[%s4 + $0x50] sm:$0xff]
  %v3958 = vld [vmem:[%s4 + $0x58] sm:$0xff]
  %v3959 = vld [vmem:[%s4 + $0x60] sm:$0xff]
  %v3960 = vld [vmem:[%s4 + $0x68] sm:$0xff]
  %v3961 = vld [vmem:[%s4 + $0x70] sm:$0xff]
  %v3962 = vld [vmem:[%s4 + $0x78] sm:$0xff]
  %v3963 = vld [vmem:[%s4 + $0x80] sm:$0xff]
  %v3964 = vld [vmem:[%s4 + $0x88] sm:$0xff]
  %v3965 = vld [vmem:[%s4 + $0x90] sm:$0xff]
  %v3966 = vld [vmem:[%s4 + $0x98] sm:$0xff]
  %v3967 = vld [vmem:[%s4 + $0xa0] sm:$0xff]
  %v3968 = vld [vmem:[%s4 + $0xa8] sm:$0xff]
  %v3969 = vld [vmem:[%s4 + $0xb0] sm:$0xff]
  %v3970 = vld [vmem:[%s4 + $0xb8] sm:$0xff]
  %v3971 = vld [vmem:[%s4 + $0xc0] sm:$0xff]
  %v3972 = vld [vmem:[%s4 + $0xc8] sm:$0xff]
  %v3973 = vld [vmem:[%s4 + $0xd0] sm:$0xff]
  %v3974 = vld [vmem:[%s4 + $0xd8] sm:$0xff]
  %v3975 = vld [vmem:[%s4 + $0xe0] sm:$0xff]
  %v3976 = vld [vmem:[%s4 + $0xe8] sm:$0xff]
  %v3977 = vld [vmem:[%s4 + $0xf0] sm:$0xff]
  %v3978 = vld [vmem:[%s4 + $0xf8] sm:$0xff]
  %v4011 = vunpack.c.l.b16 %v3947
  %v4012 = vunpack.c.h.b16 %v3947
  %v4013 = vunpack.c.l.b16 %v3948
  %v4014 = vunpack.c.h.b16 %v3948
  %v4015 = vunpack.c.l.b16 %v3949
  %v4016 = vunpack.c.h.b16 %v3949
  %v4017 = vunpack.c.l.b16 %v3950
  %v4018 = vunpack.c.h.b16 %v3950
  %v4019 = vunpack.c.l.b16 %v3951
  %v4020 = vunpack.c.h.b16 %v3951
  %v4021 = vunpack.c.l.b16 %v3952
  %v4022 = vunpack.c.h.b16 %v3952
  %v4023 = vunpack.c.l.b16 %v3953
  %v4024 = vunpack.c.h.b16 %v3953
  %v4025 = vunpack.c.l.b16 %v3954
  %v4026 = vunpack.c.h.b16 %v3954
  %v4027 = vunpack.c.l.b16 %v3955
  %v4028 = vunpack.c.h.b16 %v3955
  %v4029 = vunpack.c.l.b16 %v3956
  %v4030 = vunpack.c.h.b16 %v3956
  %v4031 = vunpack.c.l.b16 %v3957
  %v4032 = vunpack.c.h.b16 %v3957
  %v4033 = vunpack.c.l.b16 %v3958
  %v4034 = vunpack.c.h.b16 %v3958
  %v4035 = vunpack.c.l.b16 %v3959
  %v4036 = vunpack.c.h.b16 %v3959
  %v4037 = vunpack.c.l.b16 %v3960
  %v4038 = vunpack.c.h.b16 %v3960
  %v4039 = vunpack.c.l.b16 %v3961
  %v4040 = vunpack.c.h.b16 %v3961
  %v4041 = vunpack.c.l.b16 %v3962
  %v4042 = vunpack.c.h.b16 %v3962
  %v4043 = vunpack.c.l.b16 %v3963
  %v4044 = vunpack.c.h.b16 %v3963
  %v4045 = vunpack.c.l.b16 %v3964
  %v4046 = vunpack.c.h.b16 %v3964
  %v4047 = vunpack.c.l.b16 %v3965
  %v4048 = vunpack.c.h.b16 %v3965
  %v4049 = vunpack.c.l.b16 %v3966
  %v4050 = vunpack.c.h.b16 %v3966
  %v4051 = vunpack.c.l.b16 %v3967
  %v4052 = vunpack.c.h.b16 %v3967
  %v4053 = vunpack.c.l.b16 %v3968
  %v4054 = vunpack.c.h.b16 %v3968
  %v4055 = vunpack.c.l.b16 %v3969
  %v4056 = vunpack.c.h.b16 %v3969
  %v4057 = vunpack.c.l.b16 %v3970
  %v4058 = vunpack.c.h.b16 %v3970
  %v4059 = vunpack.c.l.b16 %v3971
  %v4060 = vunpack.c.h.b16 %v3971
  %v4061 = vunpack.c.l.b16 %v3972
  %v4062 = vunpack.c.h.b16 %v3972
  %v4063 = vunpack.c.l.b16 %v3973
  %v4064 = vunpack.c.h.b16 %v3973
  %v4065 = vunpack.c.l.b16 %v3974
  %v4066 = vunpack.c.h.b16 %v3974
  %v4067 = vunpack.c.l.b16 %v3975
  %v4068 = vunpack.c.h.b16 %v3975
  %v4069 = vunpack.c.l.b16 %v3976
  %v4070 = vunpack.c.h.b16 %v3976
  %v4071 = vunpack.c.l.b16 %v3977
  %v4072 = vunpack.c.h.b16 %v3977
  %v4073 = vunpack.c.l.b16 %v3978
  %v4074 = vunpack.c.h.b16 %v3978
  %v4075 = vpack.c.b16 %v4015, %v4011
  %v4076 = vpack.c.b16 %v4016, %v4012
  %v4077 = vpack.c.b16 %v4017, %v4013
  %v4078 = vpack.c.b16 %v4018, %v4014
  %v4079 = vpack.c.b16 %v4023, %v4019
  %v4080 = vpack.c.b16 %v4024, %v4020
  %v4081 = vpack.c.b16 %v4025, %v4021
  %v4082 = vpack.c.b16 %v4026, %v4022
  %v4083 = vpack.c.b16 %v4031, %v4027
  %v4084 = vpack.c.b16 %v4032, %v4028
  %v4085 = vpack.c.b16 %v4033, %v4029
  %v4086 = vpack.c.b16 %v4034, %v4030
  %v4087 = vpack.c.b16 %v4039, %v4035
  %v4088 = vpack.c.b16 %v4040, %v4036
  %v4089 = vpack.c.b16 %v4041, %v4037
  %v4090 = vpack.c.b16 %v4042, %v4038
  %v4091 = vpack.c.b16 %v4047, %v4043
  %v4092 = vpack.c.b16 %v4048, %v4044
  %v4093 = vpack.c.b16 %v4049, %v4045
  %v4094 = vpack.c.b16 %v4050, %v4046
  %v4095 = vpack.c.b16 %v4055, %v4051
  %v4096 = vpack.c.b16 %v4056, %v4052
  %v4097 = vpack.c.b16 %v4057, %v4053
  %v4098 = vpack.c.b16 %v4058, %v4054
  %v4099 = vpack.c.b16 %v4063, %v4059
  %v4100 = vpack.c.b16 %v4064, %v4060
  %v4101 = vpack.c.b16 %v4065, %v4061
  %v4102 = vpack.c.b16 %v4066, %v4062
  %v4103 = vpack.c.b16 %v4071, %v4067
  %v4104 = vpack.c.b16 %v4072, %v4068
  %v4105 = vpack.c.b16 %v4073, %v4069
  %v4106 = vpack.c.b16 %v4074, %v4070
  %4139 = vmatprep.subr.bf16.mxu0 %v4076
  %4140 = vmatpush1.bf16.msra.mxu0 %v4075
  %4141 = vmatprep.subr.bf16.mxu0 %v4080
  %4142 = vmatpush1.bf16.msra.mxu0 %v4079
  %4143 = vmatprep.subr.bf16.mxu0 %v4084
  %4144 = vmatpush1.bf16.msra.mxu0 %v4083
  %4145 = vmatprep.subr.bf16.mxu0 %v4088
  %4146 = vmatpush1.bf16.msra.mxu0 %v4087
  %4147 = vmatprep.subr.bf16.mxu0 %v4092
  %4148 = vmatpush1.bf16.msra.mxu0 %v4091
  %4149 = vmatprep.subr.bf16.mxu0 %v4096
  %4150 = vmatpush1.bf16.msra.mxu0 %v4095
  %4151 = vmatprep.subr.bf16.mxu0 %v4100
  %4152 = vmatpush1.bf16.msra.mxu0 %v4099
  %4153 = vmatprep.subr.bf16.mxu0 %v4104
  %4154 = vmatpush1.bf16.msra.mxu0 %v4103
  %4155 = vmatprep.subr.bf16.mxu0 0
  %4156 = vmatpush1.bf16.msra.mxu0 0
  %4157 = vmatprep.subr.bf16.mxu0 0
  %4158 = vmatpush1.bf16.msra.mxu0 0
  %4159 = vmatprep.subr.bf16.mxu0 0
  %4160 = vmatpush1.bf16.msra.mxu0 0
  %4161 = vmatprep.subr.bf16.mxu0 0
  %4162 = vmatpush1.bf16.msra.mxu0 0
  %4163 = vmatprep.subr.bf16.mxu0 0
  %4164 = vmatpush1.bf16.msra.mxu0 0
  %4165 = vmatprep.subr.bf16.mxu0 0
  %4166 = vmatpush1.bf16.msra.mxu0 0
  %4167 = vmatprep.subr.bf16.mxu0 0
  %4168 = vmatpush1.bf16.msra.mxu0 0
  %4169 = vmatprep.subr.bf16.mxu0 0
  %4170 = vmatpush1.bf16.msra.mxu0 0
  %4171 = vmatprep.mubr.bf16.mxu0 0
  %4172 = vmatmul.mubr.bf16.gmra.mrb[0].mxu0 %v3910
  %v4173 = vpop.f32.mrb[0].mxu0
  %v4174 = vadd.f32 0.0, %v4173
  %v4175 = vpop.f32.mrb[0].mxu0
  %v4176 = vadd.f32 0.0, %v4175
  %v4177 = vpop.f32.mrb[0].mxu0
  %v4178 = vadd.f32 0.0, %v4177
  %v4179 = vpop.f32.mrb[0].mxu0
  %v4180 = vadd.f32 0.0, %v4179
  %4181 = vdwg.mxu0
  %4182 = vmatprep.subr.bf16.mxu0 %v4078
  %4183 = vmatpush1.bf16.msra.mxu0 %v4077
  %4184 = vmatprep.subr.bf16.mxu0 %v4082
  %4185 = vmatpush1.bf16.msra.mxu0 %v4081
  %4186 = vmatprep.subr.bf16.mxu0 %v4086
  %4187 = vmatpush1.bf16.msra.mxu0 %v4085
  %4188 = vmatprep.subr.bf16.mxu0 %v4090
  %4189 = vmatpush1.bf16.msra.mxu0 %v4089
  %4190 = vmatprep.subr.bf16.mxu0 %v4094
  %4191 = vmatpush1.bf16.msra.mxu0 %v4093
  %4192 = vmatprep.subr.bf16.mxu0 %v4098
  %4193 = vmatpush1.bf16.msra.mxu0 %v4097
  %4194 = vmatprep.subr.bf16.mxu0 %v4102
  %4195 = vmatpush1.bf16.msra.mxu0 %v4101
  %4196 = vmatprep.subr.bf16.mxu0 %v4106
  %4197 = vmatpush1.bf16.msra.mxu0 %v4105
  %4198 = vmatprep.subr.bf16.mxu0 0
  %4199 = vmatpush1.bf16.msra.mxu0 0
  %4200 = vmatprep.subr.bf16.mxu0 0
  %4201 = vmatpush1.bf16.msra.mxu0 0
  %4202 = vmatprep.subr.bf16.mxu0 0
  %4203 = vmatpush1.bf16.msra.mxu0 0
  %4204 = vmatprep.subr.bf16.mxu0 0
  %4205 = vmatpush1.bf16.msra.mxu0 0
  %4206 = vmatprep.subr.bf16.mxu0 0
  %4207 = vmatpush1.bf16.msra.mxu0 0
  %4208 = vmatprep.subr.bf16.mxu0 0
  %4209 = vmatpush1.bf16.msra.mxu0 0
  %4210 = vmatprep.subr.bf16.mxu0 0
  %4211 = vmatpush1.bf16.msra.mxu0 0
  %4212 = vmatprep.subr.bf16.mxu0 0
  %4213 = vmatpush1.bf16.msra.mxu0 0
  %4214 = vmatprep.mubr.bf16.mxu0 0
  %4215 = vmatmul.mubr.bf16.gmra.mrb[0].mxu0 %v3910
  %v4216 = vpop.f32.mrb[0].mxu0
  %v4217 = vadd.f32 0.0, %v4216
  %v4218 = vpop.f32.mrb[0].mxu0
  %v4219 = vadd.f32 0.0, %v4218
  %v4220 = vpop.f32.mrb[0].mxu0
  %v4221 = vadd.f32 0.0, %v4220
  %v4222 = vpop.f32.mrb[0].mxu0
  %v4223 = vadd.f32 0.0, %v4222
  %4224 = vdwg.mxu0
  %v4257 = vunpack.c.l.b16 %v3915
  %v4258 = vunpack.c.h.b16 %v3915
  %v4259 = vunpack.c.l.b16 %v3916
  %v4260 = vunpack.c.h.b16 %v3916
  %v4261 = vunpack.c.l.b16 %v3917
  %v4262 = vunpack.c.h.b16 %v3917
  %v4263 = vunpack.c.l.b16 %v3918
  %v4264 = vunpack.c.h.b16 %v3918
  %v4265 = vunpack.c.l.b16 %v3919
  %v4266 = vunpack.c.h.b16 %v3919
  %v4267 = vunpack.c.l.b16 %v3920
  %v4268 = vunpack.c.h.b16 %v3920
  %v4269 = vunpack.c.l.b16 %v3921
  %v4270 = vunpack.c.h.b16 %v3921
  %v4271 = vunpack.c.l.b16 %v3922
  %v4272 = vunpack.c.h.b16 %v3922
  %v4273 = vunpack.c.l.b16 %v3923
  %v4274 = vunpack.c.h.b16 %v3923
  %v4275 = vunpack.c.l.b16 %v3924
  %v4276 = vunpack.c.h.b16 %v3924
  %v4277 = vunpack.c.l.b16 %v3925
  %v4278 = vunpack.c.h.b16 %v3925
  %v4279 = vunpack.c.l.b16 %v3926
  %v4280 = vunpack.c.h.b16 %v3926
  %v4281 = vunpack.c.l.b16 %v3927
  %v4282 = vunpack.c.h.b16 %v3927
  %v4283 = vunpack.c.l.b16 %v3928
  %v4284 = vunpack.c.h.b16 %v3928
  %v4285 = vunpack.c.l.b16 %v3929
  %v4286 = vunpack.c.h.b16 %v3929
  %v4287 = vunpack.c.l.b16 %v3930
  %v4288 = vunpack.c.h.b16 %v3930
  %v4289 = vunpack.c.l.b16 %v3931
  %v4290 = vunpack.c.h.b16 %v3931
  %v4291 = vunpack.c.l.b16 %v3932
  %v4292 = vunpack.c.h.b16 %v3932
  %v4293 = vunpack.c.l.b16 %v3933
  %v4294 = vunpack.c.h.b16 %v3933
  %v4295 = vunpack.c.l.b16 %v3934
  %v4296 = vunpack.c.h.b16 %v3934
  %v4297 = vunpack.c.l.b16 %v3935
  %v4298 = vunpack.c.h.b16 %v3935
  %v4299 = vunpack.c.l.b16 %v3936
  %v4300 = vunpack.c.h.b16 %v3936
  %v4301 = vunpack.c.l.b16 %v3937
  %v4302 = vunpack.c.h.b16 %v3937
  %v4303 = vunpack.c.l.b16 %v3938
  %v4304 = vunpack.c.h.b16 %v3938
  %v4305 = vunpack.c.l.b16 %v3939
  %v4306 = vunpack.c.h.b16 %v3939
  %v4307 = vunpack.c.l.b16 %v3940
  %v4308 = vunpack.c.h.b16 %v3940
  %v4309 = vunpack.c.l.b16 %v3941
  %v4310 = vunpack.c.h.b16 %v3941
  %v4311 = vunpack.c.l.b16 %v3942
  %v4312 = vunpack.c.h.b16 %v3942
  %v4313 = vunpack.c.l.b16 %v3943
  %v4314 = vunpack.c.h.b16 %v3943
  %v4315 = vunpack.c.l.b16 %v3944
  %v4316 = vunpack.c.h.b16 %v3944
  %v4317 = vunpack.c.l.b16 %v3945
  %v4318 = vunpack.c.h.b16 %v3945
  %v4319 = vunpack.c.l.b16 %v3946
  %v4320 = vunpack.c.h.b16 %v3946
  %v4321 = vpack.c.b16 %v4261, %v4257
  %v4322 = vpack.c.b16 %v4262, %v4258
  %v4323 = vpack.c.b16 %v4263, %v4259
  %v4324 = vpack.c.b16 %v4264, %v4260
  %v4325 = vpack.c.b16 %v4269, %v4265
  %v4326 = vpack.c.b16 %v4270, %v4266
  %v4327 = vpack.c.b16 %v4271, %v4267
  %v4328 = vpack.c.b16 %v4272, %v4268
  %v4329 = vpack.c.b16 %v4277, %v4273
  %v4330 = vpack.c.b16 %v4278, %v4274
  %v4331 = vpack.c.b16 %v4279, %v4275
  %v4332 = vpack.c.b16 %v4280, %v4276
  %v4333 = vpack.c.b16 %v4285, %v4281
  %v4334 = vpack.c.b16 %v4286, %v4282
  %v4335 = vpack.c.b16 %v4287, %v4283
  %v4336 = vpack.c.b16 %v4288, %v4284
  %v4337 = vpack.c.b16 %v4293, %v4289
  %v4338 = vpack.c.b16 %v4294, %v4290
  %v4339 = vpack.c.b16 %v4295, %v4291
  %v4340 = vpack.c.b16 %v4296, %v4292
  %v4341 = vpack.c.b16 %v4301, %v4297
  %v4342 = vpack.c.b16 %v4302, %v4298
  %v4343 = vpack.c.b16 %v4303, %v4299
  %v4344 = vpack.c.b16 %v4304, %v4300
  %v4345 = vpack.c.b16 %v4309, %v4305
  %v4346 = vpack.c.b16 %v4310, %v4306
  %v4347 = vpack.c.b16 %v4311, %v4307
  %v4348 = vpack.c.b16 %v4312, %v4308
  %v4349 = vpack.c.b16 %v4317, %v4313
  %v4350 = vpack.c.b16 %v4318, %v4314
  %v4351 = vpack.c.b16 %v4319, %v4315
  %v4352 = vpack.c.b16 %v4320, %v4316
  %4385 = vmatprep.subr.bf16.mxu0 %v4322
  %4386 = vmatpush1.bf16.msra.mxu0 %v4321
  %4387 = vmatprep.subr.bf16.mxu0 %v4326
  %4388 = vmatpush1.bf16.msra.mxu0 %v4325
  %4389 = vmatprep.subr.bf16.mxu0 %v4330
  %4390 = vmatpush1.bf16.msra.mxu0 %v4329
  %4391 = vmatprep.subr.bf16.mxu0 %v4334
  %4392 = vmatpush1.bf16.msra.mxu0 %v4333
  %4393 = vmatprep.subr.bf16.mxu0 %v4338
  %4394 = vmatpush1.bf16.msra.mxu0 %v4337
  %4395 = vmatprep.subr.bf16.mxu0 %v4342
  %4396 = vmatpush1.bf16.msra.mxu0 %v4341
  %4397 = vmatprep.subr.bf16.mxu0 %v4346
  %4398 = vmatpush1.bf16.msra.mxu0 %v4345
  %4399 = vmatprep.subr.bf16.mxu0 %v4350
  %4400 = vmatpush1.bf16.msra.mxu0 %v4349
  %4401 = vmatprep.subr.bf16.mxu0 0
  %4402 = vmatpush1.bf16.msra.mxu0 0
  %4403 = vmatprep.subr.bf16.mxu0 0
  %4404 = vmatpush1.bf16.msra.mxu0 0
  %4405 = vmatprep.subr.bf16.mxu0 0
  %4406 = vmatpush1.bf16.msra.mxu0 0
  %4407 = vmatprep.subr.bf16.mxu0 0
  %4408 = vmatpush1.bf16.msra.mxu0 0
  %4409 = vmatprep.subr.bf16.mxu0 0
  %4410 = vmatpush1.bf16.msra.mxu0 0
  %4411 = vmatprep.subr.bf16.mxu0 0
  %4412 = vmatpush1.bf16.msra.mxu0 0
  %4413 = vmatprep.subr.bf16.mxu0 0
  %4414 = vmatpush1.bf16.msra.mxu0 0
  %4415 = vmatprep.subr.bf16.mxu0 0
  %4416 = vmatpush1.bf16.msra.mxu0 0
  %4417 = vmatprep.mubr.bf16.mxu0 0
  %4418 = vmatmul.mubr.bf16.gmra.mrb[0].mxu0 %v3914
  %v4419 = vpop.f32.mrb[0].mxu0
  %v4420 = vadd.f32 %v4174, %v4419
  %v4421 = vpop.f32.mrb[0].mxu0
  %v4422 = vadd.f32 %v4176, %v4421
  %v4423 = vpop.f32.mrb[0].mxu0
  %v4424 = vadd.f32 %v4178, %v4423
  %v4425 = vpop.f32.mrb[0].mxu0
  %v4426 = vadd.f32 %v4180, %v4425
  %4427 = vdwg.mxu0
  %4428 = vmatprep.subr.bf16.mxu0 %v4324
  %4429 = vmatpush1.bf16.msra.mxu0 %v4323
  %4430 = vmatprep.subr.bf16.mxu0 %v4328
  %4431 = vmatpush1.bf16.msra.mxu0 %v4327
  %4432 = vmatprep.subr.bf16.mxu0 %v4332
  %4433 = vmatpush1.bf16.msra.mxu0 %v4331
  %4434 = vmatprep.subr.bf16.mxu0 %v4336
  %4435 = vmatpush1.bf16.msra.mxu0 %v4335
  %4436 = vmatprep.subr.bf16.mxu0 %v4340
  %4437 = vmatpush1.bf16.msra.mxu0 %v4339
  %4438 = vmatprep.subr.bf16.mxu0 %v4344
  %4439 = vmatpush1.bf16.msra.mxu0 %v4343
  %4440 = vmatprep.subr.bf16.mxu0 %v4348
  %4441 = vmatpush1.bf16.msra.mxu0 %v4347
  %4442 = vmatprep.subr.bf16.mxu0 %v4352
  %4443 = vmatpush1.bf16.msra.mxu0 %v4351
  %4444 = vmatprep.subr.bf16.mxu0 0
  %4445 = vmatpush1.bf16.msra.mxu0 0
  %4446 = vmatprep.subr.bf16.mxu0 0
  %4447 = vmatpush1.bf16.msra.mxu0 0
  %4448 = vmatprep.subr.bf16.mxu0 0
  %4449 = vmatpush1.bf16.msra.mxu0 0
  %4450 = vmatprep.subr.bf16.mxu0 0
  %4451 = vmatpush1.bf16.msra.mxu0 0
  %4452 = vmatprep.subr.bf16.mxu0 0
  %4453 = vmatpush1.bf16.msra.mxu0 0
  %4454 = vmatprep.subr.bf16.mxu0 0
  %4455 = vmatpush1.bf16.msra.mxu0 0
  %4456 = vmatprep.subr.bf16.mxu0 0
  %4457 = vmatpush1.bf16.msra.mxu0 0
  %4458 = vmatprep.subr.bf16.mxu0 0
  %4459 = vmatpush1.bf16.msra.mxu0 0
  %4460 = vmatprep.mubr.bf16.mxu0 0
  %4461 = vmatmul.mubr.bf16.gmra.mrb[0].mxu0 %v3914
  %v4462 = vpop.f32.mrb[0].mxu0
  %v4463 = vadd.f32 %v4217, %v4462
  %v4464 = vpop.f32.mrb[0].mxu0
  %v4465 = vadd.f32 %v4219, %v4464
  %v4466 = vpop.f32.mrb[0].mxu0
  %v4467 = vadd.f32 %v4221, %v4466
  %v4468 = vpop.f32.mrb[0].mxu0
  %v4469 = vadd.f32 %v4223, %v4468
  %4470 = vdwg.mxu0
  %v4471 = vadd.f32 %v4420, %v616
  %v4472 = vadd.f32 %v4422, %v620
  %v4473 = vadd.f32 %v4463, %v624
  %v4474 = vadd.f32 %v4465, %v628
  %v4475 = vadd.f32 %v4424, %v616
  %v4476 = vadd.f32 %v4426, %v620
  %v4477 = vadd.f32 %v4467, %v624
  %v4478 = vadd.f32 %v4469, %v628
  %v4479 = vld [vmem:[#allocation5] sm:$0xff]
  %v4480 = vld [vmem:[#allocation5 + $0x8] sm:$0xff]
  %v4481 = vxor.u32 %v4471, 2147483648
  %v4482 = vxor.u32 %v4472, 2147483648
  %v4483 = vxor.u32 %v4473, 2147483648
  %v4484 = vxor.u32 %v4475, 2147483648
  %v4485 = vxor.u32 %v4476, 2147483648
  %v4486 = vxor.u32 %v4477, 2147483648
  %v4487 = vmul.f32 %v4481, 1.442695
  %v4488 = vpow.pop %v4487
  %v4489 = vmul.f32 %v4482, 1.442695
  %v4490 = vpow.pop %v4489
  %v4491 = vmul.f32 %v4483, 1.442695
  %v4492 = vpow.pop %v4491
  %v4493 = vmul.f32 %v4484, 1.442695
  %v4494 = vpow.pop %v4493
  %v4495 = vmul.f32 %v4485, 1.442695
  %v4496 = vpow.pop %v4495
  %v4497 = vmul.f32 %v4486, 1.442695
  %v4498 = vpow.pop %v4497
  %v4499 = vadd.f32 %v4488, 1.0
  %v4500 = vadd.f32 %v4490, 1.0
  %v4501 = vadd.f32 %v4492, 1.0
  %v4502 = vadd.f32 %v4494, 1.0
  %v4503 = vadd.f32 %v4496, 1.0
  %v4504 = vadd.f32 %v4498, 1.0
  %v4505 = vrcp.pop %v4499
  %v4506 = vmul.f32 1.0, %v4505
  %v4507 = vrcp.pop %v4500
  %v4508 = vmul.f32 1.0, %v4507
  %v4509 = vrcp.pop %v4501
  %v4510 = vmul.f32 1.0, %v4509
  %v4511 = vrcp.pop %v4502
  %v4512 = vmul.f32 1.0, %v4511
  %v4513 = vrcp.pop %v4503
  %v4514 = vmul.f32 1.0, %v4513
  %v4515 = vrcp.pop %v4504
  %v4516 = vmul.f32 1.0, %v4515
  %v4517 = vtanh.pop %v4474
  %v4518 = vtanh.pop %v4478
  %v4519 = vmul.f32 %v4508, %v4479
  %v4520 = vmul.f32 %v4514, %v4480
  %v4521 = vmul.f32 %v4506, %v4517
  %v4522 = vmul.f32 %v4512, %v4518
  %v4523 = vadd.f32 %v4519, %v4521
  %v4524 = vadd.f32 %v4520, %v4522
  %v4525 = vtanh.pop %v4523
  %v4526 = vtanh.pop %v4524
  %v4527 = vmul.f32 %v4510, %v4525
  %v4528 = vmul.f32 %v4516, %v4526
  %v4529 = vpack.c.bf16 %v4528, %v4527
  %4530 = vst [vmem:[#allocation4] sm:$0xff] %v4529
  %4531 = vst [vmem:[#allocation5] sm:$0xff] %v4523
  %4532 = vst [vmem:[#allocation5 + $0x8] sm:$0xff] %v4524
  %s4533 = smul.u32 4, 4
  %s4534 = smul.addr %s4533, 8
  %s4535 = scalar_lea.vmem [#allocation6], %s4534
  %v4536 = vld [vmem:[%s4535] sm:$0xff]
  %v4537 = vld [vmem:[%s4535 + $0x8] sm:$0xff]
  %v4538 = vld [vmem:[%s4535 + $0x10] sm:$0xff]
  %v4539 = vld [vmem:[%s4535 + $0x18] sm:$0xff]
  %v4540 = vld [vmem:[#allocation2] sm:$0xff]
  %v4541 = vld [vmem:[%s2] sm:$0xff]
  %v4542 = vld [vmem:[%s2 + $0x8] sm:$0xff]
  %v4543 = vld [vmem:[%s2 + $0x10] sm:$0xff]
  %v4544 = vld [vmem:[%s2 + $0x18] sm:$0xff]
  %v4545 = vld [vmem:[%s2 + $0x20] sm:$0xff]
  %v4546 = vld [vmem:[%s2 + $0x28] sm:$0xff]
  %v4547 = vld [vmem:[%s2 + $0x30] sm:$0xff]
  %v4548 = vld [vmem:[%s2 + $0x38] sm:$0xff]
  %v4549 = vld [vmem:[%s2 + $0x40] sm:$0xff]
  %v4550 = vld [vmem:[%s2 + $0x48] sm:$0xff]
  %v4551 = vld [vmem:[%s2 + $0x50] sm:$0xff]
  %v4552 = vld [vmem:[%s2 + $0x58] sm:$0xff]
  %v4553 = vld [vmem:[%s2 + $0x60] sm:$0xff]
  %v4554 = vld [vmem:[%s2 + $0x68] sm:$0xff]
  %v4555 = vld [vmem:[%s2 + $0x70] sm:$0xff]
  %v4556 = vld [vmem:[%s2 + $0x78] sm:$0xff]
  %v4557 = vld [vmem:[%s2 + $0x80] sm:$0xff]
  %v4558 = vld [vmem:[%s2 + $0x88] sm:$0xff]
  %v4559 = vld [vmem:[%s2 + $0x90] sm:$0xff]
  %v4560 = vld [vmem:[%s2 + $0x98] sm:$0xff]
  %v4561 = vld [vmem:[%s2 + $0xa0] sm:$0xff]
  %v4562 = vld [vmem:[%s2 + $0xa8] sm:$0xff]
  %v4563 = vld [vmem:[%s2 + $0xb0] sm:$0xff]
  %v4564 = vld [vmem:[%s2 + $0xb8] sm:$0xff]
  %v4565 = vld [vmem:[%s2 + $0xc0] sm:$0xff]
  %v4566 = vld [vmem:[%s2 + $0xc8] sm:$0xff]
  %v4567 = vld [vmem:[%s2 + $0xd0] sm:$0xff]
  %v4568 = vld [vmem:[%s2 + $0xd8] sm:$0xff]
  %v4569 = vld [vmem:[%s2 + $0xe0] sm:$0xff]
  %v4570 = vld [vmem:[%s2 + $0xe8] sm:$0xff]
  %v4571 = vld [vmem:[%s2 + $0xf0] sm:$0xff]
  %v4572 = vld [vmem:[%s2 + $0xf8] sm:$0xff]
  %v4605 = vunpack.c.l.b16 %v4541
  %v4606 = vunpack.c.h.b16 %v4541
  %v4607 = vunpack.c.l.b16 %v4542
  %v4608 = vunpack.c.h.b16 %v4542
  %v4609 = vunpack.c.l.b16 %v4543
  %v4610 = vunpack.c.h.b16 %v4543
  %v4611 = vunpack.c.l.b16 %v4544
  %v4612 = vunpack.c.h.b16 %v4544
  %v4613 = vunpack.c.l.b16 %v4545
  %v4614 = vunpack.c.h.b16 %v4545
  %v4615 = vunpack.c.l.b16 %v4546
  %v4616 = vunpack.c.h.b16 %v4546
  %v4617 = vunpack.c.l.b16 %v4547
  %v4618 = vunpack.c.h.b16 %v4547
  %v4619 = vunpack.c.l.b16 %v4548
  %v4620 = vunpack.c.h.b16 %v4548
  %v4621 = vunpack.c.l.b16 %v4549
  %v4622 = vunpack.c.h.b16 %v4549
  %v4623 = vunpack.c.l.b16 %v4550
  %v4624 = vunpack.c.h.b16 %v4550
  %v4625 = vunpack.c.l.b16 %v4551
  %v4626 = vunpack.c.h.b16 %v4551
  %v4627 = vunpack.c.l.b16 %v4552
  %v4628 = vunpack.c.h.b16 %v4552
  %v4629 = vunpack.c.l.b16 %v4553
  %v4630 = vunpack.c.h.b16 %v4553
  %v4631 = vunpack.c.l.b16 %v4554
  %v4632 = vunpack.c.h.b16 %v4554
  %v4633 = vunpack.c.l.b16 %v4555
  %v4634 = vunpack.c.h.b16 %v4555
  %v4635 = vunpack.c.l.b16 %v4556
  %v4636 = vunpack.c.h.b16 %v4556
  %v4637 = vunpack.c.l.b16 %v4557
  %v4638 = vunpack.c.h.b16 %v4557
  %v4639 = vunpack.c.l.b16 %v4558
  %v4640 = vunpack.c.h.b16 %v4558
  %v4641 = vunpack.c.l.b16 %v4559
  %v4642 = vunpack.c.h.b16 %v4559
  %v4643 = vunpack.c.l.b16 %v4560
  %v4644 = vunpack.c.h.b16 %v4560
  %v4645 = vunpack.c.l.b16 %v4561
  %v4646 = vunpack.c.h.b16 %v4561
  %v4647 = vunpack.c.l.b16 %v4562
  %v4648 = vunpack.c.h.b16 %v4562
  %v4649 = vunpack.c.l.b16 %v4563
  %v4650 = vunpack.c.h.b16 %v4563
  %v4651 = vunpack.c.l.b16 %v4564
  %v4652 = vunpack.c.h.b16 %v4564
  %v4653 = vunpack.c.l.b16 %v4565
  %v4654 = vunpack.c.h.b16 %v4565
  %v4655 = vunpack.c.l.b16 %v4566
  %v4656 = vunpack.c.h.b16 %v4566
  %v4657 = vunpack.c.l.b16 %v4567
  %v4658 = vunpack.c.h.b16 %v4567
  %v4659 = vunpack.c.l.b16 %v4568
  %v4660 = vunpack.c.h.b16 %v4568
  %v4661 = vunpack.c.l.b16 %v4569
  %v4662 = vunpack.c.h.b16 %v4569
  %v4663 = vunpack.c.l.b16 %v4570
  %v4664 = vunpack.c.h.b16 %v4570
  %v4665 = vunpack.c.l.b16 %v4571
  %v4666 = vunpack.c.h.b16 %v4571
  %v4667 = vunpack.c.l.b16 %v4572
  %v4668 = vunpack.c.h.b16 %v4572
  %v4669 = vpack.c.b16 %v4609, %v4605
  %v4670 = vpack.c.b16 %v4610, %v4606
  %v4671 = vpack.c.b16 %v4611, %v4607
  %v4672 = vpack.c.b16 %v4612, %v4608
  %v4673 = vpack.c.b16 %v4617, %v4613
  %v4674 = vpack.c.b16 %v4618, %v4614
  %v4675 = vpack.c.b16 %v4619, %v4615
  %v4676 = vpack.c.b16 %v4620, %v4616
  %v4677 = vpack.c.b16 %v4625, %v4621
  %v4678 = vpack.c.b16 %v4626, %v4622
  %v4679 = vpack.c.b16 %v4627, %v4623
  %v4680 = vpack.c.b16 %v4628, %v4624
  %v4681 = vpack.c.b16 %v4633, %v4629
  %v4682 = vpack.c.b16 %v4634, %v4630
  %v4683 = vpack.c.b16 %v4635, %v4631
  %v4684 = vpack.c.b16 %v4636, %v4632
  %v4685 = vpack.c.b16 %v4641, %v4637
  %v4686 = vpack.c.b16 %v4642, %v4638
  %v4687 = vpack.c.b16 %v4643, %v4639
  %v4688 = vpack.c.b16 %v4644, %v4640
  %v4689 = vpack.c.b16 %v4649, %v4645
  %v4690 = vpack.c.b16 %v4650, %v4646
  %v4691 = vpack.c.b16 %v4651, %v4647
  %v4692 = vpack.c.b16 %v4652, %v4648
  %v4693 = vpack.c.b16 %v4657, %v4653
  %v4694 = vpack.c.b16 %v4658, %v4654
  %v4695 = vpack.c.b16 %v4659, %v4655
  %v4696 = vpack.c.b16 %v4660, %v4656
  %v4697 = vpack.c.b16 %v4665, %v4661
  %v4698 = vpack.c.b16 %v4666, %v4662
  %v4699 = vpack.c.b16 %v4667, %v4663
  %v4700 = vpack.c.b16 %v4668, %v4664
  %4733 = vmatprep.subr.bf16.mxu0 %v4670
  %4734 = vmatpush1.bf16.msra.mxu0 %v4669
  %4735 = vmatprep.subr.bf16.mxu0 %v4674
  %4736 = vmatpush1.bf16.msra.mxu0 %v4673
  %4737 = vmatprep.subr.bf16.mxu0 %v4678
  %4738 = vmatpush1.bf16.msra.mxu0 %v4677
  %4739 = vmatprep.subr.bf16.mxu0 %v4682
  %4740 = vmatpush1.bf16.msra.mxu0 %v4681
  %4741 = vmatprep.subr.bf16.mxu0 %v4686
  %4742 = vmatpush1.bf16.msra.mxu0 %v4685
  %4743 = vmatprep.subr.bf16.mxu0 %v4690
  %4744 = vmatpush1.bf16.msra.mxu0 %v4689
  %4745 = vmatprep.subr.bf16.mxu0 %v4694
  %4746 = vmatpush1.bf16.msra.mxu0 %v4693
  %4747 = vmatprep.subr.bf16.mxu0 %v4698
  %4748 = vmatpush1.bf16.msra.mxu0 %v4697
  %4749 = vmatprep.subr.bf16.mxu0 0
  %4750 = vmatpush1.bf16.msra.mxu0 0
  %4751 = vmatprep.subr.bf16.mxu0 0
  %4752 = vmatpush1.bf16.msra.mxu0 0
  %4753 = vmatprep.subr.bf16.mxu0 0
  %4754 = vmatpush1.bf16.msra.mxu0 0
  %4755 = vmatprep.subr.bf16.mxu0 0
  %4756 = vmatpush1.bf16.msra.mxu0 0
  %4757 = vmatprep.subr.bf16.mxu0 0
  %4758 = vmatpush1.bf16.msra.mxu0 0
  %4759 = vmatprep.subr.bf16.mxu0 0
  %4760 = vmatpush1.bf16.msra.mxu0 0
  %4761 = vmatprep.subr.bf16.mxu0 0
  %4762 = vmatpush1.bf16.msra.mxu0 0
  %4763 = vmatprep.subr.bf16.mxu0 0
  %4764 = vmatpush1.bf16.msra.mxu0 0
  %4765 = vmatprep.mubr.bf16.mxu0 0
  %4766 = vmatmul.mubr.bf16.gmra.mrb[0].mxu0 %v4540
  %v4767 = vpop.f32.mrb[0].mxu0
  %v4768 = vadd.f32 0.0, %v4767
  %v4769 = vpop.f32.mrb[0].mxu0
  %v4770 = vadd.f32 0.0, %v4769
  %v4771 = vpop.f32.mrb[0].mxu0
  %v4772 = vadd.f32 0.0, %v4771
  %v4773 = vpop.f32.mrb[0].mxu0
  %v4774 = vadd.f32 0.0, %v4773
  %4775 = vdwg.mxu0
  %4776 = vmatprep.subr.bf16.mxu0 %v4672
  %4777 = vmatpush1.bf16.msra.mxu0 %v4671
  %4778 = vmatprep.subr.bf16.mxu0 %v4676
  %4779 = vmatpush1.bf16.msra.mxu0 %v4675
  %4780 = vmatprep.subr.bf16.mxu0 %v4680
  %4781 = vmatpush1.bf16.msra.mxu0 %v4679
  %4782 = vmatprep.subr.bf16.mxu0 %v4684
  %4783 = vmatpush1.bf16.msra.mxu0 %v4683
  %4784 = vmatprep.subr.bf16.mxu0 %v4688
  %4785 = vmatpush1.bf16.msra.mxu0 %v4687
  %4786 = vmatprep.subr.bf16.mxu0 %v4692
  %4787 = vmatpush1.bf16.msra.mxu0 %v4691
  %4788 = vmatprep.subr.bf16.mxu0 %v4696
  %4789 = vmatpush1.bf16.msra.mxu0 %v4695
  %4790 = vmatprep.subr.bf16.mxu0 %v4700
  %4791 = vmatpush1.bf16.msra.mxu0 %v4699
  %4792 = vmatprep.subr.bf16.mxu0 0
  %4793 = vmatpush1.bf16.msra.mxu0 0
  %4794 = vmatprep.subr.bf16.mxu0 0
  %4795 = vmatpush1.bf16.msra.mxu0 0
  %4796 = vmatprep.subr.bf16.mxu0 0
  %4797 = vmatpush1.bf16.msra.mxu0 0
  %4798 = vmatprep.subr.bf16.mxu0 0
  %4799 = vmatpush1.bf16.msra.mxu0 0
  %4800 = vmatprep.subr.bf16.mxu0 0
  %4801 = vmatpush1.bf16.msra.mxu0 0
  %4802 = vmatprep.subr.bf16.mxu0 0
  %4803 = vmatpush1.bf16.msra.mxu0 0
  %4804 = vmatprep.subr.bf16.mxu0 0
  %4805 = vmatpush1.bf16.msra.mxu0 0
  %4806 = vmatprep.subr.bf16.mxu0 0
  %4807 = vmatpush1.bf16.msra.mxu0 0
  %4808 = vmatprep.mubr.bf16.mxu0 0
  %4809 = vmatmul.mubr.bf16.gmra.mrb[0].mxu0 %v4540
  %v4810 = vpop.f32.mrb[0].mxu0
  %v4811 = vadd.f32 0.0, %v4810
  %v4812 = vpop.f32.mrb[0].mxu0
  %v4813 = vadd.f32 0.0, %v4812
  %v4814 = vpop.f32.mrb[0].mxu0
  %v4815 = vadd.f32 0.0, %v4814
  %v4816 = vpop.f32.mrb[0].mxu0
  %v4817 = vadd.f32 0.0, %v4816
  %4818 = vdwg.mxu0
  %v4819 = vunpack.c.l.bf16 %v4536
  %v4820 = vunpack.c.l.bf16 %v4537
  %v4821 = vunpack.c.l.bf16 %v4538
  %v4822 = vunpack.c.l.bf16 %v4539
  %v4823 = vunpack.c.h.bf16 %v4536
  %v4824 = vunpack.c.h.bf16 %v4537
  %v4825 = vunpack.c.h.bf16 %v4538
  %v4826 = vunpack.c.h.bf16 %v4539
  %v4827 = vadd.f32 %v4819, %v4768
  %v4828 = vadd.f32 %v4820, %v4770
  %v4829 = vadd.f32 %v4821, %v4811
  %v4830 = vadd.f32 %v4822, %v4813
  %v4831 = vadd.f32 %v4823, %v4772
  %v4832 = vadd.f32 %v4824, %v4774
  %v4833 = vadd.f32 %v4825, %v4815
  %v4834 = vadd.f32 %v4826, %v4817
  %v4835 = vld [vmem:[#allocation3] sm:$0xff]
  %v4836 = vld [vmem:[#allocation3 + $0x8] sm:$0xff]
  %v4837 = vxor.u32 %v4827, 2147483648
  %v4838 = vxor.u32 %v4828, 2147483648
  %v4839 = vxor.u32 %v4829, 2147483648
  %v4840 = vxor.u32 %v4831, 2147483648
  %v4841 = vxor.u32 %v4832, 2147483648
  %v4842 = vxor.u32 %v4833, 2147483648
  %v4843 = vmul.f32 %v4837, 1.442695
  %v4844 = vpow.pop %v4843
  %v4845 = vmul.f32 %v4838, 1.442695
  %v4846 = vpow.pop %v4845
  %v4847 = vmul.f32 %v4839, 1.442695
  %v4848 = vpow.pop %v4847
  %v4849 = vmul.f32 %v4840, 1.442695
  %v4850 = vpow.pop %v4849
  %v4851 = vmul.f32 %v4841, 1.442695
  %v4852 = vpow.pop %v4851
  %v4853 = vmul.f32 %v4842, 1.442695
  %v4854 = vpow.pop %v4853
  %v4855 = vadd.f32 %v4844, 1.0
  %v4856 = vadd.f32 %v4846, 1.0
  %v4857 = vadd.f32 %v4848, 1.0
  %v4858 = vadd.f32 %v4850, 1.0
  %v4859 = vadd.f32 %v4852, 1.0
  %v4860 = vadd.f32 %v4854, 1.0
  %v4861 = vrcp.pop %v4855
  %v4862 = vmul.f32 1.0, %v4861
  %v4863 = vrcp.pop %v4856
  %v4864 = vmul.f32 1.0, %v4863
  %v4865 = vrcp.pop %v4857
  %v4866 = vmul.f32 1.0, %v4865
  %v4867 = vrcp.pop %v4858
  %v4868 = vmul.f32 1.0, %v4867
  %v4869 = vrcp.pop %v4859
  %v4870 = vmul.f32 1.0, %v4869
  %v4871 = vrcp.pop %v4860
  %v4872 = vmul.f32 1.0, %v4871
  %v4873 = vtanh.pop %v4830
  %v4874 = vtanh.pop %v4834
  %v4875 = vmul.f32 %v4864, %v4835
  %v4876 = vmul.f32 %v4870, %v4836
  %v4877 = vmul.f32 %v4862, %v4873
  %v4878 = vmul.f32 %v4868, %v4874
  %v4879 = vadd.f32 %v4875, %v4877
  %v4880 = vadd.f32 %v4876, %v4878
  %v4881 = vtanh.pop %v4879
  %v4882 = vtanh.pop %v4880
  %v4883 = vmul.f32 %v4866, %v4881
  %v4884 = vmul.f32 %v4872, %v4882
  %v4885 = vpack.c.bf16 %v4884, %v4883
  %4886 = vst [vmem:[#allocation2] sm:$0xff] %v4885
  %4887 = vst [vmem:[#allocation3] sm:$0xff] %v4879
  %4888 = vst [vmem:[#allocation3 + $0x8] sm:$0xff] %v4880
  %v4889 = vld [vmem:[#allocation4] sm:$0xff]
  %v4890 = vld [vmem:[%s5] sm:$0xff]
  %v4891 = vld [vmem:[%s5 + $0x8] sm:$0xff]
  %v4892 = vld [vmem:[%s5 + $0x10] sm:$0xff]
  %v4893 = vld [vmem:[%s5 + $0x18] sm:$0xff]
  %v4894 = vld [vmem:[%s5 + $0x20] sm:$0xff]
  %v4895 = vld [vmem:[%s5 + $0x28] sm:$0xff]
  %v4896 = vld [vmem:[%s5 + $0x30] sm:$0xff]
  %v4897 = vld [vmem:[%s5 + $0x38] sm:$0xff]
  %v4898 = vld [vmem:[%s5 + $0x40] sm:$0xff]
  %v4899 = vld [vmem:[%s5 + $0x48] sm:$0xff]
  %v4900 = vld [vmem:[%s5 + $0x50] sm:$0xff]
  %v4901 = vld [vmem:[%s5 + $0x58] sm:$0xff]
  %v4902 = vld [vmem:[%s5 + $0x60] sm:$0xff]
  %v4903 = vld [vmem:[%s5 + $0x68] sm:$0xff]
  %v4904 = vld [vmem:[%s5 + $0x70] sm:$0xff]
  %v4905 = vld [vmem:[%s5 + $0x78] sm:$0xff]
  %v4906 = vld [vmem:[%s5 + $0x80] sm:$0xff]
  %v4907 = vld [vmem:[%s5 + $0x88] sm:$0xff]
  %v4908 = vld [vmem:[%s5 + $0x90] sm:$0xff]
  %v4909 = vld [vmem:[%s5 + $0x98] sm:$0xff]
  %v4910 = vld [vmem:[%s5 + $0xa0] sm:$0xff]
  %v4911 = vld [vmem:[%s5 + $0xa8] sm:$0xff]
  %v4912 = vld [vmem:[%s5 + $0xb0] sm:$0xff]
  %v4913 = vld [vmem:[%s5 + $0xb8] sm:$0xff]
  %v4914 = vld [vmem:[%s5 + $0xc0] sm:$0xff]
  %v4915 = vld [vmem:[%s5 + $0xc8] sm:$0xff]
  %v4916 = vld [vmem:[%s5 + $0xd0] sm:$0xff]
  %v4917 = vld [vmem:[%s5 + $0xd8] sm:$0xff]
  %v4918 = vld [vmem:[%s5 + $0xe0] sm:$0xff]
  %v4919 = vld [vmem:[%s5 + $0xe8] sm:$0xff]
  %v4920 = vld [vmem:[%s5 + $0xf0] sm:$0xff]
  %v4921 = vld [vmem:[%s5 + $0xf8] sm:$0xff]
  %v4922 = vld [vmem:[%s4] sm:$0xff]
  %v4923 = vld [vmem:[%s4 + $0x8] sm:$0xff]
  %v4924 = vld [vmem:[%s4 + $0x10] sm:$0xff]
  %v4925 = vld [vmem:[%s4 + $0x18] sm:$0xff]
  %v4926 = vld [vmem:[%s4 + $0x20] sm:$0xff]
  %v4927 = vld [vmem:[%s4 + $0x28] sm:$0xff]
  %v4928 = vld [vmem:[%s4 + $0x30] sm:$0xff]
  %v4929 = vld [vmem:[%s4 + $0x38] sm:$0xff]
  %v4930 = vld [vmem:[%s4 + $0x40] sm:$0xff]
  %v4931 = vld [vmem:[%s4 + $0x48] sm:$0xff]
  %v4932 = vld [vmem:[%s4 + $0x50] sm:$0xff]
  %v4933 = vld [vmem:[%s4 + $0x58] sm:$0xff]
  %v4934 = vld [vmem:[%s4 + $0x60] sm:$0xff]
  %v4935 = vld [vmem:[%s4 + $0x68] sm:$0xff]
  %v4936 = vld [vmem:[%s4 + $0x70] sm:$0xff]
  %v4937 = vld [vmem:[%s4 + $0x78] sm:$0xff]
  %v4938 = vld [vmem:[%s4 + $0x80] sm:$0xff]
  %v4939 = vld [vmem:[%s4 + $0x88] sm:$0xff]
  %v4940 = vld [vmem:[%s4 + $0x90] sm:$0xff]
  %v4941 = vld [vmem:[%s4 + $0x98] sm:$0xff]
  %v4942 = vld [vmem:[%s4 + $0xa0] sm:$0xff]
  %v4943 = vld [vmem:[%s4 + $0xa8] sm:$0xff]
  %v4944 = vld [vmem:[%s4 + $0xb0] sm:$0xff]
  %v4945 = vld [vmem:[%s4 + $0xb8] sm:$0xff]
  %v4946 = vld [vmem:[%s4 + $0xc0] sm:$0xff]
  %v4947 = vld [vmem:[%s4 + $0xc8] sm:$0xff]
  %v4948 = vld [vmem:[%s4 + $0xd0] sm:$0xff]
  %v4949 = vld [vmem:[%s4 + $0xd8] sm:$0xff]
  %v4950 = vld [vmem:[%s4 + $0xe0] sm:$0xff]
  %v4951 = vld [vmem:[%s4 + $0xe8] sm:$0xff]
  %v4952 = vld [vmem:[%s4 + $0xf0] sm:$0xff]
  %v4953 = vld [vmem:[%s4 + $0xf8] sm:$0xff]
  %v4986 = vunpack.c.l.b16 %v4922
  %v4987 = vunpack.c.h.b16 %v4922
  %v4988 = vunpack.c.l.b16 %v4923
  %v4989 = vunpack.c.h.b16 %v4923
  %v4990 = vunpack.c.l.b16 %v4924
  %v4991 = vunpack.c.h.b16 %v4924
  %v4992 = vunpack.c.l.b16 %v4925
  %v4993 = vunpack.c.h.b16 %v4925
  %v4994 = vunpack.c.l.b16 %v4926
  %v4995 = vunpack.c.h.b16 %v4926
  %v4996 = vunpack.c.l.b16 %v4927
  %v4997 = vunpack.c.h.b16 %v4927
  %v4998 = vunpack.c.l.b16 %v4928
  %v4999 = vunpack.c.h.b16 %v4928
  %v5000 = vunpack.c.l.b16 %v4929
  %v5001 = vunpack.c.h.b16 %v4929
  %v5002 = vunpack.c.l.b16 %v4930
  %v5003 = vunpack.c.h.b16 %v4930
  %v5004 = vunpack.c.l.b16 %v4931
  %v5005 = vunpack.c.h.b16 %v4931
  %v5006 = vunpack.c.l.b16 %v4932
  %v5007 = vunpack.c.h.b16 %v4932
  %v5008 = vunpack.c.l.b16 %v4933
  %v5009 = vunpack.c.h.b16 %v4933
  %v5010 = vunpack.c.l.b16 %v4934
  %v5011 = vunpack.c.h.b16 %v4934
  %v5012 = vunpack.c.l.b16 %v4935
  %v5013 = vunpack.c.h.b16 %v4935
  %v5014 = vunpack.c.l.b16 %v4936
  %v5015 = vunpack.c.h.b16 %v4936
  %v5016 = vunpack.c.l.b16 %v4937
  %v5017 = vunpack.c.h.b16 %v4937
  %v5018 = vunpack.c.l.b16 %v4938
  %v5019 = vunpack.c.h.b16 %v4938
  %v5020 = vunpack.c.l.b16 %v4939
  %v5021 = vunpack.c.h.b16 %v4939
  %v5022 = vunpack.c.l.b16 %v4940
  %v5023 = vunpack.c.h.b16 %v4940
  %v5024 = vunpack.c.l.b16 %v4941
  %v5025 = vunpack.c.h.b16 %v4941
  %v5026 = vunpack.c.l.b16 %v4942
  %v5027 = vunpack.c.h.b16 %v4942
  %v5028 = vunpack.c.l.b16 %v4943
  %v5029 = vunpack.c.h.b16 %v4943
  %v5030 = vunpack.c.l.b16 %v4944
  %v5031 = vunpack.c.h.b16 %v4944
  %v5032 = vunpack.c.l.b16 %v4945
  %v5033 = vunpack.c.h.b16 %v4945
  %v5034 = vunpack.c.l.b16 %v4946
  %v5035 = vunpack.c.h.b16 %v4946
  %v5036 = vunpack.c.l.b16 %v4947
  %v5037 = vunpack.c.h.b16 %v4947
  %v5038 = vunpack.c.l.b16 %v4948
  %v5039 = vunpack.c.h.b16 %v4948
  %v5040 = vunpack.c.l.b16 %v4949
  %v5041 = vunpack.c.h.b16 %v4949
  %v5042 = vunpack.c.l.b16 %v4950
  %v5043 = vunpack.c.h.b16 %v4950
  %v5044 = vunpack.c.l.b16 %v4951
  %v5045 = vunpack.c.h.b16 %v4951
  %v5046 = vunpack.c.l.b16 %v4952
  %v5047 = vunpack.c.h.b16 %v4952
  %v5048 = vunpack.c.l.b16 %v4953
  %v5049 = vunpack.c.h.b16 %v4953
  %v5050 = vpack.c.b16 %v4990, %v4986
  %v5051 = vpack.c.b16 %v4991, %v4987
  %v5052 = vpack.c.b16 %v4992, %v4988
  %v5053 = vpack.c.b16 %v4993, %v4989
  %v5054 = vpack.c.b16 %v4998, %v4994
  %v5055 = vpack.c.b16 %v4999, %v4995
  %v5056 = vpack.c.b16 %v5000, %v4996
  %v5057 = vpack.c.b16 %v5001, %v4997
  %v5058 = vpack.c.b16 %v5006, %v5002
  %v5059 = vpack.c.b16 %v5007, %v5003
  %v5060 = vpack.c.b16 %v5008, %v5004
  %v5061 = vpack.c.b16 %v5009, %v5005
  %v5062 = vpack.c.b16 %v5014, %v5010
  %v5063 = vpack.c.b16 %v5015, %v5011
  %v5064 = vpack.c.b16 %v5016, %v5012
  %v5065 = vpack.c.b16 %v5017, %v5013
  %v5066 = vpack.c.b16 %v5022, %v5018
  %v5067 = vpack.c.b16 %v5023, %v5019
  %v5068 = vpack.c.b16 %v5024, %v5020
  %v5069 = vpack.c.b16 %v5025, %v5021
  %v5070 = vpack.c.b16 %v5030, %v5026
  %v5071 = vpack.c.b16 %v5031, %v5027
  %v5072 = vpack.c.b16 %v5032, %v5028
  %v5073 = vpack.c.b16 %v5033, %v5029
  %v5074 = vpack.c.b16 %v5038, %v5034
  %v5075 = vpack.c.b16 %v5039, %v5035
  %v5076 = vpack.c.b16 %v5040, %v5036
  %v5077 = vpack.c.b16 %v5041, %v5037
  %v5078 = vpack.c.b16 %v5046, %v5042
  %v5079 = vpack.c.b16 %v5047, %v5043
  %v5080 = vpack.c.b16 %v5048, %v5044
  %v5081 = vpack.c.b16 %v5049, %v5045
  %5114 = vmatprep.subr.bf16.mxu0 %v5051
  %5115 = vmatpush1.bf16.msra.mxu0 %v5050
  %5116 = vmatprep.subr.bf16.mxu0 %v5055
  %5117 = vmatpush1.bf16.msra.mxu0 %v5054
  %5118 = vmatprep.subr.bf16.mxu0 %v5059
  %5119 = vmatpush1.bf16.msra.mxu0 %v5058
  %5120 = vmatprep.subr.bf16.mxu0 %v5063
  %5121 = vmatpush1.bf16.msra.mxu0 %v5062
  %5122 = vmatprep.subr.bf16.mxu0 %v5067
  %5123 = vmatpush1.bf16.msra.mxu0 %v5066
  %5124 = vmatprep.subr.bf16.mxu0 %v5071
  %5125 = vmatpush1.bf16.msra.mxu0 %v5070
  %5126 = vmatprep.subr.bf16.mxu0 %v5075
  %5127 = vmatpush1.bf16.msra.mxu0 %v5074
  %5128 = vmatprep.subr.bf16.mxu0 %v5079
  %5129 = vmatpush1.bf16.msra.mxu0 %v5078
  %5130 = vmatprep.subr.bf16.mxu0 0
  %5131 = vmatpush1.bf16.msra.mxu0 0
  %5132 = vmatprep.subr.bf16.mxu0 0
  %5133 = vmatpush1.bf16.msra.mxu0 0
  %5134 = vmatprep.subr.bf16.mxu0 0
  %5135 = vmatpush1.bf16.msra.mxu0 0
  %5136 = vmatprep.subr.bf16.mxu0 0
  %5137 = vmatpush1.bf16.msra.mxu0 0
  %5138 = vmatprep.subr.bf16.mxu0 0
  %5139 = vmatpush1.bf16.msra.mxu0 0
  %5140 = vmatprep.subr.bf16.mxu0 0
  %5141 = vmatpush1.bf16.msra.mxu0 0
  %5142 = vmatprep.subr.bf16.mxu0 0
  %5143 = vmatpush1.bf16.msra.mxu0 0
  %5144 = vmatprep.subr.bf16.mxu0 0
  %5145 = vmatpush1.bf16.msra.mxu0 0
  %5146 = vmatprep.mubr.bf16.mxu0 0
  %5147 = vmatmul.mubr.bf16.gmra.mrb[0].mxu0 %v4885
  %v5148 = vpop.f32.mrb[0].mxu0
  %v5149 = vadd.f32 0.0, %v5148
  %v5150 = vpop.f32.mrb[0].mxu0
  %v5151 = vadd.f32 0.0, %v5150
  %v5152 = vpop.f32.mrb[0].mxu0
  %v5153 = vadd.f32 0.0, %v5152
  %v5154 = vpop.f32.mrb[0].mxu0
  %v5155 = vadd.f32 0.0, %v5154
  %5156 = vdwg.mxu0
  %5157 = vmatprep.subr.bf16.mxu0 %v5053
  %5158 = vmatpush1.bf16.msra.mxu0 %v5052
  %5159 = vmatprep.subr.bf16.mxu0 %v5057
  %5160 = vmatpush1.bf16.msra.mxu0 %v5056
  %5161 = vmatprep.subr.bf16.mxu0 %v5061
  %5162 = vmatpush1.bf16.msra.mxu0 %v5060
  %5163 = vmatprep.subr.bf16.mxu0 %v5065
  %5164 = vmatpush1.bf16.msra.mxu0 %v5064
  %5165 = vmatprep.subr.bf16.mxu0 %v5069
  %5166 = vmatpush1.bf16.msra.mxu0 %v5068
  %5167 = vmatprep.subr.bf16.mxu0 %v5073
  %5168 = vmatpush1.bf16.msra.mxu0 %v5072
  %5169 = vmatprep.subr.bf16.mxu0 %v5077
  %5170 = vmatpush1.bf16.msra.mxu0 %v5076
  %5171 = vmatprep.subr.bf16.mxu0 %v5081
  %5172 = vmatpush1.bf16.msra.mxu0 %v5080
  %5173 = vmatprep.subr.bf16.mxu0 0
  %5174 = vmatpush1.bf16.msra.mxu0 0
  %5175 = vmatprep.subr.bf16.mxu0 0
  %5176 = vmatpush1.bf16.msra.mxu0 0
  %5177 = vmatprep.subr.bf16.mxu0 0
  %5178 = vmatpush1.bf16.msra.mxu0 0
  %5179 = vmatprep.subr.bf16.mxu0 0
  %5180 = vmatpush1.bf16.msra.mxu0 0
  %5181 = vmatprep.subr.bf16.mxu0 0
  %5182 = vmatpush1.bf16.msra.mxu0 0
  %5183 = vmatprep.subr.bf16.mxu0 0
  %5184 = vmatpush1.bf16.msra.mxu0 0
  %5185 = vmatprep.subr.bf16.mxu0 0
  %5186 = vmatpush1.bf16.msra.mxu0 0
  %5187 = vmatprep.subr.bf16.mxu0 0
  %5188 = vmatpush1.bf16.msra.mxu0 0
  %5189 = vmatprep.mubr.bf16.mxu0 0
  %5190 = vmatmul.mubr.bf16.gmra.mrb[0].mxu0 %v4885
  %v5191 = vpop.f32.mrb[0].mxu0
  %v5192 = vadd.f32 0.0, %v5191
  %v5193 = vpop.f32.mrb[0].mxu0
  %v5194 = vadd.f32 0.0, %v5193
  %v5195 = vpop.f32.mrb[0].mxu0
  %v5196 = vadd.f32 0.0, %v5195
  %v5197 = vpop.f32.mrb[0].mxu0
  %v5198 = vadd.f32 0.0, %v5197
  %5199 = vdwg.mxu0
  %v5232 = vunpack.c.l.b16 %v4890
  %v5233 = vunpack.c.h.b16 %v4890
  %v5234 = vunpack.c.l.b16 %v4891
  %v5235 = vunpack.c.h.b16 %v4891
  %v5236 = vunpack.c.l.b16 %v4892
  %v5237 = vunpack.c.h.b16 %v4892
  %v5238 = vunpack.c.l.b16 %v4893
  %v5239 = vunpack.c.h.b16 %v4893
  %v5240 = vunpack.c.l.b16 %v4894
  %v5241 = vunpack.c.h.b16 %v4894
  %v5242 = vunpack.c.l.b16 %v4895
  %v5243 = vunpack.c.h.b16 %v4895
  %v5244 = vunpack.c.l.b16 %v4896
  %v5245 = vunpack.c.h.b16 %v4896
  %v5246 = vunpack.c.l.b16 %v4897
  %v5247 = vunpack.c.h.b16 %v4897
  %v5248 = vunpack.c.l.b16 %v4898
  %v5249 = vunpack.c.h.b16 %v4898
  %v5250 = vunpack.c.l.b16 %v4899
  %v5251 = vunpack.c.h.b16 %v4899
  %v5252 = vunpack.c.l.b16 %v4900
  %v5253 = vunpack.c.h.b16 %v4900
  %v5254 = vunpack.c.l.b16 %v4901
  %v5255 = vunpack.c.h.b16 %v4901
  %v5256 = vunpack.c.l.b16 %v4902
  %v5257 = vunpack.c.h.b16 %v4902
  %v5258 = vunpack.c.l.b16 %v4903
  %v5259 = vunpack.c.h.b16 %v4903
  %v5260 = vunpack.c.l.b16 %v4904
  %v5261 = vunpack.c.h.b16 %v4904
  %v5262 = vunpack.c.l.b16 %v4905
  %v5263 = vunpack.c.h.b16 %v4905
  %v5264 = vunpack.c.l.b16 %v4906
  %v5265 = vunpack.c.h.b16 %v4906
  %v5266 = vunpack.c.l.b16 %v4907
  %v5267 = vunpack.c.h.b16 %v4907
  %v5268 = vunpack.c.l.b16 %v4908
  %v5269 = vunpack.c.h.b16 %v4908
  %v5270 = vunpack.c.l.b16 %v4909
  %v5271 = vunpack.c.h.b16 %v4909
  %v5272 = vunpack.c.l.b16 %v4910
  %v5273 = vunpack.c.h.b16 %v4910
  %v5274 = vunpack.c.l.b16 %v4911
  %v5275 = vunpack.c.h.b16 %v4911
  %v5276 = vunpack.c.l.b16 %v4912
  %v5277 = vunpack.c.h.b16 %v4912
  %v5278 = vunpack.c.l.b16 %v4913
  %v5279 = vunpack.c.h.b16 %v4913
  %v5280 = vunpack.c.l.b16 %v4914
  %v5281 = vunpack.c.h.b16 %v4914
  %v5282 = vunpack.c.l.b16 %v4915
  %v5283 = vunpack.c.h.b16 %v4915
  %v5284 = vunpack.c.l.b16 %v4916
  %v5285 = vunpack.c.h.b16 %v4916
  %v5286 = vunpack.c.l.b16 %v4917
  %v5287 = vunpack.c.h.b16 %v4917
  %v5288 = vunpack.c.l.b16 %v4918
  %v5289 = vunpack.c.h.b16 %v4918
  %v5290 = vunpack.c.l.b16 %v4919
  %v5291 = vunpack.c.h.b16 %v4919
  %v5292 = vunpack.c.l.b16 %v4920
  %v5293 = vunpack.c.h.b16 %v4920
  %v5294 = vunpack.c.l.b16 %v4921
  %v5295 = vunpack.c.h.b16 %v4921
  %v5296 = vpack.c.b16 %v5236, %v5232
  %v5297 = vpack.c.b16 %v5237, %v5233
  %v5298 = vpack.c.b16 %v5238, %v5234
  %v5299 = vpack.c.b16 %v5239, %v5235
  %v5300 = vpack.c.b16 %v5244, %v5240
  %v5301 = vpack.c.b16 %v5245, %v5241
  %v5302 = vpack.c.b16 %v5246, %v5242
  %v5303 = vpack.c.b16 %v5247, %v5243
  %v5304 = vpack.c.b16 %v5252, %v5248
  %v5305 = vpack.c.b16 %v5253, %v5249
  %v5306 = vpack.c.b16 %v5254, %v5250
  %v5307 = vpack.c.b16 %v5255, %v5251
  %v5308 = vpack.c.b16 %v5260, %v5256
  %v5309 = vpack.c.b16 %v5261, %v5257
  %v5310 = vpack.c.b16 %v5262, %v5258
  %v5311 = vpack.c.b16 %v5263, %v5259
  %v5312 = vpack.c.b16 %v5268, %v5264
  %v5313 = vpack.c.b16 %v5269, %v5265
  %v5314 = vpack.c.b16 %v5270, %v5266
  %v5315 = vpack.c.b16 %v5271, %v5267
  %v5316 = vpack.c.b16 %v5276, %v5272
  %v5317 = vpack.c.b16 %v5277, %v5273
  %v5318 = vpack.c.b16 %v5278, %v5274
  %v5319 = vpack.c.b16 %v5279, %v5275
  %v5320 = vpack.c.b16 %v5284, %v5280
  %v5321 = vpack.c.b16 %v5285, %v5281
  %v5322 = vpack.c.b16 %v5286, %v5282
  %v5323 = vpack.c.b16 %v5287, %v5283
  %v5324 = vpack.c.b16 %v5292, %v5288
  %v5325 = vpack.c.b16 %v5293, %v5289
  %v5326 = vpack.c.b16 %v5294, %v5290
  %v5327 = vpack.c.b16 %v5295, %v5291
  %5360 = vmatprep.subr.bf16.mxu0 %v5297
  %5361 = vmatpush1.bf16.msra.mxu0 %v5296
  %5362 = vmatprep.subr.bf16.mxu0 %v5301
  %5363 = vmatpush1.bf16.msra.mxu0 %v5300
  %5364 = vmatprep.subr.bf16.mxu0 %v5305
  %5365 = vmatpush1.bf16.msra.mxu0 %v5304
  %5366 = vmatprep.subr.bf16.mxu0 %v5309
  %5367 = vmatpush1.bf16.msra.mxu0 %v5308
  %5368 = vmatprep.subr.bf16.mxu0 %v5313
  %5369 = vmatpush1.bf16.msra.mxu0 %v5312
  %5370 = vmatprep.subr.bf16.mxu0 %v5317
  %5371 = vmatpush1.bf16.msra.mxu0 %v5316
  %5372 = vmatprep.subr.bf16.mxu0 %v5321
  %5373 = vmatpush1.bf16.msra.mxu0 %v5320
  %5374 = vmatprep.subr.bf16.mxu0 %v5325
  %5375 = vmatpush1.bf16.msra.mxu0 %v5324
  %5376 = vmatprep.subr.bf16.mxu0 0
  %5377 = vmatpush1.bf16.msra.mxu0 0
  %5378 = vmatprep.subr.bf16.mxu0 0
  %5379 = vmatpush1.bf16.msra.mxu0 0
  %5380 = vmatprep.subr.bf16.mxu0 0
  %5381 = vmatpush1.bf16.msra.mxu0 0
  %5382 = vmatprep.subr.bf16.mxu0 0
  %5383 = vmatpush1.bf16.msra.mxu0 0
  %5384 = vmatprep.subr.bf16.mxu0 0
  %5385 = vmatpush1.bf16.msra.mxu0 0
  %5386 = vmatprep.subr.bf16.mxu0 0
  %5387 = vmatpush1.bf16.msra.mxu0 0
  %5388 = vmatprep.subr.bf16.mxu0 0
  %5389 = vmatpush1.bf16.msra.mxu0 0
  %5390 = vmatprep.subr.bf16.mxu0 0
  %5391 = vmatpush1.bf16.msra.mxu0 0
  %5392 = vmatprep.mubr.bf16.mxu0 0
  %5393 = vmatmul.mubr.bf16.gmra.mrb[0].mxu0 %v4889
  %v5394 = vpop.f32.mrb[0].mxu0
  %v5395 = vadd.f32 %v5149, %v5394
  %v5396 = vpop.f32.mrb[0].mxu0
  %v5397 = vadd.f32 %v5151, %v5396
  %v5398 = vpop.f32.mrb[0].mxu0
  %v5399 = vadd.f32 %v5153, %v5398
  %v5400 = vpop.f32.mrb[0].mxu0
  %v5401 = vadd.f32 %v5155, %v5400
  %5402 = vdwg.mxu0
  %5403 = vmatprep.subr.bf16.mxu0 %v5299
  %5404 = vmatpush1.bf16.msra.mxu0 %v5298
  %5405 = vmatprep.subr.bf16.mxu0 %v5303
  %5406 = vmatpush1.bf16.msra.mxu0 %v5302
  %5407 = vmatprep.subr.bf16.mxu0 %v5307
  %5408 = vmatpush1.bf16.msra.mxu0 %v5306
  %5409 = vmatprep.subr.bf16.mxu0 %v5311
  %5410 = vmatpush1.bf16.msra.mxu0 %v5310
  %5411 = vmatprep.subr.bf16.mxu0 %v5315
  %5412 = vmatpush1.bf16.msra.mxu0 %v5314
  %5413 = vmatprep.subr.bf16.mxu0 %v5319
  %5414 = vmatpush1.bf16.msra.mxu0 %v5318
  %5415 = vmatprep.subr.bf16.mxu0 %v5323
  %5416 = vmatpush1.bf16.msra.mxu0 %v5322
  %5417 = vmatprep.subr.bf16.mxu0 %v5327
  %5418 = vmatpush1.bf16.msra.mxu0 %v5326
  %5419 = vmatprep.subr.bf16.mxu0 0
  %5420 = vmatpush1.bf16.msra.mxu0 0
  %5421 = vmatprep.subr.bf16.mxu0 0
  %5422 = vmatpush1.bf16.msra.mxu0 0
  %5423 = vmatprep.subr.bf16.mxu0 0
  %5424 = vmatpush1.bf16.msra.mxu0 0
  %5425 = vmatprep.subr.bf16.mxu0 0
  %5426 = vmatpush1.bf16.msra.mxu0 0
  %5427 = vmatprep.subr.bf16.mxu0 0
  %5428 = vmatpush1.bf16.msra.mxu0 0
  %5429 = vmatprep.subr.bf16.mxu0 0
  %5430 = vmatpush1.bf16.msra.mxu0 0
  %5431 = vmatprep.subr.bf16.mxu0 0
  %5432 = vmatpush1.bf16.msra.mxu0 0
  %5433 = vmatprep.subr.bf16.mxu0 0
  %5434 = vmatpush1.bf16.msra.mxu0 0
  %5435 = vmatprep.mubr.bf16.mxu0 0
  %5436 = vmatmul.mubr.bf16.gmra.mrb[0].mxu0 %v4889
  %v5437 = vpop.f32.mrb[0].mxu0
  %v5438 = vadd.f32 %v5192, %v5437
  %v5439 = vpop.f32.mrb[0].mxu0
  %v5440 = vadd.f32 %v5194, %v5439
  %v5441 = vpop.f32.mrb[0].mxu0
  %v5442 = vadd.f32 %v5196, %v5441
  %v5443 = vpop.f32.mrb[0].mxu0
  %v5444 = vadd.f32 %v5198, %v5443
  %5445 = vdwg.mxu0
  %v5446 = vadd.f32 %v5395, %v616
  %v5447 = vadd.f32 %v5397, %v620
  %v5448 = vadd.f32 %v5438, %v624
  %v5449 = vadd.f32 %v5440, %v628
  %v5450 = vadd.f32 %v5399, %v616
  %v5451 = vadd.f32 %v5401, %v620
  %v5452 = vadd.f32 %v5442, %v624
  %v5453 = vadd.f32 %v5444, %v628
  %v5454 = vld [vmem:[#allocation5] sm:$0xff]
  %v5455 = vld [vmem:[#allocation5 + $0x8] sm:$0xff]
  %v5456 = vxor.u32 %v5446, 2147483648
  %v5457 = vxor.u32 %v5447, 2147483648
  %v5458 = vxor.u32 %v5448, 2147483648
  %v5459 = vxor.u32 %v5450, 2147483648
  %v5460 = vxor.u32 %v5451, 2147483648
  %v5461 = vxor.u32 %v5452, 2147483648
  %v5462 = vmul.f32 %v5456, 1.442695
  %v5463 = vpow.pop %v5462
  %v5464 = vmul.f32 %v5457, 1.442695
  %v5465 = vpow.pop %v5464
  %v5466 = vmul.f32 %v5458, 1.442695
  %v5467 = vpow.pop %v5466
  %v5468 = vmul.f32 %v5459, 1.442695
  %v5469 = vpow.pop %v5468
  %v5470 = vmul.f32 %v5460, 1.442695
  %v5471 = vpow.pop %v5470
  %v5472 = vmul.f32 %v5461, 1.442695
  %v5473 = vpow.pop %v5472
  %v5474 = vadd.f32 %v5463, 1.0
  %v5475 = vadd.f32 %v5465, 1.0
  %v5476 = vadd.f32 %v5467, 1.0
  %v5477 = vadd.f32 %v5469, 1.0
  %v5478 = vadd.f32 %v5471, 1.0
  %v5479 = vadd.f32 %v5473, 1.0
  %v5480 = vrcp.pop %v5474
  %v5481 = vmul.f32 1.0, %v5480
  %v5482 = vrcp.pop %v5475
  %v5483 = vmul.f32 1.0, %v5482
  %v5484 = vrcp.pop %v5476
  %v5485 = vmul.f32 1.0, %v5484
  %v5486 = vrcp.pop %v5477
  %v5487 = vmul.f32 1.0, %v5486
  %v5488 = vrcp.pop %v5478
  %v5489 = vmul.f32 1.0, %v5488
  %v5490 = vrcp.pop %v5479
  %v5491 = vmul.f32 1.0, %v5490
  %v5492 = vtanh.pop %v5449
  %v5493 = vtanh.pop %v5453
  %v5494 = vmul.f32 %v5483, %v5454
  %v5495 = vmul.f32 %v5489, %v5455
  %v5496 = vmul.f32 %v5481, %v5492
  %v5497 = vmul.f32 %v5487, %v5493
  %v5498 = vadd.f32 %v5494, %v5496
  %v5499 = vadd.f32 %v5495, %v5497
  %v5500 = vtanh.pop %v5498
  %v5501 = vtanh.pop %v5499
  %v5502 = vmul.f32 %v5485, %v5500
  %v5503 = vmul.f32 %v5491, %v5501
  %v5504 = vpack.c.bf16 %v5503, %v5502
  %5505 = vst [vmem:[#allocation4] sm:$0xff] %v5504
  %5506 = vst [vmem:[#allocation5] sm:$0xff] %v5498
  %5507 = vst [vmem:[#allocation5 + $0x8] sm:$0xff] %v5499
  %s5508 = smul.u32 5, 4
  %s5509 = smul.addr %s5508, 8
  %s5510 = scalar_lea.vmem [#allocation6], %s5509
  %v5511 = vld [vmem:[%s5510] sm:$0xff]
  %v5512 = vld [vmem:[%s5510 + $0x8] sm:$0xff]
  %v5513 = vld [vmem:[%s5510 + $0x10] sm:$0xff]
  %v5514 = vld [vmem:[%s5510 + $0x18] sm:$0xff]
  %v5515 = vld [vmem:[#allocation2] sm:$0xff]
  %v5516 = vld [vmem:[%s2] sm:$0xff]
  %v5517 = vld [vmem:[%s2 + $0x8] sm:$0xff]
  %v5518 = vld [vmem:[%s2 + $0x10] sm:$0xff]
  %v5519 = vld [vmem:[%s2 + $0x18] sm:$0xff]
  %v5520 = vld [vmem:[%s2 + $0x20] sm:$0xff]
  %v5521 = vld [vmem:[%s2 + $0x28] sm:$0xff]
  %v5522 = vld [vmem:[%s2 + $0x30] sm:$0xff]
  %v5523 = vld [vmem:[%s2 + $0x38] sm:$0xff]
  %v5524 = vld [vmem:[%s2 + $0x40] sm:$0xff]
  %v5525 = vld [vmem:[%s2 + $0x48] sm:$0xff]
  %v5526 = vld [vmem:[%s2 + $0x50] sm:$0xff]
  %v5527 = vld [vmem:[%s2 + $0x58] sm:$0xff]
  %v5528 = vld [vmem:[%s2 + $0x60] sm:$0xff]
  %v5529 = vld [vmem:[%s2 + $0x68] sm:$0xff]
  %v5530 = vld [vmem:[%s2 + $0x70] sm:$0xff]
  %v5531 = vld [vmem:[%s2 + $0x78] sm:$0xff]
  %v5532 = vld [vmem:[%s2 + $0x80] sm:$0xff]
  %v5533 = vld [vmem:[%s2 + $0x88] sm:$0xff]
  %v5534 = vld [vmem:[%s2 + $0x90] sm:$0xff]
  %v5535 = vld [vmem:[%s2 + $0x98] sm:$0xff]
  %v5536 = vld [vmem:[%s2 + $0xa0] sm:$0xff]
  %v5537 = vld [vmem:[%s2 + $0xa8] sm:$0xff]
  %v5538 = vld [vmem:[%s2 + $0xb0] sm:$0xff]
  %v5539 = vld [vmem:[%s2 + $0xb8] sm:$0xff]
  %v5540 = vld [vmem:[%s2 + $0xc0] sm:$0xff]
  %v5541 = vld [vmem:[%s2 + $0xc8] sm:$0xff]
  %v5542 = vld [vmem:[%s2 + $0xd0] sm:$0xff]
  %v5543 = vld [vmem:[%s2 + $0xd8] sm:$0xff]
  %v5544 = vld [vmem:[%s2 + $0xe0] sm:$0xff]
  %v5545 = vld [vmem:[%s2 + $0xe8] sm:$0xff]
  %v5546 = vld [vmem:[%s2 + $0xf0] sm:$0xff]
  %v5547 = vld [vmem:[%s2 + $0xf8] sm:$0xff]
  %v5580 = vunpack.c.l.b16 %v5516
  %v5581 = vunpack.c.h.b16 %v5516
  %v5582 = vunpack.c.l.b16 %v5517
  %v5583 = vunpack.c.h.b16 %v5517
  %v5584 = vunpack.c.l.b16 %v5518
  %v5585 = vunpack.c.h.b16 %v5518
  %v5586 = vunpack.c.l.b16 %v5519
  %v5587 = vunpack.c.h.b16 %v5519
  %v5588 = vunpack.c.l.b16 %v5520
  %v5589 = vunpack.c.h.b16 %v5520
  %v5590 = vunpack.c.l.b16 %v5521
  %v5591 = vunpack.c.h.b16 %v5521
  %v5592 = vunpack.c.l.b16 %v5522
  %v5593 = vunpack.c.h.b16 %v5522
  %v5594 = vunpack.c.l.b16 %v5523
  %v5595 = vunpack.c.h.b16 %v5523
  %v5596 = vunpack.c.l.b16 %v5524
  %v5597 = vunpack.c.h.b16 %v5524
  %v5598 = vunpack.c.l.b16 %v5525
  %v5599 = vunpack.c.h.b16 %v5525
  %v5600 = vunpack.c.l.b16 %v5526
  %v5601 = vunpack.c.h.b16 %v5526
  %v5602 = vunpack.c.l.b16 %v5527
  %v5603 = vunpack.c.h.b16 %v5527
  %v5604 = vunpack.c.l.b16 %v5528
  %v5605 = vunpack.c.h.b16 %v5528
  %v5606 = vunpack.c.l.b16 %v5529
  %v5607 = vunpack.c.h.b16 %v5529
  %v5608 = vunpack.c.l.b16 %v5530
  %v5609 = vunpack.c.h.b16 %v5530
  %v5610 = vunpack.c.l.b16 %v5531
  %v5611 = vunpack.c.h.b16 %v5531
  %v5612 = vunpack.c.l.b16 %v5532
  %v5613 = vunpack.c.h.b16 %v5532
  %v5614 = vunpack.c.l.b16 %v5533
  %v5615 = vunpack.c.h.b16 %v5533
  %v5616 = vunpack.c.l.b16 %v5534
  %v5617 = vunpack.c.h.b16 %v5534
  %v5618 = vunpack.c.l.b16 %v5535
  %v5619 = vunpack.c.h.b16 %v5535
  %v5620 = vunpack.c.l.b16 %v5536
  %v5621 = vunpack.c.h.b16 %v5536
  %v5622 = vunpack.c.l.b16 %v5537
  %v5623 = vunpack.c.h.b16 %v5537
  %v5624 = vunpack.c.l.b16 %v5538
  %v5625 = vunpack.c.h.b16 %v5538
  %v5626 = vunpack.c.l.b16 %v5539
  %v5627 = vunpack.c.h.b16 %v5539
  %v5628 = vunpack.c.l.b16 %v5540
  %v5629 = vunpack.c.h.b16 %v5540
  %v5630 = vunpack.c.l.b16 %v5541
  %v5631 = vunpack.c.h.b16 %v5541
  %v5632 = vunpack.c.l.b16 %v5542
  %v5633 = vunpack.c.h.b16 %v5542
  %v5634 = vunpack.c.l.b16 %v5543
  %v5635 = vunpack.c.h.b16 %v5543
  %v5636 = vunpack.c.l.b16 %v5544
  %v5637 = vunpack.c.h.b16 %v5544
  %v5638 = vunpack.c.l.b16 %v5545
  %v5639 = vunpack.c.h.b16 %v5545
  %v5640 = vunpack.c.l.b16 %v5546
  %v5641 = vunpack.c.h.b16 %v5546
  %v5642 = vunpack.c.l.b16 %v5547
  %v5643 = vunpack.c.h.b16 %v5547
  %v5644 = vpack.c.b16 %v5584, %v5580
  %v5645 = vpack.c.b16 %v5585, %v5581
  %v5646 = vpack.c.b16 %v5586, %v5582
  %v5647 = vpack.c.b16 %v5587, %v5583
  %v5648 = vpack.c.b16 %v5592, %v5588
  %v5649 = vpack.c.b16 %v5593, %v5589
  %v5650 = vpack.c.b16 %v5594, %v5590
  %v5651 = vpack.c.b16 %v5595, %v5591
  %v5652 = vpack.c.b16 %v5600, %v5596
  %v5653 = vpack.c.b16 %v5601, %v5597
  %v5654 = vpack.c.b16 %v5602, %v5598
  %v5655 = vpack.c.b16 %v5603, %v5599
  %v5656 = vpack.c.b16 %v5608, %v5604
  %v5657 = vpack.c.b16 %v5609, %v5605
  %v5658 = vpack.c.b16 %v5610, %v5606
  %v5659 = vpack.c.b16 %v5611, %v5607
  %v5660 = vpack.c.b16 %v5616, %v5612
  %v5661 = vpack.c.b16 %v5617, %v5613
  %v5662 = vpack.c.b16 %v5618, %v5614
  %v5663 = vpack.c.b16 %v5619, %v5615
  %v5664 = vpack.c.b16 %v5624, %v5620
  %v5665 = vpack.c.b16 %v5625, %v5621
  %v5666 = vpack.c.b16 %v5626, %v5622
  %v5667 = vpack.c.b16 %v5627, %v5623
  %v5668 = vpack.c.b16 %v5632, %v5628
  %v5669 = vpack.c.b16 %v5633, %v5629
  %v5670 = vpack.c.b16 %v5634, %v5630
  %v5671 = vpack.c.b16 %v5635, %v5631
  %v5672 = vpack.c.b16 %v5640, %v5636
  %v5673 = vpack.c.b16 %v5641, %v5637
  %v5674 = vpack.c.b16 %v5642, %v5638
  %v5675 = vpack.c.b16 %v5643, %v5639
  %5708 = vmatprep.subr.bf16.mxu0 %v5645
  %5709 = vmatpush1.bf16.msra.mxu0 %v5644
  %5710 = vmatprep.subr.bf16.mxu0 %v5649
  %5711 = vmatpush1.bf16.msra.mxu0 %v5648
  %5712 = vmatprep.subr.bf16.mxu0 %v5653
  %5713 = vmatpush1.bf16.msra.mxu0 %v5652
  %5714 = vmatprep.subr.bf16.mxu0 %v5657
  %5715 = vmatpush1.bf16.msra.mxu0 %v5656
  %5716 = vmatprep.subr.bf16.mxu0 %v5661
  %5717 = vmatpush1.bf16.msra.mxu0 %v5660
  %5718 = vmatprep.subr.bf16.mxu0 %v5665
  %5719 = vmatpush1.bf16.msra.mxu0 %v5664
  %5720 = vmatprep.subr.bf16.mxu0 %v5669
  %5721 = vmatpush1.bf16.msra.mxu0 %v5668
  %5722 = vmatprep.subr.bf16.mxu0 %v5673
  %5723 = vmatpush1.bf16.msra.mxu0 %v5672
  %5724 = vmatprep.subr.bf16.mxu0 0
  %5725 = vmatpush1.bf16.msra.mxu0 0
  %5726 = vmatprep.subr.bf16.mxu0 0
  %5727 = vmatpush1.bf16.msra.mxu0 0
  %5728 = vmatprep.subr.bf16.mxu0 0
  %5729 = vmatpush1.bf16.msra.mxu0 0
  %5730 = vmatprep.subr.bf16.mxu0 0
  %5731 = vmatpush1.bf16.msra.mxu0 0
  %5732 = vmatprep.subr.bf16.mxu0 0
  %5733 = vmatpush1.bf16.msra.mxu0 0
  %5734 = vmatprep.subr.bf16.mxu0 0
  %5735 = vmatpush1.bf16.msra.mxu0 0
  %5736 = vmatprep.subr.bf16.mxu0 0
  %5737 = vmatpush1.bf16.msra.mxu0 0
  %5738 = vmatprep.subr.bf16.mxu0 0
  %5739 = vmatpush1.bf16.msra.mxu0 0
  %5740 = vmatprep.mubr.bf16.mxu0 0
  %5741 = vmatmul.mubr.bf16.gmra.mrb[0].mxu0 %v5515
  %v5742 = vpop.f32.mrb[0].mxu0
  %v5743 = vadd.f32 0.0, %v5742
  %v5744 = vpop.f32.mrb[0].mxu0
  %v5745 = vadd.f32 0.0, %v5744
  %v5746 = vpop.f32.mrb[0].mxu0
  %v5747 = vadd.f32 0.0, %v5746
  %v5748 = vpop.f32.mrb[0].mxu0
  %v5749 = vadd.f32 0.0, %v5748
  %5750 = vdwg.mxu0
  %5751 = vmatprep.subr.bf16.mxu0 %v5647
  %5752 = vmatpush1.bf16.msra.mxu0 %v5646
  %5753 = vmatprep.subr.bf16.mxu0 %v5651
  %5754 = vmatpush1.bf16.msra.mxu0 %v5650
  %5755 = vmatprep.subr.bf16.mxu0 %v5655
  %5756 = vmatpush1.bf16.msra.mxu0 %v5654
  %5757 = vmatprep.subr.bf16.mxu0 %v5659
  %5758 = vmatpush1.bf16.msra.mxu0 %v5658
  %5759 = vmatprep.subr.bf16.mxu0 %v5663
  %5760 = vmatpush1.bf16.msra.mxu0 %v5662
  %5761 = vmatprep.subr.bf16.mxu0 %v5667
  %5762 = vmatpush1.bf16.msra.mxu0 %v5666
  %5763 = vmatprep.subr.bf16.mxu0 %v5671
  %5764 = vmatpush1.bf16.msra.mxu0 %v5670
  %5765 = vmatprep.subr.bf16.mxu0 %v5675
  %5766 = vmatpush1.bf16.msra.mxu0 %v5674
  %5767 = vmatprep.subr.bf16.mxu0 0
  %5768 = vmatpush1.bf16.msra.mxu0 0
  %5769 = vmatprep.subr.bf16.mxu0 0
  %5770 = vmatpush1.bf16.msra.mxu0 0
  %5771 = vmatprep.subr.bf16.mxu0 0
  %5772 = vmatpush1.bf16.msra.mxu0 0
  %5773 = vmatprep.subr.bf16.mxu0 0
  %5774 = vmatpush1.bf16.msra.mxu0 0
  %5775 = vmatprep.subr.bf16.mxu0 0
  %5776 = vmatpush1.bf16.msra.mxu0 0
  %5777 = vmatprep.subr.bf16.mxu0 0
  %5778 = vmatpush1.bf16.msra.mxu0 0
  %5779 = vmatprep.subr.bf16.mxu0 0
  %5780 = vmatpush1.bf16.msra.mxu0 0
  %5781 = vmatprep.subr.bf16.mxu0 0
  %5782 = vmatpush1.bf16.msra.mxu0 0
  %5783 = vmatprep.mubr.bf16.mxu0 0
  %5784 = vmatmul.mubr.bf16.gmra.mrb[0].mxu0 %v5515
  %v5785 = vpop.f32.mrb[0].mxu0
  %v5786 = vadd.f32 0.0, %v5785
  %v5787 = vpop.f32.mrb[0].mxu0
  %v5788 = vadd.f32 0.0, %v5787
  %v5789 = vpop.f32.mrb[0].mxu0
  %v5790 = vadd.f32 0.0, %v5789
  %v5791 = vpop.f32.mrb[0].mxu0
  %v5792 = vadd.f32 0.0, %v5791
  %5793 = vdwg.mxu0
  %v5794 = vunpack.c.l.bf16 %v5511
  %v5795 = vunpack.c.l.bf16 %v5512
  %v5796 = vunpack.c.l.bf16 %v5513
  %v5797 = vunpack.c.l.bf16 %v5514
  %v5798 = vunpack.c.h.bf16 %v5511
  %v5799 = vunpack.c.h.bf16 %v5512
  %v5800 = vunpack.c.h.bf16 %v5513
  %v5801 = vunpack.c.h.bf16 %v5514
  %v5802 = vadd.f32 %v5794, %v5743
  %v5803 = vadd.f32 %v5795, %v5745
  %v5804 = vadd.f32 %v5796, %v5786
  %v5805 = vadd.f32 %v5797, %v5788
  %v5806 = vadd.f32 %v5798, %v5747
  %v5807 = vadd.f32 %v5799, %v5749
  %v5808 = vadd.f32 %v5800, %v5790
  %v5809 = vadd.f32 %v5801, %v5792
  %v5810 = vld [vmem:[#allocation3] sm:$0xff]
  %v5811 = vld [vmem:[#allocation3 + $0x8] sm:$0xff]
  %v5812 = vxor.u32 %v5802, 2147483648
  %v5813 = vxor.u32 %v5803, 2147483648
  %v5814 = vxor.u32 %v5804, 2147483648
  %v5815 = vxor.u32 %v5806, 2147483648
  %v5816 = vxor.u32 %v5807, 2147483648
  %v5817 = vxor.u32 %v5808, 2147483648
  %v5818 = vmul.f32 %v5812, 1.442695
  %v5819 = vpow.pop %v5818
  %v5820 = vmul.f32 %v5813, 1.442695
  %v5821 = vpow.pop %v5820
  %v5822 = vmul.f32 %v5814, 1.442695
  %v5823 = vpow.pop %v5822
  %v5824 = vmul.f32 %v5815, 1.442695
  %v5825 = vpow.pop %v5824
  %v5826 = vmul.f32 %v5816, 1.442695
  %v5827 = vpow.pop %v5826
  %v5828 = vmul.f32 %v5817, 1.442695
  %v5829 = vpow.pop %v5828
  %v5830 = vadd.f32 %v5819, 1.0
  %v5831 = vadd.f32 %v5821, 1.0
  %v5832 = vadd.f32 %v5823, 1.0
  %v5833 = vadd.f32 %v5825, 1.0
  %v5834 = vadd.f32 %v5827, 1.0
  %v5835 = vadd.f32 %v5829, 1.0
  %v5836 = vrcp.pop %v5830
  %v5837 = vmul.f32 1.0, %v5836
  %v5838 = vrcp.pop %v5831
  %v5839 = vmul.f32 1.0, %v5838
  %v5840 = vrcp.pop %v5832
  %v5841 = vmul.f32 1.0, %v5840
  %v5842 = vrcp.pop %v5833
  %v5843 = vmul.f32 1.0, %v5842
  %v5844 = vrcp.pop %v5834
  %v5845 = vmul.f32 1.0, %v5844
  %v5846 = vrcp.pop %v5835
  %v5847 = vmul.f32 1.0, %v5846
  %v5848 = vtanh.pop %v5805
  %v5849 = vtanh.pop %v5809
  %v5850 = vmul.f32 %v5839, %v5810
  %v5851 = vmul.f32 %v5845, %v5811
  %v5852 = vmul.f32 %v5837, %v5848
  %v5853 = vmul.f32 %v5843, %v5849
  %v5854 = vadd.f32 %v5850, %v5852
  %v5855 = vadd.f32 %v5851, %v5853
  %v5856 = vtanh.pop %v5854
  %v5857 = vtanh.pop %v5855
  %v5858 = vmul.f32 %v5841, %v5856
  %v5859 = vmul.f32 %v5847, %v5857
  %v5860 = vpack.c.bf16 %v5859, %v5858
  %5861 = vst [vmem:[#allocation2] sm:$0xff] %v5860
  %5862 = vst [vmem:[#allocation3] sm:$0xff] %v5854
  %5863 = vst [vmem:[#allocation3 + $0x8] sm:$0xff] %v5855
  %v5864 = vld [vmem:[#allocation4] sm:$0xff]
  %v5865 = vld [vmem:[%s5] sm:$0xff]
  %v5866 = vld [vmem:[%s5 + $0x8] sm:$0xff]
  %v5867 = vld [vmem:[%s5 + $0x10] sm:$0xff]
  %v5868 = vld [vmem:[%s5 + $0x18] sm:$0xff]
  %v5869 = vld [vmem:[%s5 + $0x20] sm:$0xff]
  %v5870 = vld [vmem:[%s5 + $0x28] sm:$0xff]
  %v5871 = vld [vmem:[%s5 + $0x30] sm:$0xff]
  %v5872 = vld [vmem:[%s5 + $0x38] sm:$0xff]
  %v5873 = vld [vmem:[%s5 + $0x40] sm:$0xff]
  %v5874 = vld [vmem:[%s5 + $0x48] sm:$0xff]
  %v5875 = vld [vmem:[%s5 + $0x50] sm:$0xff]
  %v5876 = vld [vmem:[%s5 + $0x58] sm:$0xff]
  %v5877 = vld [vmem:[%s5 + $0x60] sm:$0xff]
  %v5878 = vld [vmem:[%s5 + $0x68] sm:$0xff]
  %v5879 = vld [vmem:[%s5 + $0x70] sm:$0xff]
  %v5880 = vld [vmem:[%s5 + $0x78] sm:$0xff]
  %v5881 = vld [vmem:[%s5 + $0x80] sm:$0xff]
  %v5882 = vld [vmem:[%s5 + $0x88] sm:$0xff]
  %v5883 = vld [vmem:[%s5 + $0x90] sm:$0xff]
  %v5884 = vld [vmem:[%s5 + $0x98] sm:$0xff]
  %v5885 = vld [vmem:[%s5 + $0xa0] sm:$0xff]
  %v5886 = vld [vmem:[%s5 + $0xa8] sm:$0xff]
  %v5887 = vld [vmem:[%s5 + $0xb0] sm:$0xff]
  %v5888 = vld [vmem:[%s5 + $0xb8] sm:$0xff]
  %v5889 = vld [vmem:[%s5 + $0xc0] sm:$0xff]
  %v5890 = vld [vmem:[%s5 + $0xc8] sm:$0xff]
  %v5891 = vld [vmem:[%s5 + $0xd0] sm:$0xff]
  %v5892 = vld [vmem:[%s5 + $0xd8] sm:$0xff]
  %v5893 = vld [vmem:[%s5 + $0xe0] sm:$0xff]
  %v5894 = vld [vmem:[%s5 + $0xe8] sm:$0xff]
  %v5895 = vld [vmem:[%s5 + $0xf0] sm:$0xff]
  %v5896 = vld [vmem:[%s5 + $0xf8] sm:$0xff]
  %v5897 = vld [vmem:[%s4] sm:$0xff]
  %v5898 = vld [vmem:[%s4 + $0x8] sm:$0xff]
  %v5899 = vld [vmem:[%s4 + $0x10] sm:$0xff]
  %v5900 = vld [vmem:[%s4 + $0x18] sm:$0xff]
  %v5901 = vld [vmem:[%s4 + $0x20] sm:$0xff]
  %v5902 = vld [vmem:[%s4 + $0x28] sm:$0xff]
  %v5903 = vld [vmem:[%s4 + $0x30] sm:$0xff]
  %v5904 = vld [vmem:[%s4 + $0x38] sm:$0xff]
  %v5905 = vld [vmem:[%s4 + $0x40] sm:$0xff]
  %v5906 = vld [vmem:[%s4 + $0x48] sm:$0xff]
  %v5907 = vld [vmem:[%s4 + $0x50] sm:$0xff]
  %v5908 = vld [vmem:[%s4 + $0x58] sm:$0xff]
  %v5909 = vld [vmem:[%s4 + $0x60] sm:$0xff]
  %v5910 = vld [vmem:[%s4 + $0x68] sm:$0xff]
  %v5911 = vld [vmem:[%s4 + $0x70] sm:$0xff]
  %v5912 = vld [vmem:[%s4 + $0x78] sm:$0xff]
  %v5913 = vld [vmem:[%s4 + $0x80] sm:$0xff]
  %v5914 = vld [vmem:[%s4 + $0x88] sm:$0xff]
  %v5915 = vld [vmem:[%s4 + $0x90] sm:$0xff]
  %v5916 = vld [vmem:[%s4 + $0x98] sm:$0xff]
  %v5917 = vld [vmem:[%s4 + $0xa0] sm:$0xff]
  %v5918 = vld [vmem:[%s4 + $0xa8] sm:$0xff]
  %v5919 = vld [vmem:[%s4 + $0xb0] sm:$0xff]
  %v5920 = vld [vmem:[%s4 + $0xb8] sm:$0xff]
  %v5921 = vld [vmem:[%s4 + $0xc0] sm:$0xff]
  %v5922 = vld [vmem:[%s4 + $0xc8] sm:$0xff]
  %v5923 = vld [vmem:[%s4 + $0xd0] sm:$0xff]
  %v5924 = vld [vmem:[%s4 + $0xd8] sm:$0xff]
  %v5925 = vld [vmem:[%s4 + $0xe0] sm:$0xff]
  %v5926 = vld [vmem:[%s4 + $0xe8] sm:$0xff]
  %v5927 = vld [vmem:[%s4 + $0xf0] sm:$0xff]
  %v5928 = vld [vmem:[%s4 + $0xf8] sm:$0xff]
  %v5961 = vunpack.c.l.b16 %v5897
  %v5962 = vunpack.c.h.b16 %v5897
  %v5963 = vunpack.c.l.b16 %v5898
  %v5964 = vunpack.c.h.b16 %v5898
  %v5965 = vunpack.c.l.b16 %v5899
  %v5966 = vunpack.c.h.b16 %v5899
  %v5967 = vunpack.c.l.b16 %v5900
  %v5968 = vunpack.c.h.b16 %v5900
  %v5969 = vunpack.c.l.b16 %v5901
  %v5970 = vunpack.c.h.b16 %v5901
  %v5971 = vunpack.c.l.b16 %v5902
  %v5972 = vunpack.c.h.b16 %v5902
  %v5973 = vunpack.c.l.b16 %v5903
  %v5974 = vunpack.c.h.b16 %v5903
  %v5975 = vunpack.c.l.b16 %v5904
  %v5976 = vunpack.c.h.b16 %v5904
  %v5977 = vunpack.c.l.b16 %v5905
  %v5978 = vunpack.c.h.b16 %v5905
  %v5979 = vunpack.c.l.b16 %v5906
  %v5980 = vunpack.c.h.b16 %v5906
  %v5981 = vunpack.c.l.b16 %v5907
  %v5982 = vunpack.c.h.b16 %v5907
  %v5983 = vunpack.c.l.b16 %v5908
  %v5984 = vunpack.c.h.b16 %v5908
  %v5985 = vunpack.c.l.b16 %v5909
  %v5986 = vunpack.c.h.b16 %v5909
  %v5987 = vunpack.c.l.b16 %v5910
  %v5988 = vunpack.c.h.b16 %v5910
  %v5989 = vunpack.c.l.b16 %v5911
  %v5990 = vunpack.c.h.b16 %v5911
  %v5991 = vunpack.c.l.b16 %v5912
  %v5992 = vunpack.c.h.b16 %v5912
  %v5993 = vunpack.c.l.b16 %v5913
  %v5994 = vunpack.c.h.b16 %v5913
  %v5995 = vunpack.c.l.b16 %v5914
  %v5996 = vunpack.c.h.b16 %v5914
  %v5997 = vunpack.c.l.b16 %v5915
  %v5998 = vunpack.c.h.b16 %v5915
  %v5999 = vunpack.c.l.b16 %v5916
  %v6000 = vunpack.c.h.b16 %v5916
  %v6001 = vunpack.c.l.b16 %v5917
  %v6002 = vunpack.c.h.b16 %v5917
  %v6003 = vunpack.c.l.b16 %v5918
  %v6004 = vunpack.c.h.b16 %v5918
  %v6005 = vunpack.c.l.b16 %v5919
  %v6006 = vunpack.c.h.b16 %v5919
  %v6007 = vunpack.c.l.b16 %v5920
  %v6008 = vunpack.c.h.b16 %v5920
  %v6009 = vunpack.c.l.b16 %v5921
  %v6010 = vunpack.c.h.b16 %v5921
  %v6011 = vunpack.c.l.b16 %v5922
  %v6012 = vunpack.c.h.b16 %v5922
  %v6013 = vunpack.c.l.b16 %v5923
  %v6014 = vunpack.c.h.b16 %v5923
  %v6015 = vunpack.c.l.b16 %v5924
  %v6016 = vunpack.c.h.b16 %v5924
  %v6017 = vunpack.c.l.b16 %v5925
  %v6018 = vunpack.c.h.b16 %v5925
  %v6019 = vunpack.c.l.b16 %v5926
  %v6020 = vunpack.c.h.b16 %v5926
  %v6021 = vunpack.c.l.b16 %v5927
  %v6022 = vunpack.c.h.b16 %v5927
  %v6023 = vunpack.c.l.b16 %v5928
  %v6024 = vunpack.c.h.b16 %v5928
  %v6025 = vpack.c.b16 %v5965, %v5961
  %v6026 = vpack.c.b16 %v5966, %v5962
  %v6027 = vpack.c.b16 %v5967, %v5963
  %v6028 = vpack.c.b16 %v5968, %v5964
  %v6029 = vpack.c.b16 %v5973, %v5969
  %v6030 = vpack.c.b16 %v5974, %v5970
  %v6031 = vpack.c.b16 %v5975, %v5971
  %v6032 = vpack.c.b16 %v5976, %v5972
  %v6033 = vpack.c.b16 %v5981, %v5977
  %v6034 = vpack.c.b16 %v5982, %v5978
  %v6035 = vpack.c.b16 %v5983, %v5979
  %v6036 = vpack.c.b16 %v5984, %v5980
  %v6037 = vpack.c.b16 %v5989, %v5985
  %v6038 = vpack.c.b16 %v5990, %v5986
  %v6039 = vpack.c.b16 %v5991, %v5987
  %v6040 = vpack.c.b16 %v5992, %v5988
  %v6041 = vpack.c.b16 %v5997, %v5993
  %v6042 = vpack.c.b16 %v5998, %v5994
  %v6043 = vpack.c.b16 %v5999, %v5995
  %v6044 = vpack.c.b16 %v6000, %v5996
  %v6045 = vpack.c.b16 %v6005, %v6001
  %v6046 = vpack.c.b16 %v6006, %v6002
  %v6047 = vpack.c.b16 %v6007, %v6003
  %v6048 = vpack.c.b16 %v6008, %v6004
  %v6049 = vpack.c.b16 %v6013, %v6009
  %v6050 = vpack.c.b16 %v6014, %v6010
  %v6051 = vpack.c.b16 %v6015, %v6011
  %v6052 = vpack.c.b16 %v6016, %v6012
  %v6053 = vpack.c.b16 %v6021, %v6017
  %v6054 = vpack.c.b16 %v6022, %v6018
  %v6055 = vpack.c.b16 %v6023, %v6019
  %v6056 = vpack.c.b16 %v6024, %v6020
  %6089 = vmatprep.subr.bf16.mxu0 %v6026
  %6090 = vmatpush1.bf16.msra.mxu0 %v6025
  %6091 = vmatprep.subr.bf16.mxu0 %v6030
  %6092 = vmatpush1.bf16.msra.mxu0 %v6029
  %6093 = vmatprep.subr.bf16.mxu0 %v6034
  %6094 = vmatpush1.bf16.msra.mxu0 %v6033
  %6095 = vmatprep.subr.bf16.mxu0 %v6038
  %6096 = vmatpush1.bf16.msra.mxu0 %v6037
  %6097 = vmatprep.subr.bf16.mxu0 %v6042
  %6098 = vmatpush1.bf16.msra.mxu0 %v6041
  %6099 = vmatprep.subr.bf16.mxu0 %v6046
  %6100 = vmatpush1.bf16.msra.mxu0 %v6045
  %6101 = vmatprep.subr.bf16.mxu0 %v6050
  %6102 = vmatpush1.bf16.msra.mxu0 %v6049
  %6103 = vmatprep.subr.bf16.mxu0 %v6054
  %6104 = vmatpush1.bf16.msra.mxu0 %v6053
  %6105 = vmatprep.subr.bf16.mxu0 0
  %6106 = vmatpush1.bf16.msra.mxu0 0
  %6107 = vmatprep.subr.bf16.mxu0 0
  %6108 = vmatpush1.bf16.msra.mxu0 0
  %6109 = vmatprep.subr.bf16.mxu0 0
  %6110 = vmatpush1.bf16.msra.mxu0 0
  %6111 = vmatprep.subr.bf16.mxu0 0
  %6112 = vmatpush1.bf16.msra.mxu0 0
  %6113 = vmatprep.subr.bf16.mxu0 0
  %6114 = vmatpush1.bf16.msra.mxu0 0
  %6115 = vmatprep.subr.bf16.mxu0 0
  %6116 = vmatpush1.bf16.msra.mxu0 0
  %6117 = vmatprep.subr.bf16.mxu0 0
  %6118 = vmatpush1.bf16.msra.mxu0 0
  %6119 = vmatprep.subr.bf16.mxu0 0
  %6120 = vmatpush1.bf16.msra.mxu0 0
  %6121 = vmatprep.mubr.bf16.mxu0 0
  %6122 = vmatmul.mubr.bf16.gmra.mrb[0].mxu0 %v5860
  %v6123 = vpop.f32.mrb[0].mxu0
  %v6124 = vadd.f32 0.0, %v6123
  %v6125 = vpop.f32.mrb[0].mxu0
  %v6126 = vadd.f32 0.0, %v6125
  %v6127 = vpop.f32.mrb[0].mxu0
  %v6128 = vadd.f32 0.0, %v6127
  %v6129 = vpop.f32.mrb[0].mxu0
  %v6130 = vadd.f32 0.0, %v6129
  %6131 = vdwg.mxu0
  %6132 = vmatprep.subr.bf16.mxu0 %v6028
  %6133 = vmatpush1.bf16.msra.mxu0 %v6027
  %6134 = vmatprep.subr.bf16.mxu0 %v6032
  %6135 = vmatpush1.bf16.msra.mxu0 %v6031
  %6136 = vmatprep.subr.bf16.mxu0 %v6036
  %6137 = vmatpush1.bf16.msra.mxu0 %v6035
  %6138 = vmatprep.subr.bf16.mxu0 %v6040
  %6139 = vmatpush1.bf16.msra.mxu0 %v6039
  %6140 = vmatprep.subr.bf16.mxu0 %v6044
  %6141 = vmatpush1.bf16.msra.mxu0 %v6043
  %6142 = vmatprep.subr.bf16.mxu0 %v6048
  %6143 = vmatpush1.bf16.msra.mxu0 %v6047
  %6144 = vmatprep.subr.bf16.mxu0 %v6052
  %6145 = vmatpush1.bf16.msra.mxu0 %v6051
  %6146 = vmatprep.subr.bf16.mxu0 %v6056
  %6147 = vmatpush1.bf16.msra.mxu0 %v6055
  %6148 = vmatprep.subr.bf16.mxu0 0
  %6149 = vmatpush1.bf16.msra.mxu0 0
  %6150 = vmatprep.subr.bf16.mxu0 0
  %6151 = vmatpush1.bf16.msra.mxu0 0
  %6152 = vmatprep.subr.bf16.mxu0 0
  %6153 = vmatpush1.bf16.msra.mxu0 0
  %6154 = vmatprep.subr.bf16.mxu0 0
  %6155 = vmatpush1.bf16.msra.mxu0 0
  %6156 = vmatprep.subr.bf16.mxu0 0
  %6157 = vmatpush1.bf16.msra.mxu0 0
  %6158 = vmatprep.subr.bf16.mxu0 0
  %6159 = vmatpush1.bf16.msra.mxu0 0
  %6160 = vmatprep.subr.bf16.mxu0 0
  %6161 = vmatpush1.bf16.msra.mxu0 0
  %6162 = vmatprep.subr.bf16.mxu0 0
  %6163 = vmatpush1.bf16.msra.mxu0 0
  %6164 = vmatprep.mubr.bf16.mxu0 0
  %6165 = vmatmul.mubr.bf16.gmra.mrb[0].mxu0 %v5860
  %v6166 = vpop.f32.mrb[0].mxu0
  %v6167 = vadd.f32 0.0, %v6166
  %v6168 = vpop.f32.mrb[0].mxu0
  %v6169 = vadd.f32 0.0, %v6168
  %v6170 = vpop.f32.mrb[0].mxu0
  %v6171 = vadd.f32 0.0, %v6170
  %v6172 = vpop.f32.mrb[0].mxu0
  %v6173 = vadd.f32 0.0, %v6172
  %6174 = vdwg.mxu0
  %v6207 = vunpack.c.l.b16 %v5865
  %v6208 = vunpack.c.h.b16 %v5865
  %v6209 = vunpack.c.l.b16 %v5866
  %v6210 = vunpack.c.h.b16 %v5866
  %v6211 = vunpack.c.l.b16 %v5867
  %v6212 = vunpack.c.h.b16 %v5867
  %v6213 = vunpack.c.l.b16 %v5868
  %v6214 = vunpack.c.h.b16 %v5868
  %v6215 = vunpack.c.l.b16 %v5869
  %v6216 = vunpack.c.h.b16 %v5869
  %v6217 = vunpack.c.l.b16 %v5870
  %v6218 = vunpack.c.h.b16 %v5870
  %v6219 = vunpack.c.l.b16 %v5871
  %v6220 = vunpack.c.h.b16 %v5871
  %v6221 = vunpack.c.l.b16 %v5872
  %v6222 = vunpack.c.h.b16 %v5872
  %v6223 = vunpack.c.l.b16 %v5873
  %v6224 = vunpack.c.h.b16 %v5873
  %v6225 = vunpack.c.l.b16 %v5874
  %v6226 = vunpack.c.h.b16 %v5874
  %v6227 = vunpack.c.l.b16 %v5875
  %v6228 = vunpack.c.h.b16 %v5875
  %v6229 = vunpack.c.l.b16 %v5876
  %v6230 = vunpack.c.h.b16 %v5876
  %v6231 = vunpack.c.l.b16 %v5877
  %v6232 = vunpack.c.h.b16 %v5877
  %v6233 = vunpack.c.l.b16 %v5878
  %v6234 = vunpack.c.h.b16 %v5878
  %v6235 = vunpack.c.l.b16 %v5879
  %v6236 = vunpack.c.h.b16 %v5879
  %v6237 = vunpack.c.l.b16 %v5880
  %v6238 = vunpack.c.h.b16 %v5880
  %v6239 = vunpack.c.l.b16 %v5881
  %v6240 = vunpack.c.h.b16 %v5881
  %v6241 = vunpack.c.l.b16 %v5882
  %v6242 = vunpack.c.h.b16 %v5882
  %v6243 = vunpack.c.l.b16 %v5883
  %v6244 = vunpack.c.h.b16 %v5883
  %v6245 = vunpack.c.l.b16 %v5884
  %v6246 = vunpack.c.h.b16 %v5884
  %v6247 = vunpack.c.l.b16 %v5885
  %v6248 = vunpack.c.h.b16 %v5885
  %v6249 = vunpack.c.l.b16 %v5886
  %v6250 = vunpack.c.h.b16 %v5886
  %v6251 = vunpack.c.l.b16 %v5887
  %v6252 = vunpack.c.h.b16 %v5887
  %v6253 = vunpack.c.l.b16 %v5888
  %v6254 = vunpack.c.h.b16 %v5888
  %v6255 = vunpack.c.l.b16 %v5889
  %v6256 = vunpack.c.h.b16 %v5889
  %v6257 = vunpack.c.l.b16 %v5890
  %v6258 = vunpack.c.h.b16 %v5890
  %v6259 = vunpack.c.l.b16 %v5891
  %v6260 = vunpack.c.h.b16 %v5891
  %v6261 = vunpack.c.l.b16 %v5892
  %v6262 = vunpack.c.h.b16 %v5892
  %v6263 = vunpack.c.l.b16 %v5893
  %v6264 = vunpack.c.h.b16 %v5893
  %v6265 = vunpack.c.l.b16 %v5894
  %v6266 = vunpack.c.h.b16 %v5894
  %v6267 = vunpack.c.l.b16 %v5895
  %v6268 = vunpack.c.h.b16 %v5895
  %v6269 = vunpack.c.l.b16 %v5896
  %v6270 = vunpack.c.h.b16 %v5896
  %v6271 = vpack.c.b16 %v6211, %v6207
  %v6272 = vpack.c.b16 %v6212, %v6208
  %v6273 = vpack.c.b16 %v6213, %v6209
  %v6274 = vpack.c.b16 %v6214, %v6210
  %v6275 = vpack.c.b16 %v6219, %v6215
  %v6276 = vpack.c.b16 %v6220, %v6216
  %v6277 = vpack.c.b16 %v6221, %v6217
  %v6278 = vpack.c.b16 %v6222, %v6218
  %v6279 = vpack.c.b16 %v6227, %v6223
  %v6280 = vpack.c.b16 %v6228, %v6224
  %v6281 = vpack.c.b16 %v6229, %v6225
  %v6282 = vpack.c.b16 %v6230, %v6226
  %v6283 = vpack.c.b16 %v6235, %v6231
  %v6284 = vpack.c.b16 %v6236, %v6232
  %v6285 = vpack.c.b16 %v6237, %v6233
  %v6286 = vpack.c.b16 %v6238, %v6234
  %v6287 = vpack.c.b16 %v6243, %v6239
  %v6288 = vpack.c.b16 %v6244, %v6240
  %v6289 = vpack.c.b16 %v6245, %v6241
  %v6290 = vpack.c.b16 %v6246, %v6242
  %v6291 = vpack.c.b16 %v6251, %v6247
  %v6292 = vpack.c.b16 %v6252, %v6248
  %v6293 = vpack.c.b16 %v6253, %v6249
  %v6294 = vpack.c.b16 %v6254, %v6250
  %v6295 = vpack.c.b16 %v6259, %v6255
  %v6296 = vpack.c.b16 %v6260, %v6256
  %v6297 = vpack.c.b16 %v6261, %v6257
  %v6298 = vpack.c.b16 %v6262, %v6258
  %v6299 = vpack.c.b16 %v6267, %v6263
  %v6300 = vpack.c.b16 %v6268, %v6264
  %v6301 = vpack.c.b16 %v6269, %v6265
  %v6302 = vpack.c.b16 %v6270, %v6266
  %6335 = vmatprep.subr.bf16.mxu0 %v6272
  %6336 = vmatpush1.bf16.msra.mxu0 %v6271
  %6337 = vmatprep.subr.bf16.mxu0 %v6276
  %6338 = vmatpush1.bf16.msra.mxu0 %v6275
  %6339 = vmatprep.subr.bf16.mxu0 %v6280
  %6340 = vmatpush1.bf16.msra.mxu0 %v6279
  %6341 = vmatprep.subr.bf16.mxu0 %v6284
  %6342 = vmatpush1.bf16.msra.mxu0 %v6283
  %6343 = vmatprep.subr.bf16.mxu0 %v6288
  %6344 = vmatpush1.bf16.msra.mxu0 %v6287
  %6345 = vmatprep.subr.bf16.mxu0 %v6292
  %6346 = vmatpush1.bf16.msra.mxu0 %v6291
  %6347 = vmatprep.subr.bf16.mxu0 %v6296
  %6348 = vmatpush1.bf16.msra.mxu0 %v6295
  %6349 = vmatprep.subr.bf16.mxu0 %v6300
  %6350 = vmatpush1.bf16.msra.mxu0 %v6299
  %6351 = vmatprep.subr.bf16.mxu0 0
  %6352 = vmatpush1.bf16.msra.mxu0 0
  %6353 = vmatprep.subr.bf16.mxu0 0
  %6354 = vmatpush1.bf16.msra.mxu0 0
  %6355 = vmatprep.subr.bf16.mxu0 0
  %6356 = vmatpush1.bf16.msra.mxu0 0
  %6357 = vmatprep.subr.bf16.mxu0 0
  %6358 = vmatpush1.bf16.msra.mxu0 0
  %6359 = vmatprep.subr.bf16.mxu0 0
  %6360 = vmatpush1.bf16.msra.mxu0 0
  %6361 = vmatprep.subr.bf16.mxu0 0
  %6362 = vmatpush1.bf16.msra.mxu0 0
  %6363 = vmatprep.subr.bf16.mxu0 0
  %6364 = vmatpush1.bf16.msra.mxu0 0
  %6365 = vmatprep.subr.bf16.mxu0 0
  %6366 = vmatpush1.bf16.msra.mxu0 0
  %6367 = vmatprep.mubr.bf16.mxu0 0
  %6368 = vmatmul.mubr.bf16.gmra.mrb[0].mxu0 %v5864
  %v6369 = vpop.f32.mrb[0].mxu0
  %v6370 = vadd.f32 %v6124, %v6369
  %v6371 = vpop.f32.mrb[0].mxu0
  %v6372 = vadd.f32 %v6126, %v6371
  %v6373 = vpop.f32.mrb[0].mxu0
  %v6374 = vadd.f32 %v6128, %v6373
  %v6375 = vpop.f32.mrb[0].mxu0
  %v6376 = vadd.f32 %v6130, %v6375
  %6377 = vdwg.mxu0
  %6378 = vmatprep.subr.bf16.mxu0 %v6274
  %6379 = vmatpush1.bf16.msra.mxu0 %v6273
  %6380 = vmatprep.subr.bf16.mxu0 %v6278
  %6381 = vmatpush1.bf16.msra.mxu0 %v6277
  %6382 = vmatprep.subr.bf16.mxu0 %v6282
  %6383 = vmatpush1.bf16.msra.mxu0 %v6281
  %6384 = vmatprep.subr.bf16.mxu0 %v6286
  %6385 = vmatpush1.bf16.msra.mxu0 %v6285
  %6386 = vmatprep.subr.bf16.mxu0 %v6290
  %6387 = vmatpush1.bf16.msra.mxu0 %v6289
  %6388 = vmatprep.subr.bf16.mxu0 %v6294
  %6389 = vmatpush1.bf16.msra.mxu0 %v6293
  %6390 = vmatprep.subr.bf16.mxu0 %v6298
  %6391 = vmatpush1.bf16.msra.mxu0 %v6297
  %6392 = vmatprep.subr.bf16.mxu0 %v6302
  %6393 = vmatpush1.bf16.msra.mxu0 %v6301
  %6394 = vmatprep.subr.bf16.mxu0 0
  %6395 = vmatpush1.bf16.msra.mxu0 0
  %6396 = vmatprep.subr.bf16.mxu0 0
  %6397 = vmatpush1.bf16.msra.mxu0 0
  %6398 = vmatprep.subr.bf16.mxu0 0
  %6399 = vmatpush1.bf16.msra.mxu0 0
  %6400 = vmatprep.subr.bf16.mxu0 0
  %6401 = vmatpush1.bf16.msra.mxu0 0
  %6402 = vmatprep.subr.bf16.mxu0 0
  %6403 = vmatpush1.bf16.msra.mxu0 0
  %6404 = vmatprep.subr.bf16.mxu0 0
  %6405 = vmatpush1.bf16.msra.mxu0 0
  %6406 = vmatprep.subr.bf16.mxu0 0
  %6407 = vmatpush1.bf16.msra.mxu0 0
  %6408 = vmatprep.subr.bf16.mxu0 0
  %6409 = vmatpush1.bf16.msra.mxu0 0
  %6410 = vmatprep.mubr.bf16.mxu0 0
  %6411 = vmatmul.mubr.bf16.gmra.mrb[0].mxu0 %v5864
  %v6412 = vpop.f32.mrb[0].mxu0
  %v6413 = vadd.f32 %v6167, %v6412
  %v6414 = vpop.f32.mrb[0].mxu0
  %v6415 = vadd.f32 %v6169, %v6414
  %v6416 = vpop.f32.mrb[0].mxu0
  %v6417 = vadd.f32 %v6171, %v6416
  %v6418 = vpop.f32.mrb[0].mxu0
  %v6419 = vadd.f32 %v6173, %v6418
  %6420 = vdwg.mxu0
  %v6421 = vadd.f32 %v6370, %v616
  %v6422 = vadd.f32 %v6372, %v620
  %v6423 = vadd.f32 %v6413, %v624
  %v6424 = vadd.f32 %v6415, %v628
  %v6425 = vadd.f32 %v6374, %v616
  %v6426 = vadd.f32 %v6376, %v620
  %v6427 = vadd.f32 %v6417, %v624
  %v6428 = vadd.f32 %v6419, %v628
  %v6429 = vld [vmem:[#allocation5] sm:$0xff]
  %v6430 = vld [vmem:[#allocation5 + $0x8] sm:$0xff]
  %v6431 = vxor.u32 %v6421, 2147483648
  %v6432 = vxor.u32 %v6422, 2147483648
  %v6433 = vxor.u32 %v6423, 2147483648
  %v6434 = vxor.u32 %v6425, 2147483648
  %v6435 = vxor.u32 %v6426, 2147483648
  %v6436 = vxor.u32 %v6427, 2147483648
  %v6437 = vmul.f32 %v6431, 1.442695
  %v6438 = vpow.pop %v6437
  %v6439 = vmul.f32 %v6432, 1.442695
  %v6440 = vpow.pop %v6439
  %v6441 = vmul.f32 %v6433, 1.442695
  %v6442 = vpow.pop %v6441
  %v6443 = vmul.f32 %v6434, 1.442695
  %v6444 = vpow.pop %v6443
  %v6445 = vmul.f32 %v6435, 1.442695
  %v6446 = vpow.pop %v6445
  %v6447 = vmul.f32 %v6436, 1.442695
  %v6448 = vpow.pop %v6447
  %v6449 = vadd.f32 %v6438, 1.0
  %v6450 = vadd.f32 %v6440, 1.0
  %v6451 = vadd.f32 %v6442, 1.0
  %v6452 = vadd.f32 %v6444, 1.0
  %v6453 = vadd.f32 %v6446, 1.0
  %v6454 = vadd.f32 %v6448, 1.0
  %v6455 = vrcp.pop %v6449
  %v6456 = vmul.f32 1.0, %v6455
  %v6457 = vrcp.pop %v6450
  %v6458 = vmul.f32 1.0, %v6457
  %v6459 = vrcp.pop %v6451
  %v6460 = vmul.f32 1.0, %v6459
  %v6461 = vrcp.pop %v6452
  %v6462 = vmul.f32 1.0, %v6461
  %v6463 = vrcp.pop %v6453
  %v6464 = vmul.f32 1.0, %v6463
  %v6465 = vrcp.pop %v6454
  %v6466 = vmul.f32 1.0, %v6465
  %v6467 = vtanh.pop %v6424
  %v6468 = vtanh.pop %v6428
  %v6469 = vmul.f32 %v6458, %v6429
  %v6470 = vmul.f32 %v6464, %v6430
  %v6471 = vmul.f32 %v6456, %v6467
  %v6472 = vmul.f32 %v6462, %v6468
  %v6473 = vadd.f32 %v6469, %v6471
  %v6474 = vadd.f32 %v6470, %v6472
  %v6475 = vtanh.pop %v6473
  %v6476 = vtanh.pop %v6474
  %v6477 = vmul.f32 %v6460, %v6475
  %v6478 = vmul.f32 %v6466, %v6476
  %v6479 = vpack.c.bf16 %v6478, %v6477
  %6480 = vst [vmem:[#allocation4] sm:$0xff] %v6479
  %6481 = vst [vmem:[#allocation5] sm:$0xff] %v6473
  %6482 = vst [vmem:[#allocation5 + $0x8] sm:$0xff] %v6474
  %s6483 = smul.u32 6, 4
  %s6484 = smul.addr %s6483, 8
  %s6485 = scalar_lea.vmem [#allocation6], %s6484
  %v6486 = vld [vmem:[%s6485] sm:$0xff]
  %v6487 = vld [vmem:[%s6485 + $0x8] sm:$0xff]
  %v6488 = vld [vmem:[%s6485 + $0x10] sm:$0xff]
  %v6489 = vld [vmem:[%s6485 + $0x18] sm:$0xff]
  %v6490 = vld [vmem:[#allocation2] sm:$0xff]
  %v6491 = vld [vmem:[%s2] sm:$0xff]
  %v6492 = vld [vmem:[%s2 + $0x8] sm:$0xff]
  %v6493 = vld [vmem:[%s2 + $0x10] sm:$0xff]
  %v6494 = vld [vmem:[%s2 + $0x18] sm:$0xff]
  %v6495 = vld [vmem:[%s2 + $0x20] sm:$0xff]
  %v6496 = vld [vmem:[%s2 + $0x28] sm:$0xff]
  %v6497 = vld [vmem:[%s2 + $0x30] sm:$0xff]
  %v6498 = vld [vmem:[%s2 + $0x38] sm:$0xff]
  %v6499 = vld [vmem:[%s2 + $0x40] sm:$0xff]
  %v6500 = vld [vmem:[%s2 + $0x48] sm:$0xff]
  %v6501 = vld [vmem:[%s2 + $0x50] sm:$0xff]
  %v6502 = vld [vmem:[%s2 + $0x58] sm:$0xff]
  %v6503 = vld [vmem:[%s2 + $0x60] sm:$0xff]
  %v6504 = vld [vmem:[%s2 + $0x68] sm:$0xff]
  %v6505 = vld [vmem:[%s2 + $0x70] sm:$0xff]
  %v6506 = vld [vmem:[%s2 + $0x78] sm:$0xff]
  %v6507 = vld [vmem:[%s2 + $0x80] sm:$0xff]
  %v6508 = vld [vmem:[%s2 + $0x88] sm:$0xff]
  %v6509 = vld [vmem:[%s2 + $0x90] sm:$0xff]
  %v6510 = vld [vmem:[%s2 + $0x98] sm:$0xff]
  %v6511 = vld [vmem:[%s2 + $0xa0] sm:$0xff]
  %v6512 = vld [vmem:[%s2 + $0xa8] sm:$0xff]
  %v6513 = vld [vmem:[%s2 + $0xb0] sm:$0xff]
  %v6514 = vld [vmem:[%s2 + $0xb8] sm:$0xff]
  %v6515 = vld [vmem:[%s2 + $0xc0] sm:$0xff]
  %v6516 = vld [vmem:[%s2 + $0xc8] sm:$0xff]
  %v6517 = vld [vmem:[%s2 + $0xd0] sm:$0xff]
  %v6518 = vld [vmem:[%s2 + $0xd8] sm:$0xff]
  %v6519 = vld [vmem:[%s2 + $0xe0] sm:$0xff]
  %v6520 = vld [vmem:[%s2 + $0xe8] sm:$0xff]
  %v6521 = vld [vmem:[%s2 + $0xf0] sm:$0xff]
  %v6522 = vld [vmem:[%s2 + $0xf8] sm:$0xff]
  %v6555 = vunpack.c.l.b16 %v6491
  %v6556 = vunpack.c.h.b16 %v6491
  %v6557 = vunpack.c.l.b16 %v6492
  %v6558 = vunpack.c.h.b16 %v6492
  %v6559 = vunpack.c.l.b16 %v6493
  %v6560 = vunpack.c.h.b16 %v6493
  %v6561 = vunpack.c.l.b16 %v6494
  %v6562 = vunpack.c.h.b16 %v6494
  %v6563 = vunpack.c.l.b16 %v6495
  %v6564 = vunpack.c.h.b16 %v6495
  %v6565 = vunpack.c.l.b16 %v6496
  %v6566 = vunpack.c.h.b16 %v6496
  %v6567 = vunpack.c.l.b16 %v6497
  %v6568 = vunpack.c.h.b16 %v6497
  %v6569 = vunpack.c.l.b16 %v6498
  %v6570 = vunpack.c.h.b16 %v6498
  %v6571 = vunpack.c.l.b16 %v6499
  %v6572 = vunpack.c.h.b16 %v6499
  %v6573 = vunpack.c.l.b16 %v6500
  %v6574 = vunpack.c.h.b16 %v6500
  %v6575 = vunpack.c.l.b16 %v6501
  %v6576 = vunpack.c.h.b16 %v6501
  %v6577 = vunpack.c.l.b16 %v6502
  %v6578 = vunpack.c.h.b16 %v6502
  %v6579 = vunpack.c.l.b16 %v6503
  %v6580 = vunpack.c.h.b16 %v6503
  %v6581 = vunpack.c.l.b16 %v6504
  %v6582 = vunpack.c.h.b16 %v6504
  %v6583 = vunpack.c.l.b16 %v6505
  %v6584 = vunpack.c.h.b16 %v6505
  %v6585 = vunpack.c.l.b16 %v6506
  %v6586 = vunpack.c.h.b16 %v6506
  %v6587 = vunpack.c.l.b16 %v6507
  %v6588 = vunpack.c.h.b16 %v6507
  %v6589 = vunpack.c.l.b16 %v6508
  %v6590 = vunpack.c.h.b16 %v6508
  %v6591 = vunpack.c.l.b16 %v6509
  %v6592 = vunpack.c.h.b16 %v6509
  %v6593 = vunpack.c.l.b16 %v6510
  %v6594 = vunpack.c.h.b16 %v6510
  %v6595 = vunpack.c.l.b16 %v6511
  %v6596 = vunpack.c.h.b16 %v6511
  %v6597 = vunpack.c.l.b16 %v6512
  %v6598 = vunpack.c.h.b16 %v6512
  %v6599 = vunpack.c.l.b16 %v6513
  %v6600 = vunpack.c.h.b16 %v6513
  %v6601 = vunpack.c.l.b16 %v6514
  %v6602 = vunpack.c.h.b16 %v6514
  %v6603 = vunpack.c.l.b16 %v6515
  %v6604 = vunpack.c.h.b16 %v6515
  %v6605 = vunpack.c.l.b16 %v6516
  %v6606 = vunpack.c.h.b16 %v6516
  %v6607 = vunpack.c.l.b16 %v6517
  %v6608 = vunpack.c.h.b16 %v6517
  %v6609 = vunpack.c.l.b16 %v6518
  %v6610 = vunpack.c.h.b16 %v6518
  %v6611 = vunpack.c.l.b16 %v6519
  %v6612 = vunpack.c.h.b16 %v6519
  %v6613 = vunpack.c.l.b16 %v6520
  %v6614 = vunpack.c.h.b16 %v6520
  %v6615 = vunpack.c.l.b16 %v6521
  %v6616 = vunpack.c.h.b16 %v6521
  %v6617 = vunpack.c.l.b16 %v6522
  %v6618 = vunpack.c.h.b16 %v6522
  %v6619 = vpack.c.b16 %v6559, %v6555
  %v6620 = vpack.c.b16 %v6560, %v6556
  %v6621 = vpack.c.b16 %v6561, %v6557
  %v6622 = vpack.c.b16 %v6562, %v6558
  %v6623 = vpack.c.b16 %v6567, %v6563
  %v6624 = vpack.c.b16 %v6568, %v6564
  %v6625 = vpack.c.b16 %v6569, %v6565
  %v6626 = vpack.c.b16 %v6570, %v6566
  %v6627 = vpack.c.b16 %v6575, %v6571
  %v6628 = vpack.c.b16 %v6576, %v6572
  %v6629 = vpack.c.b16 %v6577, %v6573
  %v6630 = vpack.c.b16 %v6578, %v6574
  %v6631 = vpack.c.b16 %v6583, %v6579
  %v6632 = vpack.c.b16 %v6584, %v6580
  %v6633 = vpack.c.b16 %v6585, %v6581
  %v6634 = vpack.c.b16 %v6586, %v6582
  %v6635 = vpack.c.b16 %v6591, %v6587
  %v6636 = vpack.c.b16 %v6592, %v6588
  %v6637 = vpack.c.b16 %v6593, %v6589
  %v6638 = vpack.c.b16 %v6594, %v6590
  %v6639 = vpack.c.b16 %v6599, %v6595
  %v6640 = vpack.c.b16 %v6600, %v6596
  %v6641 = vpack.c.b16 %v6601, %v6597
  %v6642 = vpack.c.b16 %v6602, %v6598
  %v6643 = vpack.c.b16 %v6607, %v6603
  %v6644 = vpack.c.b16 %v6608, %v6604
  %v6645 = vpack.c.b16 %v6609, %v6605
  %v6646 = vpack.c.b16 %v6610, %v6606
  %v6647 = vpack.c.b16 %v6615, %v6611
  %v6648 = vpack.c.b16 %v6616, %v6612
  %v6649 = vpack.c.b16 %v6617, %v6613
  %v6650 = vpack.c.b16 %v6618, %v6614
  %6683 = vmatprep.subr.bf16.mxu0 %v6620
  %6684 = vmatpush1.bf16.msra.mxu0 %v6619
  %6685 = vmatprep.subr.bf16.mxu0 %v6624
  %6686 = vmatpush1.bf16.msra.mxu0 %v6623
  %6687 = vmatprep.subr.bf16.mxu0 %v6628
  %6688 = vmatpush1.bf16.msra.mxu0 %v6627
  %6689 = vmatprep.subr.bf16.mxu0 %v6632
  %6690 = vmatpush1.bf16.msra.mxu0 %v6631
  %6691 = vmatprep.subr.bf16.mxu0 %v6636
  %6692 = vmatpush1.bf16.msra.mxu0 %v6635
  %6693 = vmatprep.subr.bf16.mxu0 %v6640
  %6694 = vmatpush1.bf16.msra.mxu0 %v6639
  %6695 = vmatprep.subr.bf16.mxu0 %v6644
  %6696 = vmatpush1.bf16.msra.mxu0 %v6643
  %6697 = vmatprep.subr.bf16.mxu0 %v6648
  %6698 = vmatpush1.bf16.msra.mxu0 %v6647
  %6699 = vmatprep.subr.bf16.mxu0 0
  %6700 = vmatpush1.bf16.msra.mxu0 0
  %6701 = vmatprep.subr.bf16.mxu0 0
  %6702 = vmatpush1.bf16.msra.mxu0 0
  %6703 = vmatprep.subr.bf16.mxu0 0
  %6704 = vmatpush1.bf16.msra.mxu0 0
  %6705 = vmatprep.subr.bf16.mxu0 0
  %6706 = vmatpush1.bf16.msra.mxu0 0
  %6707 = vmatprep.subr.bf16.mxu0 0
  %6708 = vmatpush1.bf16.msra.mxu0 0
  %6709 = vmatprep.subr.bf16.mxu0 0
  %6710 = vmatpush1.bf16.msra.mxu0 0
  %6711 = vmatprep.subr.bf16.mxu0 0
  %6712 = vmatpush1.bf16.msra.mxu0 0
  %6713 = vmatprep.subr.bf16.mxu0 0
  %6714 = vmatpush1.bf16.msra.mxu0 0
  %6715 = vmatprep.mubr.bf16.mxu0 0
  %6716 = vmatmul.mubr.bf16.gmra.mrb[0].mxu0 %v6490
  %v6717 = vpop.f32.mrb[0].mxu0
  %v6718 = vadd.f32 0.0, %v6717
  %v6719 = vpop.f32.mrb[0].mxu0
  %v6720 = vadd.f32 0.0, %v6719
  %v6721 = vpop.f32.mrb[0].mxu0
  %v6722 = vadd.f32 0.0, %v6721
  %v6723 = vpop.f32.mrb[0].mxu0
  %v6724 = vadd.f32 0.0, %v6723
  %6725 = vdwg.mxu0
  %6726 = vmatprep.subr.bf16.mxu0 %v6622
  %6727 = vmatpush1.bf16.msra.mxu0 %v6621
  %6728 = vmatprep.subr.bf16.mxu0 %v6626
  %6729 = vmatpush1.bf16.msra.mxu0 %v6625
  %6730 = vmatprep.subr.bf16.mxu0 %v6630
  %6731 = vmatpush1.bf16.msra.mxu0 %v6629
  %6732 = vmatprep.subr.bf16.mxu0 %v6634
  %6733 = vmatpush1.bf16.msra.mxu0 %v6633
  %6734 = vmatprep.subr.bf16.mxu0 %v6638
  %6735 = vmatpush1.bf16.msra.mxu0 %v6637
  %6736 = vmatprep.subr.bf16.mxu0 %v6642
  %6737 = vmatpush1.bf16.msra.mxu0 %v6641
  %6738 = vmatprep.subr.bf16.mxu0 %v6646
  %6739 = vmatpush1.bf16.msra.mxu0 %v6645
  %6740 = vmatprep.subr.bf16.mxu0 %v6650
  %6741 = vmatpush1.bf16.msra.mxu0 %v6649
  %6742 = vmatprep.subr.bf16.mxu0 0
  %6743 = vmatpush1.bf16.msra.mxu0 0
  %6744 = vmatprep.subr.bf16.mxu0 0
  %6745 = vmatpush1.bf16.msra.mxu0 0
  %6746 = vmatprep.subr.bf16.mxu0 0
  %6747 = vmatpush1.bf16.msra.mxu0 0
  %6748 = vmatprep.subr.bf16.mxu0 0
  %6749 = vmatpush1.bf16.msra.mxu0 0
  %6750 = vmatprep.subr.bf16.mxu0 0
  %6751 = vmatpush1.bf16.msra.mxu0 0
  %6752 = vmatprep.subr.bf16.mxu0 0
  %6753 = vmatpush1.bf16.msra.mxu0 0
  %6754 = vmatprep.subr.bf16.mxu0 0
  %6755 = vmatpush1.bf16.msra.mxu0 0
  %6756 = vmatprep.subr.bf16.mxu0 0
  %6757 = vmatpush1.bf16.msra.mxu0 0
  %6758 = vmatprep.mubr.bf16.mxu0 0
  %6759 = vmatmul.mubr.bf16.gmra.mrb[0].mxu0 %v6490
  %v6760 = vpop.f32.mrb[0].mxu0
  %v6761 = vadd.f32 0.0, %v6760
  %v6762 = vpop.f32.mrb[0].mxu0
  %v6763 = vadd.f32 0.0, %v6762
  %v6764 = vpop.f32.mrb[0].mxu0
  %v6765 = vadd.f32 0.0, %v6764
  %v6766 = vpop.f32.mrb[0].mxu0
  %v6767 = vadd.f32 0.0, %v6766
  %6768 = vdwg.mxu0
  %v6769 = vunpack.c.l.bf16 %v6486
  %v6770 = vunpack.c.l.bf16 %v6487
  %v6771 = vunpack.c.l.bf16 %v6488
  %v6772 = vunpack.c.l.bf16 %v6489
  %v6773 = vunpack.c.h.bf16 %v6486
  %v6774 = vunpack.c.h.bf16 %v6487
  %v6775 = vunpack.c.h.bf16 %v6488
  %v6776 = vunpack.c.h.bf16 %v6489
  %v6777 = vadd.f32 %v6769, %v6718
  %v6778 = vadd.f32 %v6770, %v6720
  %v6779 = vadd.f32 %v6771, %v6761
  %v6780 = vadd.f32 %v6772, %v6763
  %v6781 = vadd.f32 %v6773, %v6722
  %v6782 = vadd.f32 %v6774, %v6724
  %v6783 = vadd.f32 %v6775, %v6765
  %v6784 = vadd.f32 %v6776, %v6767
  %v6785 = vld [vmem:[#allocation3] sm:$0xff]
  %v6786 = vld [vmem:[#allocation3 + $0x8] sm:$0xff]
  %v6787 = vxor.u32 %v6777, 2147483648
  %v6788 = vxor.u32 %v6778, 2147483648
  %v6789 = vxor.u32 %v6779, 2147483648
  %v6790 = vxor.u32 %v6781, 2147483648
  %v6791 = vxor.u32 %v6782, 2147483648
  %v6792 = vxor.u32 %v6783, 2147483648
  %v6793 = vmul.f32 %v6787, 1.442695
  %v6794 = vpow.pop %v6793
  %v6795 = vmul.f32 %v6788, 1.442695
  %v6796 = vpow.pop %v6795
  %v6797 = vmul.f32 %v6789, 1.442695
  %v6798 = vpow.pop %v6797
  %v6799 = vmul.f32 %v6790, 1.442695
  %v6800 = vpow.pop %v6799
  %v6801 = vmul.f32 %v6791, 1.442695
  %v6802 = vpow.pop %v6801
  %v6803 = vmul.f32 %v6792, 1.442695
  %v6804 = vpow.pop %v6803
  %v6805 = vadd.f32 %v6794, 1.0
  %v6806 = vadd.f32 %v6796, 1.0
  %v6807 = vadd.f32 %v6798, 1.0
  %v6808 = vadd.f32 %v6800, 1.0
  %v6809 = vadd.f32 %v6802, 1.0
  %v6810 = vadd.f32 %v6804, 1.0
  %v6811 = vrcp.pop %v6805
  %v6812 = vmul.f32 1.0, %v6811
  %v6813 = vrcp.pop %v6806
  %v6814 = vmul.f32 1.0, %v6813
  %v6815 = vrcp.pop %v6807
  %v6816 = vmul.f32 1.0, %v6815
  %v6817 = vrcp.pop %v6808
  %v6818 = vmul.f32 1.0, %v6817
  %v6819 = vrcp.pop %v6809
  %v6820 = vmul.f32 1.0, %v6819
  %v6821 = vrcp.pop %v6810
  %v6822 = vmul.f32 1.0, %v6821
  %v6823 = vtanh.pop %v6780
  %v6824 = vtanh.pop %v6784
  %v6825 = vmul.f32 %v6814, %v6785
  %v6826 = vmul.f32 %v6820, %v6786
  %v6827 = vmul.f32 %v6812, %v6823
  %v6828 = vmul.f32 %v6818, %v6824
  %v6829 = vadd.f32 %v6825, %v6827
  %v6830 = vadd.f32 %v6826, %v6828
  %v6831 = vtanh.pop %v6829
  %v6832 = vtanh.pop %v6830
  %v6833 = vmul.f32 %v6816, %v6831
  %v6834 = vmul.f32 %v6822, %v6832
  %v6835 = vpack.c.bf16 %v6834, %v6833
  %6836 = vst [vmem:[#allocation2] sm:$0xff] %v6835
  %6837 = vst [vmem:[#allocation3] sm:$0xff] %v6829
  %6838 = vst [vmem:[#allocation3 + $0x8] sm:$0xff] %v6830
  %v6839 = vld [vmem:[#allocation4] sm:$0xff]
  %v6840 = vld [vmem:[%s5] sm:$0xff]
  %v6841 = vld [vmem:[%s5 + $0x8] sm:$0xff]
  %v6842 = vld [vmem:[%s5 + $0x10] sm:$0xff]
  %v6843 = vld [vmem:[%s5 + $0x18] sm:$0xff]
  %v6844 = vld [vmem:[%s5 + $0x20] sm:$0xff]
  %v6845 = vld [vmem:[%s5 + $0x28] sm:$0xff]
  %v6846 = vld [vmem:[%s5 + $0x30] sm:$0xff]
  %v6847 = vld [vmem:[%s5 + $0x38] sm:$0xff]
  %v6848 = vld [vmem:[%s5 + $0x40] sm:$0xff]
  %v6849 = vld [vmem:[%s5 + $0x48] sm:$0xff]
  %v6850 = vld [vmem:[%s5 + $0x50] sm:$0xff]
  %v6851 = vld [vmem:[%s5 + $0x58] sm:$0xff]
  %v6852 = vld [vmem:[%s5 + $0x60] sm:$0xff]
  %v6853 = vld [vmem:[%s5 + $0x68] sm:$0xff]
  %v6854 = vld [vmem:[%s5 + $0x70] sm:$0xff]
  %v6855 = vld [vmem:[%s5 + $0x78] sm:$0xff]
  %v6856 = vld [vmem:[%s5 + $0x80] sm:$0xff]
  %v6857 = vld [vmem:[%s5 + $0x88] sm:$0xff]
  %v6858 = vld [vmem:[%s5 + $0x90] sm:$0xff]
  %v6859 = vld [vmem:[%s5 + $0x98] sm:$0xff]
  %v6860 = vld [vmem:[%s5 + $0xa0] sm:$0xff]
  %v6861 = vld [vmem:[%s5 + $0xa8] sm:$0xff]
  %v6862 = vld [vmem:[%s5 + $0xb0] sm:$0xff]
  %v6863 = vld [vmem:[%s5 + $0xb8] sm:$0xff]
  %v6864 = vld [vmem:[%s5 + $0xc0] sm:$0xff]
  %v6865 = vld [vmem:[%s5 + $0xc8] sm:$0xff]
  %v6866 = vld [vmem:[%s5 + $0xd0] sm:$0xff]
  %v6867 = vld [vmem:[%s5 + $0xd8] sm:$0xff]
  %v6868 = vld [vmem:[%s5 + $0xe0] sm:$0xff]
  %v6869 = vld [vmem:[%s5 + $0xe8] sm:$0xff]
  %v6870 = vld [vmem:[%s5 + $0xf0] sm:$0xff]
  %v6871 = vld [vmem:[%s5 + $0xf8] sm:$0xff]
  %v6872 = vld [vmem:[%s4] sm:$0xff]
  %v6873 = vld [vmem:[%s4 + $0x8] sm:$0xff]
  %v6874 = vld [vmem:[%s4 + $0x10] sm:$0xff]
  %v6875 = vld [vmem:[%s4 + $0x18] sm:$0xff]
  %v6876 = vld [vmem:[%s4 + $0x20] sm:$0xff]
  %v6877 = vld [vmem:[%s4 + $0x28] sm:$0xff]
  %v6878 = vld [vmem:[%s4 + $0x30] sm:$0xff]
  %v6879 = vld [vmem:[%s4 + $0x38] sm:$0xff]
  %v6880 = vld [vmem:[%s4 + $0x40] sm:$0xff]
  %v6881 = vld [vmem:[%s4 + $0x48] sm:$0xff]
  %v6882 = vld [vmem:[%s4 + $0x50] sm:$0xff]
  %v6883 = vld [vmem:[%s4 + $0x58] sm:$0xff]
  %v6884 = vld [vmem:[%s4 + $0x60] sm:$0xff]
  %v6885 = vld [vmem:[%s4 + $0x68] sm:$0xff]
  %v6886 = vld [vmem:[%s4 + $0x70] sm:$0xff]
  %v6887 = vld [vmem:[%s4 + $0x78] sm:$0xff]
  %v6888 = vld [vmem:[%s4 + $0x80] sm:$0xff]
  %v6889 = vld [vmem:[%s4 + $0x88] sm:$0xff]
  %v6890 = vld [vmem:[%s4 + $0x90] sm:$0xff]
  %v6891 = vld [vmem:[%s4 + $0x98] sm:$0xff]
  %v6892 = vld [vmem:[%s4 + $0xa0] sm:$0xff]
  %v6893 = vld [vmem:[%s4 + $0xa8] sm:$0xff]
  %v6894 = vld [vmem:[%s4 + $0xb0] sm:$0xff]
  %v6895 = vld [vmem:[%s4 + $0xb8] sm:$0xff]
  %v6896 = vld [vmem:[%s4 + $0xc0] sm:$0xff]
  %v6897 = vld [vmem:[%s4 + $0xc8] sm:$0xff]
  %v6898 = vld [vmem:[%s4 + $0xd0] sm:$0xff]
  %v6899 = vld [vmem:[%s4 + $0xd8] sm:$0xff]
  %v6900 = vld [vmem:[%s4 + $0xe0] sm:$0xff]
  %v6901 = vld [vmem:[%s4 + $0xe8] sm:$0xff]
  %v6902 = vld [vmem:[%s4 + $0xf0] sm:$0xff]
  %v6903 = vld [vmem:[%s4 + $0xf8] sm:$0xff]
  %v6936 = vunpack.c.l.b16 %v6872
  %v6937 = vunpack.c.h.b16 %v6872
  %v6938 = vunpack.c.l.b16 %v6873
  %v6939 = vunpack.c.h.b16 %v6873
  %v6940 = vunpack.c.l.b16 %v6874
  %v6941 = vunpack.c.h.b16 %v6874
  %v6942 = vunpack.c.l.b16 %v6875
  %v6943 = vunpack.c.h.b16 %v6875
  %v6944 = vunpack.c.l.b16 %v6876
  %v6945 = vunpack.c.h.b16 %v6876
  %v6946 = vunpack.c.l.b16 %v6877
  %v6947 = vunpack.c.h.b16 %v6877
  %v6948 = vunpack.c.l.b16 %v6878
  %v6949 = vunpack.c.h.b16 %v6878
  %v6950 = vunpack.c.l.b16 %v6879
  %v6951 = vunpack.c.h.b16 %v6879
  %v6952 = vunpack.c.l.b16 %v6880
  %v6953 = vunpack.c.h.b16 %v6880
  %v6954 = vunpack.c.l.b16 %v6881
  %v6955 = vunpack.c.h.b16 %v6881
  %v6956 = vunpack.c.l.b16 %v6882
  %v6957 = vunpack.c.h.b16 %v6882
  %v6958 = vunpack.c.l.b16 %v6883
  %v6959 = vunpack.c.h.b16 %v6883
  %v6960 = vunpack.c.l.b16 %v6884
  %v6961 = vunpack.c.h.b16 %v6884
  %v6962 = vunpack.c.l.b16 %v6885
  %v6963 = vunpack.c.h.b16 %v6885
  %v6964 = vunpack.c.l.b16 %v6886
  %v6965 = vunpack.c.h.b16 %v6886
  %v6966 = vunpack.c.l.b16 %v6887
  %v6967 = vunpack.c.h.b16 %v6887
  %v6968 = vunpack.c.l.b16 %v6888
  %v6969 = vunpack.c.h.b16 %v6888
  %v6970 = vunpack.c.l.b16 %v6889
  %v6971 = vunpack.c.h.b16 %v6889
  %v6972 = vunpack.c.l.b16 %v6890
  %v6973 = vunpack.c.h.b16 %v6890
  %v6974 = vunpack.c.l.b16 %v6891
  %v6975 = vunpack.c.h.b16 %v6891
  %v6976 = vunpack.c.l.b16 %v6892
  %v6977 = vunpack.c.h.b16 %v6892
  %v6978 = vunpack.c.l.b16 %v6893
  %v6979 = vunpack.c.h.b16 %v6893
  %v6980 = vunpack.c.l.b16 %v6894
  %v6981 = vunpack.c.h.b16 %v6894
  %v6982 = vunpack.c.l.b16 %v6895
  %v6983 = vunpack.c.h.b16 %v6895
  %v6984 = vunpack.c.l.b16 %v6896
  %v6985 = vunpack.c.h.b16 %v6896
  %v6986 = vunpack.c.l.b16 %v6897
  %v6987 = vunpack.c.h.b16 %v6897
  %v6988 = vunpack.c.l.b16 %v6898
  %v6989 = vunpack.c.h.b16 %v6898
  %v6990 = vunpack.c.l.b16 %v6899
  %v6991 = vunpack.c.h.b16 %v6899
  %v6992 = vunpack.c.l.b16 %v6900
  %v6993 = vunpack.c.h.b16 %v6900
  %v6994 = vunpack.c.l.b16 %v6901
  %v6995 = vunpack.c.h.b16 %v6901
  %v6996 = vunpack.c.l.b16 %v6902
  %v6997 = vunpack.c.h.b16 %v6902
  %v6998 = vunpack.c.l.b16 %v6903
  %v6999 = vunpack.c.h.b16 %v6903
  %v7000 = vpack.c.b16 %v6940, %v6936
  %v7001 = vpack.c.b16 %v6941, %v6937
  %v7002 = vpack.c.b16 %v6942, %v6938
  %v7003 = vpack.c.b16 %v6943, %v6939
  %v7004 = vpack.c.b16 %v6948, %v6944
  %v7005 = vpack.c.b16 %v6949, %v6945
  %v7006 = vpack.c.b16 %v6950, %v6946
  %v7007 = vpack.c.b16 %v6951, %v6947
  %v7008 = vpack.c.b16 %v6956, %v6952
  %v7009 = vpack.c.b16 %v6957, %v6953
  %v7010 = vpack.c.b16 %v6958, %v6954
  %v7011 = vpack.c.b16 %v6959, %v6955
  %v7012 = vpack.c.b16 %v6964, %v6960
  %v7013 = vpack.c.b16 %v6965, %v6961
  %v7014 = vpack.c.b16 %v6966, %v6962
  %v7015 = vpack.c.b16 %v6967, %v6963
  %v7016 = vpack.c.b16 %v6972, %v6968
  %v7017 = vpack.c.b16 %v6973, %v6969
  %v7018 = vpack.c.b16 %v6974, %v6970
  %v7019 = vpack.c.b16 %v6975, %v6971
  %v7020 = vpack.c.b16 %v6980, %v6976
  %v7021 = vpack.c.b16 %v6981, %v6977
  %v7022 = vpack.c.b16 %v6982, %v6978
  %v7023 = vpack.c.b16 %v6983, %v6979
  %v7024 = vpack.c.b16 %v6988, %v6984
  %v7025 = vpack.c.b16 %v6989, %v6985
  %v7026 = vpack.c.b16 %v6990, %v6986
  %v7027 = vpack.c.b16 %v6991, %v6987
  %v7028 = vpack.c.b16 %v6996, %v6992
  %v7029 = vpack.c.b16 %v6997, %v6993
  %v7030 = vpack.c.b16 %v6998, %v6994
  %v7031 = vpack.c.b16 %v6999, %v6995
  %7064 = vmatprep.subr.bf16.mxu0 %v7001
  %7065 = vmatpush1.bf16.msra.mxu0 %v7000
  %7066 = vmatprep.subr.bf16.mxu0 %v7005
  %7067 = vmatpush1.bf16.msra.mxu0 %v7004
  %7068 = vmatprep.subr.bf16.mxu0 %v7009
  %7069 = vmatpush1.bf16.msra.mxu0 %v7008
  %7070 = vmatprep.subr.bf16.mxu0 %v7013
  %7071 = vmatpush1.bf16.msra.mxu0 %v7012
  %7072 = vmatprep.subr.bf16.mxu0 %v7017
  %7073 = vmatpush1.bf16.msra.mxu0 %v7016
  %7074 = vmatprep.subr.bf16.mxu0 %v7021
  %7075 = vmatpush1.bf16.msra.mxu0 %v7020
  %7076 = vmatprep.subr.bf16.mxu0 %v7025
  %7077 = vmatpush1.bf16.msra.mxu0 %v7024
  %7078 = vmatprep.subr.bf16.mxu0 %v7029
  %7079 = vmatpush1.bf16.msra.mxu0 %v7028
  %7080 = vmatprep.subr.bf16.mxu0 0
  %7081 = vmatpush1.bf16.msra.mxu0 0
  %7082 = vmatprep.subr.bf16.mxu0 0
  %7083 = vmatpush1.bf16.msra.mxu0 0
  %7084 = vmatprep.subr.bf16.mxu0 0
  %7085 = vmatpush1.bf16.msra.mxu0 0
  %7086 = vmatprep.subr.bf16.mxu0 0
  %7087 = vmatpush1.bf16.msra.mxu0 0
  %7088 = vmatprep.subr.bf16.mxu0 0
  %7089 = vmatpush1.bf16.msra.mxu0 0
  %7090 = vmatprep.subr.bf16.mxu0 0
  %7091 = vmatpush1.bf16.msra.mxu0 0
  %7092 = vmatprep.subr.bf16.mxu0 0
  %7093 = vmatpush1.bf16.msra.mxu0 0
  %7094 = vmatprep.subr.bf16.mxu0 0
  %7095 = vmatpush1.bf16.msra.mxu0 0
  %7096 = vmatprep.mubr.bf16.mxu0 0
  %7097 = vmatmul.mubr.bf16.gmra.mrb[0].mxu0 %v6835
  %v7098 = vpop.f32.mrb[0].mxu0
  %v7099 = vadd.f32 0.0, %v7098
  %v7100 = vpop.f32.mrb[0].mxu0
  %v7101 = vadd.f32 0.0, %v7100
  %v7102 = vpop.f32.mrb[0].mxu0
  %v7103 = vadd.f32 0.0, %v7102
  %v7104 = vpop.f32.mrb[0].mxu0
  %v7105 = vadd.f32 0.0, %v7104
  %7106 = vdwg.mxu0
  %7107 = vmatprep.subr.bf16.mxu0 %v7003
  %7108 = vmatpush1.bf16.msra.mxu0 %v7002
  %7109 = vmatprep.subr.bf16.mxu0 %v7007
  %7110 = vmatpush1.bf16.msra.mxu0 %v7006
  %7111 = vmatprep.subr.bf16.mxu0 %v7011
  %7112 = vmatpush1.bf16.msra.mxu0 %v7010
  %7113 = vmatprep.subr.bf16.mxu0 %v7015
  %7114 = vmatpush1.bf16.msra.mxu0 %v7014
  %7115 = vmatprep.subr.bf16.mxu0 %v7019
  %7116 = vmatpush1.bf16.msra.mxu0 %v7018
  %7117 = vmatprep.subr.bf16.mxu0 %v7023
  %7118 = vmatpush1.bf16.msra.mxu0 %v7022
  %7119 = vmatprep.subr.bf16.mxu0 %v7027
  %7120 = vmatpush1.bf16.msra.mxu0 %v7026
  %7121 = vmatprep.subr.bf16.mxu0 %v7031
  %7122 = vmatpush1.bf16.msra.mxu0 %v7030
  %7123 = vmatprep.subr.bf16.mxu0 0
  %7124 = vmatpush1.bf16.msra.mxu0 0
  %7125 = vmatprep.subr.bf16.mxu0 0
  %7126 = vmatpush1.bf16.msra.mxu0 0
  %7127 = vmatprep.subr.bf16.mxu0 0
  %7128 = vmatpush1.bf16.msra.mxu0 0
  %7129 = vmatprep.subr.bf16.mxu0 0
  %7130 = vmatpush1.bf16.msra.mxu0 0
  %7131 = vmatprep.subr.bf16.mxu0 0
  %7132 = vmatpush1.bf16.msra.mxu0 0
  %7133 = vmatprep.subr.bf16.mxu0 0
  %7134 = vmatpush1.bf16.msra.mxu0 0
  %7135 = vmatprep.subr.bf16.mxu0 0
  %7136 = vmatpush1.bf16.msra.mxu0 0
  %7137 = vmatprep.subr.bf16.mxu0 0
  %7138 = vmatpush1.bf16.msra.mxu0 0
  %7139 = vmatprep.mubr.bf16.mxu0 0
  %7140 = vmatmul.mubr.bf16.gmra.mrb[0].mxu0 %v6835
  %v7141 = vpop.f32.mrb[0].mxu0
  %v7142 = vadd.f32 0.0, %v7141
  %v7143 = vpop.f32.mrb[0].mxu0
  %v7144 = vadd.f32 0.0, %v7143
  %v7145 = vpop.f32.mrb[0].mxu0
  %v7146 = vadd.f32 0.0, %v7145
  %v7147 = vpop.f32.mrb[0].mxu0
  %v7148 = vadd.f32 0.0, %v7147
  %7149 = vdwg.mxu0
  %v7182 = vunpack.c.l.b16 %v6840
  %v7183 = vunpack.c.h.b16 %v6840
  %v7184 = vunpack.c.l.b16 %v6841
  %v7185 = vunpack.c.h.b16 %v6841
  %v7186 = vunpack.c.l.b16 %v6842
  %v7187 = vunpack.c.h.b16 %v6842
  %v7188 = vunpack.c.l.b16 %v6843
  %v7189 = vunpack.c.h.b16 %v6843
  %v7190 = vunpack.c.l.b16 %v6844
  %v7191 = vunpack.c.h.b16 %v6844
  %v7192 = vunpack.c.l.b16 %v6845
  %v7193 = vunpack.c.h.b16 %v6845
  %v7194 = vunpack.c.l.b16 %v6846
  %v7195 = vunpack.c.h.b16 %v6846
  %v7196 = vunpack.c.l.b16 %v6847
  %v7197 = vunpack.c.h.b16 %v6847
  %v7198 = vunpack.c.l.b16 %v6848
  %v7199 = vunpack.c.h.b16 %v6848
  %v7200 = vunpack.c.l.b16 %v6849
  %v7201 = vunpack.c.h.b16 %v6849
  %v7202 = vunpack.c.l.b16 %v6850
  %v7203 = vunpack.c.h.b16 %v6850
  %v7204 = vunpack.c.l.b16 %v6851
  %v7205 = vunpack.c.h.b16 %v6851
  %v7206 = vunpack.c.l.b16 %v6852
  %v7207 = vunpack.c.h.b16 %v6852
  %v7208 = vunpack.c.l.b16 %v6853
  %v7209 = vunpack.c.h.b16 %v6853
  %v7210 = vunpack.c.l.b16 %v6854
  %v7211 = vunpack.c.h.b16 %v6854
  %v7212 = vunpack.c.l.b16 %v6855
  %v7213 = vunpack.c.h.b16 %v6855
  %v7214 = vunpack.c.l.b16 %v6856
  %v7215 = vunpack.c.h.b16 %v6856
  %v7216 = vunpack.c.l.b16 %v6857
  %v7217 = vunpack.c.h.b16 %v6857
  %v7218 = vunpack.c.l.b16 %v6858
  %v7219 = vunpack.c.h.b16 %v6858
  %v7220 = vunpack.c.l.b16 %v6859
  %v7221 = vunpack.c.h.b16 %v6859
  %v7222 = vunpack.c.l.b16 %v6860
  %v7223 = vunpack.c.h.b16 %v6860
  %v7224 = vunpack.c.l.b16 %v6861
  %v7225 = vunpack.c.h.b16 %v6861
  %v7226 = vunpack.c.l.b16 %v6862
  %v7227 = vunpack.c.h.b16 %v6862
  %v7228 = vunpack.c.l.b16 %v6863
  %v7229 = vunpack.c.h.b16 %v6863
  %v7230 = vunpack.c.l.b16 %v6864
  %v7231 = vunpack.c.h.b16 %v6864
  %v7232 = vunpack.c.l.b16 %v6865
  %v7233 = vunpack.c.h.b16 %v6865
  %v7234 = vunpack.c.l.b16 %v6866
  %v7235 = vunpack.c.h.b16 %v6866
  %v7236 = vunpack.c.l.b16 %v6867
  %v7237 = vunpack.c.h.b16 %v6867
  %v7238 = vunpack.c.l.b16 %v6868
  %v7239 = vunpack.c.h.b16 %v6868
  %v7240 = vunpack.c.l.b16 %v6869
  %v7241 = vunpack.c.h.b16 %v6869
  %v7242 = vunpack.c.l.b16 %v6870
  %v7243 = vunpack.c.h.b16 %v6870
  %v7244 = vunpack.c.l.b16 %v6871
  %v7245 = vunpack.c.h.b16 %v6871
  %v7246 = vpack.c.b16 %v7186, %v7182
  %v7247 = vpack.c.b16 %v7187, %v7183
  %v7248 = vpack.c.b16 %v7188, %v7184
  %v7249 = vpack.c.b16 %v7189, %v7185
  %v7250 = vpack.c.b16 %v7194, %v7190
  %v7251 = vpack.c.b16 %v7195, %v7191
  %v7252 = vpack.c.b16 %v7196, %v7192
  %v7253 = vpack.c.b16 %v7197, %v7193
  %v7254 = vpack.c.b16 %v7202, %v7198
  %v7255 = vpack.c.b16 %v7203, %v7199
  %v7256 = vpack.c.b16 %v7204, %v7200
  %v7257 = vpack.c.b16 %v7205, %v7201
  %v7258 = vpack.c.b16 %v7210, %v7206
  %v7259 = vpack.c.b16 %v7211, %v7207
  %v7260 = vpack.c.b16 %v7212, %v7208
  %v7261 = vpack.c.b16 %v7213, %v7209
  %v7262 = vpack.c.b16 %v7218, %v7214
  %v7263 = vpack.c.b16 %v7219, %v7215
  %v7264 = vpack.c.b16 %v7220, %v7216
  %v7265 = vpack.c.b16 %v7221, %v7217
  %v7266 = vpack.c.b16 %v7226, %v7222
  %v7267 = vpack.c.b16 %v7227, %v7223
  %v7268 = vpack.c.b16 %v7228, %v7224
  %v7269 = vpack.c.b16 %v7229, %v7225
  %v7270 = vpack.c.b16 %v7234, %v7230
  %v7271 = vpack.c.b16 %v7235, %v7231
  %v7272 = vpack.c.b16 %v7236, %v7232
  %v7273 = vpack.c.b16 %v7237, %v7233
  %v7274 = vpack.c.b16 %v7242, %v7238
  %v7275 = vpack.c.b16 %v7243, %v7239
  %v7276 = vpack.c.b16 %v7244, %v7240
  %v7277 = vpack.c.b16 %v7245, %v7241
  %7310 = vmatprep.subr.bf16.mxu0 %v7247
  %7311 = vmatpush1.bf16.msra.mxu0 %v7246
  %7312 = vmatprep.subr.bf16.mxu0 %v7251
  %7313 = vmatpush1.bf16.msra.mxu0 %v7250
  %7314 = vmatprep.subr.bf16.mxu0 %v7255
  %7315 = vmatpush1.bf16.msra.mxu0 %v7254
  %7316 = vmatprep.subr.bf16.mxu0 %v7259
  %7317 = vmatpush1.bf16.msra.mxu0 %v7258
  %7318 = vmatprep.subr.bf16.mxu0 %v7263
  %7319 = vmatpush1.bf16.msra.mxu0 %v7262
  %7320 = vmatprep.subr.bf16.mxu0 %v7267
  %7321 = vmatpush1.bf16.msra.mxu0 %v7266
  %7322 = vmatprep.subr.bf16.mxu0 %v7271
  %7323 = vmatpush1.bf16.msra.mxu0 %v7270
  %7324 = vmatprep.subr.bf16.mxu0 %v7275
  %7325 = vmatpush1.bf16.msra.mxu0 %v7274
  %7326 = vmatprep.subr.bf16.mxu0 0
  %7327 = vmatpush1.bf16.msra.mxu0 0
  %7328 = vmatprep.subr.bf16.mxu0 0
  %7329 = vmatpush1.bf16.msra.mxu0 0
  %7330 = vmatprep.subr.bf16.mxu0 0
  %7331 = vmatpush1.bf16.msra.mxu0 0
  %7332 = vmatprep.subr.bf16.mxu0 0
  %7333 = vmatpush1.bf16.msra.mxu0 0
  %7334 = vmatprep.subr.bf16.mxu0 0
  %7335 = vmatpush1.bf16.msra.mxu0 0
  %7336 = vmatprep.subr.bf16.mxu0 0
  %7337 = vmatpush1.bf16.msra.mxu0 0
  %7338 = vmatprep.subr.bf16.mxu0 0
  %7339 = vmatpush1.bf16.msra.mxu0 0
  %7340 = vmatprep.subr.bf16.mxu0 0
  %7341 = vmatpush1.bf16.msra.mxu0 0
  %7342 = vmatprep.mubr.bf16.mxu0 0
  %7343 = vmatmul.mubr.bf16.gmra.mrb[0].mxu0 %v6839
  %v7344 = vpop.f32.mrb[0].mxu0
  %v7345 = vadd.f32 %v7099, %v7344
  %v7346 = vpop.f32.mrb[0].mxu0
  %v7347 = vadd.f32 %v7101, %v7346
  %v7348 = vpop.f32.mrb[0].mxu0
  %v7349 = vadd.f32 %v7103, %v7348
  %v7350 = vpop.f32.mrb[0].mxu0
  %v7351 = vadd.f32 %v7105, %v7350
  %7352 = vdwg.mxu0
  %7353 = vmatprep.subr.bf16.mxu0 %v7249
  %7354 = vmatpush1.bf16.msra.mxu0 %v7248
  %7355 = vmatprep.subr.bf16.mxu0 %v7253
  %7356 = vmatpush1.bf16.msra.mxu0 %v7252
  %7357 = vmatprep.subr.bf16.mxu0 %v7257
  %7358 = vmatpush1.bf16.msra.mxu0 %v7256
  %7359 = vmatprep.subr.bf16.mxu0 %v7261
  %7360 = vmatpush1.bf16.msra.mxu0 %v7260
  %7361 = vmatprep.subr.bf16.mxu0 %v7265
  %7362 = vmatpush1.bf16.msra.mxu0 %v7264
  %7363 = vmatprep.subr.bf16.mxu0 %v7269
  %7364 = vmatpush1.bf16.msra.mxu0 %v7268
  %7365 = vmatprep.subr.bf16.mxu0 %v7273
  %7366 = vmatpush1.bf16.msra.mxu0 %v7272
  %7367 = vmatprep.subr.bf16.mxu0 %v7277
  %7368 = vmatpush1.bf16.msra.mxu0 %v7276
  %7369 = vmatprep.subr.bf16.mxu0 0
  %7370 = vmatpush1.bf16.msra.mxu0 0
  %7371 = vmatprep.subr.bf16.mxu0 0
  %7372 = vmatpush1.bf16.msra.mxu0 0
  %7373 = vmatprep.subr.bf16.mxu0 0
  %7374 = vmatpush1.bf16.msra.mxu0 0
  %7375 = vmatprep.subr.bf16.mxu0 0
  %7376 = vmatpush1.bf16.msra.mxu0 0
  %7377 = vmatprep.subr.bf16.mxu0 0
  %7378 = vmatpush1.bf16.msra.mxu0 0
  %7379 = vmatprep.subr.bf16.mxu0 0
  %7380 = vmatpush1.bf16.msra.mxu0 0
  %7381 = vmatprep.subr.bf16.mxu0 0
  %7382 = vmatpush1.bf16.msra.mxu0 0
  %7383 = vmatprep.subr.bf16.mxu0 0
  %7384 = vmatpush1.bf16.msra.mxu0 0
  %7385 = vmatprep.mubr.bf16.mxu0 0
  %7386 = vmatmul.mubr.bf16.gmra.mrb[0].mxu0 %v6839
  %v7387 = vpop.f32.mrb[0].mxu0
  %v7388 = vadd.f32 %v7142, %v7387
  %v7389 = vpop.f32.mrb[0].mxu0
  %v7390 = vadd.f32 %v7144, %v7389
  %v7391 = vpop.f32.mrb[0].mxu0
  %v7392 = vadd.f32 %v7146, %v7391
  %v7393 = vpop.f32.mrb[0].mxu0
  %v7394 = vadd.f32 %v7148, %v7393
  %7395 = vdwg.mxu0
  %v7396 = vadd.f32 %v7345, %v616
  %v7397 = vadd.f32 %v7347, %v620
  %v7398 = vadd.f32 %v7388, %v624
  %v7399 = vadd.f32 %v7390, %v628
  %v7400 = vadd.f32 %v7349, %v616
  %v7401 = vadd.f32 %v7351, %v620
  %v7402 = vadd.f32 %v7392, %v624
  %v7403 = vadd.f32 %v7394, %v628
  %v7404 = vld [vmem:[#allocation5] sm:$0xff]
  %v7405 = vld [vmem:[#allocation5 + $0x8] sm:$0xff]
  %v7406 = vxor.u32 %v7396, 2147483648
  %v7407 = vxor.u32 %v7397, 2147483648
  %v7408 = vxor.u32 %v7398, 2147483648
  %v7409 = vxor.u32 %v7400, 2147483648
  %v7410 = vxor.u32 %v7401, 2147483648
  %v7411 = vxor.u32 %v7402, 2147483648
  %v7412 = vmul.f32 %v7406, 1.442695
  %v7413 = vpow.pop %v7412
  %v7414 = vmul.f32 %v7407, 1.442695
  %v7415 = vpow.pop %v7414
  %v7416 = vmul.f32 %v7408, 1.442695
  %v7417 = vpow.pop %v7416
  %v7418 = vmul.f32 %v7409, 1.442695
  %v7419 = vpow.pop %v7418
  %v7420 = vmul.f32 %v7410, 1.442695
  %v7421 = vpow.pop %v7420
  %v7422 = vmul.f32 %v7411, 1.442695
  %v7423 = vpow.pop %v7422
  %v7424 = vadd.f32 %v7413, 1.0
  %v7425 = vadd.f32 %v7415, 1.0
  %v7426 = vadd.f32 %v7417, 1.0
  %v7427 = vadd.f32 %v7419, 1.0
  %v7428 = vadd.f32 %v7421, 1.0
  %v7429 = vadd.f32 %v7423, 1.0
  %v7430 = vrcp.pop %v7424
  %v7431 = vmul.f32 1.0, %v7430
  %v7432 = vrcp.pop %v7425
  %v7433 = vmul.f32 1.0, %v7432
  %v7434 = vrcp.pop %v7426
  %v7435 = vmul.f32 1.0, %v7434
  %v7436 = vrcp.pop %v7427
  %v7437 = vmul.f32 1.0, %v7436
  %v7438 = vrcp.pop %v7428
  %v7439 = vmul.f32 1.0, %v7438
  %v7440 = vrcp.pop %v7429
  %v7441 = vmul.f32 1.0, %v7440
  %v7442 = vtanh.pop %v7399
  %v7443 = vtanh.pop %v7403
  %v7444 = vmul.f32 %v7433, %v7404
  %v7445 = vmul.f32 %v7439, %v7405
  %v7446 = vmul.f32 %v7431, %v7442
  %v7447 = vmul.f32 %v7437, %v7443
  %v7448 = vadd.f32 %v7444, %v7446
  %v7449 = vadd.f32 %v7445, %v7447
  %v7450 = vtanh.pop %v7448
  %v7451 = vtanh.pop %v7449
  %v7452 = vmul.f32 %v7435, %v7450
  %v7453 = vmul.f32 %v7441, %v7451
  %v7454 = vpack.c.bf16 %v7453, %v7452
  %7455 = vst [vmem:[#allocation4] sm:$0xff] %v7454
  %7456 = vst [vmem:[#allocation5] sm:$0xff] %v7448
  %7457 = vst [vmem:[#allocation5 + $0x8] sm:$0xff] %v7449
  %s7458 = smul.u32 7, 4
  %s7459 = smul.addr %s7458, 8
  %s7460 = scalar_lea.vmem [#allocation6], %s7459
  %v7461 = vld [vmem:[%s7460] sm:$0xff]
  %v7462 = vld [vmem:[%s7460 + $0x8] sm:$0xff]
  %v7463 = vld [vmem:[%s7460 + $0x10] sm:$0xff]
  %v7464 = vld [vmem:[%s7460 + $0x18] sm:$0xff]
  %v7465 = vld [vmem:[#allocation2] sm:$0xff]
  %v7466 = vld [vmem:[%s2] sm:$0xff]
  %v7467 = vld [vmem:[%s2 + $0x8] sm:$0xff]
  %v7468 = vld [vmem:[%s2 + $0x10] sm:$0xff]
  %v7469 = vld [vmem:[%s2 + $0x18] sm:$0xff]
  %v7470 = vld [vmem:[%s2 + $0x20] sm:$0xff]
  %v7471 = vld [vmem:[%s2 + $0x28] sm:$0xff]
  %v7472 = vld [vmem:[%s2 + $0x30] sm:$0xff]
  %v7473 = vld [vmem:[%s2 + $0x38] sm:$0xff]
  %v7474 = vld [vmem:[%s2 + $0x40] sm:$0xff]
  %v7475 = vld [vmem:[%s2 + $0x48] sm:$0xff]
  %v7476 = vld [vmem:[%s2 + $0x50] sm:$0xff]
  %v7477 = vld [vmem:[%s2 + $0x58] sm:$0xff]
  %v7478 = vld [vmem:[%s2 + $0x60] sm:$0xff]
  %v7479 = vld [vmem:[%s2 + $0x68] sm:$0xff]
  %v7480 = vld [vmem:[%s2 + $0x70] sm:$0xff]
  %v7481 = vld [vmem:[%s2 + $0x78] sm:$0xff]
  %v7482 = vld [vmem:[%s2 + $0x80] sm:$0xff]
  %v7483 = vld [vmem:[%s2 + $0x88] sm:$0xff]
  %v7484 = vld [vmem:[%s2 + $0x90] sm:$0xff]
  %v7485 = vld [vmem:[%s2 + $0x98] sm:$0xff]
  %v7486 = vld [vmem:[%s2 + $0xa0] sm:$0xff]
  %v7487 = vld [vmem:[%s2 + $0xa8] sm:$0xff]
  %v7488 = vld [vmem:[%s2 + $0xb0] sm:$0xff]
  %v7489 = vld [vmem:[%s2 + $0xb8] sm:$0xff]
  %v7490 = vld [vmem:[%s2 + $0xc0] sm:$0xff]
  %v7491 = vld [vmem:[%s2 + $0xc8] sm:$0xff]
  %v7492 = vld [vmem:[%s2 + $0xd0] sm:$0xff]
  %v7493 = vld [vmem:[%s2 + $0xd8] sm:$0xff]
  %v7494 = vld [vmem:[%s2 + $0xe0] sm:$0xff]
  %v7495 = vld [vmem:[%s2 + $0xe8] sm:$0xff]
  %v7496 = vld [vmem:[%s2 + $0xf0] sm:$0xff]
  %v7497 = vld [vmem:[%s2 + $0xf8] sm:$0xff]
  %v7530 = vunpack.c.l.b16 %v7466
  %v7531 = vunpack.c.h.b16 %v7466
  %v7532 = vunpack.c.l.b16 %v7467
  %v7533 = vunpack.c.h.b16 %v7467
  %v7534 = vunpack.c.l.b16 %v7468
  %v7535 = vunpack.c.h.b16 %v7468
  %v7536 = vunpack.c.l.b16 %v7469
  %v7537 = vunpack.c.h.b16 %v7469
  %v7538 = vunpack.c.l.b16 %v7470
  %v7539 = vunpack.c.h.b16 %v7470
  %v7540 = vunpack.c.l.b16 %v7471
  %v7541 = vunpack.c.h.b16 %v7471
  %v7542 = vunpack.c.l.b16 %v7472
  %v7543 = vunpack.c.h.b16 %v7472
  %v7544 = vunpack.c.l.b16 %v7473
  %v7545 = vunpack.c.h.b16 %v7473
  %v7546 = vunpack.c.l.b16 %v7474
  %v7547 = vunpack.c.h.b16 %v7474
  %v7548 = vunpack.c.l.b16 %v7475
  %v7549 = vunpack.c.h.b16 %v7475
  %v7550 = vunpack.c.l.b16 %v7476
  %v7551 = vunpack.c.h.b16 %v7476
  %v7552 = vunpack.c.l.b16 %v7477
  %v7553 = vunpack.c.h.b16 %v7477
  %v7554 = vunpack.c.l.b16 %v7478
  %v7555 = vunpack.c.h.b16 %v7478
  %v7556 = vunpack.c.l.b16 %v7479
  %v7557 = vunpack.c.h.b16 %v7479
  %v7558 = vunpack.c.l.b16 %v7480
  %v7559 = vunpack.c.h.b16 %v7480
  %v7560 = vunpack.c.l.b16 %v7481
  %v7561 = vunpack.c.h.b16 %v7481
  %v7562 = vunpack.c.l.b16 %v7482
  %v7563 = vunpack.c.h.b16 %v7482
  %v7564 = vunpack.c.l.b16 %v7483
  %v7565 = vunpack.c.h.b16 %v7483
  %v7566 = vunpack.c.l.b16 %v7484
  %v7567 = vunpack.c.h.b16 %v7484
  %v7568 = vunpack.c.l.b16 %v7485
  %v7569 = vunpack.c.h.b16 %v7485
  %v7570 = vunpack.c.l.b16 %v7486
  %v7571 = vunpack.c.h.b16 %v7486
  %v7572 = vunpack.c.l.b16 %v7487
  %v7573 = vunpack.c.h.b16 %v7487
  %v7574 = vunpack.c.l.b16 %v7488
  %v7575 = vunpack.c.h.b16 %v7488
  %v7576 = vunpack.c.l.b16 %v7489
  %v7577 = vunpack.c.h.b16 %v7489
  %v7578 = vunpack.c.l.b16 %v7490
  %v7579 = vunpack.c.h.b16 %v7490
  %v7580 = vunpack.c.l.b16 %v7491
  %v7581 = vunpack.c.h.b16 %v7491
  %v7582 = vunpack.c.l.b16 %v7492
  %v7583 = vunpack.c.h.b16 %v7492
  %v7584 = vunpack.c.l.b16 %v7493
  %v7585 = vunpack.c.h.b16 %v7493
  %v7586 = vunpack.c.l.b16 %v7494
  %v7587 = vunpack.c.h.b16 %v7494
  %v7588 = vunpack.c.l.b16 %v7495
  %v7589 = vunpack.c.h.b16 %v7495
  %v7590 = vunpack.c.l.b16 %v7496
  %v7591 = vunpack.c.h.b16 %v7496
  %v7592 = vunpack.c.l.b16 %v7497
  %v7593 = vunpack.c.h.b16 %v7497
  %v7594 = vpack.c.b16 %v7534, %v7530
  %v7595 = vpack.c.b16 %v7535, %v7531
  %v7596 = vpack.c.b16 %v7536, %v7532
  %v7597 = vpack.c.b16 %v7537, %v7533
  %v7598 = vpack.c.b16 %v7542, %v7538
  %v7599 = vpack.c.b16 %v7543, %v7539
  %v7600 = vpack.c.b16 %v7544, %v7540
  %v7601 = vpack.c.b16 %v7545, %v7541
  %v7602 = vpack.c.b16 %v7550, %v7546
  %v7603 = vpack.c.b16 %v7551, %v7547
  %v7604 = vpack.c.b16 %v7552, %v7548
  %v7605 = vpack.c.b16 %v7553, %v7549
  %v7606 = vpack.c.b16 %v7558, %v7554
  %v7607 = vpack.c.b16 %v7559, %v7555
  %v7608 = vpack.c.b16 %v7560, %v7556
  %v7609 = vpack.c.b16 %v7561, %v7557
  %v7610 = vpack.c.b16 %v7566, %v7562
  %v7611 = vpack.c.b16 %v7567, %v7563
  %v7612 = vpack.c.b16 %v7568, %v7564
  %v7613 = vpack.c.b16 %v7569, %v7565
  %v7614 = vpack.c.b16 %v7574, %v7570
  %v7615 = vpack.c.b16 %v7575, %v7571
  %v7616 = vpack.c.b16 %v7576, %v7572
  %v7617 = vpack.c.b16 %v7577, %v7573
  %v7618 = vpack.c.b16 %v7582, %v7578
  %v7619 = vpack.c.b16 %v7583, %v7579
  %v7620 = vpack.c.b16 %v7584, %v7580
  %v7621 = vpack.c.b16 %v7585, %v7581
  %v7622 = vpack.c.b16 %v7590, %v7586
  %v7623 = vpack.c.b16 %v7591, %v7587
  %v7624 = vpack.c.b16 %v7592, %v7588
  %v7625 = vpack.c.b16 %v7593, %v7589
  %7658 = vmatprep.subr.bf16.mxu0 %v7595
  %7659 = vmatpush1.bf16.msra.mxu0 %v7594
  %7660 = vmatprep.subr.bf16.mxu0 %v7599
  %7661 = vmatpush1.bf16.msra.mxu0 %v7598
  %7662 = vmatprep.subr.bf16.mxu0 %v7603
  %7663 = vmatpush1.bf16.msra.mxu0 %v7602
  %7664 = vmatprep.subr.bf16.mxu0 %v7607
  %7665 = vmatpush1.bf16.msra.mxu0 %v7606
  %7666 = vmatprep.subr.bf16.mxu0 %v7611
  %7667 = vmatpush1.bf16.msra.mxu0 %v7610
  %7668 = vmatprep.subr.bf16.mxu0 %v7615
  %7669 = vmatpush1.bf16.msra.mxu0 %v7614
  %7670 = vmatprep.subr.bf16.mxu0 %v7619
  %7671 = vmatpush1.bf16.msra.mxu0 %v7618
  %7672 = vmatprep.subr.bf16.mxu0 %v7623
  %7673 = vmatpush1.bf16.msra.mxu0 %v7622
  %7674 = vmatprep.subr.bf16.mxu0 0
  %7675 = vmatpush1.bf16.msra.mxu0 0
  %7676 = vmatprep.subr.bf16.mxu0 0
  %7677 = vmatpush1.bf16.msra.mxu0 0
  %7678 = vmatprep.subr.bf16.mxu0 0
  %7679 = vmatpush1.bf16.msra.mxu0 0
  %7680 = vmatprep.subr.bf16.mxu0 0
  %7681 = vmatpush1.bf16.msra.mxu0 0
  %7682 = vmatprep.subr.bf16.mxu0 0
  %7683 = vmatpush1.bf16.msra.mxu0 0
  %7684 = vmatprep.subr.bf16.mxu0 0
  %7685 = vmatpush1.bf16.msra.mxu0 0
  %7686 = vmatprep.subr.bf16.mxu0 0
  %7687 = vmatpush1.bf16.msra.mxu0 0
  %7688 = vmatprep.subr.bf16.mxu0 0
  %7689 = vmatpush1.bf16.msra.mxu0 0
  %7690 = vmatprep.mubr.bf16.mxu0 0
  %7691 = vmatmul.mubr.bf16.gmra.mrb[0].mxu0 %v7465
  %v7692 = vpop.f32.mrb[0].mxu0
  %v7693 = vadd.f32 0.0, %v7692
  %v7694 = vpop.f32.mrb[0].mxu0
  %v7695 = vadd.f32 0.0, %v7694
  %v7696 = vpop.f32.mrb[0].mxu0
  %v7697 = vadd.f32 0.0, %v7696
  %v7698 = vpop.f32.mrb[0].mxu0
  %v7699 = vadd.f32 0.0, %v7698
  %7700 = vdwg.mxu0
  %7701 = vmatprep.subr.bf16.mxu0 %v7597
  %7702 = vmatpush1.bf16.msra.mxu0 %v7596
  %7703 = vmatprep.subr.bf16.mxu0 %v7601
  %7704 = vmatpush1.bf16.msra.mxu0 %v7600
  %7705 = vmatprep.subr.bf16.mxu0 %v7605
  %7706 = vmatpush1.bf16.msra.mxu0 %v7604
  %7707 = vmatprep.subr.bf16.mxu0 %v7609
  %7708 = vmatpush1.bf16.msra.mxu0 %v7608
  %7709 = vmatprep.subr.bf16.mxu0 %v7613
  %7710 = vmatpush1.bf16.msra.mxu0 %v7612
  %7711 = vmatprep.subr.bf16.mxu0 %v7617
  %7712 = vmatpush1.bf16.msra.mxu0 %v7616
  %7713 = vmatprep.subr.bf16.mxu0 %v7621
  %7714 = vmatpush1.bf16.msra.mxu0 %v7620
  %7715 = vmatprep.subr.bf16.mxu0 %v7625
  %7716 = vmatpush1.bf16.msra.mxu0 %v7624
  %7717 = vmatprep.subr.bf16.mxu0 0
  %7718 = vmatpush1.bf16.msra.mxu0 0
  %7719 = vmatprep.subr.bf16.mxu0 0
  %7720 = vmatpush1.bf16.msra.mxu0 0
  %7721 = vmatprep.subr.bf16.mxu0 0
  %7722 = vmatpush1.bf16.msra.mxu0 0
  %7723 = vmatprep.subr.bf16.mxu0 0
  %7724 = vmatpush1.bf16.msra.mxu0 0
  %7725 = vmatprep.subr.bf16.mxu0 0
  %7726 = vmatpush1.bf16.msra.mxu0 0
  %7727 = vmatprep.subr.bf16.mxu0 0
  %7728 = vmatpush1.bf16.msra.mxu0 0
  %7729 = vmatprep.subr.bf16.mxu0 0
  %7730 = vmatpush1.bf16.msra.mxu0 0
  %7731 = vmatprep.subr.bf16.mxu0 0
  %7732 = vmatpush1.bf16.msra.mxu0 0
  %7733 = vmatprep.mubr.bf16.mxu0 0
  %7734 = vmatmul.mubr.bf16.gmra.mrb[0].mxu0 %v7465
  %v7735 = vpop.f32.mrb[0].mxu0
  %v7736 = vadd.f32 0.0, %v7735
  %v7737 = vpop.f32.mrb[0].mxu0
  %v7738 = vadd.f32 0.0, %v7737
  %v7739 = vpop.f32.mrb[0].mxu0
  %v7740 = vadd.f32 0.0, %v7739
  %v7741 = vpop.f32.mrb[0].mxu0
  %v7742 = vadd.f32 0.0, %v7741
  %7743 = vdwg.mxu0
  %v7744 = vunpack.c.l.bf16 %v7461
  %v7745 = vunpack.c.l.bf16 %v7462
  %v7746 = vunpack.c.l.bf16 %v7463
  %v7747 = vunpack.c.l.bf16 %v7464
  %v7748 = vunpack.c.h.bf16 %v7461
  %v7749 = vunpack.c.h.bf16 %v7462
  %v7750 = vunpack.c.h.bf16 %v7463
  %v7751 = vunpack.c.h.bf16 %v7464
  %v7752 = vadd.f32 %v7744, %v7693
  %v7753 = vadd.f32 %v7745, %v7695
  %v7754 = vadd.f32 %v7746, %v7736
  %v7755 = vadd.f32 %v7747, %v7738
  %v7756 = vadd.f32 %v7748, %v7697
  %v7757 = vadd.f32 %v7749, %v7699
  %v7758 = vadd.f32 %v7750, %v7740
  %v7759 = vadd.f32 %v7751, %v7742
  %v7760 = vld [vmem:[#allocation3] sm:$0xff]
  %v7761 = vld [vmem:[#allocation3 + $0x8] sm:$0xff]
  %v7762 = vxor.u32 %v7752, 2147483648
  %v7763 = vxor.u32 %v7753, 2147483648
  %v7764 = vxor.u32 %v7754, 2147483648
  %v7765 = vxor.u32 %v7756, 2147483648
  %v7766 = vxor.u32 %v7757, 2147483648
  %v7767 = vxor.u32 %v7758, 2147483648
  %v7768 = vmul.f32 %v7762, 1.442695
  %v7769 = vpow.pop %v7768
  %v7770 = vmul.f32 %v7763, 1.442695
  %v7771 = vpow.pop %v7770
  %v7772 = vmul.f32 %v7764, 1.442695
  %v7773 = vpow.pop %v7772
  %v7774 = vmul.f32 %v7765, 1.442695
  %v7775 = vpow.pop %v7774
  %v7776 = vmul.f32 %v7766, 1.442695
  %v7777 = vpow.pop %v7776
  %v7778 = vmul.f32 %v7767, 1.442695
  %v7779 = vpow.pop %v7778
  %v7780 = vadd.f32 %v7769, 1.0
  %v7781 = vadd.f32 %v7771, 1.0
  %v7782 = vadd.f32 %v7773, 1.0
  %v7783 = vadd.f32 %v7775, 1.0
  %v7784 = vadd.f32 %v7777, 1.0
  %v7785 = vadd.f32 %v7779, 1.0
  %v7786 = vrcp.pop %v7780
  %v7787 = vmul.f32 1.0, %v7786
  %v7788 = vrcp.pop %v7781
  %v7789 = vmul.f32 1.0, %v7788
  %v7790 = vrcp.pop %v7782
  %v7791 = vmul.f32 1.0, %v7790
  %v7792 = vrcp.pop %v7783
  %v7793 = vmul.f32 1.0, %v7792
  %v7794 = vrcp.pop %v7784
  %v7795 = vmul.f32 1.0, %v7794
  %v7796 = vrcp.pop %v7785
  %v7797 = vmul.f32 1.0, %v7796
  %v7798 = vtanh.pop %v7755
  %v7799 = vtanh.pop %v7759
  %v7800 = vmul.f32 %v7789, %v7760
  %v7801 = vmul.f32 %v7795, %v7761
  %v7802 = vmul.f32 %v7787, %v7798
  %v7803 = vmul.f32 %v7793, %v7799
  %v7804 = vadd.f32 %v7800, %v7802
  %v7805 = vadd.f32 %v7801, %v7803
  %v7806 = vtanh.pop %v7804
  %v7807 = vtanh.pop %v7805
  %v7808 = vmul.f32 %v7791, %v7806
  %v7809 = vmul.f32 %v7797, %v7807
  %v7810 = vpack.c.bf16 %v7809, %v7808
  %7811 = vst [vmem:[#allocation2] sm:$0xff] %v7810
  %7812 = vst [vmem:[#allocation3] sm:$0xff] %v7804
  %7813 = vst [vmem:[#allocation3 + $0x8] sm:$0xff] %v7805
  %v7814 = vld [vmem:[#allocation4] sm:$0xff]
  %v7815 = vld [vmem:[%s5] sm:$0xff]
  %v7816 = vld [vmem:[%s5 + $0x8] sm:$0xff]
  %v7817 = vld [vmem:[%s5 + $0x10] sm:$0xff]
  %v7818 = vld [vmem:[%s5 + $0x18] sm:$0xff]
  %v7819 = vld [vmem:[%s5 + $0x20] sm:$0xff]
  %v7820 = vld [vmem:[%s5 + $0x28] sm:$0xff]
  %v7821 = vld [vmem:[%s5 + $0x30] sm:$0xff]
  %v7822 = vld [vmem:[%s5 + $0x38] sm:$0xff]
  %v7823 = vld [vmem:[%s5 + $0x40] sm:$0xff]
  %v7824 = vld [vmem:[%s5 + $0x48] sm:$0xff]
  %v7825 = vld [vmem:[%s5 + $0x50] sm:$0xff]
  %v7826 = vld [vmem:[%s5 + $0x58] sm:$0xff]
  %v7827 = vld [vmem:[%s5 + $0x60] sm:$0xff]
  %v7828 = vld [vmem:[%s5 + $0x68] sm:$0xff]
  %v7829 = vld [vmem:[%s5 + $0x70] sm:$0xff]
  %v7830 = vld [vmem:[%s5 + $0x78] sm:$0xff]
  %v7831 = vld [vmem:[%s5 + $0x80] sm:$0xff]
  %v7832 = vld [vmem:[%s5 + $0x88] sm:$0xff]
  %v7833 = vld [vmem:[%s5 + $0x90] sm:$0xff]
  %v7834 = vld [vmem:[%s5 + $0x98] sm:$0xff]
  %v7835 = vld [vmem:[%s5 + $0xa0] sm:$0xff]
  %v7836 = vld [vmem:[%s5 + $0xa8] sm:$0xff]
  %v7837 = vld [vmem:[%s5 + $0xb0] sm:$0xff]
  %v7838 = vld [vmem:[%s5 + $0xb8] sm:$0xff]
  %v7839 = vld [vmem:[%s5 + $0xc0] sm:$0xff]
  %v7840 = vld [vmem:[%s5 + $0xc8] sm:$0xff]
  %v7841 = vld [vmem:[%s5 + $0xd0] sm:$0xff]
  %v7842 = vld [vmem:[%s5 + $0xd8] sm:$0xff]
  %v7843 = vld [vmem:[%s5 + $0xe0] sm:$0xff]
  %v7844 = vld [vmem:[%s5 + $0xe8] sm:$0xff]
  %v7845 = vld [vmem:[%s5 + $0xf0] sm:$0xff]
  %v7846 = vld [vmem:[%s5 + $0xf8] sm:$0xff]
  %v7847 = vld [vmem:[%s4] sm:$0xff]
  %v7848 = vld [vmem:[%s4 + $0x8] sm:$0xff]
  %v7849 = vld [vmem:[%s4 + $0x10] sm:$0xff]
  %v7850 = vld [vmem:[%s4 + $0x18] sm:$0xff]
  %v7851 = vld [vmem:[%s4 + $0x20] sm:$0xff]
  %v7852 = vld [vmem:[%s4 + $0x28] sm:$0xff]
  %v7853 = vld [vmem:[%s4 + $0x30] sm:$0xff]
  %v7854 = vld [vmem:[%s4 + $0x38] sm:$0xff]
  %v7855 = vld [vmem:[%s4 + $0x40] sm:$0xff]
  %v7856 = vld [vmem:[%s4 + $0x48] sm:$0xff]
  %v7857 = vld [vmem:[%s4 + $0x50] sm:$0xff]
  %v7858 = vld [vmem:[%s4 + $0x58] sm:$0xff]
  %v7859 = vld [vmem:[%s4 + $0x60] sm:$0xff]
  %v7860 = vld [vmem:[%s4 + $0x68] sm:$0xff]
  %v7861 = vld [vmem:[%s4 + $0x70] sm:$0xff]
  %v7862 = vld [vmem:[%s4 + $0x78] sm:$0xff]
  %v7863 = vld [vmem:[%s4 + $0x80] sm:$0xff]
  %v7864 = vld [vmem:[%s4 + $0x88] sm:$0xff]
  %v7865 = vld [vmem:[%s4 + $0x90] sm:$0xff]
  %v7866 = vld [vmem:[%s4 + $0x98] sm:$0xff]
  %v7867 = vld [vmem:[%s4 + $0xa0] sm:$0xff]
  %v7868 = vld [vmem:[%s4 + $0xa8] sm:$0xff]
  %v7869 = vld [vmem:[%s4 + $0xb0] sm:$0xff]
  %v7870 = vld [vmem:[%s4 + $0xb8] sm:$0xff]
  %v7871 = vld [vmem:[%s4 + $0xc0] sm:$0xff]
  %v7872 = vld [vmem:[%s4 + $0xc8] sm:$0xff]
  %v7873 = vld [vmem:[%s4 + $0xd0] sm:$0xff]
  %v7874 = vld [vmem:[%s4 + $0xd8] sm:$0xff]
  %v7875 = vld [vmem:[%s4 + $0xe0] sm:$0xff]
  %v7876 = vld [vmem:[%s4 + $0xe8] sm:$0xff]
  %v7877 = vld [vmem:[%s4 + $0xf0] sm:$0xff]
  %v7878 = vld [vmem:[%s4 + $0xf8] sm:$0xff]
  %v7911 = vunpack.c.l.b16 %v7847
  %v7912 = vunpack.c.h.b16 %v7847
  %v7913 = vunpack.c.l.b16 %v7848
  %v7914 = vunpack.c.h.b16 %v7848
  %v7915 = vunpack.c.l.b16 %v7849
  %v7916 = vunpack.c.h.b16 %v7849
  %v7917 = vunpack.c.l.b16 %v7850
  %v7918 = vunpack.c.h.b16 %v7850
  %v7919 = vunpack.c.l.b16 %v7851
  %v7920 = vunpack.c.h.b16 %v7851
  %v7921 = vunpack.c.l.b16 %v7852
  %v7922 = vunpack.c.h.b16 %v7852
  %v7923 = vunpack.c.l.b16 %v7853
  %v7924 = vunpack.c.h.b16 %v7853
  %v7925 = vunpack.c.l.b16 %v7854
  %v7926 = vunpack.c.h.b16 %v7854
  %v7927 = vunpack.c.l.b16 %v7855
  %v7928 = vunpack.c.h.b16 %v7855
  %v7929 = vunpack.c.l.b16 %v7856
  %v7930 = vunpack.c.h.b16 %v7856
  %v7931 = vunpack.c.l.b16 %v7857
  %v7932 = vunpack.c.h.b16 %v7857
  %v7933 = vunpack.c.l.b16 %v7858
  %v7934 = vunpack.c.h.b16 %v7858
  %v7935 = vunpack.c.l.b16 %v7859
  %v7936 = vunpack.c.h.b16 %v7859
  %v7937 = vunpack.c.l.b16 %v7860
  %v7938 = vunpack.c.h.b16 %v7860
  %v7939 = vunpack.c.l.b16 %v7861
  %v7940 = vunpack.c.h.b16 %v7861
  %v7941 = vunpack.c.l.b16 %v7862
  %v7942 = vunpack.c.h.b16 %v7862
  %v7943 = vunpack.c.l.b16 %v7863
  %v7944 = vunpack.c.h.b16 %v7863
  %v7945 = vunpack.c.l.b16 %v7864
  %v7946 = vunpack.c.h.b16 %v7864
  %v7947 = vunpack.c.l.b16 %v7865
  %v7948 = vunpack.c.h.b16 %v7865
  %v7949 = vunpack.c.l.b16 %v7866
  %v7950 = vunpack.c.h.b16 %v7866
  %v7951 = vunpack.c.l.b16 %v7867
  %v7952 = vunpack.c.h.b16 %v7867
  %v7953 = vunpack.c.l.b16 %v7868
  %v7954 = vunpack.c.h.b16 %v7868
  %v7955 = vunpack.c.l.b16 %v7869
  %v7956 = vunpack.c.h.b16 %v7869
  %v7957 = vunpack.c.l.b16 %v7870
  %v7958 = vunpack.c.h.b16 %v7870
  %v7959 = vunpack.c.l.b16 %v7871
  %v7960 = vunpack.c.h.b16 %v7871
  %v7961 = vunpack.c.l.b16 %v7872
  %v7962 = vunpack.c.h.b16 %v7872
  %v7963 = vunpack.c.l.b16 %v7873
  %v7964 = vunpack.c.h.b16 %v7873
  %v7965 = vunpack.c.l.b16 %v7874
  %v7966 = vunpack.c.h.b16 %v7874
  %v7967 = vunpack.c.l.b16 %v7875
  %v7968 = vunpack.c.h.b16 %v7875
  %v7969 = vunpack.c.l.b16 %v7876
  %v7970 = vunpack.c.h.b16 %v7876
  %v7971 = vunpack.c.l.b16 %v7877
  %v7972 = vunpack.c.h.b16 %v7877
  %v7973 = vunpack.c.l.b16 %v7878
  %v7974 = vunpack.c.h.b16 %v7878
  %v7975 = vpack.c.b16 %v7915, %v7911
  %v7976 = vpack.c.b16 %v7916, %v7912
  %v7977 = vpack.c.b16 %v7917, %v7913
  %v7978 = vpack.c.b16 %v7918, %v7914
  %v7979 = vpack.c.b16 %v7923, %v7919
  %v7980 = vpack.c.b16 %v7924, %v7920
  %v7981 = vpack.c.b16 %v7925, %v7921
  %v7982 = vpack.c.b16 %v7926, %v7922
  %v7983 = vpack.c.b16 %v7931, %v7927
  %v7984 = vpack.c.b16 %v7932, %v7928
  %v7985 = vpack.c.b16 %v7933, %v7929
  %v7986 = vpack.c.b16 %v7934, %v7930
  %v7987 = vpack.c.b16 %v7939, %v7935
  %v7988 = vpack.c.b16 %v7940, %v7936
  %v7989 = vpack.c.b16 %v7941, %v7937
  %v7990 = vpack.c.b16 %v7942, %v7938
  %v7991 = vpack.c.b16 %v7947, %v7943
  %v7992 = vpack.c.b16 %v7948, %v7944
  %v7993 = vpack.c.b16 %v7949, %v7945
  %v7994 = vpack.c.b16 %v7950, %v7946
  %v7995 = vpack.c.b16 %v7955, %v7951
  %v7996 = vpack.c.b16 %v7956, %v7952
  %v7997 = vpack.c.b16 %v7957, %v7953
  %v7998 = vpack.c.b16 %v7958, %v7954
  %v7999 = vpack.c.b16 %v7963, %v7959
  %v8000 = vpack.c.b16 %v7964, %v7960
  %v8001 = vpack.c.b16 %v7965, %v7961
  %v8002 = vpack.c.b16 %v7966, %v7962
  %v8003 = vpack.c.b16 %v7971, %v7967
  %v8004 = vpack.c.b16 %v7972, %v7968
  %v8005 = vpack.c.b16 %v7973, %v7969
  %v8006 = vpack.c.b16 %v7974, %v7970
  %8039 = vmatprep.subr.bf16.mxu0 %v7976
  %8040 = vmatpush1.bf16.msra.mxu0 %v7975
  %8041 = vmatprep.subr.bf16.mxu0 %v7980
  %8042 = vmatpush1.bf16.msra.mxu0 %v7979
  %8043 = vmatprep.subr.bf16.mxu0 %v7984
  %8044 = vmatpush1.bf16.msra.mxu0 %v7983
  %8045 = vmatprep.subr.bf16.mxu0 %v7988
  %8046 = vmatpush1.bf16.msra.mxu0 %v7987
  %8047 = vmatprep.subr.bf16.mxu0 %v7992
  %8048 = vmatpush1.bf16.msra.mxu0 %v7991
  %8049 = vmatprep.subr.bf16.mxu0 %v7996
  %8050 = vmatpush1.bf16.msra.mxu0 %v7995
  %8051 = vmatprep.subr.bf16.mxu0 %v8000
  %8052 = vmatpush1.bf16.msra.mxu0 %v7999
  %8053 = vmatprep.subr.bf16.mxu0 %v8004
  %8054 = vmatpush1.bf16.msra.mxu0 %v8003
  %8055 = vmatprep.subr.bf16.mxu0 0
  %8056 = vmatpush1.bf16.msra.mxu0 0
  %8057 = vmatprep.subr.bf16.mxu0 0
  %8058 = vmatpush1.bf16.msra.mxu0 0
  %8059 = vmatprep.subr.bf16.mxu0 0
  %8060 = vmatpush1.bf16.msra.mxu0 0
  %8061 = vmatprep.subr.bf16.mxu0 0
  %8062 = vmatpush1.bf16.msra.mxu0 0
  %8063 = vmatprep.subr.bf16.mxu0 0
  %8064 = vmatpush1.bf16.msra.mxu0 0
  %8065 = vmatprep.subr.bf16.mxu0 0
  %8066 = vmatpush1.bf16.msra.mxu0 0
  %8067 = vmatprep.subr.bf16.mxu0 0
  %8068 = vmatpush1.bf16.msra.mxu0 0
  %8069 = vmatprep.subr.bf16.mxu0 0
  %8070 = vmatpush1.bf16.msra.mxu0 0
  %8071 = vmatprep.mubr.bf16.mxu0 0
  %8072 = vmatmul.mubr.bf16.gmra.mrb[0].mxu0 %v7810
  %v8073 = vpop.f32.mrb[0].mxu0
  %v8074 = vadd.f32 0.0, %v8073
  %v8075 = vpop.f32.mrb[0].mxu0
  %v8076 = vadd.f32 0.0, %v8075
  %v8077 = vpop.f32.mrb[0].mxu0
  %v8078 = vadd.f32 0.0, %v8077
  %v8079 = vpop.f32.mrb[0].mxu0
  %v8080 = vadd.f32 0.0, %v8079
  %8081 = vdwg.mxu0
  %8082 = vmatprep.subr.bf16.mxu0 %v7978
  %8083 = vmatpush1.bf16.msra.mxu0 %v7977
  %8084 = vmatprep.subr.bf16.mxu0 %v7982
  %8085 = vmatpush1.bf16.msra.mxu0 %v7981
  %8086 = vmatprep.subr.bf16.mxu0 %v7986
  %8087 = vmatpush1.bf16.msra.mxu0 %v7985
  %8088 = vmatprep.subr.bf16.mxu0 %v7990
  %8089 = vmatpush1.bf16.msra.mxu0 %v7989
  %8090 = vmatprep.subr.bf16.mxu0 %v7994
  %8091 = vmatpush1.bf16.msra.mxu0 %v7993
  %8092 = vmatprep.subr.bf16.mxu0 %v7998
  %8093 = vmatpush1.bf16.msra.mxu0 %v7997
  %8094 = vmatprep.subr.bf16.mxu0 %v8002
  %8095 = vmatpush1.bf16.msra.mxu0 %v8001
  %8096 = vmatprep.subr.bf16.mxu0 %v8006
  %8097 = vmatpush1.bf16.msra.mxu0 %v8005
  %8098 = vmatprep.subr.bf16.mxu0 0
  %8099 = vmatpush1.bf16.msra.mxu0 0
  %8100 = vmatprep.subr.bf16.mxu0 0
  %8101 = vmatpush1.bf16.msra.mxu0 0
  %8102 = vmatprep.subr.bf16.mxu0 0
  %8103 = vmatpush1.bf16.msra.mxu0 0
  %8104 = vmatprep.subr.bf16.mxu0 0
  %8105 = vmatpush1.bf16.msra.mxu0 0
  %8106 = vmatprep.subr.bf16.mxu0 0
  %8107 = vmatpush1.bf16.msra.mxu0 0
  %8108 = vmatprep.subr.bf16.mxu0 0
  %8109 = vmatpush1.bf16.msra.mxu0 0
  %8110 = vmatprep.subr.bf16.mxu0 0
  %8111 = vmatpush1.bf16.msra.mxu0 0
  %8112 = vmatprep.subr.bf16.mxu0 0
  %8113 = vmatpush1.bf16.msra.mxu0 0
  %8114 = vmatprep.mubr.bf16.mxu0 0
  %8115 = vmatmul.mubr.bf16.gmra.mrb[0].mxu0 %v7810
  %v8116 = vpop.f32.mrb[0].mxu0
  %v8117 = vadd.f32 0.0, %v8116
  %v8118 = vpop.f32.mrb[0].mxu0
  %v8119 = vadd.f32 0.0, %v8118
  %v8120 = vpop.f32.mrb[0].mxu0
  %v8121 = vadd.f32 0.0, %v8120
  %v8122 = vpop.f32.mrb[0].mxu0
  %v8123 = vadd.f32 0.0, %v8122
  %8124 = vdwg.mxu0
  %v8157 = vunpack.c.l.b16 %v7815
  %v8158 = vunpack.c.h.b16 %v7815
  %v8159 = vunpack.c.l.b16 %v7816
  %v8160 = vunpack.c.h.b16 %v7816
  %v8161 = vunpack.c.l.b16 %v7817
  %v8162 = vunpack.c.h.b16 %v7817
  %v8163 = vunpack.c.l.b16 %v7818
  %v8164 = vunpack.c.h.b16 %v7818
  %v8165 = vunpack.c.l.b16 %v7819
  %v8166 = vunpack.c.h.b16 %v7819
  %v8167 = vunpack.c.l.b16 %v7820
  %v8168 = vunpack.c.h.b16 %v7820
  %v8169 = vunpack.c.l.b16 %v7821
  %v8170 = vunpack.c.h.b16 %v7821
  %v8171 = vunpack.c.l.b16 %v7822
  %v8172 = vunpack.c.h.b16 %v7822
  %v8173 = vunpack.c.l.b16 %v7823
  %v8174 = vunpack.c.h.b16 %v7823
  %v8175 = vunpack.c.l.b16 %v7824
  %v8176 = vunpack.c.h.b16 %v7824
  %v8177 = vunpack.c.l.b16 %v7825
  %v8178 = vunpack.c.h.b16 %v7825
  %v8179 = vunpack.c.l.b16 %v7826
  %v8180 = vunpack.c.h.b16 %v7826
  %v8181 = vunpack.c.l.b16 %v7827
  %v8182 = vunpack.c.h.b16 %v7827
  %v8183 = vunpack.c.l.b16 %v7828
  %v8184 = vunpack.c.h.b16 %v7828
  %v8185 = vunpack.c.l.b16 %v7829
  %v8186 = vunpack.c.h.b16 %v7829
  %v8187 = vunpack.c.l.b16 %v7830
  %v8188 = vunpack.c.h.b16 %v7830
  %v8189 = vunpack.c.l.b16 %v7831
  %v8190 = vunpack.c.h.b16 %v7831
  %v8191 = vunpack.c.l.b16 %v7832
  %v8192 = vunpack.c.h.b16 %v7832
  %v8193 = vunpack.c.l.b16 %v7833
  %v8194 = vunpack.c.h.b16 %v7833
  %v8195 = vunpack.c.l.b16 %v7834
  %v8196 = vunpack.c.h.b16 %v7834
  %v8197 = vunpack.c.l.b16 %v7835
  %v8198 = vunpack.c.h.b16 %v7835
  %v8199 = vunpack.c.l.b16 %v7836
  %v8200 = vunpack.c.h.b16 %v7836
  %v8201 = vunpack.c.l.b16 %v7837
  %v8202 = vunpack.c.h.b16 %v7837
  %v8203 = vunpack.c.l.b16 %v7838
  %v8204 = vunpack.c.h.b16 %v7838
  %v8205 = vunpack.c.l.b16 %v7839
  %v8206 = vunpack.c.h.b16 %v7839
  %v8207 = vunpack.c.l.b16 %v7840
  %v8208 = vunpack.c.h.b16 %v7840
  %v8209 = vunpack.c.l.b16 %v7841
  %v8210 = vunpack.c.h.b16 %v7841
  %v8211 = vunpack.c.l.b16 %v7842
  %v8212 = vunpack.c.h.b16 %v7842
  %v8213 = vunpack.c.l.b16 %v7843
  %v8214 = vunpack.c.h.b16 %v7843
  %v8215 = vunpack.c.l.b16 %v7844
  %v8216 = vunpack.c.h.b16 %v7844
  %v8217 = vunpack.c.l.b16 %v7845
  %v8218 = vunpack.c.h.b16 %v7845
  %v8219 = vunpack.c.l.b16 %v7846
  %v8220 = vunpack.c.h.b16 %v7846
  %v8221 = vpack.c.b16 %v8161, %v8157
  %v8222 = vpack.c.b16 %v8162, %v8158
  %v8223 = vpack.c.b16 %v8163, %v8159
  %v8224 = vpack.c.b16 %v8164, %v8160
  %v8225 = vpack.c.b16 %v8169, %v8165
  %v8226 = vpack.c.b16 %v8170, %v8166
  %v8227 = vpack.c.b16 %v8171, %v8167
  %v8228 = vpack.c.b16 %v8172, %v8168
  %v8229 = vpack.c.b16 %v8177, %v8173
  %v8230 = vpack.c.b16 %v8178, %v8174
  %v8231 = vpack.c.b16 %v8179, %v8175
  %v8232 = vpack.c.b16 %v8180, %v8176
  %v8233 = vpack.c.b16 %v8185, %v8181
  %v8234 = vpack.c.b16 %v8186, %v8182
  %v8235 = vpack.c.b16 %v8187, %v8183
  %v8236 = vpack.c.b16 %v8188, %v8184
  %v8237 = vpack.c.b16 %v8193, %v8189
  %v8238 = vpack.c.b16 %v8194, %v8190
  %v8239 = vpack.c.b16 %v8195, %v8191
  %v8240 = vpack.c.b16 %v8196, %v8192
  %v8241 = vpack.c.b16 %v8201, %v8197
  %v8242 = vpack.c.b16 %v8202, %v8198
  %v8243 = vpack.c.b16 %v8203, %v8199
  %v8244 = vpack.c.b16 %v8204, %v8200
  %v8245 = vpack.c.b16 %v8209, %v8205
  %v8246 = vpack.c.b16 %v8210, %v8206
  %v8247 = vpack.c.b16 %v8211, %v8207
  %v8248 = vpack.c.b16 %v8212, %v8208
  %v8249 = vpack.c.b16 %v8217, %v8213
  %v8250 = vpack.c.b16 %v8218, %v8214
  %v8251 = vpack.c.b16 %v8219, %v8215
  %v8252 = vpack.c.b16 %v8220, %v8216
  %8285 = vmatprep.subr.bf16.mxu0 %v8222
  %8286 = vmatpush1.bf16.msra.mxu0 %v8221
  %8287 = vmatprep.subr.bf16.mxu0 %v8226
  %8288 = vmatpush1.bf16.msra.mxu0 %v8225
  %8289 = vmatprep.subr.bf16.mxu0 %v8230
  %8290 = vmatpush1.bf16.msra.mxu0 %v8229
  %8291 = vmatprep.subr.bf16.mxu0 %v8234
  %8292 = vmatpush1.bf16.msra.mxu0 %v8233
  %8293 = vmatprep.subr.bf16.mxu0 %v8238
  %8294 = vmatpush1.bf16.msra.mxu0 %v8237
  %8295 = vmatprep.subr.bf16.mxu0 %v8242
  %8296 = vmatpush1.bf16.msra.mxu0 %v8241
  %8297 = vmatprep.subr.bf16.mxu0 %v8246
  %8298 = vmatpush1.bf16.msra.mxu0 %v8245
  %8299 = vmatprep.subr.bf16.mxu0 %v8250
  %8300 = vmatpush1.bf16.msra.mxu0 %v8249
  %8301 = vmatprep.subr.bf16.mxu0 0
  %8302 = vmatpush1.bf16.msra.mxu0 0
  %8303 = vmatprep.subr.bf16.mxu0 0
  %8304 = vmatpush1.bf16.msra.mxu0 0
  %8305 = vmatprep.subr.bf16.mxu0 0
  %8306 = vmatpush1.bf16.msra.mxu0 0
  %8307 = vmatprep.subr.bf16.mxu0 0
  %8308 = vmatpush1.bf16.msra.mxu0 0
  %8309 = vmatprep.subr.bf16.mxu0 0
  %8310 = vmatpush1.bf16.msra.mxu0 0
  %8311 = vmatprep.subr.bf16.mxu0 0
  %8312 = vmatpush1.bf16.msra.mxu0 0
  %8313 = vmatprep.subr.bf16.mxu0 0
  %8314 = vmatpush1.bf16.msra.mxu0 0
  %8315 = vmatprep.subr.bf16.mxu0 0
  %8316 = vmatpush1.bf16.msra.mxu0 0
  %8317 = vmatprep.mubr.bf16.mxu0 0
  %8318 = vmatmul.mubr.bf16.gmra.mrb[0].mxu0 %v7814
  %v8319 = vpop.f32.mrb[0].mxu0
  %v8320 = vadd.f32 %v8074, %v8319
  %v8321 = vpop.f32.mrb[0].mxu0
  %v8322 = vadd.f32 %v8076, %v8321
  %v8323 = vpop.f32.mrb[0].mxu0
  %v8324 = vadd.f32 %v8078, %v8323
  %v8325 = vpop.f32.mrb[0].mxu0
  %v8326 = vadd.f32 %v8080, %v8325
  %8327 = vdwg.mxu0
  %8328 = vmatprep.subr.bf16.mxu0 %v8224
  %8329 = vmatpush1.bf16.msra.mxu0 %v8223
  %8330 = vmatprep.subr.bf16.mxu0 %v8228
  %8331 = vmatpush1.bf16.msra.mxu0 %v8227
  %8332 = vmatprep.subr.bf16.mxu0 %v8232
  %8333 = vmatpush1.bf16.msra.mxu0 %v8231
  %8334 = vmatprep.subr.bf16.mxu0 %v8236
  %8335 = vmatpush1.bf16.msra.mxu0 %v8235
  %8336 = vmatprep.subr.bf16.mxu0 %v8240
  %8337 = vmatpush1.bf16.msra.mxu0 %v8239
  %8338 = vmatprep.subr.bf16.mxu0 %v8244
  %8339 = vmatpush1.bf16.msra.mxu0 %v8243
  %8340 = vmatprep.subr.bf16.mxu0 %v8248
  %8341 = vmatpush1.bf16.msra.mxu0 %v8247
  %8342 = vmatprep.subr.bf16.mxu0 %v8252
  %8343 = vmatpush1.bf16.msra.mxu0 %v8251
  %8344 = vmatprep.subr.bf16.mxu0 0
  %8345 = vmatpush1.bf16.msra.mxu0 0
  %8346 = vmatprep.subr.bf16.mxu0 0
  %8347 = vmatpush1.bf16.msra.mxu0 0
  %8348 = vmatprep.subr.bf16.mxu0 0
  %8349 = vmatpush1.bf16.msra.mxu0 0
  %8350 = vmatprep.subr.bf16.mxu0 0
  %8351 = vmatpush1.bf16.msra.mxu0 0
  %8352 = vmatprep.subr.bf16.mxu0 0
  %8353 = vmatpush1.bf16.msra.mxu0 0
  %8354 = vmatprep.subr.bf16.mxu0 0
  %8355 = vmatpush1.bf16.msra.mxu0 0
  %8356 = vmatprep.subr.bf16.mxu0 0
  %8357 = vmatpush1.bf16.msra.mxu0 0
  %8358 = vmatprep.subr.bf16.mxu0 0
  %8359 = vmatpush1.bf16.msra.mxu0 0
  %8360 = vmatprep.mubr.bf16.mxu0 0
  %8361 = vmatmul.mubr.bf16.gmra.mrb[0].mxu0 %v7814
  %v8362 = vpop.f32.mrb[0].mxu0
  %v8363 = vadd.f32 %v8117, %v8362
  %v8364 = vpop.f32.mrb[0].mxu0
  %v8365 = vadd.f32 %v8119, %v8364
  %v8366 = vpop.f32.mrb[0].mxu0
  %v8367 = vadd.f32 %v8121, %v8366
  %v8368 = vpop.f32.mrb[0].mxu0
  %v8369 = vadd.f32 %v8123, %v8368
  %8370 = vdwg.mxu0
  %v8371 = vadd.f32 %v8320, %v616
  %v8372 = vadd.f32 %v8322, %v620
  %v8373 = vadd.f32 %v8363, %v624
  %v8374 = vadd.f32 %v8365, %v628
  %v8375 = vadd.f32 %v8324, %v616
  %v8376 = vadd.f32 %v8326, %v620
  %v8377 = vadd.f32 %v8367, %v624
  %v8378 = vadd.f32 %v8369, %v628
  %v8379 = vld [vmem:[#allocation5] sm:$0xff]
  %v8380 = vld [vmem:[#allocation5 + $0x8] sm:$0xff]
  %v8381 = vxor.u32 %v8371, 2147483648
  %v8382 = vxor.u32 %v8372, 2147483648
  %v8383 = vxor.u32 %v8373, 2147483648
  %v8384 = vxor.u32 %v8375, 2147483648
  %v8385 = vxor.u32 %v8376, 2147483648
  %v8386 = vxor.u32 %v8377, 2147483648
  %v8387 = vmul.f32 %v8381, 1.442695
  %v8388 = vpow.pop %v8387
  %v8389 = vmul.f32 %v8382, 1.442695
  %v8390 = vpow.pop %v8389
  %v8391 = vmul.f32 %v8383, 1.442695
  %v8392 = vpow.pop %v8391
  %v8393 = vmul.f32 %v8384, 1.442695
  %v8394 = vpow.pop %v8393
  %v8395 = vmul.f32 %v8385, 1.442695
  %v8396 = vpow.pop %v8395
  %v8397 = vmul.f32 %v8386, 1.442695
  %v8398 = vpow.pop %v8397
  %v8399 = vadd.f32 %v8388, 1.0
  %v8400 = vadd.f32 %v8390, 1.0
  %v8401 = vadd.f32 %v8392, 1.0
  %v8402 = vadd.f32 %v8394, 1.0
  %v8403 = vadd.f32 %v8396, 1.0
  %v8404 = vadd.f32 %v8398, 1.0
  %v8405 = vrcp.pop %v8399
  %v8406 = vmul.f32 1.0, %v8405
  %v8407 = vrcp.pop %v8400
  %v8408 = vmul.f32 1.0, %v8407
  %v8409 = vrcp.pop %v8401
  %v8410 = vmul.f32 1.0, %v8409
  %v8411 = vrcp.pop %v8402
  %v8412 = vmul.f32 1.0, %v8411
  %v8413 = vrcp.pop %v8403
  %v8414 = vmul.f32 1.0, %v8413
  %v8415 = vrcp.pop %v8404
  %v8416 = vmul.f32 1.0, %v8415
  %v8417 = vtanh.pop %v8374
  %v8418 = vtanh.pop %v8378
  %v8419 = vmul.f32 %v8408, %v8379
  %v8420 = vmul.f32 %v8414, %v8380
  %v8421 = vmul.f32 %v8406, %v8417
  %v8422 = vmul.f32 %v8412, %v8418
  %v8423 = vadd.f32 %v8419, %v8421
  %v8424 = vadd.f32 %v8420, %v8422
  %v8425 = vtanh.pop %v8423
  %v8426 = vtanh.pop %v8424
  %v8427 = vmul.f32 %v8410, %v8425
  %v8428 = vmul.f32 %v8416, %v8426
  %v8429 = vpack.c.bf16 %v8428, %v8427
  %8430 = vst [vmem:[#allocation4] sm:$0xff] %v8429
  %8431 = vst [vmem:[#allocation5] sm:$0xff] %v8423
  %8432 = vst [vmem:[#allocation5 + $0x8] sm:$0xff] %v8424
  // Predicated region
  $region42: #{lstm_mlcq_forward.1} parent=0 // pred_check
    %p8433 = pneg %p33
  $region43: #{lstm_mlcq_forward.1} parent=0 // pred_check_branch
    %8435 = sbr.rel (%p8433) target = $region45
  $region44: #{lstm_mlcq_forward.1} parent=0 // pred_region
    %v8436 = vld [vmem:[#allocation4] sm:$0xff]
    %v8437 = vld [vmem:[%s7] sm:$0xf]
    %v8438 = vld [vmem:[%s7 + $0x4] sm:$0xf]
    %v8439 = vld [vmem:[%s7 + $0x8] sm:$0xf]
    %v8440 = vld [vmem:[%s7 + $0xc] sm:$0xf]
    %v8441 = vld [vmem:[%s7 + $0x10] sm:$0xf]
    %v8442 = vld [vmem:[%s7 + $0x14] sm:$0xf]
    %v8443 = vld [vmem:[%s7 + $0x18] sm:$0xf]
    %v8444 = vld [vmem:[%s7 + $0x1c] sm:$0xf]
    %v8445 = vld [vmem:[%s7 + $0x20] sm:$0xf]
    %v8446 = vld [vmem:[%s7 + $0x24] sm:$0xf]
    %v8447 = vld [vmem:[%s7 + $0x28] sm:$0xf]
    %v8448 = vld [vmem:[%s7 + $0x2c] sm:$0xf]
    %v8449 = vld [vmem:[%s7 + $0x30] sm:$0xf]
    %v8450 = vld [vmem:[%s7 + $0x34] sm:$0xf]
    %v8451 = vld [vmem:[%s7 + $0x38] sm:$0xf]
    %v8452 = vld [vmem:[%s7 + $0x3c] sm:$0xf]
    %v8453 = vld [vmem:[%s8] sm:$0x1]
    %v8455 = vlaneseq
    %v8456 = vshrl.u32 %v8455, 7
    %v8457 = vsub.s32 0, %v8456
    %v8458 = vrot.slane %v8453, %v8457
    %v8476 = vunpack.c.l.b16 %v8437
    %v8477 = vunpack.c.l.b16 %v8438
    %v8478 = vunpack.c.l.b16 %v8439
    %v8479 = vunpack.c.l.b16 %v8440
    %v8480 = vunpack.c.l.b16 %v8441
    %v8481 = vunpack.c.l.b16 %v8442
    %v8482 = vunpack.c.l.b16 %v8443
    %v8483 = vunpack.c.l.b16 %v8444
    %v8484 = vunpack.c.l.b16 %v8445
    %v8485 = vunpack.c.l.b16 %v8446
    %v8486 = vunpack.c.l.b16 %v8447
    %v8487 = vunpack.c.l.b16 %v8448
    %v8488 = vunpack.c.l.b16 %v8449
    %v8489 = vunpack.c.l.b16 %v8450
    %v8490 = vunpack.c.l.b16 %v8451
    %v8491 = vunpack.c.l.b16 %v8452
    %v8492 = vpack.c.b16 %v8477, %v8476
    %v8493 = vpack.c.b16 %v8479, %v8478
    %v8494 = vpack.c.b16 %v8481, %v8480
    %v8495 = vpack.c.b16 %v8483, %v8482
    %v8496 = vpack.c.b16 %v8485, %v8484
    %v8497 = vpack.c.b16 %v8487, %v8486
    %v8498 = vpack.c.b16 %v8489, %v8488
    %v8499 = vpack.c.b16 %v8491, %v8490
    %8508 = vmatprep.subr.bf16.mxu0 0
    %8509 = vmatpush1.bf16.msra.mxu0 %v8492
    %8510 = vmatprep.subr.bf16.mxu0 0
    %8511 = vmatpush1.bf16.msra.mxu0 %v8493
    %8512 = vmatprep.subr.bf16.mxu0 0
    %8513 = vmatpush1.bf16.msra.mxu0 %v8494
    %8514 = vmatprep.subr.bf16.mxu0 0
    %8515 = vmatpush1.bf16.msra.mxu0 %v8495
    %8516 = vmatprep.subr.bf16.mxu0 0
    %8517 = vmatpush1.bf16.msra.mxu0 %v8496
    %8518 = vmatprep.subr.bf16.mxu0 0
    %8519 = vmatpush1.bf16.msra.mxu0 %v8497
    %8520 = vmatprep.subr.bf16.mxu0 0
    %8521 = vmatpush1.bf16.msra.mxu0 %v8498
    %8522 = vmatprep.subr.bf16.mxu0 0
    %8523 = vmatpush1.bf16.msra.mxu0 %v8499
    %8524 = vmatprep.subr.bf16.mxu0 0
    %8525 = vmatpush1.bf16.msra.mxu0 0
    %8526 = vmatprep.subr.bf16.mxu0 0
    %8527 = vmatpush1.bf16.msra.mxu0 0
    %8528 = vmatprep.subr.bf16.mxu0 0
    %8529 = vmatpush1.bf16.msra.mxu0 0
    %8530 = vmatprep.subr.bf16.mxu0 0
    %8531 = vmatpush1.bf16.msra.mxu0 0
    %8532 = vmatprep.subr.bf16.mxu0 0
    %8533 = vmatpush1.bf16.msra.mxu0 0
    %8534 = vmatprep.subr.bf16.mxu0 0
    %8535 = vmatpush1.bf16.msra.mxu0 0
    %8536 = vmatprep.subr.bf16.mxu0 0
    %8537 = vmatpush1.bf16.msra.mxu0 0
    %8538 = vmatprep.subr.bf16.mxu0 0
    %8539 = vmatpush1.bf16.msra.mxu0 0
    %8540 = vmatprep.mubr.bf16.mxu0 0
    %8541 = vmatmul.mubr.bf16.gmra.mrb[0].mxu0 %v8436
    %v8542 = vpop.f32.mrb[0].mxu0
    %v8543 = vadd.f32 %v8458, %v8542
    %v8544 = vpop.f32.mrb[0].mxu0
    %v8545 = vpop.f32.mrb[0].mxu0
    %v8546 = vadd.f32 %v8458, %v8545
    %v8547 = vpop.f32.mrb[0].mxu0
    %8548 = vdwg.mxu0
    %8549 = vst [vmem:[%s9] sm:$0xff] %v8543
    %8550 = vst [vmem:[%s9 + $0x8] sm:$0xff] %v8546
  $region45: #{lstm_mlcq_forward.1} parent=0 // pred_fallthru
    _
  // Predicated region
  $region46: #{lstm_mlcq_forward.1} parent=0 // pred_check
    _
  $region47: #{lstm_mlcq_forward.1} parent=0 // pred_check_branch
    %8552 = sbr.rel (0) target = $region49
  $region48: #{lstm_mlcq_forward.1} parent=0 // pred_region
    _
  $region49: #{lstm_mlcq_forward.1} parent=0 // pred_fallthru
    _
  // Predicated region
  $region50: #{lstm_mlcq_forward.1} parent=0 // pred_check
    _
  $region51: #{lstm_mlcq_forward.1} parent=0 // pred_check_branch
    %8554 = sbr.rel (0) target = $region53
  $region52: #{lstm_mlcq_forward.1} parent=0 // pred_region
    _
  $region53: #{lstm_mlcq_forward.1} parent=0 // pred_fallthru
    _

</llo_original>
